<compile_context>
chip_gen: v5e
topology: v5e:2x2
jax: 0.10.0
libtpu: 0.0.40
codegen_flags: <defaults>
</compile_context>

<pallas_src>
import jax
import jax.numpy as jnp
from jax.experimental import pallas as pl
from jax.experimental.pallas import tpu as pltpu

# ----------------------------- module dimensions -----------------------------
FEATS_DIM = 4424          # hard-coded in PredicatedRCNN.__init__
HIDDEN_SIZE = 1024        # (out_obj head - unused in forward)
NUM_OBJ_CLASSES = 151
NUM_REL_CLASSES = 51
CTX_DIM = 512
EDGE_HIDDEN_DIM = 512     # cfg.MODEL.ROI_RELATION_HEAD.CONTEXT_HIDDEN_DIM
EMBED_DIM = 200           # cfg.MODEL.ROI_RELATION_HEAD.EMBED_DIM
POOLING_DIM = 4096        # cfg.MODEL.ROI_RELATION_HEAD.CONTEXT_POOLING_DIM
DOWN_IN, DOWN_OUT = 4096, 2048   # down_dim / up_dim hard-coded sizes

_M = 8                         # sublane-padded "batch" of 1 row
VMEM_LIMIT = 48 * 1024 * 1024  # well under v7x's 64 MiB physical VMEM


def _round_up(x, m):
    return ((x + m - 1) // m) * m


# ------------------------------ Pallas kernels -------------------------------
def _linear_kernel(x_ref, w_ref, b_ref, o_ref):
    # Full-K block: one bf16 matmul per N tile, f32 accumulate, bias epilogue.
    o_ref[...] = (jnp.dot(x_ref[...], w_ref[...],
                          preferred_element_type=jnp.float32) + b_ref[...])


def pallas_linear(x_pad, w_pad, b_pad, *, tn):
    """x_pad (8, Kp) bf16, w_pad (Kp, Np) bf16, b_pad (1, Np) f32 -> (8, Np) f32."""
    Kp, Np = w_pad.shape
    return pl.pallas_call(
        _linear_kernel,
        out_shape=jax.ShapeDtypeStruct((_M, Np), jnp.float32),
        grid_spec=pltpu.PrefetchScalarGridSpec(
            num_scalar_prefetch=0,
            grid=(Np // tn,),
            in_specs=[
                pl.BlockSpec((_M, Kp), lambda j: (0, 0)),
                pl.BlockSpec((Kp, tn), lambda j: (0, j)),
                pl.BlockSpec((1, tn), lambda j: (0, j)),
            ],
            out_specs=pl.BlockSpec((_M, tn), lambda j: (0, j)),
        ),
        compiler_params=pltpu.CompilerParams(
            dimension_semantics=("parallel",),
            vmem_limit_bytes=VMEM_LIMIT),
    )(x_pad, w_pad, b_pad)


def _mlp2_kernel(x_ref, w1_ref, b1_ref, w2_ref, b2_ref, o_ref):
    # Fused post_emb -> post_cat. (The head/tail split+concat in the torch
    # code is an identity, so prod_rep == post_emb(edge_feats).)
    h = (jnp.dot(x_ref[...], w1_ref[...],
                 preferred_element_type=jnp.float32) + b1_ref[...])
    o_ref[...] = (jnp.dot(h.astype(jnp.bfloat16), w2_ref[...],
                          preferred_element_type=jnp.float32) + b2_ref[...])


def pallas_mlp2(x_pad, w1, b1, w2, b2, *, tn):
    """Fused x @ W1 + b1 -> @ W2 + b2. x_pad (8, K1) bf16 -> (8, N2) f32."""
    K1p, Hp = w1.shape
    _, N2p = w2.shape
    return pl.pallas_call(
        _mlp2_kernel,
        out_shape=jax.ShapeDtypeStruct((_M, N2p), jnp.float32),
        grid_spec=pltpu.PrefetchScalarGridSpec(
            num_scalar_prefetch=0,
            grid=(N2p // tn,),
            in_specs=[
                pl.BlockSpec((_M, K1p), lambda j: (0, 0)),
                pl.BlockSpec((K1p, Hp), lambda j: (0, 0)),   # W1 stays resident
                pl.BlockSpec((1, Hp), lambda j: (0, 0)),
                pl.BlockSpec((Hp, tn), lambda j: (0, j)),    # W2 streams
                pl.BlockSpec((1, tn), lambda j: (0, j)),
            ],
            out_specs=pl.BlockSpec((_M, tn), lambda j: (0, j)),
        ),
        compiler_params=pltpu.CompilerParams(
            dimension_semantics=("parallel",),
            vmem_limit_bytes=VMEM_LIMIT),
    )(x_pad, w1, b1, w2, b2)


def _rel_head_kernel(p_ref, u_ref, w_ref, b_ref, d_ref, s_ref):
    # Fused: dists = (prod * union) @ W_rel + (b_rel + freq_bias); then a
    # masked 51-wide softmax epilogue (one vreg of VPU/EUP work).
    rel = (p_ref[...] * u_ref[...]).astype(jnp.bfloat16)
    dists = (jnp.dot(rel, w_ref[...],
                     preferred_element_type=jnp.float32) + b_ref[...])
    d_ref[...] = dists
    lane = jax.lax.broadcasted_iota(jnp.int32, dists.shape, 1)
    mask = lane < NUM_REL_CLASSES
    xm = jnp.where(mask, dists, -jnp.inf)
    m = jnp.max(xm, axis=-1, keepdims=True)
    e = jnp.where(mask, jnp.exp(xm - m), 0.0)
    s = jnp.sum(e, axis=-1, keepdims=True)
    s_ref[...] = e / s


def pallas_rel_head(prod_pad, union_pad, w_pad, bias_pad):
    """prod/union (8, K) f32, w_pad (K, Np) bf16, bias_pad (1, Np) f32
       -> (dists (8, Np) f32, softmax (8, Np) f32). Single block, no grid."""
    Kp, Np = w_pad.shape
    return pl.pallas_call(
        _rel_head_kernel,
        out_shape=(jax.ShapeDtypeStruct((_M, Np), jnp.float32),
                   jax.ShapeDtypeStruct((_M, Np), jnp.float32)),
        compiler_params=pltpu.CompilerParams(vmem_limit_bytes=VMEM_LIMIT),
    )(prod_pad, union_pad, w_pad, bias_pad)


# ------------------------------ parameter init -------------------------------
def _prep_linear(w, b):
    """Pad once at init: W -> (Kp, Np) bf16, b -> (1, Np) f32."""
    K, N = w.shape
    Kp = _round_up(K, 128)
    Np = _round_up(N, 128)
    wp = jnp.zeros((Kp, Np), jnp.bfloat16).at[:K, :N].set(w.astype(jnp.bfloat16))
    bp = jnp.zeros((1, Np), jnp.float32).at[0, :N].set(b)
    return {"w": wp, "b": bp, "k": K, "n": N}


def init_params(key):
    def lin(k, fan_in, fan_out):
        kw, kb = jax.random.split(k)
        scale = 1.0 / jnp.sqrt(jnp.float32(fan_in))
        w = jax.random.normal(kw, (fan_in, fan_out), jnp.float32) * scale
        b = jax.random.normal(kb, (fan_out,), jnp.float32) * 0.01
        return w, b

    keys = jax.random.split(key, 10)
    p = {}
    # GloVe obj_edge_vectors replaced with deterministic random embeddings.
    p["edge_obj_embed"] = jax.random.normal(
        keys[0], (NUM_OBJ_CLASSES, EMBED_DIM), jnp.float32) * 0.1
    edge_in = (EMBED_DIM + FEATS_DIM + CTX_DIM) * 2
    p["edge_lin"] = _prep_linear(*lin(keys[1], edge_in, EDGE_HIDDEN_DIM))
    p["post_emb"] = _prep_linear(*lin(keys[2], EDGE_HIDDEN_DIM,
                                      EDGE_HIDDEN_DIM * 2))
    p["post_cat"] = _prep_linear(*lin(keys[3], EDGE_HIDDEN_DIM * 2,
                                      POOLING_DIM))
    p["rel"] = _prep_linear(*lin(keys[4], POOLING_DIM, NUM_REL_CLASSES))
    p["down"] = _prep_linear(*lin(keys[5], DOWN_IN, DOWN_OUT))
    p["up"] = _prep_linear(*lin(keys[6], DOWN_OUT, DOWN_IN))
    # FrequencyBias: embedding table over (sub_label, obj_label) pairs.
    p["freq_bias"] = jax.random.normal(
        keys[7], (NUM_OBJ_CLASSES * NUM_OBJ_CLASSES, NUM_REL_CLASSES),
        jnp.float32) * 0.1
    # out_obj head and sub_obj_embed1 are created in __init__ but never used in
    # forward; omitted here.
    return p


def _pad_row_bf16(row, kp):
    """(1, n) / (n,) f32 -> (8, kp) bf16, row 0 carries the data, rest zero."""
    row = row.reshape(-1)
    out = jnp.zeros((_M, kp), jnp.bfloat16)
    return out.at[0, :row.shape[0]].set(row.astype(jnp.bfloat16))


# --------------------------------- forward -----------------------------------
def predicated_rcnn_forward(params, train_data, target, union_feats=None, *,
                            training=False, use_gt_object_label=False,
                            to_val=True):
    sub_feats = train_data["sub_feats"].reshape(1, -1).astype(jnp.float32)
    obj_feats = train_data["obj_feats"].reshape(1, -1).astype(jnp.float32)
    pre_sub_dist = train_data["sub_dist"].reshape(-1).astype(jnp.float32)
    pre_obj_dist = train_data["obj_dist"].reshape(-1).astype(jnp.float32)
    pre_sub_ctx = train_data["sub_ctx"].reshape(1, -1).astype(jnp.float32)
    pre_obj_ctx = train_data["obj_ctx"].reshape(1, -1).astype(jnp.float32)

    # 151-wide softmaxes: trivial vector work, keep in plain JAX (no kernel).
    sub_logits = jax.nn.softmax(pre_sub_dist)   # (151,)
    obj_logits = jax.nn.softmax(pre_obj_dist)   # (151,)

    if use_gt_object_label:
        sub_pred = jnp.asarray(target["sub_labels"], jnp.int32).reshape(1)
        obj_pred = jnp.asarray(target["obj_labels"], jnp.int32).reshape(1)
    else:
        sub_pred = jnp.argmax(sub_logits).reshape(1).astype(jnp.int32)
        obj_pred = jnp.argmax(obj_logits).reshape(1).astype(jnp.int32)

    sub_embed = jnp.take(params["edge_obj_embed"], sub_pred, axis=0)  # (1, 200)
    obj_embed = jnp.take(params["edge_obj_embed"], obj_pred, axis=0)

    edge_in_row = jnp.concatenate(
        [sub_embed.reshape(1, -1), sub_feats, pre_sub_ctx,
         obj_embed.reshape(1, -1), obj_feats, pre_obj_ctx], axis=-1)  # (1, 10272)

    # edge_lin: (10272 -> 512), full-K bf16 block, tn=256 => grid=(2,) parallel
    edge_x = _pad_row_bf16(edge_in_row, params["edge_lin"]["w"].shape[0])
    edge_feats = pallas_linear(edge_x, params["edge_lin"]["w"],
                               params["edge_lin"]["b"], tn=256)       # (8, 512)

    # fused post_emb (512->1024) + post_cat (1024->4096); the torch
    # head/tail split + concat is an identity so this equals prod_rep.
    prod_rep = pallas_mlp2(edge_feats.astype(jnp.bfloat16),
                           params["post_emb"]["w"], params["post_emb"]["b"],
                           params["post_cat"]["w"], params["post_cat"]["b"],
                           tn=2048)                                   # (8, 4096)

    # FrequencyBias.index_with_labels(pair) == table[sub * num_obj + obj].
    # Matches the torch module: uses ground-truth target labels in all modes.
    sub_label = jnp.asarray(target["sub_labels"], jnp.int32).reshape(1)
    obj_label = jnp.asarray(target["obj_labels"], jnp.int32).reshape(1)
    pair_idx = sub_label * NUM_OBJ_CLASSES + obj_label
    freq_row = jnp.take(params["freq_bias"], pair_idx, axis=0).reshape(-1)  # (51,)
    bias_pad = params["rel"]["b"].at[0, :NUM_REL_CLASSES].add(freq_row)     # (1, 128)

    if union_feats is not None:
        u_x = _pad_row_bf16(union_feats, params["down"]["w"].shape[0])
        down = pallas_linear(u_x, params["down"]["w"],
                             params["down"]["b"], tn=1024)            # (8, 2048)
        union_proj = pallas_linear(down.astype(jnp.bfloat16),
                                   params["up"]["w"],
                                   params["up"]["b"], tn=2048)        # (8, 4096)
    else:
        union_proj = jnp.ones_like(prod_rep)

    # fused: (prod * union) @ W_rel + b_rel + freq_bias, plus in-kernel softmax
    dists_pad, probs_pad = pallas_rel_head(prod_rep, union_proj,
                                           params["rel"]["w"], bias_pad)
    relation_dists = dists_pad[0, :NUM_REL_CLASSES]    # (51,)
    relation_logits = probs_pad[0, :NUM_REL_CLASSES]   # (51,) softmax probs

    new_relation_logits = relation_logits[1:]          # drop class 0
    predicate_pred = jnp.argmax(new_relation_logits).reshape(1)
    rel_label = jnp.asarray(target["predicate_label"], jnp.int32).reshape(1)

    sub_index = sub_pred[0]
    sub_scores = sub_logits[sub_index]
    obj_index = obj_pred[0]
    obj_scores = obj_logits[obj_index]
    predicate_index = predicate_pred[0] + 1
    predicate_scores = relation_logits[predicate_index]

    if training:
        # CrossEntropyLoss(relation_dists, rel_label): numerically stable
        # log-softmax on the raw dists (not log of the softmax output).
        rel_loss = -jax.nn.log_softmax(relation_dists)[rel_label[0]]
        return dict(loss_rel=rel_loss)
    elif to_val:
        return dict(sub_pred=sub_index, obj_pred=obj_index,
                    predicate_pred=predicate_index,
                    sub_scores=sub_scores, obj_scores=obj_scores,
                    predicate_scores=predicate_scores)
    # TODO(synk): torch path returns None implicitly when neither training nor TO_VAL.
    return None


# ----------------------------------- main -------------------------------------
if __name__ == "__main__":
    root = jax.random.PRNGKey(0)
    k_par, k_in = jax.random.split(root)
    params = init_params(k_par)

    ks = jax.random.split(k_in, 7)
    train_data = {
        "sub_feats": jax.random.normal(ks[0], (FEATS_DIM,), jnp.float32),
        "obj_feats": jax.random.normal(ks[1], (FEATS_DIM,), jnp.float32),
        "sub_dist": jax.random.normal(ks[2], (NUM_OBJ_CLASSES,), jnp.float32),
        "obj_dist": jax.random.normal(ks[3], (NUM_OBJ_CLASSES,), jnp.float32),
        "sub_ctx": jax.random.normal(ks[4], (CTX_DIM,), jnp.float32),
        "obj_ctx": jax.random.normal(ks[5], (CTX_DIM,), jnp.float32),
    }
    union_feats = jax.random.normal(ks[6], (1, DOWN_IN), jnp.float32)
    target = {"sub_labels": 7, "obj_labels": 23, "predicate_label": 3}

    # eval path (training=False, SOLVER.TO_VAL=True)
    preds = predicated_rcnn_forward(params, train_data, target,
                                    union_feats=union_feats,
                                    training=False,
                                    use_gt_object_label=False)
    for v in preds.values():
        jax.block_until_ready(v)

    # training path (loss) as a sanity check of the other branch
    losses = predicated_rcnn_forward(params, train_data, target,
                                     union_feats=union_feats,
                                     training=True)
    jax.block_until_ready(losses["loss_rel"])

    print("KERNEL_OK")
</pallas_src>

<mosaic_0001>
module attributes {stable_mosaic.version = 11 : i64} {
  func.func @_linear_kernel(%arg0: i32, %arg1: memref<8x10368xbf16, #tpu.memory_space<vmem>>, %arg2: memref<10368x256xbf16, #tpu.memory_space<vmem>>, %arg3: memref<1x256xf32, #tpu.memory_space<vmem>>, %arg4: memref<8x256xf32, #tpu.memory_space<vmem>>) attributes {dimension_semantics = [#tpu.dimension_semantics<parallel>], iteration_bounds = array<i64: 2>, scalar_prefetch = 0 : i64, scratch_operands = 0 : i64, tpu.core_type = #tpu.core_type<tc>, window_params = [{pipeline_mode = #tpu.pipeline_mode<synchronous>, transform_indices = @transform_0, window_bounds = array<i64: 8, 10368>}, {transform_indices = @transform_1, window_bounds = array<i64: 10368, 256>}, {transform_indices = @transform_2, window_bounds = array<i64: 1, 256>}, {transform_indices = @transform_3, window_bounds = array<i64: 8, 256>}]} {
    %c0 = arith.constant 0 : index
    %c0_0 = arith.constant 0 : index
    %0 = vector.load %arg1[%c0, %c0_0] : memref<8x10368xbf16, #tpu.memory_space<vmem>>, vector<8x10368xbf16>
    %c0_1 = arith.constant 0 : index
    %c0_2 = arith.constant 0 : index
    %1 = vector.load %arg2[%c0_1, %c0_2] : memref<10368x256xbf16, #tpu.memory_space<vmem>>, vector<10368x256xbf16>
    %cst = arith.constant dense<0.000000e+00> : vector<8x256xf32>
    %2 = tpu.matmul %0, %1, %cst {dimension_numbers = #tpu.dot_dimension_numbers<[1], [0], [0], [1], [0, 0, 1, 1], [], []>} : vector<8x10368xbf16>, vector<10368x256xbf16>, vector<8x256xf32> -> vector<8x256xf32>
    %c0_3 = arith.constant 0 : index
    %c0_4 = arith.constant 0 : index
    %3 = vector.load %arg3[%c0_3, %c0_4] : memref<1x256xf32, #tpu.memory_space<vmem>>, vector<1x256xf32>
    %4 = vector.broadcast %3 : vector<1x256xf32> to vector<8x256xf32>
    %5 = arith.addf %2, %4 : vector<8x256xf32>
    %c0_5 = arith.constant 0 : index
    %c0_6 = arith.constant 0 : index
    %6 = vector.load %arg4[%c0_5, %c0_6] : memref<8x256xf32, #tpu.memory_space<vmem>>, vector<8x256xf32>
    tpu.vector_store %arg4[%c0_5, %c0_6], %5 {strides = array<i32>} : memref<8x256xf32, #tpu.memory_space<vmem>>, vector<8x256xf32>,
    return
  }
  func.func @transform_0(%arg0: i32) -> (i32, i32) {
    %c0_i32 = arith.constant 0 : i32
    %c0_i32_0 = arith.constant 0 : i32
    %c0_i32_1 = arith.constant 0 : i32
    return %c0_i32, %c0_i32_0 : i32, i32
  }
  func.func @transform_1(%arg0: i32) -> (i32, i32) {
    %c0_i32 = arith.constant 0 : i32
    %c0_i32_0 = arith.constant 0 : i32
    return %c0_i32, %arg0 : i32, i32
  }
  func.func @transform_2(%arg0: i32) -> (i32, i32) {
    %c0_i32 = arith.constant 0 : i32
    %c0_i32_0 = arith.constant 0 : i32
    return %c0_i32, %arg0 : i32, i32
  }
  func.func @transform_3(%arg0: i32) -> (i32, i32) {
    %c0_i32 = arith.constant 0 : i32
    %c0_i32_0 = arith.constant 0 : i32
    return %c0_i32, %arg0 : i32, i32
  }
}

</mosaic_0001>

<llo_original>
// kernel: tpu_custom_call.1
$region0: #{tpu_custom_call.1}
  #allocation0 [shape = 'u32[]', space=smem, size = 0x4, offset = 0x4, fixed_abs, tag = 'smem constant byte address 0x4 - core index']
  #allocation1 [shape = 'u32[72,128]{1,0:T(1,128)}', space=vmem, size = 0x9000, scoped, tag = 'internal scratch']
  %s0 = inlined_call_operand.hbm [shape: bf16[8,10368], index: 0, kind: input, shape index: {}]
  %s1 = inlined_call_operand.hbm [shape: bf16[10368,512], index: 1, kind: input, shape index: {}]
  %s2 = inlined_call_operand.hbm [shape: f32[1,512], index: 2, kind: input, shape index: {}]
  %s3 = inlined_call_operand.hbm [shape: f32[8,512], index: 3, kind: output, shape index: {}]
  %s4 = sld [smem:[#allocation0]]
  $region57: #{tpu_custom_call.1} parent=0
    _
  %s6 = ssub.s32 1, %s4
  %s7 = scalar_select 0, %s6, %s4
  $region1: #{tpu_custom_call.1} parent=0
    #allocation2 [shape = 'u8[165888]{0}', space=vmem, size = 0x28800, scoped, tag = 'input window, operand 0, single buffered']
    #allocation3 [shape = 's32[2]{0}', space=sflag, size = 0x8, scoped, tag = 'scoped memory for tpu_custom_call.1']
    #allocation4 [shape = 's32[2]{0}', space=sflag, size = 0x8, scoped, tag = 'scoped memory for tpu_custom_call.1']
    #allocation5 [shape = 'u8[10616832]{0}', space=vmem, size = 0xa20000, scoped, tag = 'input window, operand 1']
    #allocation6 [shape = 's32[2]{0}', space=sflag, size = 0x8, scoped, tag = 'scoped memory for tpu_custom_call.1']
    #allocation7 [shape = 'u8[2048]{0}', space=vmem, size = 0x800, scoped, tag = 'input window, operand 2']
    #allocation8 [shape = 'u8[16384]{0}', space=vmem, size = 0x4000, scoped, tag = 'output window, operand 0']
    %8 = vsyncpa [#allocation3], 0
    %9 = vsyncpa [#allocation6], 0
    %s10 = scalar_lea.sflag [#allocation6], 1
    %11 = vsyncpa %s10, 0
    %12 = vsyncpa [#allocation4], 0
    %s13 = scalar_lea.sflag [#allocation4], 1
    %14 = vsyncpa %s13, 0
    loop: start=0, step=1, limit=4
    $region2: #{tpu_custom_call.1} parent=1 // loop_pre_header
      _
    $region3: #{tpu_custom_call.1} parent=1 // loop_header
      %s16 = sphi 0, %s20
      %p17 = scmp.ge.s32.totalorder %s16, 4
      %s24 = sphi 0, %s24
      %s26 = sphi 0, %s24
      %s27 = sphi 0, %s26
      %s41 = sphi 0, %s27
      %s47 = sphi 0, %s49
      %s50 = sphi 0, %s47
      %s51 = sphi 0, %s50
      %s67 = sphi 0, %s51
      %s73 = sphi 0, %s75
      %s76 = sphi 0, %s73
      %s77 = sphi 0, %s76
      %s93 = sphi 0, %s77
      %s99 = sphi 0, %s101
      %s102 = sphi 0, %s99
      %s103 = sphi 0, %s102
      %s119 = sphi 0, %s103
    $region4: #{tpu_custom_call.1} parent=1 // loop_header_branch
      %19 = sbr.rel (%p17) target = $region8
    $region5: #{tpu_custom_call.1} parent=1 // loop_body
      %s21 = ssub.s32 %s16, 1
      %s22 = ssub.s32 %s16, 2
      %s23 = sadd.s32 %s16, 1
      %s25 = sadd.s32 %s24, 1
      %p28 = scmp.eq.s32.totalorder %s16, 1
      %p29 = scmp.ne.s32.totalorder %s24, %s26
      %p30 = scmp.eq.s32.totalorder %s16, 0
      %p31 = por %p29, %p30
      %p32 = scmp.ne.s32.totalorder %s24, %s26
      %p33 = scmp.eq.s32.totalorder %s21, 1
      %p34 = por %p32, %p33
      %p35 = scmp.ne.s32.totalorder %s26, %s27
      %p36 = scmp.eq.s32.totalorder %s21, 0
      %p37 = por %p35, %p36
      %p38 = scmp.ne.s32.totalorder %s26, %s27
      %p39 = scmp.eq.s32.totalorder %s22, 1
      %p40 = por %p38, %p39
      %p42 = scmp.ne.s32.totalorder %s27, %s41
      %p43 = scmp.eq.s32.totalorder %s22, 0
      %p44 = por %p42, %p43
      %s45 = ssub.s32 %s16, %s23
      %p46 = scmp.eq.s32.totalorder %s45, 0
      %s48 = sadd.s32 %s47, 1
      %s49 = scalar_select %p46, %s47, %s48
      %p52 = pneg %p46
      %p53 = scmp.eq.s32.totalorder %s16, 1
      %p54 = por %p52, %p53
      %p55 = scmp.ne.s32.totalorder %s47, %s50
      %p56 = scmp.eq.s32.totalorder %s16, 0
      %p57 = por %p55, %p56
      %p58 = scmp.ne.s32.totalorder %s47, %s50
      %p59 = scmp.eq.s32.totalorder %s21, 1
      %p60 = por %p58, %p59
      %p61 = scmp.ne.s32.totalorder %s50, %s51
      %p62 = scmp.eq.s32.totalorder %s21, 0
      %p63 = por %p61, %p62
      %p64 = scmp.ne.s32.totalorder %s50, %s51
      %p65 = scmp.eq.s32.totalorder %s22, 1
      %p66 = por %p64, %p65
      %p68 = scmp.ne.s32.totalorder %s51, %s67
      %p69 = scmp.eq.s32.totalorder %s22, 0
      %p70 = por %p68, %p69
      %s71 = ssub.s32 %s16, %s23
      %p72 = scmp.eq.s32.totalorder %s71, 0
      %s74 = sadd.s32 %s73, 1
      %s75 = scalar_select %p72, %s73, %s74
      %p78 = pneg %p72
      %p79 = scmp.eq.s32.totalorder %s16, 1
      %p80 = por %p78, %p79
      %p81 = scmp.ne.s32.totalorder %s73, %s76
      %p82 = scmp.eq.s32.totalorder %s16, 0
      %p83 = por %p81, %p82
      %p84 = scmp.ne.s32.totalorder %s73, %s76
      %p85 = scmp.eq.s32.totalorder %s21, 1
      %p86 = por %p84, %p85
      %p87 = scmp.ne.s32.totalorder %s76, %s77
      %p88 = scmp.eq.s32.totalorder %s21, 0
      %p89 = por %p87, %p88
      %p90 = scmp.ne.s32.totalorder %s76, %s77
      %p91 = scmp.eq.s32.totalorder %s22, 1
      %p92 = por %p90, %p91
      %p94 = scmp.ne.s32.totalorder %s77, %s93
      %p95 = scmp.eq.s32.totalorder %s22, 0
      %p96 = por %p94, %p95
      %s97 = ssub.s32 %s16, %s23
      %p98 = scmp.eq.s32.totalorder %s97, 0
      %s100 = sadd.s32 %s99, 1
      %s101 = scalar_select %p98, %s99, %s100
      %p104 = pneg %p98
      %p105 = scmp.eq.s32.totalorder %s16, 1
      %p106 = por %p104, %p105
      %p107 = scmp.ne.s32.totalorder %s99, %s102
      %p108 = scmp.eq.s32.totalorder %s16, 0
      %p109 = por %p107, %p108
      %p110 = scmp.ne.s32.totalorder %s99, %s102
      %p111 = scmp.eq.s32.totalorder %s21, 1
      %p112 = por %p110, %p111
      %p113 = scmp.ne.s32.totalorder %s102, %s103
      %p114 = scmp.eq.s32.totalorder %s21, 0
      %p115 = por %p113, %p114
      %p116 = scmp.ne.s32.totalorder %s102, %s103
      %p117 = scmp.eq.s32.totalorder %s22, 1
      %p118 = por %p116, %p117
      %p120 = scmp.ne.s32.totalorder %s103, %s119
      %p121 = scmp.eq.s32.totalorder %s22, 0
      %p122 = por %p120, %p121
      %p123 = scmp.le.s32.totalorder 1, %s16
      %p124 = scmp.lt.s32.totalorder %s16, 3
      %p125 = pnand %p123, %p124
      %p126 = pneg %p125
      // Predicated region
      $region9: #{tpu_custom_call.1} parent=5 // pred_check
        _
      $region10: #{tpu_custom_call.1} parent=5 // pred_check_branch
        %128 = sbr.rel (%p125) target = $region12
      $region11: #{tpu_custom_call.1} parent=5 // pred_region
        %s129 = ssub.s32 %s16, 1
        // Predicated region
        $region13: #{tpu_custom_call.1} parent=11 // pred_check
          %p130 = pneg %p37
        $region14: #{tpu_custom_call.1} parent=11 // pred_check_branch
          %132 = sbr.rel (%p130) target = $region16
        $region15: #{tpu_custom_call.1} parent=11 // pred_region
          %134 = vsyncadd [#allocation3], 0
          %s136 = sshll.u32 %s0, 4
          %s137 = int_to_ptr.hbm [resolvable:$true] %s136
          %s138 = sshll.u32 [#allocation2], 4
          %s139 = int_to_ptr.vmem [resolvable:$true] %s138
          %141 = dma.hbm_to_vmem [thread:$0]  %s137, 5184, %s139, [#allocation3]
        $region16: #{tpu_custom_call.1} parent=11 // pred_fallthru
          _
      $region12: #{tpu_custom_call.1} parent=5 // pred_fallthru
        _
      %p142 = scmp.lt.s32.totalorder %s16, 2
      // Predicated region
      $region17: #{tpu_custom_call.1} parent=5 // pred_check
        %p143 = pneg %p142
      $region18: #{tpu_custom_call.1} parent=5 // pred_check_branch
        %145 = sbr.rel (%p143) target = $region20
      $region19: #{tpu_custom_call.1} parent=5 // pred_region
        // Predicated region
        $region21: #{tpu_custom_call.1} parent=19 // pred_check
          %p146 = pneg %p57
        $region22: #{tpu_custom_call.1} parent=19 // pred_check_branch
          %148 = sbr.rel (%p146) target = $region24
        $region23: #{tpu_custom_call.1} parent=19 // pred_region
          %s149 = sand.u32 %s16, 1
          %s150 = scalar_lea.sflag [#allocation6], %s149
          %s151 = sand.u32 %s47, 1
          %s152 = smul.addr %s151, 10368
          %s153 = scalar_lea.vmem [#allocation5], %s152
          %s154 = smul.u32 2, %s16
          %156 = vsyncadd %s150, 0
          %s157 = smul.addr %s154, 4
          %s158 = scalar_lea.hbm %s1, %s157
          %s159 = sshll.u32 %s158, 4
          %s160 = int_to_ptr.hbm [resolvable:$true] %s159
          %s161 = sshll.u32 %s153, 4
          %s162 = int_to_ptr.vmem [resolvable:$true] %s161
          %167 = dma.hbm_to_vmem [thread:$0]  %s160, 165888, %s162, %s150, 256, 128, 8
        $region24: #{tpu_custom_call.1} parent=19 // pred_fallthru
          _
        // Predicated region
        $region25: #{tpu_custom_call.1} parent=19 // pred_check
          %p168 = pneg %p83
        $region26: #{tpu_custom_call.1} parent=19 // pred_check_branch
          %170 = sbr.rel (%p168) target = $region28
        $region27: #{tpu_custom_call.1} parent=19 // pred_region
          %s171 = sand.u32 %s16, 1
          %s172 = scalar_lea.sflag [#allocation6], %s171
          %s173 = sand.u32 %s73, 1
          %s174 = smul.addr %s173, 2
          %s175 = scalar_lea.vmem [#allocation7], %s174
          %s176 = smul.u32 2, %s16
          %178 = vsyncadd %s172, 0
          %s179 = scalar_lea.hbm %s2, %s176
          %s181 = sshll.u32 %s179, 4
          %s182 = int_to_ptr.hbm [resolvable:$true] %s181
          %s183 = sshll.u32 %s175, 4
          %s184 = int_to_ptr.vmem [resolvable:$true] %s183
          %186 = dma.hbm_to_vmem [thread:$0]  %s182, 32, %s184, %s172
        $region28: #{tpu_custom_call.1} parent=19 // pred_fallthru
          _
      $region20: #{tpu_custom_call.1} parent=5 // pred_fallthru
        _
      %p187 = scmp.le.s32.totalorder 1, %s16
      %p188 = scmp.lt.s32.totalorder %s16, 3
      %p189 = pnand %p187, %p188
      %p190 = pneg %p189
      // Predicated region
      $region29: #{tpu_custom_call.1} parent=5 // pred_check
        _
      $region30: #{tpu_custom_call.1} parent=5 // pred_check_branch
        %192 = sbr.rel (%p189) target = $region32
      $region31: #{tpu_custom_call.1} parent=5 // pred_region
        %s193 = ssub.s32 %s16, 1
        // Predicated region
        $region33: #{tpu_custom_call.1} parent=31 // pred_check
          %p194 = pneg %p37
        $region34: #{tpu_custom_call.1} parent=31 // pred_check_branch
          %196 = sbr.rel (%p194) target = $region36
        $region35: #{tpu_custom_call.1} parent=31 // pred_region
          %198 = dma.done [#allocation3], 5184
        $region36: #{tpu_custom_call.1} parent=31 // pred_fallthru
          _
        %s199 = sand.u32 %s21, 1
        %s200 = scalar_lea.sflag [#allocation6], %s199
        %s201 = sand.u32 %s50, 1
        %s202 = smul.addr %s201, 10368
        %s203 = scalar_lea.vmem [#allocation5], %s202
        // Predicated region
        $region37: #{tpu_custom_call.1} parent=31 // pred_check
          %p204 = pneg %p63
        $region38: #{tpu_custom_call.1} parent=31 // pred_check_branch
          %206 = sbr.rel (%p204) target = $region40
        $region39: #{tpu_custom_call.1} parent=31 // pred_region
          %208 = dma.done %s200, 165888
        $region40: #{tpu_custom_call.1} parent=31 // pred_fallthru
          _
        %s209 = sand.u32 %s21, 1
        %s210 = scalar_lea.sflag [#allocation6], %s209
        %s211 = sand.u32 %s76, 1
        %s212 = smul.addr %s211, 2
        %s213 = scalar_lea.vmem [#allocation7], %s212
        // Predicated region
        $region41: #{tpu_custom_call.1} parent=31 // pred_check
          %p214 = pneg %p89
        $region42: #{tpu_custom_call.1} parent=31 // pred_check_branch
          %216 = sbr.rel (%p214) target = $region44
        $region43: #{tpu_custom_call.1} parent=31 // pred_region
          %218 = dma.done %s210, 32
        $region44: #{tpu_custom_call.1} parent=31 // pred_fallthru
          _
        %p219 = pneg %p37
        %p220 = pneg %p34
        %s221 = sand.u32 %s21, 1
        %s222 = scalar_lea.sflag [#allocation6], %s221
        %s223 = sand.u32 %s50, 1
        %s224 = smul.addr %s223, 10368
        %s225 = scalar_lea.vmem [#allocation5], %s224
        %p226 = pneg %p63
        %p227 = pneg %p60
        %s228 = sand.u32 %s21, 1
        %s229 = scalar_lea.sflag [#allocation6], %s228
        %s230 = sand.u32 %s76, 1
        %s231 = smul.addr %s230, 2
        %s232 = scalar_lea.vmem [#allocation7], %s231
        %p233 = pneg %p89
        %p234 = pneg %p86
        %p235 = pneg %p115
        %p236 = pneg %p112
        %s237 = sand.u32 %s102, 1
        %s238 = scalar_lea.sflag [#allocation4], %s237
        %s239 = sand.u32 %s102, 1
        %s240 = smul.addr %s239, 16
        %s241 = scalar_lea.vmem [#allocation8], %s240
        %s242 = smul.u32 2, %s21
        %s243 = smul.u32 2, %s21
        %s244 = smul.u32 2, %s21
        %v245 = vld [vmem:[#allocation2] sm:$0xff]
        %v246 = vld [vmem:[#allocation2 + $0x8] sm:$0xff]
        %v247 = vld [vmem:[#allocation2 + $0x10] sm:$0xff]
        %v248 = vld [vmem:[#allocation2 + $0x18] sm:$0xff]
        %v249 = vld [vmem:[#allocation2 + $0x20] sm:$0xff]
        %v250 = vld [vmem:[#allocation2 + $0x28] sm:$0xff]
        %v251 = vld [vmem:[#allocation2 + $0x30] sm:$0xff]
        %v252 = vld [vmem:[#allocation2 + $0x38] sm:$0xff]
        %v253 = vld [vmem:[#allocation2 + $0x40] sm:$0xff]
        %v254 = vld [vmem:[#allocation2 + $0x48] sm:$0xff]
        %v255 = vld [vmem:[#allocation2 + $0x50] sm:$0xff]
        %v256 = vld [vmem:[#allocation2 + $0x58] sm:$0xff]
        %v257 = vld [vmem:[#allocation2 + $0x60] sm:$0xff]
        %v258 = vld [vmem:[#allocation2 + $0x68] sm:$0xff]
        %v259 = vld [vmem:[#allocation2 + $0x70] sm:$0xff]
        %v260 = vld [vmem:[#allocation2 + $0x78] sm:$0xff]
        %v261 = vld [vmem:[#allocation2 + $0x80] sm:$0xff]
        %v262 = vld [vmem:[#allocation2 + $0x88] sm:$0xff]
        %v263 = vld [vmem:[#allocation2 + $0x90] sm:$0xff]
        %v264 = vld [vmem:[#allocation2 + $0x98] sm:$0xff]
        %v265 = vld [vmem:[#allocation2 + $0xa0] sm:$0xff]
        %v266 = vld [vmem:[#allocation2 + $0xa8] sm:$0xff]
        %v267 = vld [vmem:[#allocation2 + $0xb0] sm:$0xff]
        %v268 = vld [vmem:[#allocation2 + $0xb8] sm:$0xff]
        %v269 = vld [vmem:[#allocation2 + $0xc0] sm:$0xff]
        %v270 = vld [vmem:[#allocation2 + $0xc8] sm:$0xff]
        %v271 = vld [vmem:[#allocation2 + $0xd0] sm:$0xff]
        %v272 = vld [vmem:[#allocation2 + $0xd8] sm:$0xff]
        %v273 = vld [vmem:[#allocation2 + $0xe0] sm:$0xff]
        %v274 = vld [vmem:[#allocation2 + $0xe8] sm:$0xff]
        %v275 = vld [vmem:[#allocation2 + $0xf0] sm:$0xff]
        %v276 = vld [vmem:[#allocation2 + $0xf8] sm:$0xff]
        %v277 = vld [vmem:[#allocation2 + $0x100] sm:$0xff]
        %v278 = vld [vmem:[#allocation2 + $0x108] sm:$0xff]
        %v279 = vld [vmem:[#allocation2 + $0x110] sm:$0xff]
        %v280 = vld [vmem:[#allocation2 + $0x118] sm:$0xff]
        %v281 = vld [vmem:[#allocation2 + $0x120] sm:$0xff]
        %v282 = vld [vmem:[#allocation2 + $0x128] sm:$0xff]
        %v283 = vld [vmem:[#allocation2 + $0x130] sm:$0xff]
        %v284 = vld [vmem:[#allocation2 + $0x138] sm:$0xff]
        %v285 = vld [vmem:[#allocation2 + $0x140] sm:$0xf]
        %v286 = vld [vmem:[%s203] sm:$0xff]
        %v287 = vld [vmem:[%s203 + $0x8] sm:$0xff]
        %v288 = vld [vmem:[%s203 + $0x10] sm:$0xff]
        %v289 = vld [vmem:[%s203 + $0x18] sm:$0xff]
        %v290 = vld [vmem:[%s203 + $0x20] sm:$0xff]
        %v291 = vld [vmem:[%s203 + $0x28] sm:$0xff]
        %v292 = vld [vmem:[%s203 + $0x30] sm:$0xff]
        %v293 = vld [vmem:[%s203 + $0x38] sm:$0xff]
        %v294 = vld [vmem:[%s203 + $0x40] sm:$0xff]
        %v295 = vld [vmem:[%s203 + $0x48] sm:$0xff]
        %v296 = vld [vmem:[%s203 + $0x50] sm:$0xff]
        %v297 = vld [vmem:[%s203 + $0x58] sm:$0xff]
        %v298 = vld [vmem:[%s203 + $0x60] sm:$0xff]
        %v299 = vld [vmem:[%s203 + $0x68] sm:$0xff]
        %v300 = vld [vmem:[%s203 + $0x70] sm:$0xff]
        %v301 = vld [vmem:[%s203 + $0x78] sm:$0xff]
        %v302 = vld [vmem:[%s203 + $0x80] sm:$0xff]
        %v303 = vld [vmem:[%s203 + $0x88] sm:$0xff]
        %v304 = vld [vmem:[%s203 + $0x90] sm:$0xff]
        %v305 = vld [vmem:[%s203 + $0x98] sm:$0xff]
        %v306 = vld [vmem:[%s203 + $0xa0] sm:$0xff]
        %v307 = vld [vmem:[%s203 + $0xa8] sm:$0xff]
        %v308 = vld [vmem:[%s203 + $0xb0] sm:$0xff]
        %v309 = vld [vmem:[%s203 + $0xb8] sm:$0xff]
        %v310 = vld [vmem:[%s203 + $0xc0] sm:$0xff]
        %v311 = vld [vmem:[%s203 + $0xc8] sm:$0xff]
        %v312 = vld [vmem:[%s203 + $0xd0] sm:$0xff]
        %v313 = vld [vmem:[%s203 + $0xd8] sm:$0xff]
        %v314 = vld [vmem:[%s203 + $0xe0] sm:$0xff]
        %v315 = vld [vmem:[%s203 + $0xe8] sm:$0xff]
        %v316 = vld [vmem:[%s203 + $0xf0] sm:$0xff]
        %v317 = vld [vmem:[%s203 + $0xf8] sm:$0xff]
        %v318 = vld [vmem:[%s203 + $0x100] sm:$0xff]
        %v319 = vld [vmem:[%s203 + $0x108] sm:$0xff]
        %v320 = vld [vmem:[%s203 + $0x110] sm:$0xff]
        %v321 = vld [vmem:[%s203 + $0x118] sm:$0xff]
        %v322 = vld [vmem:[%s203 + $0x120] sm:$0xff]
        %v323 = vld [vmem:[%s203 + $0x128] sm:$0xff]
        %v324 = vld [vmem:[%s203 + $0x130] sm:$0xff]
        %v325 = vld [vmem:[%s203 + $0x138] sm:$0xff]
        %v326 = vld [vmem:[%s203 + $0x140] sm:$0xff]
        %v327 = vld [vmem:[%s203 + $0x148] sm:$0xff]
        %v328 = vld [vmem:[%s203 + $0x150] sm:$0xff]
        %v329 = vld [vmem:[%s203 + $0x158] sm:$0xff]
        %v330 = vld [vmem:[%s203 + $0x160] sm:$0xff]
        %v331 = vld [vmem:[%s203 + $0x168] sm:$0xff]
        %v332 = vld [vmem:[%s203 + $0x170] sm:$0xff]
        %v333 = vld [vmem:[%s203 + $0x178] sm:$0xff]
        %v334 = vld [vmem:[%s203 + $0x180] sm:$0xff]
        %v335 = vld [vmem:[%s203 + $0x188] sm:$0xff]
        %v336 = vld [vmem:[%s203 + $0x190] sm:$0xff]
        %v337 = vld [vmem:[%s203 + $0x198] sm:$0xff]
        %v338 = vld [vmem:[%s203 + $0x1a0] sm:$0xff]
        %v339 = vld [vmem:[%s203 + $0x1a8] sm:$0xff]
        %v340 = vld [vmem:[%s203 + $0x1b0] sm:$0xff]
        %v341 = vld [vmem:[%s203 + $0x1b8] sm:$0xff]
        %v342 = vld [vmem:[%s203 + $0x1c0] sm:$0xff]
        %v343 = vld [vmem:[%s203 + $0x1c8] sm:$0xff]
        %v344 = vld [vmem:[%s203 + $0x1d0] sm:$0xff]
        %v345 = vld [vmem:[%s203 + $0x1d8] sm:$0xff]
        %v346 = vld [vmem:[%s203 + $0x1e0] sm:$0xff]
        %v347 = vld [vmem:[%s203 + $0x1e8] sm:$0xff]
        %v348 = vld [vmem:[%s203 + $0x1f0] sm:$0xff]
        %v349 = vld [vmem:[%s203 + $0x1f8] sm:$0xff]
        %v350 = vld [vmem:[%s203 + $0x200] sm:$0xff]
        %v351 = vld [vmem:[%s203 + $0x208] sm:$0xff]
        %v352 = vld [vmem:[%s203 + $0x210] sm:$0xff]
        %v353 = vld [vmem:[%s203 + $0x218] sm:$0xff]
        %v354 = vld [vmem:[%s203 + $0x220] sm:$0xff]
        %v355 = vld [vmem:[%s203 + $0x228] sm:$0xff]
        %v356 = vld [vmem:[%s203 + $0x230] sm:$0xff]
        %v357 = vld [vmem:[%s203 + $0x238] sm:$0xff]
        %v358 = vld [vmem:[%s203 + $0x240] sm:$0xff]
        %v359 = vld [vmem:[%s203 + $0x248] sm:$0xff]
        %v360 = vld [vmem:[%s203 + $0x250] sm:$0xff]
        %v361 = vld [vmem:[%s203 + $0x258] sm:$0xff]
        %v362 = vld [vmem:[%s203 + $0x260] sm:$0xff]
        %v363 = vld [vmem:[%s203 + $0x268] sm:$0xff]
        %v364 = vld [vmem:[%s203 + $0x270] sm:$0xff]
        %v365 = vld [vmem:[%s203 + $0x278] sm:$0xff]
        %v366 = vld [vmem:[%s203 + $0x280] sm:$0xff]
        %v367 = vld [vmem:[%s203 + $0x288] sm:$0xff]
        %v368 = vld [vmem:[%s203 + $0x290] sm:$0xff]
        %v369 = vld [vmem:[%s203 + $0x298] sm:$0xff]
        %v370 = vld [vmem:[%s203 + $0x2a0] sm:$0xff]
        %v371 = vld [vmem:[%s203 + $0x2a8] sm:$0xff]
        %v372 = vld [vmem:[%s203 + $0x2b0] sm:$0xff]
        %v373 = vld [vmem:[%s203 + $0x2b8] sm:$0xff]
        %v374 = vld [vmem:[%s203 + $0x2c0] sm:$0xff]
        %v375 = vld [vmem:[%s203 + $0x2c8] sm:$0xff]
        %v376 = vld [vmem:[%s203 + $0x2d0] sm:$0xff]
        %v377 = vld [vmem:[%s203 + $0x2d8] sm:$0xff]
        %v378 = vld [vmem:[%s203 + $0x2e0] sm:$0xff]
        %v379 = vld [vmem:[%s203 + $0x2e8] sm:$0xff]
        %v380 = vld [vmem:[%s203 + $0x2f0] sm:$0xff]
        %v381 = vld [vmem:[%s203 + $0x2f8] sm:$0xff]
        %v382 = vld [vmem:[%s203 + $0x300] sm:$0xff]
        %v383 = vld [vmem:[%s203 + $0x308] sm:$0xff]
        %v384 = vld [vmem:[%s203 + $0x310] sm:$0xff]
        %v385 = vld [vmem:[%s203 + $0x318] sm:$0xff]
        %v386 = vld [vmem:[%s203 + $0x320] sm:$0xff]
        %v387 = vld [vmem:[%s203 + $0x328] sm:$0xff]
        %v388 = vld [vmem:[%s203 + $0x330] sm:$0xff]
        %v389 = vld [vmem:[%s203 + $0x338] sm:$0xff]
        %v390 = vld [vmem:[%s203 + $0x340] sm:$0xff]
        %v391 = vld [vmem:[%s203 + $0x348] sm:$0xff]
        %v392 = vld [vmem:[%s203 + $0x350] sm:$0xff]
        %v393 = vld [vmem:[%s203 + $0x358] sm:$0xff]
        %v394 = vld [vmem:[%s203 + $0x360] sm:$0xff]
        %v395 = vld [vmem:[%s203 + $0x368] sm:$0xff]
        %v396 = vld [vmem:[%s203 + $0x370] sm:$0xff]
        %v397 = vld [vmem:[%s203 + $0x378] sm:$0xff]
        %v398 = vld [vmem:[%s203 + $0x380] sm:$0xff]
        %v399 = vld [vmem:[%s203 + $0x388] sm:$0xff]
        %v400 = vld [vmem:[%s203 + $0x390] sm:$0xff]
        %v401 = vld [vmem:[%s203 + $0x398] sm:$0xff]
        %v402 = vld [vmem:[%s203 + $0x3a0] sm:$0xff]
        %v403 = vld [vmem:[%s203 + $0x3a8] sm:$0xff]
        %v404 = vld [vmem:[%s203 + $0x3b0] sm:$0xff]
        %v405 = vld [vmem:[%s203 + $0x3b8] sm:$0xff]
        %v406 = vld [vmem:[%s203 + $0x3c0] sm:$0xff]
        %v407 = vld [vmem:[%s203 + $0x3c8] sm:$0xff]
        %v408 = vld [vmem:[%s203 + $0x3d0] sm:$0xff]
        %v409 = vld [vmem:[%s203 + $0x3d8] sm:$0xff]
        %v410 = vld [vmem:[%s203 + $0x3e0] sm:$0xff]
        %v411 = vld [vmem:[%s203 + $0x3e8] sm:$0xff]
        %v412 = vld [vmem:[%s203 + $0x3f0] sm:$0xff]
        %v413 = vld [vmem:[%s203 + $0x3f8] sm:$0xff]
        %v414 = vld [vmem:[%s203 + $0x400] sm:$0xff]
        %v415 = vld [vmem:[%s203 + $0x408] sm:$0xff]
        %v416 = vld [vmem:[%s203 + $0x410] sm:$0xff]
        %v417 = vld [vmem:[%s203 + $0x418] sm:$0xff]
        %v418 = vld [vmem:[%s203 + $0x420] sm:$0xff]
        %v419 = vld [vmem:[%s203 + $0x428] sm:$0xff]
        %v420 = vld [vmem:[%s203 + $0x430] sm:$0xff]
        %v421 = vld [vmem:[%s203 + $0x438] sm:$0xff]
        %v422 = vld [vmem:[%s203 + $0x440] sm:$0xff]
        %v423 = vld [vmem:[%s203 + $0x448] sm:$0xff]
        %v424 = vld [vmem:[%s203 + $0x450] sm:$0xff]
        %v425 = vld [vmem:[%s203 + $0x458] sm:$0xff]
        %v426 = vld [vmem:[%s203 + $0x460] sm:$0xff]
        %v427 = vld [vmem:[%s203 + $0x468] sm:$0xff]
        %v428 = vld [vmem:[%s203 + $0x470] sm:$0xff]
        %v429 = vld [vmem:[%s203 + $0x478] sm:$0xff]
        %v430 = vld [vmem:[%s203 + $0x480] sm:$0xff]
        %v431 = vld [vmem:[%s203 + $0x488] sm:$0xff]
        %v432 = vld [vmem:[%s203 + $0x490] sm:$0xff]
        %v433 = vld [vmem:[%s203 + $0x498] sm:$0xff]
        %v434 = vld [vmem:[%s203 + $0x4a0] sm:$0xff]
        %v435 = vld [vmem:[%s203 + $0x4a8] sm:$0xff]
        %v436 = vld [vmem:[%s203 + $0x4b0] sm:$0xff]
        %v437 = vld [vmem:[%s203 + $0x4b8] sm:$0xff]
        %v438 = vld [vmem:[%s203 + $0x4c0] sm:$0xff]
        %v439 = vld [vmem:[%s203 + $0x4c8] sm:$0xff]
        %v440 = vld [vmem:[%s203 + $0x4d0] sm:$0xff]
        %v441 = vld [vmem:[%s203 + $0x4d8] sm:$0xff]
        %v442 = vld [vmem:[%s203 + $0x4e0] sm:$0xff]
        %v443 = vld [vmem:[%s203 + $0x4e8] sm:$0xff]
        %v444 = vld [vmem:[%s203 + $0x4f0] sm:$0xff]
        %v445 = vld [vmem:[%s203 + $0x4f8] sm:$0xff]
        %v446 = vld [vmem:[%s203 + $0x500] sm:$0xff]
        %v447 = vld [vmem:[%s203 + $0x508] sm:$0xff]
        %v448 = vld [vmem:[%s203 + $0x510] sm:$0xff]
        %v449 = vld [vmem:[%s203 + $0x518] sm:$0xff]
        %v450 = vld [vmem:[%s203 + $0x520] sm:$0xff]
        %v451 = vld [vmem:[%s203 + $0x528] sm:$0xff]
        %v452 = vld [vmem:[%s203 + $0x530] sm:$0xff]
        %v453 = vld [vmem:[%s203 + $0x538] sm:$0xff]
        %v454 = vld [vmem:[%s203 + $0x540] sm:$0xff]
        %v455 = vld [vmem:[%s203 + $0x548] sm:$0xff]
        %v456 = vld [vmem:[%s203 + $0x550] sm:$0xff]
        %v457 = vld [vmem:[%s203 + $0x558] sm:$0xff]
        %v458 = vld [vmem:[%s203 + $0x560] sm:$0xff]
        %v459 = vld [vmem:[%s203 + $0x568] sm:$0xff]
        %v460 = vld [vmem:[%s203 + $0x570] sm:$0xff]
        %v461 = vld [vmem:[%s203 + $0x578] sm:$0xff]
        %v462 = vld [vmem:[%s203 + $0x580] sm:$0xff]
        %v463 = vld [vmem:[%s203 + $0x588] sm:$0xff]
        %v464 = vld [vmem:[%s203 + $0x590] sm:$0xff]
        %v465 = vld [vmem:[%s203 + $0x598] sm:$0xff]
        %v466 = vld [vmem:[%s203 + $0x5a0] sm:$0xff]
        %v467 = vld [vmem:[%s203 + $0x5a8] sm:$0xff]
        %v468 = vld [vmem:[%s203 + $0x5b0] sm:$0xff]
        %v469 = vld [vmem:[%s203 + $0x5b8] sm:$0xff]
        %v470 = vld [vmem:[%s203 + $0x5c0] sm:$0xff]
        %v471 = vld [vmem:[%s203 + $0x5c8] sm:$0xff]
        %v472 = vld [vmem:[%s203 + $0x5d0] sm:$0xff]
        %v473 = vld [vmem:[%s203 + $0x5d8] sm:$0xff]
        %v474 = vld [vmem:[%s203 + $0x5e0] sm:$0xff]
        %v475 = vld [vmem:[%s203 + $0x5e8] sm:$0xff]
        %v476 = vld [vmem:[%s203 + $0x5f0] sm:$0xff]
        %v477 = vld [vmem:[%s203 + $0x5f8] sm:$0xff]
        %v478 = vld [vmem:[%s203 + $0x600] sm:$0xff]
        %v479 = vld [vmem:[%s203 + $0x608] sm:$0xff]
        %v480 = vld [vmem:[%s203 + $0x610] sm:$0xff]
        %v481 = vld [vmem:[%s203 + $0x618] sm:$0xff]
        %v482 = vld [vmem:[%s203 + $0x620] sm:$0xff]
        %v483 = vld [vmem:[%s203 + $0x628] sm:$0xff]
        %v484 = vld [vmem:[%s203 + $0x630] sm:$0xff]
        %v485 = vld [vmem:[%s203 + $0x638] sm:$0xff]
        %v486 = vld [vmem:[%s203 + $0x640] sm:$0xff]
        %v487 = vld [vmem:[%s203 + $0x648] sm:$0xff]
        %v488 = vld [vmem:[%s203 + $0x650] sm:$0xff]
        %v489 = vld [vmem:[%s203 + $0x658] sm:$0xff]
        %v490 = vld [vmem:[%s203 + $0x660] sm:$0xff]
        %v491 = vld [vmem:[%s203 + $0x668] sm:$0xff]
        %v492 = vld [vmem:[%s203 + $0x670] sm:$0xff]
        %v493 = vld [vmem:[%s203 + $0x678] sm:$0xff]
        %v494 = vld [vmem:[%s203 + $0x680] sm:$0xff]
        %v495 = vld [vmem:[%s203 + $0x688] sm:$0xff]
        %v496 = vld [vmem:[%s203 + $0x690] sm:$0xff]
        %v497 = vld [vmem:[%s203 + $0x698] sm:$0xff]
        %v498 = vld [vmem:[%s203 + $0x6a0] sm:$0xff]
        %v499 = vld [vmem:[%s203 + $0x6a8] sm:$0xff]
        %v500 = vld [vmem:[%s203 + $0x6b0] sm:$0xff]
        %v501 = vld [vmem:[%s203 + $0x6b8] sm:$0xff]
        %v502 = vld [vmem:[%s203 + $0x6c0] sm:$0xff]
        %v503 = vld [vmem:[%s203 + $0x6c8] sm:$0xff]
        %v504 = vld [vmem:[%s203 + $0x6d0] sm:$0xff]
        %v505 = vld [vmem:[%s203 + $0x6d8] sm:$0xff]
        %v506 = vld [vmem:[%s203 + $0x6e0] sm:$0xff]
        %v507 = vld [vmem:[%s203 + $0x6e8] sm:$0xff]
        %v508 = vld [vmem:[%s203 + $0x6f0] sm:$0xff]
        %v509 = vld [vmem:[%s203 + $0x6f8] sm:$0xff]
        %v510 = vld [vmem:[%s203 + $0x700] sm:$0xff]
        %v511 = vld [vmem:[%s203 + $0x708] sm:$0xff]
        %v512 = vld [vmem:[%s203 + $0x710] sm:$0xff]
        %v513 = vld [vmem:[%s203 + $0x718] sm:$0xff]
        %v514 = vld [vmem:[%s203 + $0x720] sm:$0xff]
        %v515 = vld [vmem:[%s203 + $0x728] sm:$0xff]
        %v516 = vld [vmem:[%s203 + $0x730] sm:$0xff]
        %v517 = vld [vmem:[%s203 + $0x738] sm:$0xff]
        %v518 = vld [vmem:[%s203 + $0x740] sm:$0xff]
        %v519 = vld [vmem:[%s203 + $0x748] sm:$0xff]
        %v520 = vld [vmem:[%s203 + $0x750] sm:$0xff]
        %v521 = vld [vmem:[%s203 + $0x758] sm:$0xff]
        %v522 = vld [vmem:[%s203 + $0x760] sm:$0xff]
        %v523 = vld [vmem:[%s203 + $0x768] sm:$0xff]
        %v524 = vld [vmem:[%s203 + $0x770] sm:$0xff]
        %v525 = vld [vmem:[%s203 + $0x778] sm:$0xff]
        %v526 = vld [vmem:[%s203 + $0x780] sm:$0xff]
        %v527 = vld [vmem:[%s203 + $0x788] sm:$0xff]
        %v528 = vld [vmem:[%s203 + $0x790] sm:$0xff]
        %v529 = vld [vmem:[%s203 + $0x798] sm:$0xff]
        %v530 = vld [vmem:[%s203 + $0x7a0] sm:$0xff]
        %v531 = vld [vmem:[%s203 + $0x7a8] sm:$0xff]
        %v532 = vld [vmem:[%s203 + $0x7b0] sm:$0xff]
        %v533 = vld [vmem:[%s203 + $0x7b8] sm:$0xff]
        %v534 = vld [vmem:[%s203 + $0x7c0] sm:$0xff]
        %v535 = vld [vmem:[%s203 + $0x7c8] sm:$0xff]
        %v536 = vld [vmem:[%s203 + $0x7d0] sm:$0xff]
        %v537 = vld [vmem:[%s203 + $0x7d8] sm:$0xff]
        %v538 = vld [vmem:[%s203 + $0x7e0] sm:$0xff]
        %v539 = vld [vmem:[%s203 + $0x7e8] sm:$0xff]
        %v540 = vld [vmem:[%s203 + $0x7f0] sm:$0xff]
        %v541 = vld [vmem:[%s203 + $0x7f8] sm:$0xff]
        %v542 = vld [vmem:[%s203 + $0x800] sm:$0xff]
        %v543 = vld [vmem:[%s203 + $0x808] sm:$0xff]
        %v544 = vld [vmem:[%s203 + $0x810] sm:$0xff]
        %v545 = vld [vmem:[%s203 + $0x818] sm:$0xff]
        %v546 = vld [vmem:[%s203 + $0x820] sm:$0xff]
        %v547 = vld [vmem:[%s203 + $0x828] sm:$0xff]
        %v548 = vld [vmem:[%s203 + $0x830] sm:$0xff]
        %v549 = vld [vmem:[%s203 + $0x838] sm:$0xff]
        %v550 = vld [vmem:[%s203 + $0x840] sm:$0xff]
        %v551 = vld [vmem:[%s203 + $0x848] sm:$0xff]
        %v552 = vld [vmem:[%s203 + $0x850] sm:$0xff]
        %v553 = vld [vmem:[%s203 + $0x858] sm:$0xff]
        %v554 = vld [vmem:[%s203 + $0x860] sm:$0xff]
        %v555 = vld [vmem:[%s203 + $0x868] sm:$0xff]
        %v556 = vld [vmem:[%s203 + $0x870] sm:$0xff]
        %v557 = vld [vmem:[%s203 + $0x878] sm:$0xff]
        %v558 = vld [vmem:[%s203 + $0x880] sm:$0xff]
        %v559 = vld [vmem:[%s203 + $0x888] sm:$0xff]
        %v560 = vld [vmem:[%s203 + $0x890] sm:$0xff]
        %v561 = vld [vmem:[%s203 + $0x898] sm:$0xff]
        %v562 = vld [vmem:[%s203 + $0x8a0] sm:$0xff]
        %v563 = vld [vmem:[%s203 + $0x8a8] sm:$0xff]
        %v564 = vld [vmem:[%s203 + $0x8b0] sm:$0xff]
        %v565 = vld [vmem:[%s203 + $0x8b8] sm:$0xff]
        %v566 = vld [vmem:[%s203 + $0x8c0] sm:$0xff]
        %v567 = vld [vmem:[%s203 + $0x8c8] sm:$0xff]
        %v568 = vld [vmem:[%s203 + $0x8d0] sm:$0xff]
        %v569 = vld [vmem:[%s203 + $0x8d8] sm:$0xff]
        %v570 = vld [vmem:[%s203 + $0x8e0] sm:$0xff]
        %v571 = vld [vmem:[%s203 + $0x8e8] sm:$0xff]
        %v572 = vld [vmem:[%s203 + $0x8f0] sm:$0xff]
        %v573 = vld [vmem:[%s203 + $0x8f8] sm:$0xff]
        %v574 = vld [vmem:[%s203 + $0x900] sm:$0xff]
        %v575 = vld [vmem:[%s203 + $0x908] sm:$0xff]
        %v576 = vld [vmem:[%s203 + $0x910] sm:$0xff]
        %v577 = vld [vmem:[%s203 + $0x918] sm:$0xff]
        %v578 = vld [vmem:[%s203 + $0x920] sm:$0xff]
        %v579 = vld [vmem:[%s203 + $0x928] sm:$0xff]
        %v580 = vld [vmem:[%s203 + $0x930] sm:$0xff]
        %v581 = vld [vmem:[%s203 + $0x938] sm:$0xff]
        %v582 = vld [vmem:[%s203 + $0x940] sm:$0xff]
        %v583 = vld [vmem:[%s203 + $0x948] sm:$0xff]
        %v584 = vld [vmem:[%s203 + $0x950] sm:$0xff]
        %v585 = vld [vmem:[%s203 + $0x958] sm:$0xff]
        %v586 = vld [vmem:[%s203 + $0x960] sm:$0xff]
        %v587 = vld [vmem:[%s203 + $0x968] sm:$0xff]
        %v588 = vld [vmem:[%s203 + $0x970] sm:$0xff]
        %v589 = vld [vmem:[%s203 + $0x978] sm:$0xff]
        %v590 = vld [vmem:[%s203 + $0x980] sm:$0xff]
        %v591 = vld [vmem:[%s203 + $0x988] sm:$0xff]
        %v592 = vld [vmem:[%s203 + $0x990] sm:$0xff]
        %v593 = vld [vmem:[%s203 + $0x998] sm:$0xff]
        %v594 = vld [vmem:[%s203 + $0x9a0] sm:$0xff]
        %v595 = vld [vmem:[%s203 + $0x9a8] sm:$0xff]
        %v596 = vld [vmem:[%s203 + $0x9b0] sm:$0xff]
        %v597 = vld [vmem:[%s203 + $0x9b8] sm:$0xff]
        %v598 = vld [vmem:[%s203 + $0x9c0] sm:$0xff]
        %v599 = vld [vmem:[%s203 + $0x9c8] sm:$0xff]
        %v600 = vld [vmem:[%s203 + $0x9d0] sm:$0xff]
        %v601 = vld [vmem:[%s203 + $0x9d8] sm:$0xff]
        %v602 = vld [vmem:[%s203 + $0x9e0] sm:$0xff]
        %v603 = vld [vmem:[%s203 + $0x9e8] sm:$0xff]
        %v604 = vld [vmem:[%s203 + $0x9f0] sm:$0xff]
        %v605 = vld [vmem:[%s203 + $0x9f8] sm:$0xff]
        %v606 = vld [vmem:[%s203 + $0xa00] sm:$0xff]
        %v607 = vld [vmem:[%s203 + $0xa08] sm:$0xff]
        %v608 = vld [vmem:[%s203 + $0xa10] sm:$0xff]
        %v609 = vld [vmem:[%s203 + $0xa18] sm:$0xff]
        %v610 = vld [vmem:[%s203 + $0xa20] sm:$0xff]
        %v611 = vld [vmem:[%s203 + $0xa28] sm:$0xff]
        %v612 = vld [vmem:[%s203 + $0xa30] sm:$0xff]
        %v613 = vld [vmem:[%s203 + $0xa38] sm:$0xff]
        %v614 = vld [vmem:[%s203 + $0xa40] sm:$0xff]
        %v615 = vld [vmem:[%s203 + $0xa48] sm:$0xff]
        %v616 = vld [vmem:[%s203 + $0xa50] sm:$0xff]
        %v617 = vld [vmem:[%s203 + $0xa58] sm:$0xff]
        %v618 = vld [vmem:[%s203 + $0xa60] sm:$0xff]
        %v619 = vld [vmem:[%s203 + $0xa68] sm:$0xff]
        %v620 = vld [vmem:[%s203 + $0xa70] sm:$0xff]
        %v621 = vld [vmem:[%s203 + $0xa78] sm:$0xff]
        %v622 = vld [vmem:[%s203 + $0xa80] sm:$0xff]
        %v623 = vld [vmem:[%s203 + $0xa88] sm:$0xff]
        %v624 = vld [vmem:[%s203 + $0xa90] sm:$0xff]
        %v625 = vld [vmem:[%s203 + $0xa98] sm:$0xff]
        %v626 = vld [vmem:[%s203 + $0xaa0] sm:$0xff]
        %v627 = vld [vmem:[%s203 + $0xaa8] sm:$0xff]
        %v628 = vld [vmem:[%s203 + $0xab0] sm:$0xff]
        %v629 = vld [vmem:[%s203 + $0xab8] sm:$0xff]
        %v630 = vld [vmem:[%s203 + $0xac0] sm:$0xff]
        %v631 = vld [vmem:[%s203 + $0xac8] sm:$0xff]
        %v632 = vld [vmem:[%s203 + $0xad0] sm:$0xff]
        %v633 = vld [vmem:[%s203 + $0xad8] sm:$0xff]
        %v634 = vld [vmem:[%s203 + $0xae0] sm:$0xff]
        %v635 = vld [vmem:[%s203 + $0xae8] sm:$0xff]
        %v636 = vld [vmem:[%s203 + $0xaf0] sm:$0xff]
        %v637 = vld [vmem:[%s203 + $0xaf8] sm:$0xff]
        %v638 = vld [vmem:[%s203 + $0xb00] sm:$0xff]
        %v639 = vld [vmem:[%s203 + $0xb08] sm:$0xff]
        %v640 = vld [vmem:[%s203 + $0xb10] sm:$0xff]
        %v641 = vld [vmem:[%s203 + $0xb18] sm:$0xff]
        %v642 = vld [vmem:[%s203 + $0xb20] sm:$0xff]
        %v643 = vld [vmem:[%s203 + $0xb28] sm:$0xff]
        %v644 = vld [vmem:[%s203 + $0xb30] sm:$0xff]
        %v645 = vld [vmem:[%s203 + $0xb38] sm:$0xff]
        %v646 = vld [vmem:[%s203 + $0xb40] sm:$0xff]
        %v647 = vld [vmem:[%s203 + $0xb48] sm:$0xff]
        %v648 = vld [vmem:[%s203 + $0xb50] sm:$0xff]
        %v649 = vld [vmem:[%s203 + $0xb58] sm:$0xff]
        %v650 = vld [vmem:[%s203 + $0xb60] sm:$0xff]
        %v651 = vld [vmem:[%s203 + $0xb68] sm:$0xff]
        %v652 = vld [vmem:[%s203 + $0xb70] sm:$0xff]
        %v653 = vld [vmem:[%s203 + $0xb78] sm:$0xff]
        %v654 = vld [vmem:[%s203 + $0xb80] sm:$0xff]
        %v655 = vld [vmem:[%s203 + $0xb88] sm:$0xff]
        %v656 = vld [vmem:[%s203 + $0xb90] sm:$0xff]
        %v657 = vld [vmem:[%s203 + $0xb98] sm:$0xff]
        %v658 = vld [vmem:[%s203 + $0xba0] sm:$0xff]
        %v659 = vld [vmem:[%s203 + $0xba8] sm:$0xff]
        %v660 = vld [vmem:[%s203 + $0xbb0] sm:$0xff]
        %v661 = vld [vmem:[%s203 + $0xbb8] sm:$0xff]
        %v662 = vld [vmem:[%s203 + $0xbc0] sm:$0xff]
        %v663 = vld [vmem:[%s203 + $0xbc8] sm:$0xff]
        %v664 = vld [vmem:[%s203 + $0xbd0] sm:$0xff]
        %v665 = vld [vmem:[%s203 + $0xbd8] sm:$0xff]
        %v666 = vld [vmem:[%s203 + $0xbe0] sm:$0xff]
        %v667 = vld [vmem:[%s203 + $0xbe8] sm:$0xff]
        %v668 = vld [vmem:[%s203 + $0xbf0] sm:$0xff]
        %v669 = vld [vmem:[%s203 + $0xbf8] sm:$0xff]
        %v670 = vld [vmem:[%s203 + $0xc00] sm:$0xff]
        %v671 = vld [vmem:[%s203 + $0xc08] sm:$0xff]
        %v672 = vld [vmem:[%s203 + $0xc10] sm:$0xff]
        %v673 = vld [vmem:[%s203 + $0xc18] sm:$0xff]
        %v674 = vld [vmem:[%s203 + $0xc20] sm:$0xff]
        %v675 = vld [vmem:[%s203 + $0xc28] sm:$0xff]
        %v676 = vld [vmem:[%s203 + $0xc30] sm:$0xff]
        %v677 = vld [vmem:[%s203 + $0xc38] sm:$0xff]
        %v678 = vld [vmem:[%s203 + $0xc40] sm:$0xff]
        %v679 = vld [vmem:[%s203 + $0xc48] sm:$0xff]
        %v680 = vld [vmem:[%s203 + $0xc50] sm:$0xff]
        %v681 = vld [vmem:[%s203 + $0xc58] sm:$0xff]
        %v682 = vld [vmem:[%s203 + $0xc60] sm:$0xff]
        %v683 = vld [vmem:[%s203 + $0xc68] sm:$0xff]
        %v684 = vld [vmem:[%s203 + $0xc70] sm:$0xff]
        %v685 = vld [vmem:[%s203 + $0xc78] sm:$0xff]
        %v686 = vld [vmem:[%s203 + $0xc80] sm:$0xff]
        %v687 = vld [vmem:[%s203 + $0xc88] sm:$0xff]
        %v688 = vld [vmem:[%s203 + $0xc90] sm:$0xff]
        %v689 = vld [vmem:[%s203 + $0xc98] sm:$0xff]
        %v690 = vld [vmem:[%s203 + $0xca0] sm:$0xff]
        %v691 = vld [vmem:[%s203 + $0xca8] sm:$0xff]
        %v692 = vld [vmem:[%s203 + $0xcb0] sm:$0xff]
        %v693 = vld [vmem:[%s203 + $0xcb8] sm:$0xff]
        %v694 = vld [vmem:[%s203 + $0xcc0] sm:$0xff]
        %v695 = vld [vmem:[%s203 + $0xcc8] sm:$0xff]
        %v696 = vld [vmem:[%s203 + $0xcd0] sm:$0xff]
        %v697 = vld [vmem:[%s203 + $0xcd8] sm:$0xff]
        %v698 = vld [vmem:[%s203 + $0xce0] sm:$0xff]
        %v699 = vld [vmem:[%s203 + $0xce8] sm:$0xff]
        %v700 = vld [vmem:[%s203 + $0xcf0] sm:$0xff]
        %v701 = vld [vmem:[%s203 + $0xcf8] sm:$0xff]
        %v702 = vld [vmem:[%s203 + $0xd00] sm:$0xff]
        %v703 = vld [vmem:[%s203 + $0xd08] sm:$0xff]
        %v704 = vld [vmem:[%s203 + $0xd10] sm:$0xff]
        %v705 = vld [vmem:[%s203 + $0xd18] sm:$0xff]
        %v706 = vld [vmem:[%s203 + $0xd20] sm:$0xff]
        %v707 = vld [vmem:[%s203 + $0xd28] sm:$0xff]
        %v708 = vld [vmem:[%s203 + $0xd30] sm:$0xff]
        %v709 = vld [vmem:[%s203 + $0xd38] sm:$0xff]
        %v710 = vld [vmem:[%s203 + $0xd40] sm:$0xff]
        %v711 = vld [vmem:[%s203 + $0xd48] sm:$0xff]
        %v712 = vld [vmem:[%s203 + $0xd50] sm:$0xff]
        %v713 = vld [vmem:[%s203 + $0xd58] sm:$0xff]
        %v714 = vld [vmem:[%s203 + $0xd60] sm:$0xff]
        %v715 = vld [vmem:[%s203 + $0xd68] sm:$0xff]
        %v716 = vld [vmem:[%s203 + $0xd70] sm:$0xff]
        %v717 = vld [vmem:[%s203 + $0xd78] sm:$0xff]
        %v718 = vld [vmem:[%s203 + $0xd80] sm:$0xff]
        %v719 = vld [vmem:[%s203 + $0xd88] sm:$0xff]
        %v720 = vld [vmem:[%s203 + $0xd90] sm:$0xff]
        %v721 = vld [vmem:[%s203 + $0xd98] sm:$0xff]
        %v722 = vld [vmem:[%s203 + $0xda0] sm:$0xff]
        %v723 = vld [vmem:[%s203 + $0xda8] sm:$0xff]
        %v724 = vld [vmem:[%s203 + $0xdb0] sm:$0xff]
        %v725 = vld [vmem:[%s203 + $0xdb8] sm:$0xff]
        %v726 = vld [vmem:[%s203 + $0xdc0] sm:$0xff]
        %v727 = vld [vmem:[%s203 + $0xdc8] sm:$0xff]
        %v728 = vld [vmem:[%s203 + $0xdd0] sm:$0xff]
        %v729 = vld [vmem:[%s203 + $0xdd8] sm:$0xff]
        %v730 = vld [vmem:[%s203 + $0xde0] sm:$0xff]
        %v731 = vld [vmem:[%s203 + $0xde8] sm:$0xff]
        %v732 = vld [vmem:[%s203 + $0xdf0] sm:$0xff]
        %v733 = vld [vmem:[%s203 + $0xdf8] sm:$0xff]
        %v734 = vld [vmem:[%s203 + $0xe00] sm:$0xff]
        %v735 = vld [vmem:[%s203 + $0xe08] sm:$0xff]
        %v736 = vld [vmem:[%s203 + $0xe10] sm:$0xff]
        %v737 = vld [vmem:[%s203 + $0xe18] sm:$0xff]
        %v738 = vld [vmem:[%s203 + $0xe20] sm:$0xff]
        %v739 = vld [vmem:[%s203 + $0xe28] sm:$0xff]
        %v740 = vld [vmem:[%s203 + $0xe30] sm:$0xff]
        %v741 = vld [vmem:[%s203 + $0xe38] sm:$0xff]
        %v742 = vld [vmem:[%s203 + $0xe40] sm:$0xff]
        %v743 = vld [vmem:[%s203 + $0xe48] sm:$0xff]
        %v744 = vld [vmem:[%s203 + $0xe50] sm:$0xff]
        %v745 = vld [vmem:[%s203 + $0xe58] sm:$0xff]
        %v746 = vld [vmem:[%s203 + $0xe60] sm:$0xff]
        %v747 = vld [vmem:[%s203 + $0xe68] sm:$0xff]
        %v748 = vld [vmem:[%s203 + $0xe70] sm:$0xff]
        %v749 = vld [vmem:[%s203 + $0xe78] sm:$0xff]
        %v750 = vld [vmem:[%s203 + $0xe80] sm:$0xff]
        %v751 = vld [vmem:[%s203 + $0xe88] sm:$0xff]
        %v752 = vld [vmem:[%s203 + $0xe90] sm:$0xff]
        %v753 = vld [vmem:[%s203 + $0xe98] sm:$0xff]
        %v754 = vld [vmem:[%s203 + $0xea0] sm:$0xff]
        %v755 = vld [vmem:[%s203 + $0xea8] sm:$0xff]
        %v756 = vld [vmem:[%s203 + $0xeb0] sm:$0xff]
        %v757 = vld [vmem:[%s203 + $0xeb8] sm:$0xff]
        %v758 = vld [vmem:[%s203 + $0xec0] sm:$0xff]
        %v759 = vld [vmem:[%s203 + $0xec8] sm:$0xff]
        %v760 = vld [vmem:[%s203 + $0xed0] sm:$0xff]
        %v761 = vld [vmem:[%s203 + $0xed8] sm:$0xff]
        %v762 = vld [vmem:[%s203 + $0xee0] sm:$0xff]
        %v763 = vld [vmem:[%s203 + $0xee8] sm:$0xff]
        %v764 = vld [vmem:[%s203 + $0xef0] sm:$0xff]
        %v765 = vld [vmem:[%s203 + $0xef8] sm:$0xff]
        %v766 = vld [vmem:[%s203 + $0xf00] sm:$0xff]
        %v767 = vld [vmem:[%s203 + $0xf08] sm:$0xff]
        %v768 = vld [vmem:[%s203 + $0xf10] sm:$0xff]
        %v769 = vld [vmem:[%s203 + $0xf18] sm:$0xff]
        %v770 = vld [vmem:[%s203 + $0xf20] sm:$0xff]
        %v771 = vld [vmem:[%s203 + $0xf28] sm:$0xff]
        %v772 = vld [vmem:[%s203 + $0xf30] sm:$0xff]
        %v773 = vld [vmem:[%s203 + $0xf38] sm:$0xff]
        %v774 = vld [vmem:[%s203 + $0xf40] sm:$0xff]
        %v775 = vld [vmem:[%s203 + $0xf48] sm:$0xff]
        %v776 = vld [vmem:[%s203 + $0xf50] sm:$0xff]
        %v777 = vld [vmem:[%s203 + $0xf58] sm:$0xff]
        %v778 = vld [vmem:[%s203 + $0xf60] sm:$0xff]
        %v779 = vld [vmem:[%s203 + $0xf68] sm:$0xff]
        %v780 = vld [vmem:[%s203 + $0xf70] sm:$0xff]
        %v781 = vld [vmem:[%s203 + $0xf78] sm:$0xff]
        %v782 = vld [vmem:[%s203 + $0xf80] sm:$0xff]
        %v783 = vld [vmem:[%s203 + $0xf88] sm:$0xff]
        %v784 = vld [vmem:[%s203 + $0xf90] sm:$0xff]
        %v785 = vld [vmem:[%s203 + $0xf98] sm:$0xff]
        %v786 = vld [vmem:[%s203 + $0xfa0] sm:$0xff]
        %v787 = vld [vmem:[%s203 + $0xfa8] sm:$0xff]
        %v788 = vld [vmem:[%s203 + $0xfb0] sm:$0xff]
        %v789 = vld [vmem:[%s203 + $0xfb8] sm:$0xff]
        %v790 = vld [vmem:[%s203 + $0xfc0] sm:$0xff]
        %v791 = vld [vmem:[%s203 + $0xfc8] sm:$0xff]
        %v792 = vld [vmem:[%s203 + $0xfd0] sm:$0xff]
        %v793 = vld [vmem:[%s203 + $0xfd8] sm:$0xff]
        %v794 = vld [vmem:[%s203 + $0xfe0] sm:$0xff]
        %v795 = vld [vmem:[%s203 + $0xfe8] sm:$0xff]
        %v796 = vld [vmem:[%s203 + $0xff0] sm:$0xff]
        %v797 = vld [vmem:[%s203 + $0xff8] sm:$0xff]
        %v798 = vld [vmem:[%s203 + $0x1000] sm:$0xff]
        %v799 = vld [vmem:[%s203 + $0x1008] sm:$0xff]
        %v800 = vld [vmem:[%s203 + $0x1010] sm:$0xff]
        %v801 = vld [vmem:[%s203 + $0x1018] sm:$0xff]
        %v802 = vld [vmem:[%s203 + $0x1020] sm:$0xff]
        %v803 = vld [vmem:[%s203 + $0x1028] sm:$0xff]
        %v804 = vld [vmem:[%s203 + $0x1030] sm:$0xff]
        %v805 = vld [vmem:[%s203 + $0x1038] sm:$0xff]
        %v806 = vld [vmem:[%s203 + $0x1040] sm:$0xff]
        %v807 = vld [vmem:[%s203 + $0x1048] sm:$0xff]
        %v808 = vld [vmem:[%s203 + $0x1050] sm:$0xff]
        %v809 = vld [vmem:[%s203 + $0x1058] sm:$0xff]
        %v810 = vld [vmem:[%s203 + $0x1060] sm:$0xff]
        %v811 = vld [vmem:[%s203 + $0x1068] sm:$0xff]
        %v812 = vld [vmem:[%s203 + $0x1070] sm:$0xff]
        %v813 = vld [vmem:[%s203 + $0x1078] sm:$0xff]
        %v814 = vld [vmem:[%s203 + $0x1080] sm:$0xff]
        %v815 = vld [vmem:[%s203 + $0x1088] sm:$0xff]
        %v816 = vld [vmem:[%s203 + $0x1090] sm:$0xff]
        %v817 = vld [vmem:[%s203 + $0x1098] sm:$0xff]
        %v818 = vld [vmem:[%s203 + $0x10a0] sm:$0xff]
        %v819 = vld [vmem:[%s203 + $0x10a8] sm:$0xff]
        %v820 = vld [vmem:[%s203 + $0x10b0] sm:$0xff]
        %v821 = vld [vmem:[%s203 + $0x10b8] sm:$0xff]
        %v822 = vld [vmem:[%s203 + $0x10c0] sm:$0xff]
        %v823 = vld [vmem:[%s203 + $0x10c8] sm:$0xff]
        %v824 = vld [vmem:[%s203 + $0x10d0] sm:$0xff]
        %v825 = vld [vmem:[%s203 + $0x10d8] sm:$0xff]
        %v826 = vld [vmem:[%s203 + $0x10e0] sm:$0xff]
        %v827 = vld [vmem:[%s203 + $0x10e8] sm:$0xff]
        %v828 = vld [vmem:[%s203 + $0x10f0] sm:$0xff]
        %v829 = vld [vmem:[%s203 + $0x10f8] sm:$0xff]
        %v830 = vld [vmem:[%s203 + $0x1100] sm:$0xff]
        %v831 = vld [vmem:[%s203 + $0x1108] sm:$0xff]
        %v832 = vld [vmem:[%s203 + $0x1110] sm:$0xff]
        %v833 = vld [vmem:[%s203 + $0x1118] sm:$0xff]
        %v834 = vld [vmem:[%s203 + $0x1120] sm:$0xff]
        %v835 = vld [vmem:[%s203 + $0x1128] sm:$0xff]
        %v836 = vld [vmem:[%s203 + $0x1130] sm:$0xff]
        %v837 = vld [vmem:[%s203 + $0x1138] sm:$0xff]
        %v838 = vld [vmem:[%s203 + $0x1140] sm:$0xff]
        %v839 = vld [vmem:[%s203 + $0x1148] sm:$0xff]
        %v840 = vld [vmem:[%s203 + $0x1150] sm:$0xff]
        %v841 = vld [vmem:[%s203 + $0x1158] sm:$0xff]
        %v842 = vld [vmem:[%s203 + $0x1160] sm:$0xff]
        %v843 = vld [vmem:[%s203 + $0x1168] sm:$0xff]
        %v844 = vld [vmem:[%s203 + $0x1170] sm:$0xff]
        %v845 = vld [vmem:[%s203 + $0x1178] sm:$0xff]
        %v846 = vld [vmem:[%s203 + $0x1180] sm:$0xff]
        %v847 = vld [vmem:[%s203 + $0x1188] sm:$0xff]
        %v848 = vld [vmem:[%s203 + $0x1190] sm:$0xff]
        %v849 = vld [vmem:[%s203 + $0x1198] sm:$0xff]
        %v850 = vld [vmem:[%s203 + $0x11a0] sm:$0xff]
        %v851 = vld [vmem:[%s203 + $0x11a8] sm:$0xff]
        %v852 = vld [vmem:[%s203 + $0x11b0] sm:$0xff]
        %v853 = vld [vmem:[%s203 + $0x11b8] sm:$0xff]
        %v854 = vld [vmem:[%s203 + $0x11c0] sm:$0xff]
        %v855 = vld [vmem:[%s203 + $0x11c8] sm:$0xff]
        %v856 = vld [vmem:[%s203 + $0x11d0] sm:$0xff]
        %v857 = vld [vmem:[%s203 + $0x11d8] sm:$0xff]
        %v858 = vld [vmem:[%s203 + $0x11e0] sm:$0xff]
        %v859 = vld [vmem:[%s203 + $0x11e8] sm:$0xff]
        %v860 = vld [vmem:[%s203 + $0x11f0] sm:$0xff]
        %v861 = vld [vmem:[%s203 + $0x11f8] sm:$0xff]
        %v862 = vld [vmem:[%s203 + $0x1200] sm:$0xff]
        %v863 = vld [vmem:[%s203 + $0x1208] sm:$0xff]
        %v864 = vld [vmem:[%s203 + $0x1210] sm:$0xff]
        %v865 = vld [vmem:[%s203 + $0x1218] sm:$0xff]
        %v866 = vld [vmem:[%s203 + $0x1220] sm:$0xff]
        %v867 = vld [vmem:[%s203 + $0x1228] sm:$0xff]
        %v868 = vld [vmem:[%s203 + $0x1230] sm:$0xff]
        %v869 = vld [vmem:[%s203 + $0x1238] sm:$0xff]
        %v870 = vld [vmem:[%s203 + $0x1240] sm:$0xff]
        %v871 = vld [vmem:[%s203 + $0x1248] sm:$0xff]
        %v872 = vld [vmem:[%s203 + $0x1250] sm:$0xff]
        %v873 = vld [vmem:[%s203 + $0x1258] sm:$0xff]
        %v874 = vld [vmem:[%s203 + $0x1260] sm:$0xff]
        %v875 = vld [vmem:[%s203 + $0x1268] sm:$0xff]
        %v876 = vld [vmem:[%s203 + $0x1270] sm:$0xff]
        %v877 = vld [vmem:[%s203 + $0x1278] sm:$0xff]
        %v878 = vld [vmem:[%s203 + $0x1280] sm:$0xff]
        %v879 = vld [vmem:[%s203 + $0x1288] sm:$0xff]
        %v880 = vld [vmem:[%s203 + $0x1290] sm:$0xff]
        %v881 = vld [vmem:[%s203 + $0x1298] sm:$0xff]
        %v882 = vld [vmem:[%s203 + $0x12a0] sm:$0xff]
        %v883 = vld [vmem:[%s203 + $0x12a8] sm:$0xff]
        %v884 = vld [vmem:[%s203 + $0x12b0] sm:$0xff]
        %v885 = vld [vmem:[%s203 + $0x12b8] sm:$0xff]
        %v886 = vld [vmem:[%s203 + $0x12c0] sm:$0xff]
        %v887 = vld [vmem:[%s203 + $0x12c8] sm:$0xff]
        %v888 = vld [vmem:[%s203 + $0x12d0] sm:$0xff]
        %v889 = vld [vmem:[%s203 + $0x12d8] sm:$0xff]
        %v890 = vld [vmem:[%s203 + $0x12e0] sm:$0xff]
        %v891 = vld [vmem:[%s203 + $0x12e8] sm:$0xff]
        %v892 = vld [vmem:[%s203 + $0x12f0] sm:$0xff]
        %v893 = vld [vmem:[%s203 + $0x12f8] sm:$0xff]
        %v894 = vld [vmem:[%s203 + $0x1300] sm:$0xff]
        %v895 = vld [vmem:[%s203 + $0x1308] sm:$0xff]
        %v896 = vld [vmem:[%s203 + $0x1310] sm:$0xff]
        %v897 = vld [vmem:[%s203 + $0x1318] sm:$0xff]
        %v898 = vld [vmem:[%s203 + $0x1320] sm:$0xff]
        %v899 = vld [vmem:[%s203 + $0x1328] sm:$0xff]
        %v900 = vld [vmem:[%s203 + $0x1330] sm:$0xff]
        %v901 = vld [vmem:[%s203 + $0x1338] sm:$0xff]
        %v902 = vld [vmem:[%s203 + $0x1340] sm:$0xff]
        %v903 = vld [vmem:[%s203 + $0x1348] sm:$0xff]
        %v904 = vld [vmem:[%s203 + $0x1350] sm:$0xff]
        %v905 = vld [vmem:[%s203 + $0x1358] sm:$0xff]
        %v906 = vld [vmem:[%s203 + $0x1360] sm:$0xff]
        %v907 = vld [vmem:[%s203 + $0x1368] sm:$0xff]
        %v908 = vld [vmem:[%s203 + $0x1370] sm:$0xff]
        %v909 = vld [vmem:[%s203 + $0x1378] sm:$0xff]
        %v910 = vld [vmem:[%s203 + $0x1380] sm:$0xff]
        %v911 = vld [vmem:[%s203 + $0x1388] sm:$0xff]
        %v912 = vld [vmem:[%s203 + $0x1390] sm:$0xff]
        %v913 = vld [vmem:[%s203 + $0x1398] sm:$0xff]
        %v914 = vld [vmem:[%s203 + $0x13a0] sm:$0xff]
        %v915 = vld [vmem:[%s203 + $0x13a8] sm:$0xff]
        %v916 = vld [vmem:[%s203 + $0x13b0] sm:$0xff]
        %v917 = vld [vmem:[%s203 + $0x13b8] sm:$0xff]
        %v918 = vld [vmem:[%s203 + $0x13c0] sm:$0xff]
        %v919 = vld [vmem:[%s203 + $0x13c8] sm:$0xff]
        %v920 = vld [vmem:[%s203 + $0x13d0] sm:$0xff]
        %v921 = vld [vmem:[%s203 + $0x13d8] sm:$0xff]
        %v922 = vld [vmem:[%s203 + $0x13e0] sm:$0xff]
        %v923 = vld [vmem:[%s203 + $0x13e8] sm:$0xff]
        %v924 = vld [vmem:[%s203 + $0x13f0] sm:$0xff]
        %v925 = vld [vmem:[%s203 + $0x13f8] sm:$0xff]
        %v926 = vld [vmem:[%s203 + $0x1400] sm:$0xff]
        %v927 = vld [vmem:[%s203 + $0x1408] sm:$0xff]
        %v928 = vld [vmem:[%s203 + $0x1410] sm:$0xff]
        %v929 = vld [vmem:[%s203 + $0x1418] sm:$0xff]
        %v930 = vld [vmem:[%s203 + $0x1420] sm:$0xff]
        %v931 = vld [vmem:[%s203 + $0x1428] sm:$0xff]
        %v932 = vld [vmem:[%s203 + $0x1430] sm:$0xff]
        %v933 = vld [vmem:[%s203 + $0x1438] sm:$0xff]
        %v934 = vld [vmem:[%s203 + $0x1440] sm:$0xff]
        %v935 = vld [vmem:[%s203 + $0x1448] sm:$0xff]
        %v936 = vld [vmem:[%s203 + $0x1450] sm:$0xff]
        %v937 = vld [vmem:[%s203 + $0x1458] sm:$0xff]
        %v938 = vld [vmem:[%s203 + $0x1460] sm:$0xff]
        %v939 = vld [vmem:[%s203 + $0x1468] sm:$0xff]
        %v940 = vld [vmem:[%s203 + $0x1470] sm:$0xff]
        %v941 = vld [vmem:[%s203 + $0x1478] sm:$0xff]
        %v942 = vld [vmem:[%s203 + $0x1480] sm:$0xff]
        %v943 = vld [vmem:[%s203 + $0x1488] sm:$0xff]
        %v944 = vld [vmem:[%s203 + $0x1490] sm:$0xff]
        %v945 = vld [vmem:[%s203 + $0x1498] sm:$0xff]
        %v946 = vld [vmem:[%s203 + $0x14a0] sm:$0xff]
        %v947 = vld [vmem:[%s203 + $0x14a8] sm:$0xff]
        %v948 = vld [vmem:[%s203 + $0x14b0] sm:$0xff]
        %v949 = vld [vmem:[%s203 + $0x14b8] sm:$0xff]
        %v950 = vld [vmem:[%s203 + $0x14c0] sm:$0xff]
        %v951 = vld [vmem:[%s203 + $0x14c8] sm:$0xff]
        %v952 = vld [vmem:[%s203 + $0x14d0] sm:$0xff]
        %v953 = vld [vmem:[%s203 + $0x14d8] sm:$0xff]
        %v954 = vld [vmem:[%s203 + $0x14e0] sm:$0xff]
        %v955 = vld [vmem:[%s203 + $0x14e8] sm:$0xff]
        %v956 = vld [vmem:[%s203 + $0x14f0] sm:$0xff]
        %v957 = vld [vmem:[%s203 + $0x14f8] sm:$0xff]
        %v958 = vld [vmem:[%s203 + $0x1500] sm:$0xff]
        %v959 = vld [vmem:[%s203 + $0x1508] sm:$0xff]
        %v960 = vld [vmem:[%s203 + $0x1510] sm:$0xff]
        %v961 = vld [vmem:[%s203 + $0x1518] sm:$0xff]
        %v962 = vld [vmem:[%s203 + $0x1520] sm:$0xff]
        %v963 = vld [vmem:[%s203 + $0x1528] sm:$0xff]
        %v964 = vld [vmem:[%s203 + $0x1530] sm:$0xff]
        %v965 = vld [vmem:[%s203 + $0x1538] sm:$0xff]
        %v966 = vld [vmem:[%s203 + $0x1540] sm:$0xff]
        %v967 = vld [vmem:[%s203 + $0x1548] sm:$0xff]
        %v968 = vld [vmem:[%s203 + $0x1550] sm:$0xff]
        %v969 = vld [vmem:[%s203 + $0x1558] sm:$0xff]
        %v970 = vld [vmem:[%s203 + $0x1560] sm:$0xff]
        %v971 = vld [vmem:[%s203 + $0x1568] sm:$0xff]
        %v972 = vld [vmem:[%s203 + $0x1570] sm:$0xff]
        %v973 = vld [vmem:[%s203 + $0x1578] sm:$0xff]
        %v974 = vld [vmem:[%s203 + $0x1580] sm:$0xff]
        %v975 = vld [vmem:[%s203 + $0x1588] sm:$0xff]
        %v976 = vld [vmem:[%s203 + $0x1590] sm:$0xff]
        %v977 = vld [vmem:[%s203 + $0x1598] sm:$0xff]
        %v978 = vld [vmem:[%s203 + $0x15a0] sm:$0xff]
        %v979 = vld [vmem:[%s203 + $0x15a8] sm:$0xff]
        %v980 = vld [vmem:[%s203 + $0x15b0] sm:$0xff]
        %v981 = vld [vmem:[%s203 + $0x15b8] sm:$0xff]
        %v982 = vld [vmem:[%s203 + $0x15c0] sm:$0xff]
        %v983 = vld [vmem:[%s203 + $0x15c8] sm:$0xff]
        %v984 = vld [vmem:[%s203 + $0x15d0] sm:$0xff]
        %v985 = vld [vmem:[%s203 + $0x15d8] sm:$0xff]
        %v986 = vld [vmem:[%s203 + $0x15e0] sm:$0xff]
        %v987 = vld [vmem:[%s203 + $0x15e8] sm:$0xff]
        %v988 = vld [vmem:[%s203 + $0x15f0] sm:$0xff]
        %v989 = vld [vmem:[%s203 + $0x15f8] sm:$0xff]
        %v990 = vld [vmem:[%s203 + $0x1600] sm:$0xff]
        %v991 = vld [vmem:[%s203 + $0x1608] sm:$0xff]
        %v992 = vld [vmem:[%s203 + $0x1610] sm:$0xff]
        %v993 = vld [vmem:[%s203 + $0x1618] sm:$0xff]
        %v994 = vld [vmem:[%s203 + $0x1620] sm:$0xff]
        %v995 = vld [vmem:[%s203 + $0x1628] sm:$0xff]
        %v996 = vld [vmem:[%s203 + $0x1630] sm:$0xff]
        %v997 = vld [vmem:[%s203 + $0x1638] sm:$0xff]
        %v998 = vld [vmem:[%s203 + $0x1640] sm:$0xff]
        %v999 = vld [vmem:[%s203 + $0x1648] sm:$0xff]
        %v1000 = vld [vmem:[%s203 + $0x1650] sm:$0xff]
        %v1001 = vld [vmem:[%s203 + $0x1658] sm:$0xff]
        %v1002 = vld [vmem:[%s203 + $0x1660] sm:$0xff]
        %v1003 = vld [vmem:[%s203 + $0x1668] sm:$0xff]
        %v1004 = vld [vmem:[%s203 + $0x1670] sm:$0xff]
        %v1005 = vld [vmem:[%s203 + $0x1678] sm:$0xff]
        %v1006 = vld [vmem:[%s203 + $0x1680] sm:$0xff]
        %v1007 = vld [vmem:[%s203 + $0x1688] sm:$0xff]
        %v1008 = vld [vmem:[%s203 + $0x1690] sm:$0xff]
        %v1009 = vld [vmem:[%s203 + $0x1698] sm:$0xff]
        %v1010 = vld [vmem:[%s203 + $0x16a0] sm:$0xff]
        %v1011 = vld [vmem:[%s203 + $0x16a8] sm:$0xff]
        %v1012 = vld [vmem:[%s203 + $0x16b0] sm:$0xff]
        %v1013 = vld [vmem:[%s203 + $0x16b8] sm:$0xff]
        %v1014 = vld [vmem:[%s203 + $0x16c0] sm:$0xff]
        %v1015 = vld [vmem:[%s203 + $0x16c8] sm:$0xff]
        %v1016 = vld [vmem:[%s203 + $0x16d0] sm:$0xff]
        %v1017 = vld [vmem:[%s203 + $0x16d8] sm:$0xff]
        %v1018 = vld [vmem:[%s203 + $0x16e0] sm:$0xff]
        %v1019 = vld [vmem:[%s203 + $0x16e8] sm:$0xff]
        %v1020 = vld [vmem:[%s203 + $0x16f0] sm:$0xff]
        %v1021 = vld [vmem:[%s203 + $0x16f8] sm:$0xff]
        %v1022 = vld [vmem:[%s203 + $0x1700] sm:$0xff]
        %v1023 = vld [vmem:[%s203 + $0x1708] sm:$0xff]
        %v1024 = vld [vmem:[%s203 + $0x1710] sm:$0xff]
        %v1025 = vld [vmem:[%s203 + $0x1718] sm:$0xff]
        %v1026 = vld [vmem:[%s203 + $0x1720] sm:$0xff]
        %v1027 = vld [vmem:[%s203 + $0x1728] sm:$0xff]
        %v1028 = vld [vmem:[%s203 + $0x1730] sm:$0xff]
        %v1029 = vld [vmem:[%s203 + $0x1738] sm:$0xff]
        %v1030 = vld [vmem:[%s203 + $0x1740] sm:$0xff]
        %v1031 = vld [vmem:[%s203 + $0x1748] sm:$0xff]
        %v1032 = vld [vmem:[%s203 + $0x1750] sm:$0xff]
        %v1033 = vld [vmem:[%s203 + $0x1758] sm:$0xff]
        %v1034 = vld [vmem:[%s203 + $0x1760] sm:$0xff]
        %v1035 = vld [vmem:[%s203 + $0x1768] sm:$0xff]
        %v1036 = vld [vmem:[%s203 + $0x1770] sm:$0xff]
        %v1037 = vld [vmem:[%s203 + $0x1778] sm:$0xff]
        %v1038 = vld [vmem:[%s203 + $0x1780] sm:$0xff]
        %v1039 = vld [vmem:[%s203 + $0x1788] sm:$0xff]
        %v1040 = vld [vmem:[%s203 + $0x1790] sm:$0xff]
        %v1041 = vld [vmem:[%s203 + $0x1798] sm:$0xff]
        %v1042 = vld [vmem:[%s203 + $0x17a0] sm:$0xff]
        %v1043 = vld [vmem:[%s203 + $0x17a8] sm:$0xff]
        %v1044 = vld [vmem:[%s203 + $0x17b0] sm:$0xff]
        %v1045 = vld [vmem:[%s203 + $0x17b8] sm:$0xff]
        %v1046 = vld [vmem:[%s203 + $0x17c0] sm:$0xff]
        %v1047 = vld [vmem:[%s203 + $0x17c8] sm:$0xff]
        %v1048 = vld [vmem:[%s203 + $0x17d0] sm:$0xff]
        %v1049 = vld [vmem:[%s203 + $0x17d8] sm:$0xff]
        %v1050 = vld [vmem:[%s203 + $0x17e0] sm:$0xff]
        %v1051 = vld [vmem:[%s203 + $0x17e8] sm:$0xff]
        %v1052 = vld [vmem:[%s203 + $0x17f0] sm:$0xff]
        %v1053 = vld [vmem:[%s203 + $0x17f8] sm:$0xff]
        %v1054 = vld [vmem:[%s203 + $0x1800] sm:$0xff]
        %v1055 = vld [vmem:[%s203 + $0x1808] sm:$0xff]
        %v1056 = vld [vmem:[%s203 + $0x1810] sm:$0xff]
        %v1057 = vld [vmem:[%s203 + $0x1818] sm:$0xff]
        %v1058 = vld [vmem:[%s203 + $0x1820] sm:$0xff]
        %v1059 = vld [vmem:[%s203 + $0x1828] sm:$0xff]
        %v1060 = vld [vmem:[%s203 + $0x1830] sm:$0xff]
        %v1061 = vld [vmem:[%s203 + $0x1838] sm:$0xff]
        %v1062 = vld [vmem:[%s203 + $0x1840] sm:$0xff]
        %v1063 = vld [vmem:[%s203 + $0x1848] sm:$0xff]
        %v1064 = vld [vmem:[%s203 + $0x1850] sm:$0xff]
        %v1065 = vld [vmem:[%s203 + $0x1858] sm:$0xff]
        %v1066 = vld [vmem:[%s203 + $0x1860] sm:$0xff]
        %v1067 = vld [vmem:[%s203 + $0x1868] sm:$0xff]
        %v1068 = vld [vmem:[%s203 + $0x1870] sm:$0xff]
        %v1069 = vld [vmem:[%s203 + $0x1878] sm:$0xff]
        %v1070 = vld [vmem:[%s203 + $0x1880] sm:$0xff]
        %v1071 = vld [vmem:[%s203 + $0x1888] sm:$0xff]
        %v1072 = vld [vmem:[%s203 + $0x1890] sm:$0xff]
        %v1073 = vld [vmem:[%s203 + $0x1898] sm:$0xff]
        %v1074 = vld [vmem:[%s203 + $0x18a0] sm:$0xff]
        %v1075 = vld [vmem:[%s203 + $0x18a8] sm:$0xff]
        %v1076 = vld [vmem:[%s203 + $0x18b0] sm:$0xff]
        %v1077 = vld [vmem:[%s203 + $0x18b8] sm:$0xff]
        %v1078 = vld [vmem:[%s203 + $0x18c0] sm:$0xff]
        %v1079 = vld [vmem:[%s203 + $0x18c8] sm:$0xff]
        %v1080 = vld [vmem:[%s203 + $0x18d0] sm:$0xff]
        %v1081 = vld [vmem:[%s203 + $0x18d8] sm:$0xff]
        %v1082 = vld [vmem:[%s203 + $0x18e0] sm:$0xff]
        %v1083 = vld [vmem:[%s203 + $0x18e8] sm:$0xff]
        %v1084 = vld [vmem:[%s203 + $0x18f0] sm:$0xff]
        %v1085 = vld [vmem:[%s203 + $0x18f8] sm:$0xff]
        %v1086 = vld [vmem:[%s203 + $0x1900] sm:$0xff]
        %v1087 = vld [vmem:[%s203 + $0x1908] sm:$0xff]
        %v1088 = vld [vmem:[%s203 + $0x1910] sm:$0xff]
        %v1089 = vld [vmem:[%s203 + $0x1918] sm:$0xff]
        %v1090 = vld [vmem:[%s203 + $0x1920] sm:$0xff]
        %v1091 = vld [vmem:[%s203 + $0x1928] sm:$0xff]
        %v1092 = vld [vmem:[%s203 + $0x1930] sm:$0xff]
        %v1093 = vld [vmem:[%s203 + $0x1938] sm:$0xff]
        %v1094 = vld [vmem:[%s203 + $0x1940] sm:$0xff]
        %v1095 = vld [vmem:[%s203 + $0x1948] sm:$0xff]
        %v1096 = vld [vmem:[%s203 + $0x1950] sm:$0xff]
        %v1097 = vld [vmem:[%s203 + $0x1958] sm:$0xff]
        %v1098 = vld [vmem:[%s203 + $0x1960] sm:$0xff]
        %v1099 = vld [vmem:[%s203 + $0x1968] sm:$0xff]
        %v1100 = vld [vmem:[%s203 + $0x1970] sm:$0xff]
        %v1101 = vld [vmem:[%s203 + $0x1978] sm:$0xff]
        %v1102 = vld [vmem:[%s203 + $0x1980] sm:$0xff]
        %v1103 = vld [vmem:[%s203 + $0x1988] sm:$0xff]
        %v1104 = vld [vmem:[%s203 + $0x1990] sm:$0xff]
        %v1105 = vld [vmem:[%s203 + $0x1998] sm:$0xff]
        %v1106 = vld [vmem:[%s203 + $0x19a0] sm:$0xff]
        %v1107 = vld [vmem:[%s203 + $0x19a8] sm:$0xff]
        %v1108 = vld [vmem:[%s203 + $0x19b0] sm:$0xff]
        %v1109 = vld [vmem:[%s203 + $0x19b8] sm:$0xff]
        %v1110 = vld [vmem:[%s203 + $0x19c0] sm:$0xff]
        %v1111 = vld [vmem:[%s203 + $0x19c8] sm:$0xff]
        %v1112 = vld [vmem:[%s203 + $0x19d0] sm:$0xff]
        %v1113 = vld [vmem:[%s203 + $0x19d8] sm:$0xff]
        %v1114 = vld [vmem:[%s203 + $0x19e0] sm:$0xff]
        %v1115 = vld [vmem:[%s203 + $0x19e8] sm:$0xff]
        %v1116 = vld [vmem:[%s203 + $0x19f0] sm:$0xff]
        %v1117 = vld [vmem:[%s203 + $0x19f8] sm:$0xff]
        %v1118 = vld [vmem:[%s203 + $0x1a00] sm:$0xff]
        %v1119 = vld [vmem:[%s203 + $0x1a08] sm:$0xff]
        %v1120 = vld [vmem:[%s203 + $0x1a10] sm:$0xff]
        %v1121 = vld [vmem:[%s203 + $0x1a18] sm:$0xff]
        %v1122 = vld [vmem:[%s203 + $0x1a20] sm:$0xff]
        %v1123 = vld [vmem:[%s203 + $0x1a28] sm:$0xff]
        %v1124 = vld [vmem:[%s203 + $0x1a30] sm:$0xff]
        %v1125 = vld [vmem:[%s203 + $0x1a38] sm:$0xff]
        %v1126 = vld [vmem:[%s203 + $0x1a40] sm:$0xff]
        %v1127 = vld [vmem:[%s203 + $0x1a48] sm:$0xff]
        %v1128 = vld [vmem:[%s203 + $0x1a50] sm:$0xff]
        %v1129 = vld [vmem:[%s203 + $0x1a58] sm:$0xff]
        %v1130 = vld [vmem:[%s203 + $0x1a60] sm:$0xff]
        %v1131 = vld [vmem:[%s203 + $0x1a68] sm:$0xff]
        %v1132 = vld [vmem:[%s203 + $0x1a70] sm:$0xff]
        %v1133 = vld [vmem:[%s203 + $0x1a78] sm:$0xff]
        %v1134 = vld [vmem:[%s203 + $0x1a80] sm:$0xff]
        %v1135 = vld [vmem:[%s203 + $0x1a88] sm:$0xff]
        %v1136 = vld [vmem:[%s203 + $0x1a90] sm:$0xff]
        %v1137 = vld [vmem:[%s203 + $0x1a98] sm:$0xff]
        %v1138 = vld [vmem:[%s203 + $0x1aa0] sm:$0xff]
        %v1139 = vld [vmem:[%s203 + $0x1aa8] sm:$0xff]
        %v1140 = vld [vmem:[%s203 + $0x1ab0] sm:$0xff]
        %v1141 = vld [vmem:[%s203 + $0x1ab8] sm:$0xff]
        %v1142 = vld [vmem:[%s203 + $0x1ac0] sm:$0xff]
        %v1143 = vld [vmem:[%s203 + $0x1ac8] sm:$0xff]
        %v1144 = vld [vmem:[%s203 + $0x1ad0] sm:$0xff]
        %v1145 = vld [vmem:[%s203 + $0x1ad8] sm:$0xff]
        %v1146 = vld [vmem:[%s203 + $0x1ae0] sm:$0xff]
        %v1147 = vld [vmem:[%s203 + $0x1ae8] sm:$0xff]
        %v1148 = vld [vmem:[%s203 + $0x1af0] sm:$0xff]
        %v1149 = vld [vmem:[%s203 + $0x1af8] sm:$0xff]
        %v1150 = vld [vmem:[%s203 + $0x1b00] sm:$0xff]
        %v1151 = vld [vmem:[%s203 + $0x1b08] sm:$0xff]
        %v1152 = vld [vmem:[%s203 + $0x1b10] sm:$0xff]
        %v1153 = vld [vmem:[%s203 + $0x1b18] sm:$0xff]
        %v1154 = vld [vmem:[%s203 + $0x1b20] sm:$0xff]
        %v1155 = vld [vmem:[%s203 + $0x1b28] sm:$0xff]
        %v1156 = vld [vmem:[%s203 + $0x1b30] sm:$0xff]
        %v1157 = vld [vmem:[%s203 + $0x1b38] sm:$0xff]
        %v1158 = vld [vmem:[%s203 + $0x1b40] sm:$0xff]
        %v1159 = vld [vmem:[%s203 + $0x1b48] sm:$0xff]
        %v1160 = vld [vmem:[%s203 + $0x1b50] sm:$0xff]
        %v1161 = vld [vmem:[%s203 + $0x1b58] sm:$0xff]
        %v1162 = vld [vmem:[%s203 + $0x1b60] sm:$0xff]
        %v1163 = vld [vmem:[%s203 + $0x1b68] sm:$0xff]
        %v1164 = vld [vmem:[%s203 + $0x1b70] sm:$0xff]
        %v1165 = vld [vmem:[%s203 + $0x1b78] sm:$0xff]
        %v1166 = vld [vmem:[%s203 + $0x1b80] sm:$0xff]
        %v1167 = vld [vmem:[%s203 + $0x1b88] sm:$0xff]
        %v1168 = vld [vmem:[%s203 + $0x1b90] sm:$0xff]
        %v1169 = vld [vmem:[%s203 + $0x1b98] sm:$0xff]
        %v1170 = vld [vmem:[%s203 + $0x1ba0] sm:$0xff]
        %v1171 = vld [vmem:[%s203 + $0x1ba8] sm:$0xff]
        %v1172 = vld [vmem:[%s203 + $0x1bb0] sm:$0xff]
        %v1173 = vld [vmem:[%s203 + $0x1bb8] sm:$0xff]
        %v1174 = vld [vmem:[%s203 + $0x1bc0] sm:$0xff]
        %v1175 = vld [vmem:[%s203 + $0x1bc8] sm:$0xff]
        %v1176 = vld [vmem:[%s203 + $0x1bd0] sm:$0xff]
        %v1177 = vld [vmem:[%s203 + $0x1bd8] sm:$0xff]
        %v1178 = vld [vmem:[%s203 + $0x1be0] sm:$0xff]
        %v1179 = vld [vmem:[%s203 + $0x1be8] sm:$0xff]
        %v1180 = vld [vmem:[%s203 + $0x1bf0] sm:$0xff]
        %v1181 = vld [vmem:[%s203 + $0x1bf8] sm:$0xff]
        %v1182 = vld [vmem:[%s203 + $0x1c00] sm:$0xff]
        %v1183 = vld [vmem:[%s203 + $0x1c08] sm:$0xff]
        %v1184 = vld [vmem:[%s203 + $0x1c10] sm:$0xff]
        %v1185 = vld [vmem:[%s203 + $0x1c18] sm:$0xff]
        %v1186 = vld [vmem:[%s203 + $0x1c20] sm:$0xff]
        %v1187 = vld [vmem:[%s203 + $0x1c28] sm:$0xff]
        %v1188 = vld [vmem:[%s203 + $0x1c30] sm:$0xff]
        %v1189 = vld [vmem:[%s203 + $0x1c38] sm:$0xff]
        %v1190 = vld [vmem:[%s203 + $0x1c40] sm:$0xff]
        %v1191 = vld [vmem:[%s203 + $0x1c48] sm:$0xff]
        %v1192 = vld [vmem:[%s203 + $0x1c50] sm:$0xff]
        %v1193 = vld [vmem:[%s203 + $0x1c58] sm:$0xff]
        %v1194 = vld [vmem:[%s203 + $0x1c60] sm:$0xff]
        %v1195 = vld [vmem:[%s203 + $0x1c68] sm:$0xff]
        %v1196 = vld [vmem:[%s203 + $0x1c70] sm:$0xff]
        %v1197 = vld [vmem:[%s203 + $0x1c78] sm:$0xff]
        %v1198 = vld [vmem:[%s203 + $0x1c80] sm:$0xff]
        %v1199 = vld [vmem:[%s203 + $0x1c88] sm:$0xff]
        %v1200 = vld [vmem:[%s203 + $0x1c90] sm:$0xff]
        %v1201 = vld [vmem:[%s203 + $0x1c98] sm:$0xff]
        %v1202 = vld [vmem:[%s203 + $0x1ca0] sm:$0xff]
        %v1203 = vld [vmem:[%s203 + $0x1ca8] sm:$0xff]
        %v1204 = vld [vmem:[%s203 + $0x1cb0] sm:$0xff]
        %v1205 = vld [vmem:[%s203 + $0x1cb8] sm:$0xff]
        %v1206 = vld [vmem:[%s203 + $0x1cc0] sm:$0xff]
        %v1207 = vld [vmem:[%s203 + $0x1cc8] sm:$0xff]
        %v1208 = vld [vmem:[%s203 + $0x1cd0] sm:$0xff]
        %v1209 = vld [vmem:[%s203 + $0x1cd8] sm:$0xff]
        %v1210 = vld [vmem:[%s203 + $0x1ce0] sm:$0xff]
        %v1211 = vld [vmem:[%s203 + $0x1ce8] sm:$0xff]
        %v1212 = vld [vmem:[%s203 + $0x1cf0] sm:$0xff]
        %v1213 = vld [vmem:[%s203 + $0x1cf8] sm:$0xff]
        %v1214 = vld [vmem:[%s203 + $0x1d00] sm:$0xff]
        %v1215 = vld [vmem:[%s203 + $0x1d08] sm:$0xff]
        %v1216 = vld [vmem:[%s203 + $0x1d10] sm:$0xff]
        %v1217 = vld [vmem:[%s203 + $0x1d18] sm:$0xff]
        %v1218 = vld [vmem:[%s203 + $0x1d20] sm:$0xff]
        %v1219 = vld [vmem:[%s203 + $0x1d28] sm:$0xff]
        %v1220 = vld [vmem:[%s203 + $0x1d30] sm:$0xff]
        %v1221 = vld [vmem:[%s203 + $0x1d38] sm:$0xff]
        %v1222 = vld [vmem:[%s203 + $0x1d40] sm:$0xff]
        %v1223 = vld [vmem:[%s203 + $0x1d48] sm:$0xff]
        %v1224 = vld [vmem:[%s203 + $0x1d50] sm:$0xff]
        %v1225 = vld [vmem:[%s203 + $0x1d58] sm:$0xff]
        %v1226 = vld [vmem:[%s203 + $0x1d60] sm:$0xff]
        %v1227 = vld [vmem:[%s203 + $0x1d68] sm:$0xff]
        %v1228 = vld [vmem:[%s203 + $0x1d70] sm:$0xff]
        %v1229 = vld [vmem:[%s203 + $0x1d78] sm:$0xff]
        %v1230 = vld [vmem:[%s203 + $0x1d80] sm:$0xff]
        %v1231 = vld [vmem:[%s203 + $0x1d88] sm:$0xff]
        %v1232 = vld [vmem:[%s203 + $0x1d90] sm:$0xff]
        %v1233 = vld [vmem:[%s203 + $0x1d98] sm:$0xff]
        %v1234 = vld [vmem:[%s203 + $0x1da0] sm:$0xff]
        %v1235 = vld [vmem:[%s203 + $0x1da8] sm:$0xff]
        %v1236 = vld [vmem:[%s203 + $0x1db0] sm:$0xff]
        %v1237 = vld [vmem:[%s203 + $0x1db8] sm:$0xff]
        %v1238 = vld [vmem:[%s203 + $0x1dc0] sm:$0xff]
        %v1239 = vld [vmem:[%s203 + $0x1dc8] sm:$0xff]
        %v1240 = vld [vmem:[%s203 + $0x1dd0] sm:$0xff]
        %v1241 = vld [vmem:[%s203 + $0x1dd8] sm:$0xff]
        %v1242 = vld [vmem:[%s203 + $0x1de0] sm:$0xff]
        %v1243 = vld [vmem:[%s203 + $0x1de8] sm:$0xff]
        %v1244 = vld [vmem:[%s203 + $0x1df0] sm:$0xff]
        %v1245 = vld [vmem:[%s203 + $0x1df8] sm:$0xff]
        %v1246 = vld [vmem:[%s203 + $0x1e00] sm:$0xff]
        %v1247 = vld [vmem:[%s203 + $0x1e08] sm:$0xff]
        %v1248 = vld [vmem:[%s203 + $0x1e10] sm:$0xff]
        %v1249 = vld [vmem:[%s203 + $0x1e18] sm:$0xff]
        %v1250 = vld [vmem:[%s203 + $0x1e20] sm:$0xff]
        %v1251 = vld [vmem:[%s203 + $0x1e28] sm:$0xff]
        %v1252 = vld [vmem:[%s203 + $0x1e30] sm:$0xff]
        %v1253 = vld [vmem:[%s203 + $0x1e38] sm:$0xff]
        %v1254 = vld [vmem:[%s203 + $0x1e40] sm:$0xff]
        %v1255 = vld [vmem:[%s203 + $0x1e48] sm:$0xff]
        %v1256 = vld [vmem:[%s203 + $0x1e50] sm:$0xff]
        %v1257 = vld [vmem:[%s203 + $0x1e58] sm:$0xff]
        %v1258 = vld [vmem:[%s203 + $0x1e60] sm:$0xff]
        %v1259 = vld [vmem:[%s203 + $0x1e68] sm:$0xff]
        %v1260 = vld [vmem:[%s203 + $0x1e70] sm:$0xff]
        %v1261 = vld [vmem:[%s203 + $0x1e78] sm:$0xff]
        %v1262 = vld [vmem:[%s203 + $0x1e80] sm:$0xff]
        %v1263 = vld [vmem:[%s203 + $0x1e88] sm:$0xff]
        %v1264 = vld [vmem:[%s203 + $0x1e90] sm:$0xff]
        %v1265 = vld [vmem:[%s203 + $0x1e98] sm:$0xff]
        %v1266 = vld [vmem:[%s203 + $0x1ea0] sm:$0xff]
        %v1267 = vld [vmem:[%s203 + $0x1ea8] sm:$0xff]
        %v1268 = vld [vmem:[%s203 + $0x1eb0] sm:$0xff]
        %v1269 = vld [vmem:[%s203 + $0x1eb8] sm:$0xff]
        %v1270 = vld [vmem:[%s203 + $0x1ec0] sm:$0xff]
        %v1271 = vld [vmem:[%s203 + $0x1ec8] sm:$0xff]
        %v1272 = vld [vmem:[%s203 + $0x1ed0] sm:$0xff]
        %v1273 = vld [vmem:[%s203 + $0x1ed8] sm:$0xff]
        %v1274 = vld [vmem:[%s203 + $0x1ee0] sm:$0xff]
        %v1275 = vld [vmem:[%s203 + $0x1ee8] sm:$0xff]
        %v1276 = vld [vmem:[%s203 + $0x1ef0] sm:$0xff]
        %v1277 = vld [vmem:[%s203 + $0x1ef8] sm:$0xff]
        %v1278 = vld [vmem:[%s203 + $0x1f00] sm:$0xff]
        %v1279 = vld [vmem:[%s203 + $0x1f08] sm:$0xff]
        %v1280 = vld [vmem:[%s203 + $0x1f10] sm:$0xff]
        %v1281 = vld [vmem:[%s203 + $0x1f18] sm:$0xff]
        %v1282 = vld [vmem:[%s203 + $0x1f20] sm:$0xff]
        %v1283 = vld [vmem:[%s203 + $0x1f28] sm:$0xff]
        %v1284 = vld [vmem:[%s203 + $0x1f30] sm:$0xff]
        %v1285 = vld [vmem:[%s203 + $0x1f38] sm:$0xff]
        %v1286 = vld [vmem:[%s203 + $0x1f40] sm:$0xff]
        %v1287 = vld [vmem:[%s203 + $0x1f48] sm:$0xff]
        %v1288 = vld [vmem:[%s203 + $0x1f50] sm:$0xff]
        %v1289 = vld [vmem:[%s203 + $0x1f58] sm:$0xff]
        %v1290 = vld [vmem:[%s203 + $0x1f60] sm:$0xff]
        %v1291 = vld [vmem:[%s203 + $0x1f68] sm:$0xff]
        %v1292 = vld [vmem:[%s203 + $0x1f70] sm:$0xff]
        %v1293 = vld [vmem:[%s203 + $0x1f78] sm:$0xff]
        %v1294 = vld [vmem:[%s203 + $0x1f80] sm:$0xff]
        %v1295 = vld [vmem:[%s203 + $0x1f88] sm:$0xff]
        %v1296 = vld [vmem:[%s203 + $0x1f90] sm:$0xff]
        %v1297 = vld [vmem:[%s203 + $0x1f98] sm:$0xff]
        %v1298 = vld [vmem:[%s203 + $0x1fa0] sm:$0xff]
        %v1299 = vld [vmem:[%s203 + $0x1fa8] sm:$0xff]
        %v1300 = vld [vmem:[%s203 + $0x1fb0] sm:$0xff]
        %v1301 = vld [vmem:[%s203 + $0x1fb8] sm:$0xff]
        %v1302 = vld [vmem:[%s203 + $0x1fc0] sm:$0xff]
        %v1303 = vld [vmem:[%s203 + $0x1fc8] sm:$0xff]
        %v1304 = vld [vmem:[%s203 + $0x1fd0] sm:$0xff]
        %v1305 = vld [vmem:[%s203 + $0x1fd8] sm:$0xff]
        %v1306 = vld [vmem:[%s203 + $0x1fe0] sm:$0xff]
        %v1307 = vld [vmem:[%s203 + $0x1fe8] sm:$0xff]
        %v1308 = vld [vmem:[%s203 + $0x1ff0] sm:$0xff]
        %v1309 = vld [vmem:[%s203 + $0x1ff8] sm:$0xff]
        %v1310 = vld [vmem:[%s203 + $0x2000] sm:$0xff]
        %v1311 = vld [vmem:[%s203 + $0x2008] sm:$0xff]
        %v1312 = vld [vmem:[%s203 + $0x2010] sm:$0xff]
        %v1313 = vld [vmem:[%s203 + $0x2018] sm:$0xff]
        %v1314 = vld [vmem:[%s203 + $0x2020] sm:$0xff]
        %v1315 = vld [vmem:[%s203 + $0x2028] sm:$0xff]
        %v1316 = vld [vmem:[%s203 + $0x2030] sm:$0xff]
        %v1317 = vld [vmem:[%s203 + $0x2038] sm:$0xff]
        %v1318 = vld [vmem:[%s203 + $0x2040] sm:$0xff]
        %v1319 = vld [vmem:[%s203 + $0x2048] sm:$0xff]
        %v1320 = vld [vmem:[%s203 + $0x2050] sm:$0xff]
        %v1321 = vld [vmem:[%s203 + $0x2058] sm:$0xff]
        %v1322 = vld [vmem:[%s203 + $0x2060] sm:$0xff]
        %v1323 = vld [vmem:[%s203 + $0x2068] sm:$0xff]
        %v1324 = vld [vmem:[%s203 + $0x2070] sm:$0xff]
        %v1325 = vld [vmem:[%s203 + $0x2078] sm:$0xff]
        %v1326 = vld [vmem:[%s203 + $0x2080] sm:$0xff]
        %v1327 = vld [vmem:[%s203 + $0x2088] sm:$0xff]
        %v1328 = vld [vmem:[%s203 + $0x2090] sm:$0xff]
        %v1329 = vld [vmem:[%s203 + $0x2098] sm:$0xff]
        %v1330 = vld [vmem:[%s203 + $0x20a0] sm:$0xff]
        %v1331 = vld [vmem:[%s203 + $0x20a8] sm:$0xff]
        %v1332 = vld [vmem:[%s203 + $0x20b0] sm:$0xff]
        %v1333 = vld [vmem:[%s203 + $0x20b8] sm:$0xff]
        %v1334 = vld [vmem:[%s203 + $0x20c0] sm:$0xff]
        %v1335 = vld [vmem:[%s203 + $0x20c8] sm:$0xff]
        %v1336 = vld [vmem:[%s203 + $0x20d0] sm:$0xff]
        %v1337 = vld [vmem:[%s203 + $0x20d8] sm:$0xff]
        %v1338 = vld [vmem:[%s203 + $0x20e0] sm:$0xff]
        %v1339 = vld [vmem:[%s203 + $0x20e8] sm:$0xff]
        %v1340 = vld [vmem:[%s203 + $0x20f0] sm:$0xff]
        %v1341 = vld [vmem:[%s203 + $0x20f8] sm:$0xff]
        %v1342 = vld [vmem:[%s203 + $0x2100] sm:$0xff]
        %v1343 = vld [vmem:[%s203 + $0x2108] sm:$0xff]
        %v1344 = vld [vmem:[%s203 + $0x2110] sm:$0xff]
        %v1345 = vld [vmem:[%s203 + $0x2118] sm:$0xff]
        %v1346 = vld [vmem:[%s203 + $0x2120] sm:$0xff]
        %v1347 = vld [vmem:[%s203 + $0x2128] sm:$0xff]
        %v1348 = vld [vmem:[%s203 + $0x2130] sm:$0xff]
        %v1349 = vld [vmem:[%s203 + $0x2138] sm:$0xff]
        %v1350 = vld [vmem:[%s203 + $0x2140] sm:$0xff]
        %v1351 = vld [vmem:[%s203 + $0x2148] sm:$0xff]
        %v1352 = vld [vmem:[%s203 + $0x2150] sm:$0xff]
        %v1353 = vld [vmem:[%s203 + $0x2158] sm:$0xff]
        %v1354 = vld [vmem:[%s203 + $0x2160] sm:$0xff]
        %v1355 = vld [vmem:[%s203 + $0x2168] sm:$0xff]
        %v1356 = vld [vmem:[%s203 + $0x2170] sm:$0xff]
        %v1357 = vld [vmem:[%s203 + $0x2178] sm:$0xff]
        %v1358 = vld [vmem:[%s203 + $0x2180] sm:$0xff]
        %v1359 = vld [vmem:[%s203 + $0x2188] sm:$0xff]
        %v1360 = vld [vmem:[%s203 + $0x2190] sm:$0xff]
        %v1361 = vld [vmem:[%s203 + $0x2198] sm:$0xff]
        %v1362 = vld [vmem:[%s203 + $0x21a0] sm:$0xff]
        %v1363 = vld [vmem:[%s203 + $0x21a8] sm:$0xff]
        %v1364 = vld [vmem:[%s203 + $0x21b0] sm:$0xff]
        %v1365 = vld [vmem:[%s203 + $0x21b8] sm:$0xff]
        %v1366 = vld [vmem:[%s203 + $0x21c0] sm:$0xff]
        %v1367 = vld [vmem:[%s203 + $0x21c8] sm:$0xff]
        %v1368 = vld [vmem:[%s203 + $0x21d0] sm:$0xff]
        %v1369 = vld [vmem:[%s203 + $0x21d8] sm:$0xff]
        %v1370 = vld [vmem:[%s203 + $0x21e0] sm:$0xff]
        %v1371 = vld [vmem:[%s203 + $0x21e8] sm:$0xff]
        %v1372 = vld [vmem:[%s203 + $0x21f0] sm:$0xff]
        %v1373 = vld [vmem:[%s203 + $0x21f8] sm:$0xff]
        %v1374 = vld [vmem:[%s203 + $0x2200] sm:$0xff]
        %v1375 = vld [vmem:[%s203 + $0x2208] sm:$0xff]
        %v1376 = vld [vmem:[%s203 + $0x2210] sm:$0xff]
        %v1377 = vld [vmem:[%s203 + $0x2218] sm:$0xff]
        %v1378 = vld [vmem:[%s203 + $0x2220] sm:$0xff]
        %v1379 = vld [vmem:[%s203 + $0x2228] sm:$0xff]
        %v1380 = vld [vmem:[%s203 + $0x2230] sm:$0xff]
        %v1381 = vld [vmem:[%s203 + $0x2238] sm:$0xff]
        %v1382 = vld [vmem:[%s203 + $0x2240] sm:$0xff]
        %v1383 = vld [vmem:[%s203 + $0x2248] sm:$0xff]
        %v1384 = vld [vmem:[%s203 + $0x2250] sm:$0xff]
        %v1385 = vld [vmem:[%s203 + $0x2258] sm:$0xff]
        %v1386 = vld [vmem:[%s203 + $0x2260] sm:$0xff]
        %v1387 = vld [vmem:[%s203 + $0x2268] sm:$0xff]
        %v1388 = vld [vmem:[%s203 + $0x2270] sm:$0xff]
        %v1389 = vld [vmem:[%s203 + $0x2278] sm:$0xff]
        %v1390 = vld [vmem:[%s203 + $0x2280] sm:$0xff]
        %v1391 = vld [vmem:[%s203 + $0x2288] sm:$0xff]
        %v1392 = vld [vmem:[%s203 + $0x2290] sm:$0xff]
        %v1393 = vld [vmem:[%s203 + $0x2298] sm:$0xff]
        %v1394 = vld [vmem:[%s203 + $0x22a0] sm:$0xff]
        %v1395 = vld [vmem:[%s203 + $0x22a8] sm:$0xff]
        %v1396 = vld [vmem:[%s203 + $0x22b0] sm:$0xff]
        %v1397 = vld [vmem:[%s203 + $0x22b8] sm:$0xff]
        %v1398 = vld [vmem:[%s203 + $0x22c0] sm:$0xff]
        %v1399 = vld [vmem:[%s203 + $0x22c8] sm:$0xff]
        %v1400 = vld [vmem:[%s203 + $0x22d0] sm:$0xff]
        %v1401 = vld [vmem:[%s203 + $0x22d8] sm:$0xff]
        %v1402 = vld [vmem:[%s203 + $0x22e0] sm:$0xff]
        %v1403 = vld [vmem:[%s203 + $0x22e8] sm:$0xff]
        %v1404 = vld [vmem:[%s203 + $0x22f0] sm:$0xff]
        %v1405 = vld [vmem:[%s203 + $0x22f8] sm:$0xff]
        %v1406 = vld [vmem:[%s203 + $0x2300] sm:$0xff]
        %v1407 = vld [vmem:[%s203 + $0x2308] sm:$0xff]
        %v1408 = vld [vmem:[%s203 + $0x2310] sm:$0xff]
        %v1409 = vld [vmem:[%s203 + $0x2318] sm:$0xff]
        %v1410 = vld [vmem:[%s203 + $0x2320] sm:$0xff]
        %v1411 = vld [vmem:[%s203 + $0x2328] sm:$0xff]
        %v1412 = vld [vmem:[%s203 + $0x2330] sm:$0xff]
        %v1413 = vld [vmem:[%s203 + $0x2338] sm:$0xff]
        %v1414 = vld [vmem:[%s203 + $0x2340] sm:$0xff]
        %v1415 = vld [vmem:[%s203 + $0x2348] sm:$0xff]
        %v1416 = vld [vmem:[%s203 + $0x2350] sm:$0xff]
        %v1417 = vld [vmem:[%s203 + $0x2358] sm:$0xff]
        %v1418 = vld [vmem:[%s203 + $0x2360] sm:$0xff]
        %v1419 = vld [vmem:[%s203 + $0x2368] sm:$0xff]
        %v1420 = vld [vmem:[%s203 + $0x2370] sm:$0xff]
        %v1421 = vld [vmem:[%s203 + $0x2378] sm:$0xff]
        %v1422 = vld [vmem:[%s203 + $0x2380] sm:$0xff]
        %v1423 = vld [vmem:[%s203 + $0x2388] sm:$0xff]
        %v1424 = vld [vmem:[%s203 + $0x2390] sm:$0xff]
        %v1425 = vld [vmem:[%s203 + $0x2398] sm:$0xff]
        %v1426 = vld [vmem:[%s203 + $0x23a0] sm:$0xff]
        %v1427 = vld [vmem:[%s203 + $0x23a8] sm:$0xff]
        %v1428 = vld [vmem:[%s203 + $0x23b0] sm:$0xff]
        %v1429 = vld [vmem:[%s203 + $0x23b8] sm:$0xff]
        %v1430 = vld [vmem:[%s203 + $0x23c0] sm:$0xff]
        %v1431 = vld [vmem:[%s203 + $0x23c8] sm:$0xff]
        %v1432 = vld [vmem:[%s203 + $0x23d0] sm:$0xff]
        %v1433 = vld [vmem:[%s203 + $0x23d8] sm:$0xff]
        %v1434 = vld [vmem:[%s203 + $0x23e0] sm:$0xff]
        %v1435 = vld [vmem:[%s203 + $0x23e8] sm:$0xff]
        %v1436 = vld [vmem:[%s203 + $0x23f0] sm:$0xff]
        %v1437 = vld [vmem:[%s203 + $0x23f8] sm:$0xff]
        %v1438 = vld [vmem:[%s203 + $0x2400] sm:$0xff]
        %v1439 = vld [vmem:[%s203 + $0x2408] sm:$0xff]
        %v1440 = vld [vmem:[%s203 + $0x2410] sm:$0xff]
        %v1441 = vld [vmem:[%s203 + $0x2418] sm:$0xff]
        %v1442 = vld [vmem:[%s203 + $0x2420] sm:$0xff]
        %v1443 = vld [vmem:[%s203 + $0x2428] sm:$0xff]
        %v1444 = vld [vmem:[%s203 + $0x2430] sm:$0xff]
        %v1445 = vld [vmem:[%s203 + $0x2438] sm:$0xff]
        %v1446 = vld [vmem:[%s203 + $0x2440] sm:$0xff]
        %v1447 = vld [vmem:[%s203 + $0x2448] sm:$0xff]
        %v1448 = vld [vmem:[%s203 + $0x2450] sm:$0xff]
        %v1449 = vld [vmem:[%s203 + $0x2458] sm:$0xff]
        %v1450 = vld [vmem:[%s203 + $0x2460] sm:$0xff]
        %v1451 = vld [vmem:[%s203 + $0x2468] sm:$0xff]
        %v1452 = vld [vmem:[%s203 + $0x2470] sm:$0xff]
        %v1453 = vld [vmem:[%s203 + $0x2478] sm:$0xff]
        %v1454 = vld [vmem:[%s203 + $0x2480] sm:$0xff]
        %v1455 = vld [vmem:[%s203 + $0x2488] sm:$0xff]
        %v1456 = vld [vmem:[%s203 + $0x2490] sm:$0xff]
        %v1457 = vld [vmem:[%s203 + $0x2498] sm:$0xff]
        %v1458 = vld [vmem:[%s203 + $0x24a0] sm:$0xff]
        %v1459 = vld [vmem:[%s203 + $0x24a8] sm:$0xff]
        %v1460 = vld [vmem:[%s203 + $0x24b0] sm:$0xff]
        %v1461 = vld [vmem:[%s203 + $0x24b8] sm:$0xff]
        %v1462 = vld [vmem:[%s203 + $0x24c0] sm:$0xff]
        %v1463 = vld [vmem:[%s203 + $0x24c8] sm:$0xff]
        %v1464 = vld [vmem:[%s203 + $0x24d0] sm:$0xff]
        %v1465 = vld [vmem:[%s203 + $0x24d8] sm:$0xff]
        %v1466 = vld [vmem:[%s203 + $0x24e0] sm:$0xff]
        %v1467 = vld [vmem:[%s203 + $0x24e8] sm:$0xff]
        %v1468 = vld [vmem:[%s203 + $0x24f0] sm:$0xff]
        %v1469 = vld [vmem:[%s203 + $0x24f8] sm:$0xff]
        %v1470 = vld [vmem:[%s203 + $0x2500] sm:$0xff]
        %v1471 = vld [vmem:[%s203 + $0x2508] sm:$0xff]
        %v1472 = vld [vmem:[%s203 + $0x2510] sm:$0xff]
        %v1473 = vld [vmem:[%s203 + $0x2518] sm:$0xff]
        %v1474 = vld [vmem:[%s203 + $0x2520] sm:$0xff]
        %v1475 = vld [vmem:[%s203 + $0x2528] sm:$0xff]
        %v1476 = vld [vmem:[%s203 + $0x2530] sm:$0xff]
        %v1477 = vld [vmem:[%s203 + $0x2538] sm:$0xff]
        %v1478 = vld [vmem:[%s203 + $0x2540] sm:$0xff]
        %v1479 = vld [vmem:[%s203 + $0x2548] sm:$0xff]
        %v1480 = vld [vmem:[%s203 + $0x2550] sm:$0xff]
        %v1481 = vld [vmem:[%s203 + $0x2558] sm:$0xff]
        %v1482 = vld [vmem:[%s203 + $0x2560] sm:$0xff]
        %v1483 = vld [vmem:[%s203 + $0x2568] sm:$0xff]
        %v1484 = vld [vmem:[%s203 + $0x2570] sm:$0xff]
        %v1485 = vld [vmem:[%s203 + $0x2578] sm:$0xff]
        %v1486 = vld [vmem:[%s203 + $0x2580] sm:$0xff]
        %v1487 = vld [vmem:[%s203 + $0x2588] sm:$0xff]
        %v1488 = vld [vmem:[%s203 + $0x2590] sm:$0xff]
        %v1489 = vld [vmem:[%s203 + $0x2598] sm:$0xff]
        %v1490 = vld [vmem:[%s203 + $0x25a0] sm:$0xff]
        %v1491 = vld [vmem:[%s203 + $0x25a8] sm:$0xff]
        %v1492 = vld [vmem:[%s203 + $0x25b0] sm:$0xff]
        %v1493 = vld [vmem:[%s203 + $0x25b8] sm:$0xff]
        %v1494 = vld [vmem:[%s203 + $0x25c0] sm:$0xff]
        %v1495 = vld [vmem:[%s203 + $0x25c8] sm:$0xff]
        %v1496 = vld [vmem:[%s203 + $0x25d0] sm:$0xff]
        %v1497 = vld [vmem:[%s203 + $0x25d8] sm:$0xff]
        %v1498 = vld [vmem:[%s203 + $0x25e0] sm:$0xff]
        %v1499 = vld [vmem:[%s203 + $0x25e8] sm:$0xff]
        %v1500 = vld [vmem:[%s203 + $0x25f0] sm:$0xff]
        %v1501 = vld [vmem:[%s203 + $0x25f8] sm:$0xff]
        %v1502 = vld [vmem:[%s203 + $0x2600] sm:$0xff]
        %v1503 = vld [vmem:[%s203 + $0x2608] sm:$0xff]
        %v1504 = vld [vmem:[%s203 + $0x2610] sm:$0xff]
        %v1505 = vld [vmem:[%s203 + $0x2618] sm:$0xff]
        %v1506 = vld [vmem:[%s203 + $0x2620] sm:$0xff]
        %v1507 = vld [vmem:[%s203 + $0x2628] sm:$0xff]
        %v1508 = vld [vmem:[%s203 + $0x2630] sm:$0xff]
        %v1509 = vld [vmem:[%s203 + $0x2638] sm:$0xff]
        %v1510 = vld [vmem:[%s203 + $0x2640] sm:$0xff]
        %v1511 = vld [vmem:[%s203 + $0x2648] sm:$0xff]
        %v1512 = vld [vmem:[%s203 + $0x2650] sm:$0xff]
        %v1513 = vld [vmem:[%s203 + $0x2658] sm:$0xff]
        %v1514 = vld [vmem:[%s203 + $0x2660] sm:$0xff]
        %v1515 = vld [vmem:[%s203 + $0x2668] sm:$0xff]
        %v1516 = vld [vmem:[%s203 + $0x2670] sm:$0xff]
        %v1517 = vld [vmem:[%s203 + $0x2678] sm:$0xff]
        %v1518 = vld [vmem:[%s203 + $0x2680] sm:$0xff]
        %v1519 = vld [vmem:[%s203 + $0x2688] sm:$0xff]
        %v1520 = vld [vmem:[%s203 + $0x2690] sm:$0xff]
        %v1521 = vld [vmem:[%s203 + $0x2698] sm:$0xff]
        %v1522 = vld [vmem:[%s203 + $0x26a0] sm:$0xff]
        %v1523 = vld [vmem:[%s203 + $0x26a8] sm:$0xff]
        %v1524 = vld [vmem:[%s203 + $0x26b0] sm:$0xff]
        %v1525 = vld [vmem:[%s203 + $0x26b8] sm:$0xff]
        %v1526 = vld [vmem:[%s203 + $0x26c0] sm:$0xff]
        %v1527 = vld [vmem:[%s203 + $0x26c8] sm:$0xff]
        %v1528 = vld [vmem:[%s203 + $0x26d0] sm:$0xff]
        %v1529 = vld [vmem:[%s203 + $0x26d8] sm:$0xff]
        %v1530 = vld [vmem:[%s203 + $0x26e0] sm:$0xff]
        %v1531 = vld [vmem:[%s203 + $0x26e8] sm:$0xff]
        %v1532 = vld [vmem:[%s203 + $0x26f0] sm:$0xff]
        %v1533 = vld [vmem:[%s203 + $0x26f8] sm:$0xff]
        %v1534 = vld [vmem:[%s203 + $0x2700] sm:$0xff]
        %v1535 = vld [vmem:[%s203 + $0x2708] sm:$0xff]
        %v1536 = vld [vmem:[%s203 + $0x2710] sm:$0xff]
        %v1537 = vld [vmem:[%s203 + $0x2718] sm:$0xff]
        %v1538 = vld [vmem:[%s203 + $0x2720] sm:$0xff]
        %v1539 = vld [vmem:[%s203 + $0x2728] sm:$0xff]
        %v1540 = vld [vmem:[%s203 + $0x2730] sm:$0xff]
        %v1541 = vld [vmem:[%s203 + $0x2738] sm:$0xff]
        %v1542 = vld [vmem:[%s203 + $0x2740] sm:$0xff]
        %v1543 = vld [vmem:[%s203 + $0x2748] sm:$0xff]
        %v1544 = vld [vmem:[%s203 + $0x2750] sm:$0xff]
        %v1545 = vld [vmem:[%s203 + $0x2758] sm:$0xff]
        %v1546 = vld [vmem:[%s203 + $0x2760] sm:$0xff]
        %v1547 = vld [vmem:[%s203 + $0x2768] sm:$0xff]
        %v1548 = vld [vmem:[%s203 + $0x2770] sm:$0xff]
        %v1549 = vld [vmem:[%s203 + $0x2778] sm:$0xff]
        %v1550 = vld [vmem:[%s203 + $0x2780] sm:$0xff]
        %v1551 = vld [vmem:[%s203 + $0x2788] sm:$0xff]
        %v1552 = vld [vmem:[%s203 + $0x2790] sm:$0xff]
        %v1553 = vld [vmem:[%s203 + $0x2798] sm:$0xff]
        %v1554 = vld [vmem:[%s203 + $0x27a0] sm:$0xff]
        %v1555 = vld [vmem:[%s203 + $0x27a8] sm:$0xff]
        %v1556 = vld [vmem:[%s203 + $0x27b0] sm:$0xff]
        %v1557 = vld [vmem:[%s203 + $0x27b8] sm:$0xff]
        %v1558 = vld [vmem:[%s203 + $0x27c0] sm:$0xff]
        %v1559 = vld [vmem:[%s203 + $0x27c8] sm:$0xff]
        %v1560 = vld [vmem:[%s203 + $0x27d0] sm:$0xff]
        %v1561 = vld [vmem:[%s203 + $0x27d8] sm:$0xff]
        %v1562 = vld [vmem:[%s203 + $0x27e0] sm:$0xff]
        %v1563 = vld [vmem:[%s203 + $0x27e8] sm:$0xff]
        %v1564 = vld [vmem:[%s203 + $0x27f0] sm:$0xff]
        %v1565 = vld [vmem:[%s203 + $0x27f8] sm:$0xff]
        %v1566 = vld [vmem:[%s203 + $0x2800] sm:$0xff]
        %v1567 = vld [vmem:[%s203 + $0x2808] sm:$0xff]
        %v1568 = vld [vmem:[%s203 + $0x2810] sm:$0xff]
        %v1569 = vld [vmem:[%s203 + $0x2818] sm:$0xff]
        %v1570 = vld [vmem:[%s203 + $0x2820] sm:$0xff]
        %v1571 = vld [vmem:[%s203 + $0x2828] sm:$0xff]
        %v1572 = vld [vmem:[%s203 + $0x2830] sm:$0xff]
        %v1573 = vld [vmem:[%s203 + $0x2838] sm:$0xff]
        %v1574 = vld [vmem:[%s203 + $0x2840] sm:$0xff]
        %v1575 = vld [vmem:[%s203 + $0x2848] sm:$0xff]
        %v1576 = vld [vmem:[%s203 + $0x2850] sm:$0xff]
        %v1577 = vld [vmem:[%s203 + $0x2858] sm:$0xff]
        %v1578 = vld [vmem:[%s203 + $0x2860] sm:$0xff]
        %v1579 = vld [vmem:[%s203 + $0x2868] sm:$0xff]
        %v1580 = vld [vmem:[%s203 + $0x2870] sm:$0xff]
        %v1581 = vld [vmem:[%s203 + $0x2878] sm:$0xff]
        %v1582 = vld [vmem:[%s213] sm:$0x3]
        %v1584 = vperm.slane %v1582, 0
        %v1585 = vperm.slane %v1582, 1
        %v1629 = vunpack.c.l.b16 %v245
        %v1630 = vunpack.c.h.b16 %v245
        %v1631 = vunpack.c.l.b16 %v246
        %v1632 = vunpack.c.h.b16 %v246
        %v1633 = vunpack.c.l.b16 %v247
        %v1634 = vunpack.c.h.b16 %v247
        %v1635 = vunpack.c.l.b16 %v248
        %v1636 = vunpack.c.h.b16 %v248
        %v1637 = vunpack.c.l.b16 %v249
        %v1638 = vunpack.c.h.b16 %v249
        %v1639 = vunpack.c.l.b16 %v250
        %v1640 = vunpack.c.h.b16 %v250
        %v1641 = vunpack.c.l.b16 %v251
        %v1642 = vunpack.c.h.b16 %v251
        %v1643 = vunpack.c.l.b16 %v252
        %v1644 = vunpack.c.h.b16 %v252
        %v1645 = vunpack.c.l.b16 %v253
        %v1646 = vunpack.c.h.b16 %v253
        %v1647 = vunpack.c.l.b16 %v254
        %v1648 = vunpack.c.h.b16 %v254
        %v1649 = vunpack.c.l.b16 %v255
        %v1650 = vunpack.c.h.b16 %v255
        %v1651 = vunpack.c.l.b16 %v256
        %v1652 = vunpack.c.h.b16 %v256
        %v1653 = vunpack.c.l.b16 %v257
        %v1654 = vunpack.c.h.b16 %v257
        %v1655 = vunpack.c.l.b16 %v258
        %v1656 = vunpack.c.h.b16 %v258
        %v1657 = vunpack.c.l.b16 %v259
        %v1658 = vunpack.c.h.b16 %v259
        %v1659 = vunpack.c.l.b16 %v260
        %v1660 = vunpack.c.h.b16 %v260
        %v1661 = vunpack.c.l.b16 %v261
        %v1662 = vunpack.c.h.b16 %v261
        %v1663 = vunpack.c.l.b16 %v262
        %v1664 = vunpack.c.h.b16 %v262
        %v1665 = vunpack.c.l.b16 %v263
        %v1666 = vunpack.c.h.b16 %v263
        %v1667 = vunpack.c.l.b16 %v264
        %v1668 = vunpack.c.h.b16 %v264
        %v1669 = vunpack.c.l.b16 %v265
        %v1670 = vunpack.c.h.b16 %v265
        %v1671 = vunpack.c.l.b16 %v266
        %v1672 = vunpack.c.h.b16 %v266
        %v1673 = vunpack.c.l.b16 %v267
        %v1674 = vunpack.c.h.b16 %v267
        %v1675 = vunpack.c.l.b16 %v268
        %v1676 = vunpack.c.h.b16 %v268
        %v1677 = vunpack.c.l.b16 %v269
        %v1678 = vunpack.c.h.b16 %v269
        %v1679 = vunpack.c.l.b16 %v270
        %v1680 = vunpack.c.h.b16 %v270
        %v1681 = vunpack.c.l.b16 %v271
        %v1682 = vunpack.c.h.b16 %v271
        %v1683 = vunpack.c.l.b16 %v272
        %v1684 = vunpack.c.h.b16 %v272
        %v1685 = vunpack.c.l.b16 %v273
        %v1686 = vunpack.c.h.b16 %v273
        %v1687 = vunpack.c.l.b16 %v274
        %v1688 = vunpack.c.h.b16 %v274
        %v1689 = vunpack.c.l.b16 %v275
        %v1690 = vunpack.c.h.b16 %v275
        %v1691 = vunpack.c.l.b16 %v276
        %v1692 = vunpack.c.h.b16 %v276
        %v1693 = vunpack.c.l.b16 %v277
        %v1694 = vunpack.c.h.b16 %v277
        %v1695 = vunpack.c.l.b16 %v278
        %v1696 = vunpack.c.h.b16 %v278
        %v1697 = vunpack.c.l.b16 %v279
        %v1698 = vunpack.c.h.b16 %v279
        %v1699 = vunpack.c.l.b16 %v280
        %v1700 = vunpack.c.h.b16 %v280
        %v1701 = vunpack.c.l.b16 %v281
        %v1702 = vunpack.c.h.b16 %v281
        %v1703 = vunpack.c.l.b16 %v282
        %v1704 = vunpack.c.h.b16 %v282
        %v1705 = vunpack.c.l.b16 %v283
        %v1706 = vunpack.c.h.b16 %v283
        %v1707 = vunpack.c.l.b16 %v284
        %v1708 = vunpack.c.h.b16 %v284
        %v1709 = vunpack.c.l.b16 %v285
        %v1710 = vpack.c.b16 %v1629, %v1629
        %v1711 = vpack.c.b16 %v1630, %v1630
        %v1712 = vpack.c.b16 %v1631, %v1631
        %v1713 = vpack.c.b16 %v1632, %v1632
        %v1714 = vpack.c.b16 %v1633, %v1633
        %v1715 = vpack.c.b16 %v1634, %v1634
        %v1716 = vpack.c.b16 %v1635, %v1635
        %v1717 = vpack.c.b16 %v1636, %v1636
        %v1718 = vpack.c.b16 %v1637, %v1637
        %v1719 = vpack.c.b16 %v1638, %v1638
        %v1720 = vpack.c.b16 %v1639, %v1639
        %v1721 = vpack.c.b16 %v1640, %v1640
        %v1722 = vpack.c.b16 %v1641, %v1641
        %v1723 = vpack.c.b16 %v1642, %v1642
        %v1724 = vpack.c.b16 %v1643, %v1643
        %v1725 = vpack.c.b16 %v1644, %v1644
        %v1726 = vpack.c.b16 %v1645, %v1645
        %v1727 = vpack.c.b16 %v1646, %v1646
        %v1728 = vpack.c.b16 %v1647, %v1647
        %v1729 = vpack.c.b16 %v1648, %v1648
        %v1730 = vpack.c.b16 %v1649, %v1649
        %v1731 = vpack.c.b16 %v1650, %v1650
        %v1732 = vpack.c.b16 %v1651, %v1651
        %v1733 = vpack.c.b16 %v1652, %v1652
        %v1734 = vpack.c.b16 %v1653, %v1653
        %v1735 = vpack.c.b16 %v1654, %v1654
        %v1736 = vpack.c.b16 %v1655, %v1655
        %v1737 = vpack.c.b16 %v1656, %v1656
        %v1738 = vpack.c.b16 %v1657, %v1657
        %v1739 = vpack.c.b16 %v1658, %v1658
        %v1740 = vpack.c.b16 %v1659, %v1659
        %v1741 = vpack.c.b16 %v1660, %v1660
        %v1742 = vpack.c.b16 %v1661, %v1661
        %v1743 = vpack.c.b16 %v1662, %v1662
        %v1744 = vpack.c.b16 %v1663, %v1663
        %v1745 = vpack.c.b16 %v1664, %v1664
        %v1746 = vpack.c.b16 %v1665, %v1665
        %v1747 = vpack.c.b16 %v1666, %v1666
        %v1748 = vpack.c.b16 %v1667, %v1667
        %v1749 = vpack.c.b16 %v1668, %v1668
        %v1750 = vpack.c.b16 %v1669, %v1669
        %v1751 = vpack.c.b16 %v1670, %v1670
        %v1752 = vpack.c.b16 %v1671, %v1671
        %v1753 = vpack.c.b16 %v1672, %v1672
        %v1754 = vpack.c.b16 %v1673, %v1673
        %v1755 = vpack.c.b16 %v1674, %v1674
        %v1756 = vpack.c.b16 %v1675, %v1675
        %v1757 = vpack.c.b16 %v1676, %v1676
        %v1758 = vpack.c.b16 %v1677, %v1677
        %v1759 = vpack.c.b16 %v1678, %v1678
        %v1760 = vpack.c.b16 %v1679, %v1679
        %v1761 = vpack.c.b16 %v1680, %v1680
        %v1762 = vpack.c.b16 %v1681, %v1681
        %v1763 = vpack.c.b16 %v1682, %v1682
        %v1764 = vpack.c.b16 %v1683, %v1683
        %v1765 = vpack.c.b16 %v1684, %v1684
        %v1766 = vpack.c.b16 %v1685, %v1685
        %v1767 = vpack.c.b16 %v1686, %v1686
        %v1768 = vpack.c.b16 %v1687, %v1687
        %v1769 = vpack.c.b16 %v1688, %v1688
        %v1770 = vpack.c.b16 %v1689, %v1689
        %v1771 = vpack.c.b16 %v1690, %v1690
        %v1772 = vpack.c.b16 %v1691, %v1691
        %v1773 = vpack.c.b16 %v1692, %v1692
        %v1774 = vpack.c.b16 %v1693, %v1693
        %v1775 = vpack.c.b16 %v1694, %v1694
        %v1776 = vpack.c.b16 %v1695, %v1695
        %v1777 = vpack.c.b16 %v1696, %v1696
        %v1778 = vpack.c.b16 %v1697, %v1697
        %v1779 = vpack.c.b16 %v1698, %v1698
        %v1780 = vpack.c.b16 %v1699, %v1699
        %v1781 = vpack.c.b16 %v1700, %v1700
        %v1782 = vpack.c.b16 %v1701, %v1701
        %v1783 = vpack.c.b16 %v1702, %v1702
        %v1784 = vpack.c.b16 %v1703, %v1703
        %v1785 = vpack.c.b16 %v1704, %v1704
        %v1786 = vpack.c.b16 %v1705, %v1705
        %v1787 = vpack.c.b16 %v1706, %v1706
        %v1788 = vpack.c.b16 %v1707, %v1707
        %v1789 = vpack.c.b16 %v1708, %v1708
        %v1790 = vpack.c.b16 %v1709, %v1709
        %v3168 = vunpack.c.l.b16 %v286
        %v3169 = vunpack.c.h.b16 %v286
        %v3170 = vunpack.c.l.b16 %v287
        %v3171 = vunpack.c.h.b16 %v287
        %v3172 = vunpack.c.l.b16 %v288
        %v3173 = vunpack.c.h.b16 %v288
        %v3174 = vunpack.c.l.b16 %v289
        %v3175 = vunpack.c.h.b16 %v289
        %v3176 = vunpack.c.l.b16 %v290
        %v3177 = vunpack.c.h.b16 %v290
        %v3178 = vunpack.c.l.b16 %v291
        %v3179 = vunpack.c.h.b16 %v291
        %v3180 = vunpack.c.l.b16 %v292
        %v3181 = vunpack.c.h.b16 %v292
        %v3182 = vunpack.c.l.b16 %v293
        %v3183 = vunpack.c.h.b16 %v293
        %v3184 = vunpack.c.l.b16 %v294
        %v3185 = vunpack.c.h.b16 %v294
        %v3186 = vunpack.c.l.b16 %v295
        %v3187 = vunpack.c.h.b16 %v295
        %v3188 = vunpack.c.l.b16 %v296
        %v3189 = vunpack.c.h.b16 %v296
        %v3190 = vunpack.c.l.b16 %v297
        %v3191 = vunpack.c.h.b16 %v297
        %v3192 = vunpack.c.l.b16 %v298
        %v3193 = vunpack.c.h.b16 %v298
        %v3194 = vunpack.c.l.b16 %v299
        %v3195 = vunpack.c.h.b16 %v299
        %v3196 = vunpack.c.l.b16 %v300
        %v3197 = vunpack.c.h.b16 %v300
        %v3198 = vunpack.c.l.b16 %v301
        %v3199 = vunpack.c.h.b16 %v301
        %v3200 = vunpack.c.l.b16 %v302
        %v3201 = vunpack.c.h.b16 %v302
        %v3202 = vunpack.c.l.b16 %v303
        %v3203 = vunpack.c.h.b16 %v303
        %v3204 = vunpack.c.l.b16 %v304
        %v3205 = vunpack.c.h.b16 %v304
        %v3206 = vunpack.c.l.b16 %v305
        %v3207 = vunpack.c.h.b16 %v305
        %v3208 = vunpack.c.l.b16 %v306
        %v3209 = vunpack.c.h.b16 %v306
        %v3210 = vunpack.c.l.b16 %v307
        %v3211 = vunpack.c.h.b16 %v307
        %v3212 = vunpack.c.l.b16 %v308
        %v3213 = vunpack.c.h.b16 %v308
        %v3214 = vunpack.c.l.b16 %v309
        %v3215 = vunpack.c.h.b16 %v309
        %v3216 = vunpack.c.l.b16 %v310
        %v3217 = vunpack.c.h.b16 %v310
        %v3218 = vunpack.c.l.b16 %v311
        %v3219 = vunpack.c.h.b16 %v311
        %v3220 = vunpack.c.l.b16 %v312
        %v3221 = vunpack.c.h.b16 %v312
        %v3222 = vunpack.c.l.b16 %v313
        %v3223 = vunpack.c.h.b16 %v313
        %v3224 = vunpack.c.l.b16 %v314
        %v3225 = vunpack.c.h.b16 %v314
        %v3226 = vunpack.c.l.b16 %v315
        %v3227 = vunpack.c.h.b16 %v315
        %v3228 = vunpack.c.l.b16 %v316
        %v3229 = vunpack.c.h.b16 %v316
        %v3230 = vunpack.c.l.b16 %v317
        %v3231 = vunpack.c.h.b16 %v317
        %v3232 = vunpack.c.l.b16 %v318
        %v3233 = vunpack.c.h.b16 %v318
        %v3234 = vunpack.c.l.b16 %v319
        %v3235 = vunpack.c.h.b16 %v319
        %v3236 = vunpack.c.l.b16 %v320
        %v3237 = vunpack.c.h.b16 %v320
        %v3238 = vunpack.c.l.b16 %v321
        %v3239 = vunpack.c.h.b16 %v321
        %v3240 = vunpack.c.l.b16 %v322
        %v3241 = vunpack.c.h.b16 %v322
        %v3242 = vunpack.c.l.b16 %v323
        %v3243 = vunpack.c.h.b16 %v323
        %v3244 = vunpack.c.l.b16 %v324
        %v3245 = vunpack.c.h.b16 %v324
        %v3246 = vunpack.c.l.b16 %v325
        %v3247 = vunpack.c.h.b16 %v325
        %v3248 = vunpack.c.l.b16 %v326
        %v3249 = vunpack.c.h.b16 %v326
        %v3250 = vunpack.c.l.b16 %v327
        %v3251 = vunpack.c.h.b16 %v327
        %v3252 = vunpack.c.l.b16 %v328
        %v3253 = vunpack.c.h.b16 %v328
        %v3254 = vunpack.c.l.b16 %v329
        %v3255 = vunpack.c.h.b16 %v329
        %v3256 = vunpack.c.l.b16 %v330
        %v3257 = vunpack.c.h.b16 %v330
        %v3258 = vunpack.c.l.b16 %v331
        %v3259 = vunpack.c.h.b16 %v331
        %v3260 = vunpack.c.l.b16 %v332
        %v3261 = vunpack.c.h.b16 %v332
        %v3262 = vunpack.c.l.b16 %v333
        %v3263 = vunpack.c.h.b16 %v333
        %v3264 = vunpack.c.l.b16 %v334
        %v3265 = vunpack.c.h.b16 %v334
        %v3266 = vunpack.c.l.b16 %v335
        %v3267 = vunpack.c.h.b16 %v335
        %v3268 = vunpack.c.l.b16 %v336
        %v3269 = vunpack.c.h.b16 %v336
        %v3270 = vunpack.c.l.b16 %v337
        %v3271 = vunpack.c.h.b16 %v337
        %v3272 = vunpack.c.l.b16 %v338
        %v3273 = vunpack.c.h.b16 %v338
        %v3274 = vunpack.c.l.b16 %v339
        %v3275 = vunpack.c.h.b16 %v339
        %v3276 = vunpack.c.l.b16 %v340
        %v3277 = vunpack.c.h.b16 %v340
        %v3278 = vunpack.c.l.b16 %v341
        %v3279 = vunpack.c.h.b16 %v341
        %v3280 = vunpack.c.l.b16 %v342
        %v3281 = vunpack.c.h.b16 %v342
        %v3282 = vunpack.c.l.b16 %v343
        %v3283 = vunpack.c.h.b16 %v343
        %v3284 = vunpack.c.l.b16 %v344
        %v3285 = vunpack.c.h.b16 %v344
        %v3286 = vunpack.c.l.b16 %v345
        %v3287 = vunpack.c.h.b16 %v345
        %v3288 = vunpack.c.l.b16 %v346
        %v3289 = vunpack.c.h.b16 %v346
        %v3290 = vunpack.c.l.b16 %v347
        %v3291 = vunpack.c.h.b16 %v347
        %v3292 = vunpack.c.l.b16 %v348
        %v3293 = vunpack.c.h.b16 %v348
        %v3294 = vunpack.c.l.b16 %v349
        %v3295 = vunpack.c.h.b16 %v349
        %v3296 = vunpack.c.l.b16 %v350
        %v3297 = vunpack.c.h.b16 %v350
        %v3298 = vunpack.c.l.b16 %v351
        %v3299 = vunpack.c.h.b16 %v351
        %v3300 = vunpack.c.l.b16 %v352
        %v3301 = vunpack.c.h.b16 %v352
        %v3302 = vunpack.c.l.b16 %v353
        %v3303 = vunpack.c.h.b16 %v353
        %v3304 = vunpack.c.l.b16 %v354
        %v3305 = vunpack.c.h.b16 %v354
        %v3306 = vunpack.c.l.b16 %v355
        %v3307 = vunpack.c.h.b16 %v355
        %v3308 = vunpack.c.l.b16 %v356
        %v3309 = vunpack.c.h.b16 %v356
        %v3310 = vunpack.c.l.b16 %v357
        %v3311 = vunpack.c.h.b16 %v357
        %v3312 = vunpack.c.l.b16 %v358
        %v3313 = vunpack.c.h.b16 %v358
        %v3314 = vunpack.c.l.b16 %v359
        %v3315 = vunpack.c.h.b16 %v359
        %v3316 = vunpack.c.l.b16 %v360
        %v3317 = vunpack.c.h.b16 %v360
        %v3318 = vunpack.c.l.b16 %v361
        %v3319 = vunpack.c.h.b16 %v361
        %v3320 = vunpack.c.l.b16 %v362
        %v3321 = vunpack.c.h.b16 %v362
        %v3322 = vunpack.c.l.b16 %v363
        %v3323 = vunpack.c.h.b16 %v363
        %v3324 = vunpack.c.l.b16 %v364
        %v3325 = vunpack.c.h.b16 %v364
        %v3326 = vunpack.c.l.b16 %v365
        %v3327 = vunpack.c.h.b16 %v365
        %v3328 = vunpack.c.l.b16 %v366
        %v3329 = vunpack.c.h.b16 %v366
        %v3330 = vunpack.c.l.b16 %v367
        %v3331 = vunpack.c.h.b16 %v367
        %v3332 = vunpack.c.l.b16 %v368
        %v3333 = vunpack.c.h.b16 %v368
        %v3334 = vunpack.c.l.b16 %v369
        %v3335 = vunpack.c.h.b16 %v369
        %v3336 = vunpack.c.l.b16 %v370
        %v3337 = vunpack.c.h.b16 %v370
        %v3338 = vunpack.c.l.b16 %v371
        %v3339 = vunpack.c.h.b16 %v371
        %v3340 = vunpack.c.l.b16 %v372
        %v3341 = vunpack.c.h.b16 %v372
        %v3342 = vunpack.c.l.b16 %v373
        %v3343 = vunpack.c.h.b16 %v373
        %v3344 = vunpack.c.l.b16 %v374
        %v3345 = vunpack.c.h.b16 %v374
        %v3346 = vunpack.c.l.b16 %v375
        %v3347 = vunpack.c.h.b16 %v375
        %v3348 = vunpack.c.l.b16 %v376
        %v3349 = vunpack.c.h.b16 %v376
        %v3350 = vunpack.c.l.b16 %v377
        %v3351 = vunpack.c.h.b16 %v377
        %v3352 = vunpack.c.l.b16 %v378
        %v3353 = vunpack.c.h.b16 %v378
        %v3354 = vunpack.c.l.b16 %v379
        %v3355 = vunpack.c.h.b16 %v379
        %v3356 = vunpack.c.l.b16 %v380
        %v3357 = vunpack.c.h.b16 %v380
        %v3358 = vunpack.c.l.b16 %v381
        %v3359 = vunpack.c.h.b16 %v381
        %v3360 = vunpack.c.l.b16 %v382
        %v3361 = vunpack.c.h.b16 %v382
        %v3362 = vunpack.c.l.b16 %v383
        %v3363 = vunpack.c.h.b16 %v383
        %v3364 = vunpack.c.l.b16 %v384
        %v3365 = vunpack.c.h.b16 %v384
        %v3366 = vunpack.c.l.b16 %v385
        %v3367 = vunpack.c.h.b16 %v385
        %v3368 = vunpack.c.l.b16 %v386
        %v3369 = vunpack.c.h.b16 %v386
        %v3370 = vunpack.c.l.b16 %v387
        %v3371 = vunpack.c.h.b16 %v387
        %v3372 = vunpack.c.l.b16 %v388
        %v3373 = vunpack.c.h.b16 %v388
        %v3374 = vunpack.c.l.b16 %v389
        %v3375 = vunpack.c.h.b16 %v389
        %v3376 = vunpack.c.l.b16 %v390
        %v3377 = vunpack.c.h.b16 %v390
        %v3378 = vunpack.c.l.b16 %v391
        %v3379 = vunpack.c.h.b16 %v391
        %v3380 = vunpack.c.l.b16 %v392
        %v3381 = vunpack.c.h.b16 %v392
        %v3382 = vunpack.c.l.b16 %v393
        %v3383 = vunpack.c.h.b16 %v393
        %v3384 = vunpack.c.l.b16 %v394
        %v3385 = vunpack.c.h.b16 %v394
        %v3386 = vunpack.c.l.b16 %v395
        %v3387 = vunpack.c.h.b16 %v395
        %v3388 = vunpack.c.l.b16 %v396
        %v3389 = vunpack.c.h.b16 %v396
        %v3390 = vunpack.c.l.b16 %v397
        %v3391 = vunpack.c.h.b16 %v397
        %v3392 = vunpack.c.l.b16 %v398
        %v3393 = vunpack.c.h.b16 %v398
        %v3394 = vunpack.c.l.b16 %v399
        %v3395 = vunpack.c.h.b16 %v399
        %v3396 = vunpack.c.l.b16 %v400
        %v3397 = vunpack.c.h.b16 %v400
        %v3398 = vunpack.c.l.b16 %v401
        %v3399 = vunpack.c.h.b16 %v401
        %v3400 = vunpack.c.l.b16 %v402
        %v3401 = vunpack.c.h.b16 %v402
        %v3402 = vunpack.c.l.b16 %v403
        %v3403 = vunpack.c.h.b16 %v403
        %v3404 = vunpack.c.l.b16 %v404
        %v3405 = vunpack.c.h.b16 %v404
        %v3406 = vunpack.c.l.b16 %v405
        %v3407 = vunpack.c.h.b16 %v405
        %v3408 = vunpack.c.l.b16 %v406
        %v3409 = vunpack.c.h.b16 %v406
        %v3410 = vunpack.c.l.b16 %v407
        %v3411 = vunpack.c.h.b16 %v407
        %v3412 = vunpack.c.l.b16 %v408
        %v3413 = vunpack.c.h.b16 %v408
        %v3414 = vunpack.c.l.b16 %v409
        %v3415 = vunpack.c.h.b16 %v409
        %v3416 = vunpack.c.l.b16 %v410
        %v3417 = vunpack.c.h.b16 %v410
        %v3418 = vunpack.c.l.b16 %v411
        %v3419 = vunpack.c.h.b16 %v411
        %v3420 = vunpack.c.l.b16 %v412
        %v3421 = vunpack.c.h.b16 %v412
        %v3422 = vunpack.c.l.b16 %v413
        %v3423 = vunpack.c.h.b16 %v413
        %v3424 = vunpack.c.l.b16 %v414
        %v3425 = vunpack.c.h.b16 %v414
        %v3426 = vunpack.c.l.b16 %v415
        %v3427 = vunpack.c.h.b16 %v415
        %v3428 = vunpack.c.l.b16 %v416
        %v3429 = vunpack.c.h.b16 %v416
        %v3430 = vunpack.c.l.b16 %v417
        %v3431 = vunpack.c.h.b16 %v417
        %v3432 = vunpack.c.l.b16 %v418
        %v3433 = vunpack.c.h.b16 %v418
        %v3434 = vunpack.c.l.b16 %v419
        %v3435 = vunpack.c.h.b16 %v419
        %v3436 = vunpack.c.l.b16 %v420
        %v3437 = vunpack.c.h.b16 %v420
        %v3438 = vunpack.c.l.b16 %v421
        %v3439 = vunpack.c.h.b16 %v421
        %v3440 = vunpack.c.l.b16 %v422
        %v3441 = vunpack.c.h.b16 %v422
        %v3442 = vunpack.c.l.b16 %v423
        %v3443 = vunpack.c.h.b16 %v423
        %v3444 = vunpack.c.l.b16 %v424
        %v3445 = vunpack.c.h.b16 %v424
        %v3446 = vunpack.c.l.b16 %v425
        %v3447 = vunpack.c.h.b16 %v425
        %v3448 = vunpack.c.l.b16 %v426
        %v3449 = vunpack.c.h.b16 %v426
        %v3450 = vunpack.c.l.b16 %v427
        %v3451 = vunpack.c.h.b16 %v427
        %v3452 = vunpack.c.l.b16 %v428
        %v3453 = vunpack.c.h.b16 %v428
        %v3454 = vunpack.c.l.b16 %v429
        %v3455 = vunpack.c.h.b16 %v429
        %v3456 = vunpack.c.l.b16 %v430
        %v3457 = vunpack.c.h.b16 %v430
        %v3458 = vunpack.c.l.b16 %v431
        %v3459 = vunpack.c.h.b16 %v431
        %v3460 = vunpack.c.l.b16 %v432
        %v3461 = vunpack.c.h.b16 %v432
        %v3462 = vunpack.c.l.b16 %v433
        %v3463 = vunpack.c.h.b16 %v433
        %v3464 = vunpack.c.l.b16 %v434
        %v3465 = vunpack.c.h.b16 %v434
        %v3466 = vunpack.c.l.b16 %v435
        %v3467 = vunpack.c.h.b16 %v435
        %v3468 = vunpack.c.l.b16 %v436
        %v3469 = vunpack.c.h.b16 %v436
        %v3470 = vunpack.c.l.b16 %v437
        %v3471 = vunpack.c.h.b16 %v437
        %v3472 = vunpack.c.l.b16 %v438
        %v3473 = vunpack.c.h.b16 %v438
        %v3474 = vunpack.c.l.b16 %v439
        %v3475 = vunpack.c.h.b16 %v439
        %v3476 = vunpack.c.l.b16 %v440
        %v3477 = vunpack.c.h.b16 %v440
        %v3478 = vunpack.c.l.b16 %v441
        %v3479 = vunpack.c.h.b16 %v441
        %v3480 = vunpack.c.l.b16 %v442
        %v3481 = vunpack.c.h.b16 %v442
        %v3482 = vunpack.c.l.b16 %v443
        %v3483 = vunpack.c.h.b16 %v443
        %v3484 = vunpack.c.l.b16 %v444
        %v3485 = vunpack.c.h.b16 %v444
        %v3486 = vunpack.c.l.b16 %v445
        %v3487 = vunpack.c.h.b16 %v445
        %v3488 = vunpack.c.l.b16 %v446
        %v3489 = vunpack.c.h.b16 %v446
        %v3490 = vunpack.c.l.b16 %v447
        %v3491 = vunpack.c.h.b16 %v447
        %v3492 = vunpack.c.l.b16 %v448
        %v3493 = vunpack.c.h.b16 %v448
        %v3494 = vunpack.c.l.b16 %v449
        %v3495 = vunpack.c.h.b16 %v449
        %v3496 = vunpack.c.l.b16 %v450
        %v3497 = vunpack.c.h.b16 %v450
        %v3498 = vunpack.c.l.b16 %v451
        %v3499 = vunpack.c.h.b16 %v451
        %v3500 = vunpack.c.l.b16 %v452
        %v3501 = vunpack.c.h.b16 %v452
        %v3502 = vunpack.c.l.b16 %v453
        %v3503 = vunpack.c.h.b16 %v453
        %v3504 = vunpack.c.l.b16 %v454
        %v3505 = vunpack.c.h.b16 %v454
        %v3506 = vunpack.c.l.b16 %v455
        %v3507 = vunpack.c.h.b16 %v455
        %v3508 = vunpack.c.l.b16 %v456
        %v3509 = vunpack.c.h.b16 %v456
        %v3510 = vunpack.c.l.b16 %v457
        %v3511 = vunpack.c.h.b16 %v457
        %v3512 = vunpack.c.l.b16 %v458
        %v3513 = vunpack.c.h.b16 %v458
        %v3514 = vunpack.c.l.b16 %v459
        %v3515 = vunpack.c.h.b16 %v459
        %v3516 = vunpack.c.l.b16 %v460
        %v3517 = vunpack.c.h.b16 %v460
        %v3518 = vunpack.c.l.b16 %v461
        %v3519 = vunpack.c.h.b16 %v461
        %v3520 = vunpack.c.l.b16 %v462
        %v3521 = vunpack.c.h.b16 %v462
        %v3522 = vunpack.c.l.b16 %v463
        %v3523 = vunpack.c.h.b16 %v463
        %v3524 = vunpack.c.l.b16 %v464
        %v3525 = vunpack.c.h.b16 %v464
        %v3526 = vunpack.c.l.b16 %v465
        %v3527 = vunpack.c.h.b16 %v465
        %v3528 = vunpack.c.l.b16 %v466
        %v3529 = vunpack.c.h.b16 %v466
        %v3530 = vunpack.c.l.b16 %v467
        %v3531 = vunpack.c.h.b16 %v467
        %v3532 = vunpack.c.l.b16 %v468
        %v3533 = vunpack.c.h.b16 %v468
        %v3534 = vunpack.c.l.b16 %v469
        %v3535 = vunpack.c.h.b16 %v469
        %v3536 = vunpack.c.l.b16 %v470
        %v3537 = vunpack.c.h.b16 %v470
        %v3538 = vunpack.c.l.b16 %v471
        %v3539 = vunpack.c.h.b16 %v471
        %v3540 = vunpack.c.l.b16 %v472
        %v3541 = vunpack.c.h.b16 %v472
        %v3542 = vunpack.c.l.b16 %v473
        %v3543 = vunpack.c.h.b16 %v473
        %v3544 = vunpack.c.l.b16 %v474
        %v3545 = vunpack.c.h.b16 %v474
        %v3546 = vunpack.c.l.b16 %v475
        %v3547 = vunpack.c.h.b16 %v475
        %v3548 = vunpack.c.l.b16 %v476
        %v3549 = vunpack.c.h.b16 %v476
        %v3550 = vunpack.c.l.b16 %v477
        %v3551 = vunpack.c.h.b16 %v477
        %v3552 = vunpack.c.l.b16 %v478
        %v3553 = vunpack.c.h.b16 %v478
        %v3554 = vunpack.c.l.b16 %v479
        %v3555 = vunpack.c.h.b16 %v479
        %v3556 = vunpack.c.l.b16 %v480
        %v3557 = vunpack.c.h.b16 %v480
        %v3558 = vunpack.c.l.b16 %v481
        %v3559 = vunpack.c.h.b16 %v481
        %v3560 = vunpack.c.l.b16 %v482
        %v3561 = vunpack.c.h.b16 %v482
        %v3562 = vunpack.c.l.b16 %v483
        %v3563 = vunpack.c.h.b16 %v483
        %v3564 = vunpack.c.l.b16 %v484
        %v3565 = vunpack.c.h.b16 %v484
        %v3566 = vunpack.c.l.b16 %v485
        %v3567 = vunpack.c.h.b16 %v485
        %v3568 = vunpack.c.l.b16 %v486
        %v3569 = vunpack.c.h.b16 %v486
        %v3570 = vunpack.c.l.b16 %v487
        %v3571 = vunpack.c.h.b16 %v487
        %v3572 = vunpack.c.l.b16 %v488
        %v3573 = vunpack.c.h.b16 %v488
        %v3574 = vunpack.c.l.b16 %v489
        %v3575 = vunpack.c.h.b16 %v489
        %v3576 = vunpack.c.l.b16 %v490
        %v3577 = vunpack.c.h.b16 %v490
        %v3578 = vunpack.c.l.b16 %v491
        %v3579 = vunpack.c.h.b16 %v491
        %v3580 = vunpack.c.l.b16 %v492
        %v3581 = vunpack.c.h.b16 %v492
        %v3582 = vunpack.c.l.b16 %v493
        %v3583 = vunpack.c.h.b16 %v493
        %v3584 = vunpack.c.l.b16 %v494
        %v3585 = vunpack.c.h.b16 %v494
        %v3586 = vunpack.c.l.b16 %v495
        %v3587 = vunpack.c.h.b16 %v495
        %v3588 = vunpack.c.l.b16 %v496
        %v3589 = vunpack.c.h.b16 %v496
        %v3590 = vunpack.c.l.b16 %v497
        %v3591 = vunpack.c.h.b16 %v497
        %v3592 = vunpack.c.l.b16 %v498
        %v3593 = vunpack.c.h.b16 %v498
        %v3594 = vunpack.c.l.b16 %v499
        %v3595 = vunpack.c.h.b16 %v499
        %v3596 = vunpack.c.l.b16 %v500
        %v3597 = vunpack.c.h.b16 %v500
        %v3598 = vunpack.c.l.b16 %v501
        %v3599 = vunpack.c.h.b16 %v501
        %v3600 = vunpack.c.l.b16 %v502
        %v3601 = vunpack.c.h.b16 %v502
        %v3602 = vunpack.c.l.b16 %v503
        %v3603 = vunpack.c.h.b16 %v503
        %v3604 = vunpack.c.l.b16 %v504
        %v3605 = vunpack.c.h.b16 %v504
        %v3606 = vunpack.c.l.b16 %v505
        %v3607 = vunpack.c.h.b16 %v505
        %v3608 = vunpack.c.l.b16 %v506
        %v3609 = vunpack.c.h.b16 %v506
        %v3610 = vunpack.c.l.b16 %v507
        %v3611 = vunpack.c.h.b16 %v507
        %v3612 = vunpack.c.l.b16 %v508
        %v3613 = vunpack.c.h.b16 %v508
        %v3614 = vunpack.c.l.b16 %v509
        %v3615 = vunpack.c.h.b16 %v509
        %v3616 = vunpack.c.l.b16 %v510
        %v3617 = vunpack.c.h.b16 %v510
        %v3618 = vunpack.c.l.b16 %v511
        %v3619 = vunpack.c.h.b16 %v511
        %v3620 = vunpack.c.l.b16 %v512
        %v3621 = vunpack.c.h.b16 %v512
        %v3622 = vunpack.c.l.b16 %v513
        %v3623 = vunpack.c.h.b16 %v513
        %v3624 = vunpack.c.l.b16 %v514
        %v3625 = vunpack.c.h.b16 %v514
        %v3626 = vunpack.c.l.b16 %v515
        %v3627 = vunpack.c.h.b16 %v515
        %v3628 = vunpack.c.l.b16 %v516
        %v3629 = vunpack.c.h.b16 %v516
        %v3630 = vunpack.c.l.b16 %v517
        %v3631 = vunpack.c.h.b16 %v517
        %v3632 = vunpack.c.l.b16 %v518
        %v3633 = vunpack.c.h.b16 %v518
        %v3634 = vunpack.c.l.b16 %v519
        %v3635 = vunpack.c.h.b16 %v519
        %v3636 = vunpack.c.l.b16 %v520
        %v3637 = vunpack.c.h.b16 %v520
        %v3638 = vunpack.c.l.b16 %v521
        %v3639 = vunpack.c.h.b16 %v521
        %v3640 = vunpack.c.l.b16 %v522
        %v3641 = vunpack.c.h.b16 %v522
        %v3642 = vunpack.c.l.b16 %v523
        %v3643 = vunpack.c.h.b16 %v523
        %v3644 = vunpack.c.l.b16 %v524
        %v3645 = vunpack.c.h.b16 %v524
        %v3646 = vunpack.c.l.b16 %v525
        %v3647 = vunpack.c.h.b16 %v525
        %v3648 = vunpack.c.l.b16 %v526
        %v3649 = vunpack.c.h.b16 %v526
        %v3650 = vunpack.c.l.b16 %v527
        %v3651 = vunpack.c.h.b16 %v527
        %v3652 = vunpack.c.l.b16 %v528
        %v3653 = vunpack.c.h.b16 %v528
        %v3654 = vunpack.c.l.b16 %v529
        %v3655 = vunpack.c.h.b16 %v529
        %v3656 = vunpack.c.l.b16 %v530
        %v3657 = vunpack.c.h.b16 %v530
        %v3658 = vunpack.c.l.b16 %v531
        %v3659 = vunpack.c.h.b16 %v531
        %v3660 = vunpack.c.l.b16 %v532
        %v3661 = vunpack.c.h.b16 %v532
        %v3662 = vunpack.c.l.b16 %v533
        %v3663 = vunpack.c.h.b16 %v533
        %v3664 = vunpack.c.l.b16 %v534
        %v3665 = vunpack.c.h.b16 %v534
        %v3666 = vunpack.c.l.b16 %v535
        %v3667 = vunpack.c.h.b16 %v535
        %v3668 = vunpack.c.l.b16 %v536
        %v3669 = vunpack.c.h.b16 %v536
        %v3670 = vunpack.c.l.b16 %v537
        %v3671 = vunpack.c.h.b16 %v537
        %v3672 = vunpack.c.l.b16 %v538
        %v3673 = vunpack.c.h.b16 %v538
        %v3674 = vunpack.c.l.b16 %v539
        %v3675 = vunpack.c.h.b16 %v539
        %v3676 = vunpack.c.l.b16 %v540
        %v3677 = vunpack.c.h.b16 %v540
        %v3678 = vunpack.c.l.b16 %v541
        %v3679 = vunpack.c.h.b16 %v541
        %v3680 = vunpack.c.l.b16 %v542
        %v3681 = vunpack.c.h.b16 %v542
        %v3682 = vunpack.c.l.b16 %v543
        %v3683 = vunpack.c.h.b16 %v543
        %v3684 = vunpack.c.l.b16 %v544
        %v3685 = vunpack.c.h.b16 %v544
        %v3686 = vunpack.c.l.b16 %v545
        %v3687 = vunpack.c.h.b16 %v545
        %v3688 = vunpack.c.l.b16 %v546
        %v3689 = vunpack.c.h.b16 %v546
        %v3690 = vunpack.c.l.b16 %v547
        %v3691 = vunpack.c.h.b16 %v547
        %v3692 = vunpack.c.l.b16 %v548
        %v3693 = vunpack.c.h.b16 %v548
        %v3694 = vunpack.c.l.b16 %v549
        %v3695 = vunpack.c.h.b16 %v549
        %v3696 = vunpack.c.l.b16 %v550
        %v3697 = vunpack.c.h.b16 %v550
        %v3698 = vunpack.c.l.b16 %v551
        %v3699 = vunpack.c.h.b16 %v551
        %v3700 = vunpack.c.l.b16 %v552
        %v3701 = vunpack.c.h.b16 %v552
        %v3702 = vunpack.c.l.b16 %v553
        %v3703 = vunpack.c.h.b16 %v553
        %v3704 = vunpack.c.l.b16 %v554
        %v3705 = vunpack.c.h.b16 %v554
        %v3706 = vunpack.c.l.b16 %v555
        %v3707 = vunpack.c.h.b16 %v555
        %v3708 = vunpack.c.l.b16 %v556
        %v3709 = vunpack.c.h.b16 %v556
        %v3710 = vunpack.c.l.b16 %v557
        %v3711 = vunpack.c.h.b16 %v557
        %v3712 = vunpack.c.l.b16 %v558
        %v3713 = vunpack.c.h.b16 %v558
        %v3714 = vunpack.c.l.b16 %v559
        %v3715 = vunpack.c.h.b16 %v559
        %v3716 = vunpack.c.l.b16 %v560
        %v3717 = vunpack.c.h.b16 %v560
        %v3718 = vunpack.c.l.b16 %v561
        %v3719 = vunpack.c.h.b16 %v561
        %v3720 = vunpack.c.l.b16 %v562
        %v3721 = vunpack.c.h.b16 %v562
        %v3722 = vunpack.c.l.b16 %v563
        %v3723 = vunpack.c.h.b16 %v563
        %v3724 = vunpack.c.l.b16 %v564
        %v3725 = vunpack.c.h.b16 %v564
        %v3726 = vunpack.c.l.b16 %v565
        %v3727 = vunpack.c.h.b16 %v565
        %v3728 = vunpack.c.l.b16 %v566
        %v3729 = vunpack.c.h.b16 %v566
        %v3730 = vunpack.c.l.b16 %v567
        %v3731 = vunpack.c.h.b16 %v567
        %v3732 = vunpack.c.l.b16 %v568
        %v3733 = vunpack.c.h.b16 %v568
        %v3734 = vunpack.c.l.b16 %v569
        %v3735 = vunpack.c.h.b16 %v569
        %v3736 = vunpack.c.l.b16 %v570
        %v3737 = vunpack.c.h.b16 %v570
        %v3738 = vunpack.c.l.b16 %v571
        %v3739 = vunpack.c.h.b16 %v571
        %v3740 = vunpack.c.l.b16 %v572
        %v3741 = vunpack.c.h.b16 %v572
        %v3742 = vunpack.c.l.b16 %v573
        %v3743 = vunpack.c.h.b16 %v573
        %v3744 = vunpack.c.l.b16 %v574
        %v3745 = vunpack.c.h.b16 %v574
        %v3746 = vunpack.c.l.b16 %v575
        %v3747 = vunpack.c.h.b16 %v575
        %v3748 = vunpack.c.l.b16 %v576
        %v3749 = vunpack.c.h.b16 %v576
        %v3750 = vunpack.c.l.b16 %v577
        %v3751 = vunpack.c.h.b16 %v577
        %v3752 = vunpack.c.l.b16 %v578
        %v3753 = vunpack.c.h.b16 %v578
        %v3754 = vunpack.c.l.b16 %v579
        %v3755 = vunpack.c.h.b16 %v579
        %v3756 = vunpack.c.l.b16 %v580
        %v3757 = vunpack.c.h.b16 %v580
        %v3758 = vunpack.c.l.b16 %v581
        %v3759 = vunpack.c.h.b16 %v581
        %v3760 = vunpack.c.l.b16 %v582
        %v3761 = vunpack.c.h.b16 %v582
        %v3762 = vunpack.c.l.b16 %v583
        %v3763 = vunpack.c.h.b16 %v583
        %v3764 = vunpack.c.l.b16 %v584
        %v3765 = vunpack.c.h.b16 %v584
        %v3766 = vunpack.c.l.b16 %v585
        %v3767 = vunpack.c.h.b16 %v585
        %v3768 = vunpack.c.l.b16 %v586
        %v3769 = vunpack.c.h.b16 %v586
        %v3770 = vunpack.c.l.b16 %v587
        %v3771 = vunpack.c.h.b16 %v587
        %v3772 = vunpack.c.l.b16 %v588
        %v3773 = vunpack.c.h.b16 %v588
        %v3774 = vunpack.c.l.b16 %v589
        %v3775 = vunpack.c.h.b16 %v589
        %v3776 = vunpack.c.l.b16 %v590
        %v3777 = vunpack.c.h.b16 %v590
        %v3778 = vunpack.c.l.b16 %v591
        %v3779 = vunpack.c.h.b16 %v591
        %v3780 = vunpack.c.l.b16 %v592
        %v3781 = vunpack.c.h.b16 %v592
        %v3782 = vunpack.c.l.b16 %v593
        %v3783 = vunpack.c.h.b16 %v593
        %v3784 = vunpack.c.l.b16 %v594
        %v3785 = vunpack.c.h.b16 %v594
        %v3786 = vunpack.c.l.b16 %v595
        %v3787 = vunpack.c.h.b16 %v595
        %v3788 = vunpack.c.l.b16 %v596
        %v3789 = vunpack.c.h.b16 %v596
        %v3790 = vunpack.c.l.b16 %v597
        %v3791 = vunpack.c.h.b16 %v597
        %v3792 = vunpack.c.l.b16 %v598
        %v3793 = vunpack.c.h.b16 %v598
        %v3794 = vunpack.c.l.b16 %v599
        %v3795 = vunpack.c.h.b16 %v599
        %v3796 = vunpack.c.l.b16 %v600
        %v3797 = vunpack.c.h.b16 %v600
        %v3798 = vunpack.c.l.b16 %v601
        %v3799 = vunpack.c.h.b16 %v601
        %v3800 = vunpack.c.l.b16 %v602
        %v3801 = vunpack.c.h.b16 %v602
        %v3802 = vunpack.c.l.b16 %v603
        %v3803 = vunpack.c.h.b16 %v603
        %v3804 = vunpack.c.l.b16 %v604
        %v3805 = vunpack.c.h.b16 %v604
        %v3806 = vunpack.c.l.b16 %v605
        %v3807 = vunpack.c.h.b16 %v605
        %v3808 = vunpack.c.l.b16 %v606
        %v3809 = vunpack.c.h.b16 %v606
        %v3810 = vunpack.c.l.b16 %v607
        %v3811 = vunpack.c.h.b16 %v607
        %v3812 = vunpack.c.l.b16 %v608
        %v3813 = vunpack.c.h.b16 %v608
        %v3814 = vunpack.c.l.b16 %v609
        %v3815 = vunpack.c.h.b16 %v609
        %v3816 = vunpack.c.l.b16 %v610
        %v3817 = vunpack.c.h.b16 %v610
        %v3818 = vunpack.c.l.b16 %v611
        %v3819 = vunpack.c.h.b16 %v611
        %v3820 = vunpack.c.l.b16 %v612
        %v3821 = vunpack.c.h.b16 %v612
        %v3822 = vunpack.c.l.b16 %v613
        %v3823 = vunpack.c.h.b16 %v613
        %v3824 = vunpack.c.l.b16 %v614
        %v3825 = vunpack.c.h.b16 %v614
        %v3826 = vunpack.c.l.b16 %v615
        %v3827 = vunpack.c.h.b16 %v615
        %v3828 = vunpack.c.l.b16 %v616
        %v3829 = vunpack.c.h.b16 %v616
        %v3830 = vunpack.c.l.b16 %v617
        %v3831 = vunpack.c.h.b16 %v617
        %v3832 = vunpack.c.l.b16 %v618
        %v3833 = vunpack.c.h.b16 %v618
        %v3834 = vunpack.c.l.b16 %v619
        %v3835 = vunpack.c.h.b16 %v619
        %v3836 = vunpack.c.l.b16 %v620
        %v3837 = vunpack.c.h.b16 %v620
        %v3838 = vunpack.c.l.b16 %v621
        %v3839 = vunpack.c.h.b16 %v621
        %v3840 = vunpack.c.l.b16 %v622
        %v3841 = vunpack.c.h.b16 %v622
        %v3842 = vunpack.c.l.b16 %v623
        %v3843 = vunpack.c.h.b16 %v623
        %v3844 = vunpack.c.l.b16 %v624
        %v3845 = vunpack.c.h.b16 %v624
        %v3846 = vunpack.c.l.b16 %v625
        %v3847 = vunpack.c.h.b16 %v625
        %v3848 = vunpack.c.l.b16 %v626
        %v3849 = vunpack.c.h.b16 %v626
        %v3850 = vunpack.c.l.b16 %v627
        %v3851 = vunpack.c.h.b16 %v627
        %v3852 = vunpack.c.l.b16 %v628
        %v3853 = vunpack.c.h.b16 %v628
        %v3854 = vunpack.c.l.b16 %v629
        %v3855 = vunpack.c.h.b16 %v629
        %v3856 = vunpack.c.l.b16 %v630
        %v3857 = vunpack.c.h.b16 %v630
        %v3858 = vunpack.c.l.b16 %v631
        %v3859 = vunpack.c.h.b16 %v631
        %v3860 = vunpack.c.l.b16 %v632
        %v3861 = vunpack.c.h.b16 %v632
        %v3862 = vunpack.c.l.b16 %v633
        %v3863 = vunpack.c.h.b16 %v633
        %v3864 = vunpack.c.l.b16 %v634
        %v3865 = vunpack.c.h.b16 %v634
        %v3866 = vunpack.c.l.b16 %v635
        %v3867 = vunpack.c.h.b16 %v635
        %v3868 = vunpack.c.l.b16 %v636
        %v3869 = vunpack.c.h.b16 %v636
        %v3870 = vunpack.c.l.b16 %v637
        %v3871 = vunpack.c.h.b16 %v637
        %v3872 = vunpack.c.l.b16 %v638
        %v3873 = vunpack.c.h.b16 %v638
        %v3874 = vunpack.c.l.b16 %v639
        %v3875 = vunpack.c.h.b16 %v639
        %v3876 = vunpack.c.l.b16 %v640
        %v3877 = vunpack.c.h.b16 %v640
        %v3878 = vunpack.c.l.b16 %v641
        %v3879 = vunpack.c.h.b16 %v641
        %v3880 = vunpack.c.l.b16 %v642
        %v3881 = vunpack.c.h.b16 %v642
        %v3882 = vunpack.c.l.b16 %v643
        %v3883 = vunpack.c.h.b16 %v643
        %v3884 = vunpack.c.l.b16 %v644
        %v3885 = vunpack.c.h.b16 %v644
        %v3886 = vunpack.c.l.b16 %v645
        %v3887 = vunpack.c.h.b16 %v645
        %v3888 = vunpack.c.l.b16 %v646
        %v3889 = vunpack.c.h.b16 %v646
        %v3890 = vunpack.c.l.b16 %v647
        %v3891 = vunpack.c.h.b16 %v647
        %v3892 = vunpack.c.l.b16 %v648
        %v3893 = vunpack.c.h.b16 %v648
        %v3894 = vunpack.c.l.b16 %v649
        %v3895 = vunpack.c.h.b16 %v649
        %v3896 = vunpack.c.l.b16 %v650
        %v3897 = vunpack.c.h.b16 %v650
        %v3898 = vunpack.c.l.b16 %v651
        %v3899 = vunpack.c.h.b16 %v651
        %v3900 = vunpack.c.l.b16 %v652
        %v3901 = vunpack.c.h.b16 %v652
        %v3902 = vunpack.c.l.b16 %v653
        %v3903 = vunpack.c.h.b16 %v653
        %v3904 = vunpack.c.l.b16 %v654
        %v3905 = vunpack.c.h.b16 %v654
        %v3906 = vunpack.c.l.b16 %v655
        %v3907 = vunpack.c.h.b16 %v655
        %v3908 = vunpack.c.l.b16 %v656
        %v3909 = vunpack.c.h.b16 %v656
        %v3910 = vunpack.c.l.b16 %v657
        %v3911 = vunpack.c.h.b16 %v657
        %v3912 = vunpack.c.l.b16 %v658
        %v3913 = vunpack.c.h.b16 %v658
        %v3914 = vunpack.c.l.b16 %v659
        %v3915 = vunpack.c.h.b16 %v659
        %v3916 = vunpack.c.l.b16 %v660
        %v3917 = vunpack.c.h.b16 %v660
        %v3918 = vunpack.c.l.b16 %v661
        %v3919 = vunpack.c.h.b16 %v661
        %v3920 = vunpack.c.l.b16 %v662
        %v3921 = vunpack.c.h.b16 %v662
        %v3922 = vunpack.c.l.b16 %v663
        %v3923 = vunpack.c.h.b16 %v663
        %v3924 = vunpack.c.l.b16 %v664
        %v3925 = vunpack.c.h.b16 %v664
        %v3926 = vunpack.c.l.b16 %v665
        %v3927 = vunpack.c.h.b16 %v665
        %v3928 = vunpack.c.l.b16 %v666
        %v3929 = vunpack.c.h.b16 %v666
        %v3930 = vunpack.c.l.b16 %v667
        %v3931 = vunpack.c.h.b16 %v667
        %v3932 = vunpack.c.l.b16 %v668
        %v3933 = vunpack.c.h.b16 %v668
        %v3934 = vunpack.c.l.b16 %v669
        %v3935 = vunpack.c.h.b16 %v669
        %v3936 = vunpack.c.l.b16 %v670
        %v3937 = vunpack.c.h.b16 %v670
        %v3938 = vunpack.c.l.b16 %v671
        %v3939 = vunpack.c.h.b16 %v671
        %v3940 = vunpack.c.l.b16 %v672
        %v3941 = vunpack.c.h.b16 %v672
        %v3942 = vunpack.c.l.b16 %v673
        %v3943 = vunpack.c.h.b16 %v673
        %v3944 = vunpack.c.l.b16 %v674
        %v3945 = vunpack.c.h.b16 %v674
        %v3946 = vunpack.c.l.b16 %v675
        %v3947 = vunpack.c.h.b16 %v675
        %v3948 = vunpack.c.l.b16 %v676
        %v3949 = vunpack.c.h.b16 %v676
        %v3950 = vunpack.c.l.b16 %v677
        %v3951 = vunpack.c.h.b16 %v677
        %v3952 = vunpack.c.l.b16 %v678
        %v3953 = vunpack.c.h.b16 %v678
        %v3954 = vunpack.c.l.b16 %v679
        %v3955 = vunpack.c.h.b16 %v679
        %v3956 = vunpack.c.l.b16 %v680
        %v3957 = vunpack.c.h.b16 %v680
        %v3958 = vunpack.c.l.b16 %v681
        %v3959 = vunpack.c.h.b16 %v681
        %v3960 = vunpack.c.l.b16 %v682
        %v3961 = vunpack.c.h.b16 %v682
        %v3962 = vunpack.c.l.b16 %v683
        %v3963 = vunpack.c.h.b16 %v683
        %v3964 = vunpack.c.l.b16 %v684
        %v3965 = vunpack.c.h.b16 %v684
        %v3966 = vunpack.c.l.b16 %v685
        %v3967 = vunpack.c.h.b16 %v685
        %v3968 = vunpack.c.l.b16 %v686
        %v3969 = vunpack.c.h.b16 %v686
        %v3970 = vunpack.c.l.b16 %v687
        %v3971 = vunpack.c.h.b16 %v687
        %v3972 = vunpack.c.l.b16 %v688
        %v3973 = vunpack.c.h.b16 %v688
        %v3974 = vunpack.c.l.b16 %v689
        %v3975 = vunpack.c.h.b16 %v689
        %v3976 = vunpack.c.l.b16 %v690
        %v3977 = vunpack.c.h.b16 %v690
        %v3978 = vunpack.c.l.b16 %v691
        %v3979 = vunpack.c.h.b16 %v691
        %v3980 = vunpack.c.l.b16 %v692
        %v3981 = vunpack.c.h.b16 %v692
        %v3982 = vunpack.c.l.b16 %v693
        %v3983 = vunpack.c.h.b16 %v693
        %v3984 = vunpack.c.l.b16 %v694
        %v3985 = vunpack.c.h.b16 %v694
        %v3986 = vunpack.c.l.b16 %v695
        %v3987 = vunpack.c.h.b16 %v695
        %v3988 = vunpack.c.l.b16 %v696
        %v3989 = vunpack.c.h.b16 %v696
        %v3990 = vunpack.c.l.b16 %v697
        %v3991 = vunpack.c.h.b16 %v697
        %v3992 = vunpack.c.l.b16 %v698
        %v3993 = vunpack.c.h.b16 %v698
        %v3994 = vunpack.c.l.b16 %v699
        %v3995 = vunpack.c.h.b16 %v699
        %v3996 = vunpack.c.l.b16 %v700
        %v3997 = vunpack.c.h.b16 %v700
        %v3998 = vunpack.c.l.b16 %v701
        %v3999 = vunpack.c.h.b16 %v701
        %v4000 = vunpack.c.l.b16 %v702
        %v4001 = vunpack.c.h.b16 %v702
        %v4002 = vunpack.c.l.b16 %v703
        %v4003 = vunpack.c.h.b16 %v703
        %v4004 = vunpack.c.l.b16 %v704
        %v4005 = vunpack.c.h.b16 %v704
        %v4006 = vunpack.c.l.b16 %v705
        %v4007 = vunpack.c.h.b16 %v705
        %v4008 = vunpack.c.l.b16 %v706
        %v4009 = vunpack.c.h.b16 %v706
        %v4010 = vunpack.c.l.b16 %v707
        %v4011 = vunpack.c.h.b16 %v707
        %v4012 = vunpack.c.l.b16 %v708
        %v4013 = vunpack.c.h.b16 %v708
        %v4014 = vunpack.c.l.b16 %v709
        %v4015 = vunpack.c.h.b16 %v709
        %v4016 = vunpack.c.l.b16 %v710
        %v4017 = vunpack.c.h.b16 %v710
        %v4018 = vunpack.c.l.b16 %v711
        %v4019 = vunpack.c.h.b16 %v711
        %v4020 = vunpack.c.l.b16 %v712
        %v4021 = vunpack.c.h.b16 %v712
        %v4022 = vunpack.c.l.b16 %v713
        %v4023 = vunpack.c.h.b16 %v713
        %v4024 = vunpack.c.l.b16 %v714
        %v4025 = vunpack.c.h.b16 %v714
        %v4026 = vunpack.c.l.b16 %v715
        %v4027 = vunpack.c.h.b16 %v715
        %v4028 = vunpack.c.l.b16 %v716
        %v4029 = vunpack.c.h.b16 %v716
        %v4030 = vunpack.c.l.b16 %v717
        %v4031 = vunpack.c.h.b16 %v717
        %v4032 = vunpack.c.l.b16 %v718
        %v4033 = vunpack.c.h.b16 %v718
        %v4034 = vunpack.c.l.b16 %v719
        %v4035 = vunpack.c.h.b16 %v719
        %v4036 = vunpack.c.l.b16 %v720
        %v4037 = vunpack.c.h.b16 %v720
        %v4038 = vunpack.c.l.b16 %v721
        %v4039 = vunpack.c.h.b16 %v721
        %v4040 = vunpack.c.l.b16 %v722
        %v4041 = vunpack.c.h.b16 %v722
        %v4042 = vunpack.c.l.b16 %v723
        %v4043 = vunpack.c.h.b16 %v723
        %v4044 = vunpack.c.l.b16 %v724
        %v4045 = vunpack.c.h.b16 %v724
        %v4046 = vunpack.c.l.b16 %v725
        %v4047 = vunpack.c.h.b16 %v725
        %v4048 = vunpack.c.l.b16 %v726
        %v4049 = vunpack.c.h.b16 %v726
        %v4050 = vunpack.c.l.b16 %v727
        %v4051 = vunpack.c.h.b16 %v727
        %v4052 = vunpack.c.l.b16 %v728
        %v4053 = vunpack.c.h.b16 %v728
        %v4054 = vunpack.c.l.b16 %v729
        %v4055 = vunpack.c.h.b16 %v729
        %v4056 = vunpack.c.l.b16 %v730
        %v4057 = vunpack.c.h.b16 %v730
        %v4058 = vunpack.c.l.b16 %v731
        %v4059 = vunpack.c.h.b16 %v731
        %v4060 = vunpack.c.l.b16 %v732
        %v4061 = vunpack.c.h.b16 %v732
        %v4062 = vunpack.c.l.b16 %v733
        %v4063 = vunpack.c.h.b16 %v733
        %v4064 = vunpack.c.l.b16 %v734
        %v4065 = vunpack.c.h.b16 %v734
        %v4066 = vunpack.c.l.b16 %v735
        %v4067 = vunpack.c.h.b16 %v735
        %v4068 = vunpack.c.l.b16 %v736
        %v4069 = vunpack.c.h.b16 %v736
        %v4070 = vunpack.c.l.b16 %v737
        %v4071 = vunpack.c.h.b16 %v737
        %v4072 = vunpack.c.l.b16 %v738
        %v4073 = vunpack.c.h.b16 %v738
        %v4074 = vunpack.c.l.b16 %v739
        %v4075 = vunpack.c.h.b16 %v739
        %v4076 = vunpack.c.l.b16 %v740
        %v4077 = vunpack.c.h.b16 %v740
        %v4078 = vunpack.c.l.b16 %v741
        %v4079 = vunpack.c.h.b16 %v741
        %v4080 = vunpack.c.l.b16 %v742
        %v4081 = vunpack.c.h.b16 %v742
        %v4082 = vunpack.c.l.b16 %v743
        %v4083 = vunpack.c.h.b16 %v743
        %v4084 = vunpack.c.l.b16 %v744
        %v4085 = vunpack.c.h.b16 %v744
        %v4086 = vunpack.c.l.b16 %v745
        %v4087 = vunpack.c.h.b16 %v745
        %v4088 = vunpack.c.l.b16 %v746
        %v4089 = vunpack.c.h.b16 %v746
        %v4090 = vunpack.c.l.b16 %v747
        %v4091 = vunpack.c.h.b16 %v747
        %v4092 = vunpack.c.l.b16 %v748
        %v4093 = vunpack.c.h.b16 %v748
        %v4094 = vunpack.c.l.b16 %v749
        %v4095 = vunpack.c.h.b16 %v749
        %v4096 = vunpack.c.l.b16 %v750
        %v4097 = vunpack.c.h.b16 %v750
        %v4098 = vunpack.c.l.b16 %v751
        %v4099 = vunpack.c.h.b16 %v751
        %v4100 = vunpack.c.l.b16 %v752
        %v4101 = vunpack.c.h.b16 %v752
        %v4102 = vunpack.c.l.b16 %v753
        %v4103 = vunpack.c.h.b16 %v753
        %v4104 = vunpack.c.l.b16 %v754
        %v4105 = vunpack.c.h.b16 %v754
        %v4106 = vunpack.c.l.b16 %v755
        %v4107 = vunpack.c.h.b16 %v755
        %v4108 = vunpack.c.l.b16 %v756
        %v4109 = vunpack.c.h.b16 %v756
        %v4110 = vunpack.c.l.b16 %v757
        %v4111 = vunpack.c.h.b16 %v757
        %v4112 = vunpack.c.l.b16 %v758
        %v4113 = vunpack.c.h.b16 %v758
        %v4114 = vunpack.c.l.b16 %v759
        %v4115 = vunpack.c.h.b16 %v759
        %v4116 = vunpack.c.l.b16 %v760
        %v4117 = vunpack.c.h.b16 %v760
        %v4118 = vunpack.c.l.b16 %v761
        %v4119 = vunpack.c.h.b16 %v761
        %v4120 = vunpack.c.l.b16 %v762
        %v4121 = vunpack.c.h.b16 %v762
        %v4122 = vunpack.c.l.b16 %v763
        %v4123 = vunpack.c.h.b16 %v763
        %v4124 = vunpack.c.l.b16 %v764
        %v4125 = vunpack.c.h.b16 %v764
        %v4126 = vunpack.c.l.b16 %v765
        %v4127 = vunpack.c.h.b16 %v765
        %v4128 = vunpack.c.l.b16 %v766
        %v4129 = vunpack.c.h.b16 %v766
        %v4130 = vunpack.c.l.b16 %v767
        %v4131 = vunpack.c.h.b16 %v767
        %v4132 = vunpack.c.l.b16 %v768
        %v4133 = vunpack.c.h.b16 %v768
        %v4134 = vunpack.c.l.b16 %v769
        %v4135 = vunpack.c.h.b16 %v769
        %v4136 = vunpack.c.l.b16 %v770
        %v4137 = vunpack.c.h.b16 %v770
        %v4138 = vunpack.c.l.b16 %v771
        %v4139 = vunpack.c.h.b16 %v771
        %v4140 = vunpack.c.l.b16 %v772
        %v4141 = vunpack.c.h.b16 %v772
        %v4142 = vunpack.c.l.b16 %v773
        %v4143 = vunpack.c.h.b16 %v773
        %v4144 = vunpack.c.l.b16 %v774
        %v4145 = vunpack.c.h.b16 %v774
        %v4146 = vunpack.c.l.b16 %v775
        %v4147 = vunpack.c.h.b16 %v775
        %v4148 = vunpack.c.l.b16 %v776
        %v4149 = vunpack.c.h.b16 %v776
        %v4150 = vunpack.c.l.b16 %v777
        %v4151 = vunpack.c.h.b16 %v777
        %v4152 = vunpack.c.l.b16 %v778
        %v4153 = vunpack.c.h.b16 %v778
        %v4154 = vunpack.c.l.b16 %v779
        %v4155 = vunpack.c.h.b16 %v779
        %v4156 = vunpack.c.l.b16 %v780
        %v4157 = vunpack.c.h.b16 %v780
        %v4158 = vunpack.c.l.b16 %v781
        %v4159 = vunpack.c.h.b16 %v781
        %v4160 = vunpack.c.l.b16 %v782
        %v4161 = vunpack.c.h.b16 %v782
        %v4162 = vunpack.c.l.b16 %v783
        %v4163 = vunpack.c.h.b16 %v783
        %v4164 = vunpack.c.l.b16 %v784
        %v4165 = vunpack.c.h.b16 %v784
        %v4166 = vunpack.c.l.b16 %v785
        %v4167 = vunpack.c.h.b16 %v785
        %v4168 = vunpack.c.l.b16 %v786
        %v4169 = vunpack.c.h.b16 %v786
        %v4170 = vunpack.c.l.b16 %v787
        %v4171 = vunpack.c.h.b16 %v787
        %v4172 = vunpack.c.l.b16 %v788
        %v4173 = vunpack.c.h.b16 %v788
        %v4174 = vunpack.c.l.b16 %v789
        %v4175 = vunpack.c.h.b16 %v789
        %v4176 = vunpack.c.l.b16 %v790
        %v4177 = vunpack.c.h.b16 %v790
        %v4178 = vunpack.c.l.b16 %v791
        %v4179 = vunpack.c.h.b16 %v791
        %v4180 = vunpack.c.l.b16 %v792
        %v4181 = vunpack.c.h.b16 %v792
        %v4182 = vunpack.c.l.b16 %v793
        %v4183 = vunpack.c.h.b16 %v793
        %v4184 = vunpack.c.l.b16 %v794
        %v4185 = vunpack.c.h.b16 %v794
        %v4186 = vunpack.c.l.b16 %v795
        %v4187 = vunpack.c.h.b16 %v795
        %v4188 = vunpack.c.l.b16 %v796
        %v4189 = vunpack.c.h.b16 %v796
        %v4190 = vunpack.c.l.b16 %v797
        %v4191 = vunpack.c.h.b16 %v797
        %v4192 = vunpack.c.l.b16 %v798
        %v4193 = vunpack.c.h.b16 %v798
        %v4194 = vunpack.c.l.b16 %v799
        %v4195 = vunpack.c.h.b16 %v799
        %v4196 = vunpack.c.l.b16 %v800
        %v4197 = vunpack.c.h.b16 %v800
        %v4198 = vunpack.c.l.b16 %v801
        %v4199 = vunpack.c.h.b16 %v801
        %v4200 = vunpack.c.l.b16 %v802
        %v4201 = vunpack.c.h.b16 %v802
        %v4202 = vunpack.c.l.b16 %v803
        %v4203 = vunpack.c.h.b16 %v803
        %v4204 = vunpack.c.l.b16 %v804
        %v4205 = vunpack.c.h.b16 %v804
        %v4206 = vunpack.c.l.b16 %v805
        %v4207 = vunpack.c.h.b16 %v805
        %v4208 = vunpack.c.l.b16 %v806
        %v4209 = vunpack.c.h.b16 %v806
        %v4210 = vunpack.c.l.b16 %v807
        %v4211 = vunpack.c.h.b16 %v807
        %v4212 = vunpack.c.l.b16 %v808
        %v4213 = vunpack.c.h.b16 %v808
        %v4214 = vunpack.c.l.b16 %v809
        %v4215 = vunpack.c.h.b16 %v809
        %v4216 = vunpack.c.l.b16 %v810
        %v4217 = vunpack.c.h.b16 %v810
        %v4218 = vunpack.c.l.b16 %v811
        %v4219 = vunpack.c.h.b16 %v811
        %v4220 = vunpack.c.l.b16 %v812
        %v4221 = vunpack.c.h.b16 %v812
        %v4222 = vunpack.c.l.b16 %v813
        %v4223 = vunpack.c.h.b16 %v813
        %v4224 = vunpack.c.l.b16 %v814
        %v4225 = vunpack.c.h.b16 %v814
        %v4226 = vunpack.c.l.b16 %v815
        %v4227 = vunpack.c.h.b16 %v815
        %v4228 = vunpack.c.l.b16 %v816
        %v4229 = vunpack.c.h.b16 %v816
        %v4230 = vunpack.c.l.b16 %v817
        %v4231 = vunpack.c.h.b16 %v817
        %v4232 = vunpack.c.l.b16 %v818
        %v4233 = vunpack.c.h.b16 %v818
        %v4234 = vunpack.c.l.b16 %v819
        %v4235 = vunpack.c.h.b16 %v819
        %v4236 = vunpack.c.l.b16 %v820
        %v4237 = vunpack.c.h.b16 %v820
        %v4238 = vunpack.c.l.b16 %v821
        %v4239 = vunpack.c.h.b16 %v821
        %v4240 = vunpack.c.l.b16 %v822
        %v4241 = vunpack.c.h.b16 %v822
        %v4242 = vunpack.c.l.b16 %v823
        %v4243 = vunpack.c.h.b16 %v823
        %v4244 = vunpack.c.l.b16 %v824
        %v4245 = vunpack.c.h.b16 %v824
        %v4246 = vunpack.c.l.b16 %v825
        %v4247 = vunpack.c.h.b16 %v825
        %v4248 = vunpack.c.l.b16 %v826
        %v4249 = vunpack.c.h.b16 %v826
        %v4250 = vunpack.c.l.b16 %v827
        %v4251 = vunpack.c.h.b16 %v827
        %v4252 = vunpack.c.l.b16 %v828
        %v4253 = vunpack.c.h.b16 %v828
        %v4254 = vunpack.c.l.b16 %v829
        %v4255 = vunpack.c.h.b16 %v829
        %v4256 = vunpack.c.l.b16 %v830
        %v4257 = vunpack.c.h.b16 %v830
        %v4258 = vunpack.c.l.b16 %v831
        %v4259 = vunpack.c.h.b16 %v831
        %v4260 = vunpack.c.l.b16 %v832
        %v4261 = vunpack.c.h.b16 %v832
        %v4262 = vunpack.c.l.b16 %v833
        %v4263 = vunpack.c.h.b16 %v833
        %v4264 = vunpack.c.l.b16 %v834
        %v4265 = vunpack.c.h.b16 %v834
        %v4266 = vunpack.c.l.b16 %v835
        %v4267 = vunpack.c.h.b16 %v835
        %v4268 = vunpack.c.l.b16 %v836
        %v4269 = vunpack.c.h.b16 %v836
        %v4270 = vunpack.c.l.b16 %v837
        %v4271 = vunpack.c.h.b16 %v837
        %v4272 = vunpack.c.l.b16 %v838
        %v4273 = vunpack.c.h.b16 %v838
        %v4274 = vunpack.c.l.b16 %v839
        %v4275 = vunpack.c.h.b16 %v839
        %v4276 = vunpack.c.l.b16 %v840
        %v4277 = vunpack.c.h.b16 %v840
        %v4278 = vunpack.c.l.b16 %v841
        %v4279 = vunpack.c.h.b16 %v841
        %v4280 = vunpack.c.l.b16 %v842
        %v4281 = vunpack.c.h.b16 %v842
        %v4282 = vunpack.c.l.b16 %v843
        %v4283 = vunpack.c.h.b16 %v843
        %v4284 = vunpack.c.l.b16 %v844
        %v4285 = vunpack.c.h.b16 %v844
        %v4286 = vunpack.c.l.b16 %v845
        %v4287 = vunpack.c.h.b16 %v845
        %v4288 = vunpack.c.l.b16 %v846
        %v4289 = vunpack.c.h.b16 %v846
        %v4290 = vunpack.c.l.b16 %v847
        %v4291 = vunpack.c.h.b16 %v847
        %v4292 = vunpack.c.l.b16 %v848
        %v4293 = vunpack.c.h.b16 %v848
        %v4294 = vunpack.c.l.b16 %v849
        %v4295 = vunpack.c.h.b16 %v849
        %v4296 = vunpack.c.l.b16 %v850
        %v4297 = vunpack.c.h.b16 %v850
        %v4298 = vunpack.c.l.b16 %v851
        %v4299 = vunpack.c.h.b16 %v851
        %v4300 = vunpack.c.l.b16 %v852
        %v4301 = vunpack.c.h.b16 %v852
        %v4302 = vunpack.c.l.b16 %v853
        %v4303 = vunpack.c.h.b16 %v853
        %v4304 = vunpack.c.l.b16 %v854
        %v4305 = vunpack.c.h.b16 %v854
        %v4306 = vunpack.c.l.b16 %v855
        %v4307 = vunpack.c.h.b16 %v855
        %v4308 = vunpack.c.l.b16 %v856
        %v4309 = vunpack.c.h.b16 %v856
        %v4310 = vunpack.c.l.b16 %v857
        %v4311 = vunpack.c.h.b16 %v857
        %v4312 = vunpack.c.l.b16 %v858
        %v4313 = vunpack.c.h.b16 %v858
        %v4314 = vunpack.c.l.b16 %v859
        %v4315 = vunpack.c.h.b16 %v859
        %v4316 = vunpack.c.l.b16 %v860
        %v4317 = vunpack.c.h.b16 %v860
        %v4318 = vunpack.c.l.b16 %v861
        %v4319 = vunpack.c.h.b16 %v861
        %v4320 = vunpack.c.l.b16 %v862
        %v4321 = vunpack.c.h.b16 %v862
        %v4322 = vunpack.c.l.b16 %v863
        %v4323 = vunpack.c.h.b16 %v863
        %v4324 = vunpack.c.l.b16 %v864
        %v4325 = vunpack.c.h.b16 %v864
        %v4326 = vunpack.c.l.b16 %v865
        %v4327 = vunpack.c.h.b16 %v865
        %v4328 = vunpack.c.l.b16 %v866
        %v4329 = vunpack.c.h.b16 %v866
        %v4330 = vunpack.c.l.b16 %v867
        %v4331 = vunpack.c.h.b16 %v867
        %v4332 = vunpack.c.l.b16 %v868
        %v4333 = vunpack.c.h.b16 %v868
        %v4334 = vunpack.c.l.b16 %v869
        %v4335 = vunpack.c.h.b16 %v869
        %v4336 = vunpack.c.l.b16 %v870
        %v4337 = vunpack.c.h.b16 %v870
        %v4338 = vunpack.c.l.b16 %v871
        %v4339 = vunpack.c.h.b16 %v871
        %v4340 = vunpack.c.l.b16 %v872
        %v4341 = vunpack.c.h.b16 %v872
        %v4342 = vunpack.c.l.b16 %v873
        %v4343 = vunpack.c.h.b16 %v873
        %v4344 = vunpack.c.l.b16 %v874
        %v4345 = vunpack.c.h.b16 %v874
        %v4346 = vunpack.c.l.b16 %v875
        %v4347 = vunpack.c.h.b16 %v875
        %v4348 = vunpack.c.l.b16 %v876
        %v4349 = vunpack.c.h.b16 %v876
        %v4350 = vunpack.c.l.b16 %v877
        %v4351 = vunpack.c.h.b16 %v877
        %v4352 = vunpack.c.l.b16 %v878
        %v4353 = vunpack.c.h.b16 %v878
        %v4354 = vunpack.c.l.b16 %v879
        %v4355 = vunpack.c.h.b16 %v879
        %v4356 = vunpack.c.l.b16 %v880
        %v4357 = vunpack.c.h.b16 %v880
        %v4358 = vunpack.c.l.b16 %v881
        %v4359 = vunpack.c.h.b16 %v881
        %v4360 = vunpack.c.l.b16 %v882
        %v4361 = vunpack.c.h.b16 %v882
        %v4362 = vunpack.c.l.b16 %v883
        %v4363 = vunpack.c.h.b16 %v883
        %v4364 = vunpack.c.l.b16 %v884
        %v4365 = vunpack.c.h.b16 %v884
        %v4366 = vunpack.c.l.b16 %v885
        %v4367 = vunpack.c.h.b16 %v885
        %v4368 = vunpack.c.l.b16 %v886
        %v4369 = vunpack.c.h.b16 %v886
        %v4370 = vunpack.c.l.b16 %v887
        %v4371 = vunpack.c.h.b16 %v887
        %v4372 = vunpack.c.l.b16 %v888
        %v4373 = vunpack.c.h.b16 %v888
        %v4374 = vunpack.c.l.b16 %v889
        %v4375 = vunpack.c.h.b16 %v889
        %v4376 = vunpack.c.l.b16 %v890
        %v4377 = vunpack.c.h.b16 %v890
        %v4378 = vunpack.c.l.b16 %v891
        %v4379 = vunpack.c.h.b16 %v891
        %v4380 = vunpack.c.l.b16 %v892
        %v4381 = vunpack.c.h.b16 %v892
        %v4382 = vunpack.c.l.b16 %v893
        %v4383 = vunpack.c.h.b16 %v893
        %v4384 = vunpack.c.l.b16 %v894
        %v4385 = vunpack.c.h.b16 %v894
        %v4386 = vunpack.c.l.b16 %v895
        %v4387 = vunpack.c.h.b16 %v895
        %v4388 = vunpack.c.l.b16 %v896
        %v4389 = vunpack.c.h.b16 %v896
        %v4390 = vunpack.c.l.b16 %v897
        %v4391 = vunpack.c.h.b16 %v897
        %v4392 = vunpack.c.l.b16 %v898
        %v4393 = vunpack.c.h.b16 %v898
        %v4394 = vunpack.c.l.b16 %v899
        %v4395 = vunpack.c.h.b16 %v899
        %v4396 = vunpack.c.l.b16 %v900
        %v4397 = vunpack.c.h.b16 %v900
        %v4398 = vunpack.c.l.b16 %v901
        %v4399 = vunpack.c.h.b16 %v901
        %v4400 = vunpack.c.l.b16 %v902
        %v4401 = vunpack.c.h.b16 %v902
        %v4402 = vunpack.c.l.b16 %v903
        %v4403 = vunpack.c.h.b16 %v903
        %v4404 = vunpack.c.l.b16 %v904
        %v4405 = vunpack.c.h.b16 %v904
        %v4406 = vunpack.c.l.b16 %v905
        %v4407 = vunpack.c.h.b16 %v905
        %v4408 = vunpack.c.l.b16 %v906
        %v4409 = vunpack.c.h.b16 %v906
        %v4410 = vunpack.c.l.b16 %v907
        %v4411 = vunpack.c.h.b16 %v907
        %v4412 = vunpack.c.l.b16 %v908
        %v4413 = vunpack.c.h.b16 %v908
        %v4414 = vunpack.c.l.b16 %v909
        %v4415 = vunpack.c.h.b16 %v909
        %v4416 = vunpack.c.l.b16 %v910
        %v4417 = vunpack.c.h.b16 %v910
        %v4418 = vunpack.c.l.b16 %v911
        %v4419 = vunpack.c.h.b16 %v911
        %v4420 = vunpack.c.l.b16 %v912
        %v4421 = vunpack.c.h.b16 %v912
        %v4422 = vunpack.c.l.b16 %v913
        %v4423 = vunpack.c.h.b16 %v913
        %v4424 = vunpack.c.l.b16 %v914
        %v4425 = vunpack.c.h.b16 %v914
        %v4426 = vunpack.c.l.b16 %v915
        %v4427 = vunpack.c.h.b16 %v915
        %v4428 = vunpack.c.l.b16 %v916
        %v4429 = vunpack.c.h.b16 %v916
        %v4430 = vunpack.c.l.b16 %v917
        %v4431 = vunpack.c.h.b16 %v917
        %v4432 = vunpack.c.l.b16 %v918
        %v4433 = vunpack.c.h.b16 %v918
        %v4434 = vunpack.c.l.b16 %v919
        %v4435 = vunpack.c.h.b16 %v919
        %v4436 = vunpack.c.l.b16 %v920
        %v4437 = vunpack.c.h.b16 %v920
        %v4438 = vunpack.c.l.b16 %v921
        %v4439 = vunpack.c.h.b16 %v921
        %v4440 = vunpack.c.l.b16 %v922
        %v4441 = vunpack.c.h.b16 %v922
        %v4442 = vunpack.c.l.b16 %v923
        %v4443 = vunpack.c.h.b16 %v923
        %v4444 = vunpack.c.l.b16 %v924
        %v4445 = vunpack.c.h.b16 %v924
        %v4446 = vunpack.c.l.b16 %v925
        %v4447 = vunpack.c.h.b16 %v925
        %v4448 = vunpack.c.l.b16 %v926
        %v4449 = vunpack.c.h.b16 %v926
        %v4450 = vunpack.c.l.b16 %v927
        %v4451 = vunpack.c.h.b16 %v927
        %v4452 = vunpack.c.l.b16 %v928
        %v4453 = vunpack.c.h.b16 %v928
        %v4454 = vunpack.c.l.b16 %v929
        %v4455 = vunpack.c.h.b16 %v929
        %v4456 = vunpack.c.l.b16 %v930
        %v4457 = vunpack.c.h.b16 %v930
        %v4458 = vunpack.c.l.b16 %v931
        %v4459 = vunpack.c.h.b16 %v931
        %v4460 = vunpack.c.l.b16 %v932
        %v4461 = vunpack.c.h.b16 %v932
        %v4462 = vunpack.c.l.b16 %v933
        %v4463 = vunpack.c.h.b16 %v933
        %v4464 = vunpack.c.l.b16 %v934
        %v4465 = vunpack.c.h.b16 %v934
        %v4466 = vunpack.c.l.b16 %v935
        %v4467 = vunpack.c.h.b16 %v935
        %v4468 = vunpack.c.l.b16 %v936
        %v4469 = vunpack.c.h.b16 %v936
        %v4470 = vunpack.c.l.b16 %v937
        %v4471 = vunpack.c.h.b16 %v937
        %v4472 = vunpack.c.l.b16 %v938
        %v4473 = vunpack.c.h.b16 %v938
        %v4474 = vunpack.c.l.b16 %v939
        %v4475 = vunpack.c.h.b16 %v939
        %v4476 = vunpack.c.l.b16 %v940
        %v4477 = vunpack.c.h.b16 %v940
        %v4478 = vunpack.c.l.b16 %v941
        %v4479 = vunpack.c.h.b16 %v941
        %v4480 = vunpack.c.l.b16 %v942
        %v4481 = vunpack.c.h.b16 %v942
        %v4482 = vunpack.c.l.b16 %v943
        %v4483 = vunpack.c.h.b16 %v943
        %v4484 = vunpack.c.l.b16 %v944
        %v4485 = vunpack.c.h.b16 %v944
        %v4486 = vunpack.c.l.b16 %v945
        %v4487 = vunpack.c.h.b16 %v945
        %v4488 = vunpack.c.l.b16 %v946
        %v4489 = vunpack.c.h.b16 %v946
        %v4490 = vunpack.c.l.b16 %v947
        %v4491 = vunpack.c.h.b16 %v947
        %v4492 = vunpack.c.l.b16 %v948
        %v4493 = vunpack.c.h.b16 %v948
        %v4494 = vunpack.c.l.b16 %v949
        %v4495 = vunpack.c.h.b16 %v949
        %v4496 = vunpack.c.l.b16 %v950
        %v4497 = vunpack.c.h.b16 %v950
        %v4498 = vunpack.c.l.b16 %v951
        %v4499 = vunpack.c.h.b16 %v951
        %v4500 = vunpack.c.l.b16 %v952
        %v4501 = vunpack.c.h.b16 %v952
        %v4502 = vunpack.c.l.b16 %v953
        %v4503 = vunpack.c.h.b16 %v953
        %v4504 = vunpack.c.l.b16 %v954
        %v4505 = vunpack.c.h.b16 %v954
        %v4506 = vunpack.c.l.b16 %v955
        %v4507 = vunpack.c.h.b16 %v955
        %v4508 = vunpack.c.l.b16 %v956
        %v4509 = vunpack.c.h.b16 %v956
        %v4510 = vunpack.c.l.b16 %v957
        %v4511 = vunpack.c.h.b16 %v957
        %v4512 = vunpack.c.l.b16 %v958
        %v4513 = vunpack.c.h.b16 %v958
        %v4514 = vunpack.c.l.b16 %v959
        %v4515 = vunpack.c.h.b16 %v959
        %v4516 = vunpack.c.l.b16 %v960
        %v4517 = vunpack.c.h.b16 %v960
        %v4518 = vunpack.c.l.b16 %v961
        %v4519 = vunpack.c.h.b16 %v961
        %v4520 = vunpack.c.l.b16 %v962
        %v4521 = vunpack.c.h.b16 %v962
        %v4522 = vunpack.c.l.b16 %v963
        %v4523 = vunpack.c.h.b16 %v963
        %v4524 = vunpack.c.l.b16 %v964
        %v4525 = vunpack.c.h.b16 %v964
        %v4526 = vunpack.c.l.b16 %v965
        %v4527 = vunpack.c.h.b16 %v965
        %v4528 = vunpack.c.l.b16 %v966
        %v4529 = vunpack.c.h.b16 %v966
        %v4530 = vunpack.c.l.b16 %v967
        %v4531 = vunpack.c.h.b16 %v967
        %v4532 = vunpack.c.l.b16 %v968
        %v4533 = vunpack.c.h.b16 %v968
        %v4534 = vunpack.c.l.b16 %v969
        %v4535 = vunpack.c.h.b16 %v969
        %v4536 = vunpack.c.l.b16 %v970
        %v4537 = vunpack.c.h.b16 %v970
        %v4538 = vunpack.c.l.b16 %v971
        %v4539 = vunpack.c.h.b16 %v971
        %v4540 = vunpack.c.l.b16 %v972
        %v4541 = vunpack.c.h.b16 %v972
        %v4542 = vunpack.c.l.b16 %v973
        %v4543 = vunpack.c.h.b16 %v973
        %v4544 = vunpack.c.l.b16 %v974
        %v4545 = vunpack.c.h.b16 %v974
        %v4546 = vunpack.c.l.b16 %v975
        %v4547 = vunpack.c.h.b16 %v975
        %v4548 = vunpack.c.l.b16 %v976
        %v4549 = vunpack.c.h.b16 %v976
        %v4550 = vunpack.c.l.b16 %v977
        %v4551 = vunpack.c.h.b16 %v977
        %v4552 = vunpack.c.l.b16 %v978
        %v4553 = vunpack.c.h.b16 %v978
        %v4554 = vunpack.c.l.b16 %v979
        %v4555 = vunpack.c.h.b16 %v979
        %v4556 = vunpack.c.l.b16 %v980
        %v4557 = vunpack.c.h.b16 %v980
        %v4558 = vunpack.c.l.b16 %v981
        %v4559 = vunpack.c.h.b16 %v981
        %v4560 = vunpack.c.l.b16 %v982
        %v4561 = vunpack.c.h.b16 %v982
        %v4562 = vunpack.c.l.b16 %v983
        %v4563 = vunpack.c.h.b16 %v983
        %v4564 = vunpack.c.l.b16 %v984
        %v4565 = vunpack.c.h.b16 %v984
        %v4566 = vunpack.c.l.b16 %v985
        %v4567 = vunpack.c.h.b16 %v985
        %v4568 = vunpack.c.l.b16 %v986
        %v4569 = vunpack.c.h.b16 %v986
        %v4570 = vunpack.c.l.b16 %v987
        %v4571 = vunpack.c.h.b16 %v987
        %v4572 = vunpack.c.l.b16 %v988
        %v4573 = vunpack.c.h.b16 %v988
        %v4574 = vunpack.c.l.b16 %v989
        %v4575 = vunpack.c.h.b16 %v989
        %v4576 = vunpack.c.l.b16 %v990
        %v4577 = vunpack.c.h.b16 %v990
        %v4578 = vunpack.c.l.b16 %v991
        %v4579 = vunpack.c.h.b16 %v991
        %v4580 = vunpack.c.l.b16 %v992
        %v4581 = vunpack.c.h.b16 %v992
        %v4582 = vunpack.c.l.b16 %v993
        %v4583 = vunpack.c.h.b16 %v993
        %v4584 = vunpack.c.l.b16 %v994
        %v4585 = vunpack.c.h.b16 %v994
        %v4586 = vunpack.c.l.b16 %v995
        %v4587 = vunpack.c.h.b16 %v995
        %v4588 = vunpack.c.l.b16 %v996
        %v4589 = vunpack.c.h.b16 %v996
        %v4590 = vunpack.c.l.b16 %v997
        %v4591 = vunpack.c.h.b16 %v997
        %v4592 = vunpack.c.l.b16 %v998
        %v4593 = vunpack.c.h.b16 %v998
        %v4594 = vunpack.c.l.b16 %v999
        %v4595 = vunpack.c.h.b16 %v999
        %v4596 = vunpack.c.l.b16 %v1000
        %v4597 = vunpack.c.h.b16 %v1000
        %v4598 = vunpack.c.l.b16 %v1001
        %v4599 = vunpack.c.h.b16 %v1001
        %v4600 = vunpack.c.l.b16 %v1002
        %v4601 = vunpack.c.h.b16 %v1002
        %v4602 = vunpack.c.l.b16 %v1003
        %v4603 = vunpack.c.h.b16 %v1003
        %v4604 = vunpack.c.l.b16 %v1004
        %v4605 = vunpack.c.h.b16 %v1004
        %v4606 = vunpack.c.l.b16 %v1005
        %v4607 = vunpack.c.h.b16 %v1005
        %v4608 = vunpack.c.l.b16 %v1006
        %v4609 = vunpack.c.h.b16 %v1006
        %v4610 = vunpack.c.l.b16 %v1007
        %v4611 = vunpack.c.h.b16 %v1007
        %v4612 = vunpack.c.l.b16 %v1008
        %v4613 = vunpack.c.h.b16 %v1008
        %v4614 = vunpack.c.l.b16 %v1009
        %v4615 = vunpack.c.h.b16 %v1009
        %v4616 = vunpack.c.l.b16 %v1010
        %v4617 = vunpack.c.h.b16 %v1010
        %v4618 = vunpack.c.l.b16 %v1011
        %v4619 = vunpack.c.h.b16 %v1011
        %v4620 = vunpack.c.l.b16 %v1012
        %v4621 = vunpack.c.h.b16 %v1012
        %v4622 = vunpack.c.l.b16 %v1013
        %v4623 = vunpack.c.h.b16 %v1013
        %v4624 = vunpack.c.l.b16 %v1014
        %v4625 = vunpack.c.h.b16 %v1014
        %v4626 = vunpack.c.l.b16 %v1015
        %v4627 = vunpack.c.h.b16 %v1015
        %v4628 = vunpack.c.l.b16 %v1016
        %v4629 = vunpack.c.h.b16 %v1016
        %v4630 = vunpack.c.l.b16 %v1017
        %v4631 = vunpack.c.h.b16 %v1017
        %v4632 = vunpack.c.l.b16 %v1018
        %v4633 = vunpack.c.h.b16 %v1018
        %v4634 = vunpack.c.l.b16 %v1019
        %v4635 = vunpack.c.h.b16 %v1019
        %v4636 = vunpack.c.l.b16 %v1020
        %v4637 = vunpack.c.h.b16 %v1020
        %v4638 = vunpack.c.l.b16 %v1021
        %v4639 = vunpack.c.h.b16 %v1021
        %v4640 = vunpack.c.l.b16 %v1022
        %v4641 = vunpack.c.h.b16 %v1022
        %v4642 = vunpack.c.l.b16 %v1023
        %v4643 = vunpack.c.h.b16 %v1023
        %v4644 = vunpack.c.l.b16 %v1024
        %v4645 = vunpack.c.h.b16 %v1024
        %v4646 = vunpack.c.l.b16 %v1025
        %v4647 = vunpack.c.h.b16 %v1025
        %v4648 = vunpack.c.l.b16 %v1026
        %v4649 = vunpack.c.h.b16 %v1026
        %v4650 = vunpack.c.l.b16 %v1027
        %v4651 = vunpack.c.h.b16 %v1027
        %v4652 = vunpack.c.l.b16 %v1028
        %v4653 = vunpack.c.h.b16 %v1028
        %v4654 = vunpack.c.l.b16 %v1029
        %v4655 = vunpack.c.h.b16 %v1029
        %v4656 = vunpack.c.l.b16 %v1030
        %v4657 = vunpack.c.h.b16 %v1030
        %v4658 = vunpack.c.l.b16 %v1031
        %v4659 = vunpack.c.h.b16 %v1031
        %v4660 = vunpack.c.l.b16 %v1032
        %v4661 = vunpack.c.h.b16 %v1032
        %v4662 = vunpack.c.l.b16 %v1033
        %v4663 = vunpack.c.h.b16 %v1033
        %v4664 = vunpack.c.l.b16 %v1034
        %v4665 = vunpack.c.h.b16 %v1034
        %v4666 = vunpack.c.l.b16 %v1035
        %v4667 = vunpack.c.h.b16 %v1035
        %v4668 = vunpack.c.l.b16 %v1036
        %v4669 = vunpack.c.h.b16 %v1036
        %v4670 = vunpack.c.l.b16 %v1037
        %v4671 = vunpack.c.h.b16 %v1037
        %v4672 = vunpack.c.l.b16 %v1038
        %v4673 = vunpack.c.h.b16 %v1038
        %v4674 = vunpack.c.l.b16 %v1039
        %v4675 = vunpack.c.h.b16 %v1039
        %v4676 = vunpack.c.l.b16 %v1040
        %v4677 = vunpack.c.h.b16 %v1040
        %v4678 = vunpack.c.l.b16 %v1041
        %v4679 = vunpack.c.h.b16 %v1041
        %v4680 = vunpack.c.l.b16 %v1042
        %v4681 = vunpack.c.h.b16 %v1042
        %v4682 = vunpack.c.l.b16 %v1043
        %v4683 = vunpack.c.h.b16 %v1043
        %v4684 = vunpack.c.l.b16 %v1044
        %v4685 = vunpack.c.h.b16 %v1044
        %v4686 = vunpack.c.l.b16 %v1045
        %v4687 = vunpack.c.h.b16 %v1045
        %v4688 = vunpack.c.l.b16 %v1046
        %v4689 = vunpack.c.h.b16 %v1046
        %v4690 = vunpack.c.l.b16 %v1047
        %v4691 = vunpack.c.h.b16 %v1047
        %v4692 = vunpack.c.l.b16 %v1048
        %v4693 = vunpack.c.h.b16 %v1048
        %v4694 = vunpack.c.l.b16 %v1049
        %v4695 = vunpack.c.h.b16 %v1049
        %v4696 = vunpack.c.l.b16 %v1050
        %v4697 = vunpack.c.h.b16 %v1050
        %v4698 = vunpack.c.l.b16 %v1051
        %v4699 = vunpack.c.h.b16 %v1051
        %v4700 = vunpack.c.l.b16 %v1052
        %v4701 = vunpack.c.h.b16 %v1052
        %v4702 = vunpack.c.l.b16 %v1053
        %v4703 = vunpack.c.h.b16 %v1053
        %v4704 = vunpack.c.l.b16 %v1054
        %v4705 = vunpack.c.h.b16 %v1054
        %v4706 = vunpack.c.l.b16 %v1055
        %v4707 = vunpack.c.h.b16 %v1055
        %v4708 = vunpack.c.l.b16 %v1056
        %v4709 = vunpack.c.h.b16 %v1056
        %v4710 = vunpack.c.l.b16 %v1057
        %v4711 = vunpack.c.h.b16 %v1057
        %v4712 = vunpack.c.l.b16 %v1058
        %v4713 = vunpack.c.h.b16 %v1058
        %v4714 = vunpack.c.l.b16 %v1059
        %v4715 = vunpack.c.h.b16 %v1059
        %v4716 = vunpack.c.l.b16 %v1060
        %v4717 = vunpack.c.h.b16 %v1060
        %v4718 = vunpack.c.l.b16 %v1061
        %v4719 = vunpack.c.h.b16 %v1061
        %v4720 = vunpack.c.l.b16 %v1062
        %v4721 = vunpack.c.h.b16 %v1062
        %v4722 = vunpack.c.l.b16 %v1063
        %v4723 = vunpack.c.h.b16 %v1063
        %v4724 = vunpack.c.l.b16 %v1064
        %v4725 = vunpack.c.h.b16 %v1064
        %v4726 = vunpack.c.l.b16 %v1065
        %v4727 = vunpack.c.h.b16 %v1065
        %v4728 = vunpack.c.l.b16 %v1066
        %v4729 = vunpack.c.h.b16 %v1066
        %v4730 = vunpack.c.l.b16 %v1067
        %v4731 = vunpack.c.h.b16 %v1067
        %v4732 = vunpack.c.l.b16 %v1068
        %v4733 = vunpack.c.h.b16 %v1068
        %v4734 = vunpack.c.l.b16 %v1069
        %v4735 = vunpack.c.h.b16 %v1069
        %v4736 = vunpack.c.l.b16 %v1070
        %v4737 = vunpack.c.h.b16 %v1070
        %v4738 = vunpack.c.l.b16 %v1071
        %v4739 = vunpack.c.h.b16 %v1071
        %v4740 = vunpack.c.l.b16 %v1072
        %v4741 = vunpack.c.h.b16 %v1072
        %v4742 = vunpack.c.l.b16 %v1073
        %v4743 = vunpack.c.h.b16 %v1073
        %v4744 = vunpack.c.l.b16 %v1074
        %v4745 = vunpack.c.h.b16 %v1074
        %v4746 = vunpack.c.l.b16 %v1075
        %v4747 = vunpack.c.h.b16 %v1075
        %v4748 = vunpack.c.l.b16 %v1076
        %v4749 = vunpack.c.h.b16 %v1076
        %v4750 = vunpack.c.l.b16 %v1077
        %v4751 = vunpack.c.h.b16 %v1077
        %v4752 = vunpack.c.l.b16 %v1078
        %v4753 = vunpack.c.h.b16 %v1078
        %v4754 = vunpack.c.l.b16 %v1079
        %v4755 = vunpack.c.h.b16 %v1079
        %v4756 = vunpack.c.l.b16 %v1080
        %v4757 = vunpack.c.h.b16 %v1080
        %v4758 = vunpack.c.l.b16 %v1081
        %v4759 = vunpack.c.h.b16 %v1081
        %v4760 = vunpack.c.l.b16 %v1082
        %v4761 = vunpack.c.h.b16 %v1082
        %v4762 = vunpack.c.l.b16 %v1083
        %v4763 = vunpack.c.h.b16 %v1083
        %v4764 = vunpack.c.l.b16 %v1084
        %v4765 = vunpack.c.h.b16 %v1084
        %v4766 = vunpack.c.l.b16 %v1085
        %v4767 = vunpack.c.h.b16 %v1085
        %v4768 = vunpack.c.l.b16 %v1086
        %v4769 = vunpack.c.h.b16 %v1086
        %v4770 = vunpack.c.l.b16 %v1087
        %v4771 = vunpack.c.h.b16 %v1087
        %v4772 = vunpack.c.l.b16 %v1088
        %v4773 = vunpack.c.h.b16 %v1088
        %v4774 = vunpack.c.l.b16 %v1089
        %v4775 = vunpack.c.h.b16 %v1089
        %v4776 = vunpack.c.l.b16 %v1090
        %v4777 = vunpack.c.h.b16 %v1090
        %v4778 = vunpack.c.l.b16 %v1091
        %v4779 = vunpack.c.h.b16 %v1091
        %v4780 = vunpack.c.l.b16 %v1092
        %v4781 = vunpack.c.h.b16 %v1092
        %v4782 = vunpack.c.l.b16 %v1093
        %v4783 = vunpack.c.h.b16 %v1093
        %v4784 = vunpack.c.l.b16 %v1094
        %v4785 = vunpack.c.h.b16 %v1094
        %v4786 = vunpack.c.l.b16 %v1095
        %v4787 = vunpack.c.h.b16 %v1095
        %v4788 = vunpack.c.l.b16 %v1096
        %v4789 = vunpack.c.h.b16 %v1096
        %v4790 = vunpack.c.l.b16 %v1097
        %v4791 = vunpack.c.h.b16 %v1097
        %v4792 = vunpack.c.l.b16 %v1098
        %v4793 = vunpack.c.h.b16 %v1098
        %v4794 = vunpack.c.l.b16 %v1099
        %v4795 = vunpack.c.h.b16 %v1099
        %v4796 = vunpack.c.l.b16 %v1100
        %v4797 = vunpack.c.h.b16 %v1100
        %v4798 = vunpack.c.l.b16 %v1101
        %v4799 = vunpack.c.h.b16 %v1101
        %v4800 = vunpack.c.l.b16 %v1102
        %v4801 = vunpack.c.h.b16 %v1102
        %v4802 = vunpack.c.l.b16 %v1103
        %v4803 = vunpack.c.h.b16 %v1103
        %v4804 = vunpack.c.l.b16 %v1104
        %v4805 = vunpack.c.h.b16 %v1104
        %v4806 = vunpack.c.l.b16 %v1105
        %v4807 = vunpack.c.h.b16 %v1105
        %v4808 = vunpack.c.l.b16 %v1106
        %v4809 = vunpack.c.h.b16 %v1106
        %v4810 = vunpack.c.l.b16 %v1107
        %v4811 = vunpack.c.h.b16 %v1107
        %v4812 = vunpack.c.l.b16 %v1108
        %v4813 = vunpack.c.h.b16 %v1108
        %v4814 = vunpack.c.l.b16 %v1109
        %v4815 = vunpack.c.h.b16 %v1109
        %v4816 = vunpack.c.l.b16 %v1110
        %v4817 = vunpack.c.h.b16 %v1110
        %v4818 = vunpack.c.l.b16 %v1111
        %v4819 = vunpack.c.h.b16 %v1111
        %v4820 = vunpack.c.l.b16 %v1112
        %v4821 = vunpack.c.h.b16 %v1112
        %v4822 = vunpack.c.l.b16 %v1113
        %v4823 = vunpack.c.h.b16 %v1113
        %v4824 = vunpack.c.l.b16 %v1114
        %v4825 = vunpack.c.h.b16 %v1114
        %v4826 = vunpack.c.l.b16 %v1115
        %v4827 = vunpack.c.h.b16 %v1115
        %v4828 = vunpack.c.l.b16 %v1116
        %v4829 = vunpack.c.h.b16 %v1116
        %v4830 = vunpack.c.l.b16 %v1117
        %v4831 = vunpack.c.h.b16 %v1117
        %v4832 = vunpack.c.l.b16 %v1118
        %v4833 = vunpack.c.h.b16 %v1118
        %v4834 = vunpack.c.l.b16 %v1119
        %v4835 = vunpack.c.h.b16 %v1119
        %v4836 = vunpack.c.l.b16 %v1120
        %v4837 = vunpack.c.h.b16 %v1120
        %v4838 = vunpack.c.l.b16 %v1121
        %v4839 = vunpack.c.h.b16 %v1121
        %v4840 = vunpack.c.l.b16 %v1122
        %v4841 = vunpack.c.h.b16 %v1122
        %v4842 = vunpack.c.l.b16 %v1123
        %v4843 = vunpack.c.h.b16 %v1123
        %v4844 = vunpack.c.l.b16 %v1124
        %v4845 = vunpack.c.h.b16 %v1124
        %v4846 = vunpack.c.l.b16 %v1125
        %v4847 = vunpack.c.h.b16 %v1125
        %v4848 = vunpack.c.l.b16 %v1126
        %v4849 = vunpack.c.h.b16 %v1126
        %v4850 = vunpack.c.l.b16 %v1127
        %v4851 = vunpack.c.h.b16 %v1127
        %v4852 = vunpack.c.l.b16 %v1128
        %v4853 = vunpack.c.h.b16 %v1128
        %v4854 = vunpack.c.l.b16 %v1129
        %v4855 = vunpack.c.h.b16 %v1129
        %v4856 = vunpack.c.l.b16 %v1130
        %v4857 = vunpack.c.h.b16 %v1130
        %v4858 = vunpack.c.l.b16 %v1131
        %v4859 = vunpack.c.h.b16 %v1131
        %v4860 = vunpack.c.l.b16 %v1132
        %v4861 = vunpack.c.h.b16 %v1132
        %v4862 = vunpack.c.l.b16 %v1133
        %v4863 = vunpack.c.h.b16 %v1133
        %v4864 = vunpack.c.l.b16 %v1134
        %v4865 = vunpack.c.h.b16 %v1134
        %v4866 = vunpack.c.l.b16 %v1135
        %v4867 = vunpack.c.h.b16 %v1135
        %v4868 = vunpack.c.l.b16 %v1136
        %v4869 = vunpack.c.h.b16 %v1136
        %v4870 = vunpack.c.l.b16 %v1137
        %v4871 = vunpack.c.h.b16 %v1137
        %v4872 = vunpack.c.l.b16 %v1138
        %v4873 = vunpack.c.h.b16 %v1138
        %v4874 = vunpack.c.l.b16 %v1139
        %v4875 = vunpack.c.h.b16 %v1139
        %v4876 = vunpack.c.l.b16 %v1140
        %v4877 = vunpack.c.h.b16 %v1140
        %v4878 = vunpack.c.l.b16 %v1141
        %v4879 = vunpack.c.h.b16 %v1141
        %v4880 = vunpack.c.l.b16 %v1142
        %v4881 = vunpack.c.h.b16 %v1142
        %v4882 = vunpack.c.l.b16 %v1143
        %v4883 = vunpack.c.h.b16 %v1143
        %v4884 = vunpack.c.l.b16 %v1144
        %v4885 = vunpack.c.h.b16 %v1144
        %v4886 = vunpack.c.l.b16 %v1145
        %v4887 = vunpack.c.h.b16 %v1145
        %v4888 = vunpack.c.l.b16 %v1146
        %v4889 = vunpack.c.h.b16 %v1146
        %v4890 = vunpack.c.l.b16 %v1147
        %v4891 = vunpack.c.h.b16 %v1147
        %v4892 = vunpack.c.l.b16 %v1148
        %v4893 = vunpack.c.h.b16 %v1148
        %v4894 = vunpack.c.l.b16 %v1149
        %v4895 = vunpack.c.h.b16 %v1149
        %v4896 = vunpack.c.l.b16 %v1150
        %v4897 = vunpack.c.h.b16 %v1150
        %v4898 = vunpack.c.l.b16 %v1151
        %v4899 = vunpack.c.h.b16 %v1151
        %v4900 = vunpack.c.l.b16 %v1152
        %v4901 = vunpack.c.h.b16 %v1152
        %v4902 = vunpack.c.l.b16 %v1153
        %v4903 = vunpack.c.h.b16 %v1153
        %v4904 = vunpack.c.l.b16 %v1154
        %v4905 = vunpack.c.h.b16 %v1154
        %v4906 = vunpack.c.l.b16 %v1155
        %v4907 = vunpack.c.h.b16 %v1155
        %v4908 = vunpack.c.l.b16 %v1156
        %v4909 = vunpack.c.h.b16 %v1156
        %v4910 = vunpack.c.l.b16 %v1157
        %v4911 = vunpack.c.h.b16 %v1157
        %v4912 = vunpack.c.l.b16 %v1158
        %v4913 = vunpack.c.h.b16 %v1158
        %v4914 = vunpack.c.l.b16 %v1159
        %v4915 = vunpack.c.h.b16 %v1159
        %v4916 = vunpack.c.l.b16 %v1160
        %v4917 = vunpack.c.h.b16 %v1160
        %v4918 = vunpack.c.l.b16 %v1161
        %v4919 = vunpack.c.h.b16 %v1161
        %v4920 = vunpack.c.l.b16 %v1162
        %v4921 = vunpack.c.h.b16 %v1162
        %v4922 = vunpack.c.l.b16 %v1163
        %v4923 = vunpack.c.h.b16 %v1163
        %v4924 = vunpack.c.l.b16 %v1164
        %v4925 = vunpack.c.h.b16 %v1164
        %v4926 = vunpack.c.l.b16 %v1165
        %v4927 = vunpack.c.h.b16 %v1165
        %v4928 = vunpack.c.l.b16 %v1166
        %v4929 = vunpack.c.h.b16 %v1166
        %v4930 = vunpack.c.l.b16 %v1167
        %v4931 = vunpack.c.h.b16 %v1167
        %v4932 = vunpack.c.l.b16 %v1168
        %v4933 = vunpack.c.h.b16 %v1168
        %v4934 = vunpack.c.l.b16 %v1169
        %v4935 = vunpack.c.h.b16 %v1169
        %v4936 = vunpack.c.l.b16 %v1170
        %v4937 = vunpack.c.h.b16 %v1170
        %v4938 = vunpack.c.l.b16 %v1171
        %v4939 = vunpack.c.h.b16 %v1171
        %v4940 = vunpack.c.l.b16 %v1172
        %v4941 = vunpack.c.h.b16 %v1172
        %v4942 = vunpack.c.l.b16 %v1173
        %v4943 = vunpack.c.h.b16 %v1173
        %v4944 = vunpack.c.l.b16 %v1174
        %v4945 = vunpack.c.h.b16 %v1174
        %v4946 = vunpack.c.l.b16 %v1175
        %v4947 = vunpack.c.h.b16 %v1175
        %v4948 = vunpack.c.l.b16 %v1176
        %v4949 = vunpack.c.h.b16 %v1176
        %v4950 = vunpack.c.l.b16 %v1177
        %v4951 = vunpack.c.h.b16 %v1177
        %v4952 = vunpack.c.l.b16 %v1178
        %v4953 = vunpack.c.h.b16 %v1178
        %v4954 = vunpack.c.l.b16 %v1179
        %v4955 = vunpack.c.h.b16 %v1179
        %v4956 = vunpack.c.l.b16 %v1180
        %v4957 = vunpack.c.h.b16 %v1180
        %v4958 = vunpack.c.l.b16 %v1181
        %v4959 = vunpack.c.h.b16 %v1181
        %v4960 = vunpack.c.l.b16 %v1182
        %v4961 = vunpack.c.h.b16 %v1182
        %v4962 = vunpack.c.l.b16 %v1183
        %v4963 = vunpack.c.h.b16 %v1183
        %v4964 = vunpack.c.l.b16 %v1184
        %v4965 = vunpack.c.h.b16 %v1184
        %v4966 = vunpack.c.l.b16 %v1185
        %v4967 = vunpack.c.h.b16 %v1185
        %v4968 = vunpack.c.l.b16 %v1186
        %v4969 = vunpack.c.h.b16 %v1186
        %v4970 = vunpack.c.l.b16 %v1187
        %v4971 = vunpack.c.h.b16 %v1187
        %v4972 = vunpack.c.l.b16 %v1188
        %v4973 = vunpack.c.h.b16 %v1188
        %v4974 = vunpack.c.l.b16 %v1189
        %v4975 = vunpack.c.h.b16 %v1189
        %v4976 = vunpack.c.l.b16 %v1190
        %v4977 = vunpack.c.h.b16 %v1190
        %v4978 = vunpack.c.l.b16 %v1191
        %v4979 = vunpack.c.h.b16 %v1191
        %v4980 = vunpack.c.l.b16 %v1192
        %v4981 = vunpack.c.h.b16 %v1192
        %v4982 = vunpack.c.l.b16 %v1193
        %v4983 = vunpack.c.h.b16 %v1193
        %v4984 = vunpack.c.l.b16 %v1194
        %v4985 = vunpack.c.h.b16 %v1194
        %v4986 = vunpack.c.l.b16 %v1195
        %v4987 = vunpack.c.h.b16 %v1195
        %v4988 = vunpack.c.l.b16 %v1196
        %v4989 = vunpack.c.h.b16 %v1196
        %v4990 = vunpack.c.l.b16 %v1197
        %v4991 = vunpack.c.h.b16 %v1197
        %v4992 = vunpack.c.l.b16 %v1198
        %v4993 = vunpack.c.h.b16 %v1198
        %v4994 = vunpack.c.l.b16 %v1199
        %v4995 = vunpack.c.h.b16 %v1199
        %v4996 = vunpack.c.l.b16 %v1200
        %v4997 = vunpack.c.h.b16 %v1200
        %v4998 = vunpack.c.l.b16 %v1201
        %v4999 = vunpack.c.h.b16 %v1201
        %v5000 = vunpack.c.l.b16 %v1202
        %v5001 = vunpack.c.h.b16 %v1202
        %v5002 = vunpack.c.l.b16 %v1203
        %v5003 = vunpack.c.h.b16 %v1203
        %v5004 = vunpack.c.l.b16 %v1204
        %v5005 = vunpack.c.h.b16 %v1204
        %v5006 = vunpack.c.l.b16 %v1205
        %v5007 = vunpack.c.h.b16 %v1205
        %v5008 = vunpack.c.l.b16 %v1206
        %v5009 = vunpack.c.h.b16 %v1206
        %v5010 = vunpack.c.l.b16 %v1207
        %v5011 = vunpack.c.h.b16 %v1207
        %v5012 = vunpack.c.l.b16 %v1208
        %v5013 = vunpack.c.h.b16 %v1208
        %v5014 = vunpack.c.l.b16 %v1209
        %v5015 = vunpack.c.h.b16 %v1209
        %v5016 = vunpack.c.l.b16 %v1210
        %v5017 = vunpack.c.h.b16 %v1210
        %v5018 = vunpack.c.l.b16 %v1211
        %v5019 = vunpack.c.h.b16 %v1211
        %v5020 = vunpack.c.l.b16 %v1212
        %v5021 = vunpack.c.h.b16 %v1212
        %v5022 = vunpack.c.l.b16 %v1213
        %v5023 = vunpack.c.h.b16 %v1213
        %v5024 = vunpack.c.l.b16 %v1214
        %v5025 = vunpack.c.h.b16 %v1214
        %v5026 = vunpack.c.l.b16 %v1215
        %v5027 = vunpack.c.h.b16 %v1215
        %v5028 = vunpack.c.l.b16 %v1216
        %v5029 = vunpack.c.h.b16 %v1216
        %v5030 = vunpack.c.l.b16 %v1217
        %v5031 = vunpack.c.h.b16 %v1217
        %v5032 = vunpack.c.l.b16 %v1218
        %v5033 = vunpack.c.h.b16 %v1218
        %v5034 = vunpack.c.l.b16 %v1219
        %v5035 = vunpack.c.h.b16 %v1219
        %v5036 = vunpack.c.l.b16 %v1220
        %v5037 = vunpack.c.h.b16 %v1220
        %v5038 = vunpack.c.l.b16 %v1221
        %v5039 = vunpack.c.h.b16 %v1221
        %v5040 = vunpack.c.l.b16 %v1222
        %v5041 = vunpack.c.h.b16 %v1222
        %v5042 = vunpack.c.l.b16 %v1223
        %v5043 = vunpack.c.h.b16 %v1223
        %v5044 = vunpack.c.l.b16 %v1224
        %v5045 = vunpack.c.h.b16 %v1224
        %v5046 = vunpack.c.l.b16 %v1225
        %v5047 = vunpack.c.h.b16 %v1225
        %v5048 = vunpack.c.l.b16 %v1226
        %v5049 = vunpack.c.h.b16 %v1226
        %v5050 = vunpack.c.l.b16 %v1227
        %v5051 = vunpack.c.h.b16 %v1227
        %v5052 = vunpack.c.l.b16 %v1228
        %v5053 = vunpack.c.h.b16 %v1228
        %v5054 = vunpack.c.l.b16 %v1229
        %v5055 = vunpack.c.h.b16 %v1229
        %v5056 = vunpack.c.l.b16 %v1230
        %v5057 = vunpack.c.h.b16 %v1230
        %v5058 = vunpack.c.l.b16 %v1231
        %v5059 = vunpack.c.h.b16 %v1231
        %v5060 = vunpack.c.l.b16 %v1232
        %v5061 = vunpack.c.h.b16 %v1232
        %v5062 = vunpack.c.l.b16 %v1233
        %v5063 = vunpack.c.h.b16 %v1233
        %v5064 = vunpack.c.l.b16 %v1234
        %v5065 = vunpack.c.h.b16 %v1234
        %v5066 = vunpack.c.l.b16 %v1235
        %v5067 = vunpack.c.h.b16 %v1235
        %v5068 = vunpack.c.l.b16 %v1236
        %v5069 = vunpack.c.h.b16 %v1236
        %v5070 = vunpack.c.l.b16 %v1237
        %v5071 = vunpack.c.h.b16 %v1237
        %v5072 = vunpack.c.l.b16 %v1238
        %v5073 = vunpack.c.h.b16 %v1238
        %v5074 = vunpack.c.l.b16 %v1239
        %v5075 = vunpack.c.h.b16 %v1239
        %v5076 = vunpack.c.l.b16 %v1240
        %v5077 = vunpack.c.h.b16 %v1240
        %v5078 = vunpack.c.l.b16 %v1241
        %v5079 = vunpack.c.h.b16 %v1241
        %v5080 = vunpack.c.l.b16 %v1242
        %v5081 = vunpack.c.h.b16 %v1242
        %v5082 = vunpack.c.l.b16 %v1243
        %v5083 = vunpack.c.h.b16 %v1243
        %v5084 = vunpack.c.l.b16 %v1244
        %v5085 = vunpack.c.h.b16 %v1244
        %v5086 = vunpack.c.l.b16 %v1245
        %v5087 = vunpack.c.h.b16 %v1245
        %v5088 = vunpack.c.l.b16 %v1246
        %v5089 = vunpack.c.h.b16 %v1246
        %v5090 = vunpack.c.l.b16 %v1247
        %v5091 = vunpack.c.h.b16 %v1247
        %v5092 = vunpack.c.l.b16 %v1248
        %v5093 = vunpack.c.h.b16 %v1248
        %v5094 = vunpack.c.l.b16 %v1249
        %v5095 = vunpack.c.h.b16 %v1249
        %v5096 = vunpack.c.l.b16 %v1250
        %v5097 = vunpack.c.h.b16 %v1250
        %v5098 = vunpack.c.l.b16 %v1251
        %v5099 = vunpack.c.h.b16 %v1251
        %v5100 = vunpack.c.l.b16 %v1252
        %v5101 = vunpack.c.h.b16 %v1252
        %v5102 = vunpack.c.l.b16 %v1253
        %v5103 = vunpack.c.h.b16 %v1253
        %v5104 = vunpack.c.l.b16 %v1254
        %v5105 = vunpack.c.h.b16 %v1254
        %v5106 = vunpack.c.l.b16 %v1255
        %v5107 = vunpack.c.h.b16 %v1255
        %v5108 = vunpack.c.l.b16 %v1256
        %v5109 = vunpack.c.h.b16 %v1256
        %v5110 = vunpack.c.l.b16 %v1257
        %v5111 = vunpack.c.h.b16 %v1257
        %v5112 = vunpack.c.l.b16 %v1258
        %v5113 = vunpack.c.h.b16 %v1258
        %v5114 = vunpack.c.l.b16 %v1259
        %v5115 = vunpack.c.h.b16 %v1259
        %v5116 = vunpack.c.l.b16 %v1260
        %v5117 = vunpack.c.h.b16 %v1260
        %v5118 = vunpack.c.l.b16 %v1261
        %v5119 = vunpack.c.h.b16 %v1261
        %v5120 = vunpack.c.l.b16 %v1262
        %v5121 = vunpack.c.h.b16 %v1262
        %v5122 = vunpack.c.l.b16 %v1263
        %v5123 = vunpack.c.h.b16 %v1263
        %v5124 = vunpack.c.l.b16 %v1264
        %v5125 = vunpack.c.h.b16 %v1264
        %v5126 = vunpack.c.l.b16 %v1265
        %v5127 = vunpack.c.h.b16 %v1265
        %v5128 = vunpack.c.l.b16 %v1266
        %v5129 = vunpack.c.h.b16 %v1266
        %v5130 = vunpack.c.l.b16 %v1267
        %v5131 = vunpack.c.h.b16 %v1267
        %v5132 = vunpack.c.l.b16 %v1268
        %v5133 = vunpack.c.h.b16 %v1268
        %v5134 = vunpack.c.l.b16 %v1269
        %v5135 = vunpack.c.h.b16 %v1269
        %v5136 = vunpack.c.l.b16 %v1270
        %v5137 = vunpack.c.h.b16 %v1270
        %v5138 = vunpack.c.l.b16 %v1271
        %v5139 = vunpack.c.h.b16 %v1271
        %v5140 = vunpack.c.l.b16 %v1272
        %v5141 = vunpack.c.h.b16 %v1272
        %v5142 = vunpack.c.l.b16 %v1273
        %v5143 = vunpack.c.h.b16 %v1273
        %v5144 = vunpack.c.l.b16 %v1274
        %v5145 = vunpack.c.h.b16 %v1274
        %v5146 = vunpack.c.l.b16 %v1275
        %v5147 = vunpack.c.h.b16 %v1275
        %v5148 = vunpack.c.l.b16 %v1276
        %v5149 = vunpack.c.h.b16 %v1276
        %v5150 = vunpack.c.l.b16 %v1277
        %v5151 = vunpack.c.h.b16 %v1277
        %v5152 = vunpack.c.l.b16 %v1278
        %v5153 = vunpack.c.h.b16 %v1278
        %v5154 = vunpack.c.l.b16 %v1279
        %v5155 = vunpack.c.h.b16 %v1279
        %v5156 = vunpack.c.l.b16 %v1280
        %v5157 = vunpack.c.h.b16 %v1280
        %v5158 = vunpack.c.l.b16 %v1281
        %v5159 = vunpack.c.h.b16 %v1281
        %v5160 = vunpack.c.l.b16 %v1282
        %v5161 = vunpack.c.h.b16 %v1282
        %v5162 = vunpack.c.l.b16 %v1283
        %v5163 = vunpack.c.h.b16 %v1283
        %v5164 = vunpack.c.l.b16 %v1284
        %v5165 = vunpack.c.h.b16 %v1284
        %v5166 = vunpack.c.l.b16 %v1285
        %v5167 = vunpack.c.h.b16 %v1285
        %v5168 = vunpack.c.l.b16 %v1286
        %v5169 = vunpack.c.h.b16 %v1286
        %v5170 = vunpack.c.l.b16 %v1287
        %v5171 = vunpack.c.h.b16 %v1287
        %v5172 = vunpack.c.l.b16 %v1288
        %v5173 = vunpack.c.h.b16 %v1288
        %v5174 = vunpack.c.l.b16 %v1289
        %v5175 = vunpack.c.h.b16 %v1289
        %v5176 = vunpack.c.l.b16 %v1290
        %v5177 = vunpack.c.h.b16 %v1290
        %v5178 = vunpack.c.l.b16 %v1291
        %v5179 = vunpack.c.h.b16 %v1291
        %v5180 = vunpack.c.l.b16 %v1292
        %v5181 = vunpack.c.h.b16 %v1292
        %v5182 = vunpack.c.l.b16 %v1293
        %v5183 = vunpack.c.h.b16 %v1293
        %v5184 = vunpack.c.l.b16 %v1294
        %v5185 = vunpack.c.h.b16 %v1294
        %v5186 = vunpack.c.l.b16 %v1295
        %v5187 = vunpack.c.h.b16 %v1295
        %v5188 = vunpack.c.l.b16 %v1296
        %v5189 = vunpack.c.h.b16 %v1296
        %v5190 = vunpack.c.l.b16 %v1297
        %v5191 = vunpack.c.h.b16 %v1297
        %v5192 = vunpack.c.l.b16 %v1298
        %v5193 = vunpack.c.h.b16 %v1298
        %v5194 = vunpack.c.l.b16 %v1299
        %v5195 = vunpack.c.h.b16 %v1299
        %v5196 = vunpack.c.l.b16 %v1300
        %v5197 = vunpack.c.h.b16 %v1300
        %v5198 = vunpack.c.l.b16 %v1301
        %v5199 = vunpack.c.h.b16 %v1301
        %v5200 = vunpack.c.l.b16 %v1302
        %v5201 = vunpack.c.h.b16 %v1302
        %v5202 = vunpack.c.l.b16 %v1303
        %v5203 = vunpack.c.h.b16 %v1303
        %v5204 = vunpack.c.l.b16 %v1304
        %v5205 = vunpack.c.h.b16 %v1304
        %v5206 = vunpack.c.l.b16 %v1305
        %v5207 = vunpack.c.h.b16 %v1305
        %v5208 = vunpack.c.l.b16 %v1306
        %v5209 = vunpack.c.h.b16 %v1306
        %v5210 = vunpack.c.l.b16 %v1307
        %v5211 = vunpack.c.h.b16 %v1307
        %v5212 = vunpack.c.l.b16 %v1308
        %v5213 = vunpack.c.h.b16 %v1308
        %v5214 = vunpack.c.l.b16 %v1309
        %v5215 = vunpack.c.h.b16 %v1309
        %v5216 = vunpack.c.l.b16 %v1310
        %v5217 = vunpack.c.h.b16 %v1310
        %v5218 = vunpack.c.l.b16 %v1311
        %v5219 = vunpack.c.h.b16 %v1311
        %v5220 = vunpack.c.l.b16 %v1312
        %v5221 = vunpack.c.h.b16 %v1312
        %v5222 = vunpack.c.l.b16 %v1313
        %v5223 = vunpack.c.h.b16 %v1313
        %v5224 = vunpack.c.l.b16 %v1314
        %v5225 = vunpack.c.h.b16 %v1314
        %v5226 = vunpack.c.l.b16 %v1315
        %v5227 = vunpack.c.h.b16 %v1315
        %v5228 = vunpack.c.l.b16 %v1316
        %v5229 = vunpack.c.h.b16 %v1316
        %v5230 = vunpack.c.l.b16 %v1317
        %v5231 = vunpack.c.h.b16 %v1317
        %v5232 = vunpack.c.l.b16 %v1318
        %v5233 = vunpack.c.h.b16 %v1318
        %v5234 = vunpack.c.l.b16 %v1319
        %v5235 = vunpack.c.h.b16 %v1319
        %v5236 = vunpack.c.l.b16 %v1320
        %v5237 = vunpack.c.h.b16 %v1320
        %v5238 = vunpack.c.l.b16 %v1321
        %v5239 = vunpack.c.h.b16 %v1321
        %v5240 = vunpack.c.l.b16 %v1322
        %v5241 = vunpack.c.h.b16 %v1322
        %v5242 = vunpack.c.l.b16 %v1323
        %v5243 = vunpack.c.h.b16 %v1323
        %v5244 = vunpack.c.l.b16 %v1324
        %v5245 = vunpack.c.h.b16 %v1324
        %v5246 = vunpack.c.l.b16 %v1325
        %v5247 = vunpack.c.h.b16 %v1325
        %v5248 = vunpack.c.l.b16 %v1326
        %v5249 = vunpack.c.h.b16 %v1326
        %v5250 = vunpack.c.l.b16 %v1327
        %v5251 = vunpack.c.h.b16 %v1327
        %v5252 = vunpack.c.l.b16 %v1328
        %v5253 = vunpack.c.h.b16 %v1328
        %v5254 = vunpack.c.l.b16 %v1329
        %v5255 = vunpack.c.h.b16 %v1329
        %v5256 = vunpack.c.l.b16 %v1330
        %v5257 = vunpack.c.h.b16 %v1330
        %v5258 = vunpack.c.l.b16 %v1331
        %v5259 = vunpack.c.h.b16 %v1331
        %v5260 = vunpack.c.l.b16 %v1332
        %v5261 = vunpack.c.h.b16 %v1332
        %v5262 = vunpack.c.l.b16 %v1333
        %v5263 = vunpack.c.h.b16 %v1333
        %v5264 = vunpack.c.l.b16 %v1334
        %v5265 = vunpack.c.h.b16 %v1334
        %v5266 = vunpack.c.l.b16 %v1335
        %v5267 = vunpack.c.h.b16 %v1335
        %v5268 = vunpack.c.l.b16 %v1336
        %v5269 = vunpack.c.h.b16 %v1336
        %v5270 = vunpack.c.l.b16 %v1337
        %v5271 = vunpack.c.h.b16 %v1337
        %v5272 = vunpack.c.l.b16 %v1338
        %v5273 = vunpack.c.h.b16 %v1338
        %v5274 = vunpack.c.l.b16 %v1339
        %v5275 = vunpack.c.h.b16 %v1339
        %v5276 = vunpack.c.l.b16 %v1340
        %v5277 = vunpack.c.h.b16 %v1340
        %v5278 = vunpack.c.l.b16 %v1341
        %v5279 = vunpack.c.h.b16 %v1341
        %v5280 = vunpack.c.l.b16 %v1342
        %v5281 = vunpack.c.h.b16 %v1342
        %v5282 = vunpack.c.l.b16 %v1343
        %v5283 = vunpack.c.h.b16 %v1343
        %v5284 = vunpack.c.l.b16 %v1344
        %v5285 = vunpack.c.h.b16 %v1344
        %v5286 = vunpack.c.l.b16 %v1345
        %v5287 = vunpack.c.h.b16 %v1345
        %v5288 = vunpack.c.l.b16 %v1346
        %v5289 = vunpack.c.h.b16 %v1346
        %v5290 = vunpack.c.l.b16 %v1347
        %v5291 = vunpack.c.h.b16 %v1347
        %v5292 = vunpack.c.l.b16 %v1348
        %v5293 = vunpack.c.h.b16 %v1348
        %v5294 = vunpack.c.l.b16 %v1349
        %v5295 = vunpack.c.h.b16 %v1349
        %v5296 = vunpack.c.l.b16 %v1350
        %v5297 = vunpack.c.h.b16 %v1350
        %v5298 = vunpack.c.l.b16 %v1351
        %v5299 = vunpack.c.h.b16 %v1351
        %v5300 = vunpack.c.l.b16 %v1352
        %v5301 = vunpack.c.h.b16 %v1352
        %v5302 = vunpack.c.l.b16 %v1353
        %v5303 = vunpack.c.h.b16 %v1353
        %v5304 = vunpack.c.l.b16 %v1354
        %v5305 = vunpack.c.h.b16 %v1354
        %v5306 = vunpack.c.l.b16 %v1355
        %v5307 = vunpack.c.h.b16 %v1355
        %v5308 = vunpack.c.l.b16 %v1356
        %v5309 = vunpack.c.h.b16 %v1356
        %v5310 = vunpack.c.l.b16 %v1357
        %v5311 = vunpack.c.h.b16 %v1357
        %v5312 = vunpack.c.l.b16 %v1358
        %v5313 = vunpack.c.h.b16 %v1358
        %v5314 = vunpack.c.l.b16 %v1359
        %v5315 = vunpack.c.h.b16 %v1359
        %v5316 = vunpack.c.l.b16 %v1360
        %v5317 = vunpack.c.h.b16 %v1360
        %v5318 = vunpack.c.l.b16 %v1361
        %v5319 = vunpack.c.h.b16 %v1361
        %v5320 = vunpack.c.l.b16 %v1362
        %v5321 = vunpack.c.h.b16 %v1362
        %v5322 = vunpack.c.l.b16 %v1363
        %v5323 = vunpack.c.h.b16 %v1363
        %v5324 = vunpack.c.l.b16 %v1364
        %v5325 = vunpack.c.h.b16 %v1364
        %v5326 = vunpack.c.l.b16 %v1365
        %v5327 = vunpack.c.h.b16 %v1365
        %v5328 = vunpack.c.l.b16 %v1366
        %v5329 = vunpack.c.h.b16 %v1366
        %v5330 = vunpack.c.l.b16 %v1367
        %v5331 = vunpack.c.h.b16 %v1367
        %v5332 = vunpack.c.l.b16 %v1368
        %v5333 = vunpack.c.h.b16 %v1368
        %v5334 = vunpack.c.l.b16 %v1369
        %v5335 = vunpack.c.h.b16 %v1369
        %v5336 = vunpack.c.l.b16 %v1370
        %v5337 = vunpack.c.h.b16 %v1370
        %v5338 = vunpack.c.l.b16 %v1371
        %v5339 = vunpack.c.h.b16 %v1371
        %v5340 = vunpack.c.l.b16 %v1372
        %v5341 = vunpack.c.h.b16 %v1372
        %v5342 = vunpack.c.l.b16 %v1373
        %v5343 = vunpack.c.h.b16 %v1373
        %v5344 = vunpack.c.l.b16 %v1374
        %v5345 = vunpack.c.h.b16 %v1374
        %v5346 = vunpack.c.l.b16 %v1375
        %v5347 = vunpack.c.h.b16 %v1375
        %v5348 = vunpack.c.l.b16 %v1376
        %v5349 = vunpack.c.h.b16 %v1376
        %v5350 = vunpack.c.l.b16 %v1377
        %v5351 = vunpack.c.h.b16 %v1377
        %v5352 = vunpack.c.l.b16 %v1378
        %v5353 = vunpack.c.h.b16 %v1378
        %v5354 = vunpack.c.l.b16 %v1379
        %v5355 = vunpack.c.h.b16 %v1379
        %v5356 = vunpack.c.l.b16 %v1380
        %v5357 = vunpack.c.h.b16 %v1380
        %v5358 = vunpack.c.l.b16 %v1381
        %v5359 = vunpack.c.h.b16 %v1381
        %v5360 = vunpack.c.l.b16 %v1382
        %v5361 = vunpack.c.h.b16 %v1382
        %v5362 = vunpack.c.l.b16 %v1383
        %v5363 = vunpack.c.h.b16 %v1383
        %v5364 = vunpack.c.l.b16 %v1384
        %v5365 = vunpack.c.h.b16 %v1384
        %v5366 = vunpack.c.l.b16 %v1385
        %v5367 = vunpack.c.h.b16 %v1385
        %v5368 = vunpack.c.l.b16 %v1386
        %v5369 = vunpack.c.h.b16 %v1386
        %v5370 = vunpack.c.l.b16 %v1387
        %v5371 = vunpack.c.h.b16 %v1387
        %v5372 = vunpack.c.l.b16 %v1388
        %v5373 = vunpack.c.h.b16 %v1388
        %v5374 = vunpack.c.l.b16 %v1389
        %v5375 = vunpack.c.h.b16 %v1389
        %v5376 = vunpack.c.l.b16 %v1390
        %v5377 = vunpack.c.h.b16 %v1390
        %v5378 = vunpack.c.l.b16 %v1391
        %v5379 = vunpack.c.h.b16 %v1391
        %v5380 = vunpack.c.l.b16 %v1392
        %v5381 = vunpack.c.h.b16 %v1392
        %v5382 = vunpack.c.l.b16 %v1393
        %v5383 = vunpack.c.h.b16 %v1393
        %v5384 = vunpack.c.l.b16 %v1394
        %v5385 = vunpack.c.h.b16 %v1394
        %v5386 = vunpack.c.l.b16 %v1395
        %v5387 = vunpack.c.h.b16 %v1395
        %v5388 = vunpack.c.l.b16 %v1396
        %v5389 = vunpack.c.h.b16 %v1396
        %v5390 = vunpack.c.l.b16 %v1397
        %v5391 = vunpack.c.h.b16 %v1397
        %v5392 = vunpack.c.l.b16 %v1398
        %v5393 = vunpack.c.h.b16 %v1398
        %v5394 = vunpack.c.l.b16 %v1399
        %v5395 = vunpack.c.h.b16 %v1399
        %v5396 = vunpack.c.l.b16 %v1400
        %v5397 = vunpack.c.h.b16 %v1400
        %v5398 = vunpack.c.l.b16 %v1401
        %v5399 = vunpack.c.h.b16 %v1401
        %v5400 = vunpack.c.l.b16 %v1402
        %v5401 = vunpack.c.h.b16 %v1402
        %v5402 = vunpack.c.l.b16 %v1403
        %v5403 = vunpack.c.h.b16 %v1403
        %v5404 = vunpack.c.l.b16 %v1404
        %v5405 = vunpack.c.h.b16 %v1404
        %v5406 = vunpack.c.l.b16 %v1405
        %v5407 = vunpack.c.h.b16 %v1405
        %v5408 = vunpack.c.l.b16 %v1406
        %v5409 = vunpack.c.h.b16 %v1406
        %v5410 = vunpack.c.l.b16 %v1407
        %v5411 = vunpack.c.h.b16 %v1407
        %v5412 = vunpack.c.l.b16 %v1408
        %v5413 = vunpack.c.h.b16 %v1408
        %v5414 = vunpack.c.l.b16 %v1409
        %v5415 = vunpack.c.h.b16 %v1409
        %v5416 = vunpack.c.l.b16 %v1410
        %v5417 = vunpack.c.h.b16 %v1410
        %v5418 = vunpack.c.l.b16 %v1411
        %v5419 = vunpack.c.h.b16 %v1411
        %v5420 = vunpack.c.l.b16 %v1412
        %v5421 = vunpack.c.h.b16 %v1412
        %v5422 = vunpack.c.l.b16 %v1413
        %v5423 = vunpack.c.h.b16 %v1413
        %v5424 = vunpack.c.l.b16 %v1414
        %v5425 = vunpack.c.h.b16 %v1414
        %v5426 = vunpack.c.l.b16 %v1415
        %v5427 = vunpack.c.h.b16 %v1415
        %v5428 = vunpack.c.l.b16 %v1416
        %v5429 = vunpack.c.h.b16 %v1416
        %v5430 = vunpack.c.l.b16 %v1417
        %v5431 = vunpack.c.h.b16 %v1417
        %v5432 = vunpack.c.l.b16 %v1418
        %v5433 = vunpack.c.h.b16 %v1418
        %v5434 = vunpack.c.l.b16 %v1419
        %v5435 = vunpack.c.h.b16 %v1419
        %v5436 = vunpack.c.l.b16 %v1420
        %v5437 = vunpack.c.h.b16 %v1420
        %v5438 = vunpack.c.l.b16 %v1421
        %v5439 = vunpack.c.h.b16 %v1421
        %v5440 = vunpack.c.l.b16 %v1422
        %v5441 = vunpack.c.h.b16 %v1422
        %v5442 = vunpack.c.l.b16 %v1423
        %v5443 = vunpack.c.h.b16 %v1423
        %v5444 = vunpack.c.l.b16 %v1424
        %v5445 = vunpack.c.h.b16 %v1424
        %v5446 = vunpack.c.l.b16 %v1425
        %v5447 = vunpack.c.h.b16 %v1425
        %v5448 = vunpack.c.l.b16 %v1426
        %v5449 = vunpack.c.h.b16 %v1426
        %v5450 = vunpack.c.l.b16 %v1427
        %v5451 = vunpack.c.h.b16 %v1427
        %v5452 = vunpack.c.l.b16 %v1428
        %v5453 = vunpack.c.h.b16 %v1428
        %v5454 = vunpack.c.l.b16 %v1429
        %v5455 = vunpack.c.h.b16 %v1429
        %v5456 = vunpack.c.l.b16 %v1430
        %v5457 = vunpack.c.h.b16 %v1430
        %v5458 = vunpack.c.l.b16 %v1431
        %v5459 = vunpack.c.h.b16 %v1431
        %v5460 = vunpack.c.l.b16 %v1432
        %v5461 = vunpack.c.h.b16 %v1432
        %v5462 = vunpack.c.l.b16 %v1433
        %v5463 = vunpack.c.h.b16 %v1433
        %v5464 = vunpack.c.l.b16 %v1434
        %v5465 = vunpack.c.h.b16 %v1434
        %v5466 = vunpack.c.l.b16 %v1435
        %v5467 = vunpack.c.h.b16 %v1435
        %v5468 = vunpack.c.l.b16 %v1436
        %v5469 = vunpack.c.h.b16 %v1436
        %v5470 = vunpack.c.l.b16 %v1437
        %v5471 = vunpack.c.h.b16 %v1437
        %v5472 = vunpack.c.l.b16 %v1438
        %v5473 = vunpack.c.h.b16 %v1438
        %v5474 = vunpack.c.l.b16 %v1439
        %v5475 = vunpack.c.h.b16 %v1439
        %v5476 = vunpack.c.l.b16 %v1440
        %v5477 = vunpack.c.h.b16 %v1440
        %v5478 = vunpack.c.l.b16 %v1441
        %v5479 = vunpack.c.h.b16 %v1441
        %v5480 = vunpack.c.l.b16 %v1442
        %v5481 = vunpack.c.h.b16 %v1442
        %v5482 = vunpack.c.l.b16 %v1443
        %v5483 = vunpack.c.h.b16 %v1443
        %v5484 = vunpack.c.l.b16 %v1444
        %v5485 = vunpack.c.h.b16 %v1444
        %v5486 = vunpack.c.l.b16 %v1445
        %v5487 = vunpack.c.h.b16 %v1445
        %v5488 = vunpack.c.l.b16 %v1446
        %v5489 = vunpack.c.h.b16 %v1446
        %v5490 = vunpack.c.l.b16 %v1447
        %v5491 = vunpack.c.h.b16 %v1447
        %v5492 = vunpack.c.l.b16 %v1448
        %v5493 = vunpack.c.h.b16 %v1448
        %v5494 = vunpack.c.l.b16 %v1449
        %v5495 = vunpack.c.h.b16 %v1449
        %v5496 = vunpack.c.l.b16 %v1450
        %v5497 = vunpack.c.h.b16 %v1450
        %v5498 = vunpack.c.l.b16 %v1451
        %v5499 = vunpack.c.h.b16 %v1451
        %v5500 = vunpack.c.l.b16 %v1452
        %v5501 = vunpack.c.h.b16 %v1452
        %v5502 = vunpack.c.l.b16 %v1453
        %v5503 = vunpack.c.h.b16 %v1453
        %v5504 = vunpack.c.l.b16 %v1454
        %v5505 = vunpack.c.h.b16 %v1454
        %v5506 = vunpack.c.l.b16 %v1455
        %v5507 = vunpack.c.h.b16 %v1455
        %v5508 = vunpack.c.l.b16 %v1456
        %v5509 = vunpack.c.h.b16 %v1456
        %v5510 = vunpack.c.l.b16 %v1457
        %v5511 = vunpack.c.h.b16 %v1457
        %v5512 = vunpack.c.l.b16 %v1458
        %v5513 = vunpack.c.h.b16 %v1458
        %v5514 = vunpack.c.l.b16 %v1459
        %v5515 = vunpack.c.h.b16 %v1459
        %v5516 = vunpack.c.l.b16 %v1460
        %v5517 = vunpack.c.h.b16 %v1460
        %v5518 = vunpack.c.l.b16 %v1461
        %v5519 = vunpack.c.h.b16 %v1461
        %v5520 = vunpack.c.l.b16 %v1462
        %v5521 = vunpack.c.h.b16 %v1462
        %v5522 = vunpack.c.l.b16 %v1463
        %v5523 = vunpack.c.h.b16 %v1463
        %v5524 = vunpack.c.l.b16 %v1464
        %v5525 = vunpack.c.h.b16 %v1464
        %v5526 = vunpack.c.l.b16 %v1465
        %v5527 = vunpack.c.h.b16 %v1465
        %v5528 = vunpack.c.l.b16 %v1466
        %v5529 = vunpack.c.h.b16 %v1466
        %v5530 = vunpack.c.l.b16 %v1467
        %v5531 = vunpack.c.h.b16 %v1467
        %v5532 = vunpack.c.l.b16 %v1468
        %v5533 = vunpack.c.h.b16 %v1468
        %v5534 = vunpack.c.l.b16 %v1469
        %v5535 = vunpack.c.h.b16 %v1469
        %v5536 = vunpack.c.l.b16 %v1470
        %v5537 = vunpack.c.h.b16 %v1470
        %v5538 = vunpack.c.l.b16 %v1471
        %v5539 = vunpack.c.h.b16 %v1471
        %v5540 = vunpack.c.l.b16 %v1472
        %v5541 = vunpack.c.h.b16 %v1472
        %v5542 = vunpack.c.l.b16 %v1473
        %v5543 = vunpack.c.h.b16 %v1473
        %v5544 = vunpack.c.l.b16 %v1474
        %v5545 = vunpack.c.h.b16 %v1474
        %v5546 = vunpack.c.l.b16 %v1475
        %v5547 = vunpack.c.h.b16 %v1475
        %v5548 = vunpack.c.l.b16 %v1476
        %v5549 = vunpack.c.h.b16 %v1476
        %v5550 = vunpack.c.l.b16 %v1477
        %v5551 = vunpack.c.h.b16 %v1477
        %v5552 = vunpack.c.l.b16 %v1478
        %v5553 = vunpack.c.h.b16 %v1478
        %v5554 = vunpack.c.l.b16 %v1479
        %v5555 = vunpack.c.h.b16 %v1479
        %v5556 = vunpack.c.l.b16 %v1480
        %v5557 = vunpack.c.h.b16 %v1480
        %v5558 = vunpack.c.l.b16 %v1481
        %v5559 = vunpack.c.h.b16 %v1481
        %v5560 = vunpack.c.l.b16 %v1482
        %v5561 = vunpack.c.h.b16 %v1482
        %v5562 = vunpack.c.l.b16 %v1483
        %v5563 = vunpack.c.h.b16 %v1483
        %v5564 = vunpack.c.l.b16 %v1484
        %v5565 = vunpack.c.h.b16 %v1484
        %v5566 = vunpack.c.l.b16 %v1485
        %v5567 = vunpack.c.h.b16 %v1485
        %v5568 = vunpack.c.l.b16 %v1486
        %v5569 = vunpack.c.h.b16 %v1486
        %v5570 = vunpack.c.l.b16 %v1487
        %v5571 = vunpack.c.h.b16 %v1487
        %v5572 = vunpack.c.l.b16 %v1488
        %v5573 = vunpack.c.h.b16 %v1488
        %v5574 = vunpack.c.l.b16 %v1489
        %v5575 = vunpack.c.h.b16 %v1489
        %v5576 = vunpack.c.l.b16 %v1490
        %v5577 = vunpack.c.h.b16 %v1490
        %v5578 = vunpack.c.l.b16 %v1491
        %v5579 = vunpack.c.h.b16 %v1491
        %v5580 = vunpack.c.l.b16 %v1492
        %v5581 = vunpack.c.h.b16 %v1492
        %v5582 = vunpack.c.l.b16 %v1493
        %v5583 = vunpack.c.h.b16 %v1493
        %v5584 = vunpack.c.l.b16 %v1494
        %v5585 = vunpack.c.h.b16 %v1494
        %v5586 = vunpack.c.l.b16 %v1495
        %v5587 = vunpack.c.h.b16 %v1495
        %v5588 = vunpack.c.l.b16 %v1496
        %v5589 = vunpack.c.h.b16 %v1496
        %v5590 = vunpack.c.l.b16 %v1497
        %v5591 = vunpack.c.h.b16 %v1497
        %v5592 = vunpack.c.l.b16 %v1498
        %v5593 = vunpack.c.h.b16 %v1498
        %v5594 = vunpack.c.l.b16 %v1499
        %v5595 = vunpack.c.h.b16 %v1499
        %v5596 = vunpack.c.l.b16 %v1500
        %v5597 = vunpack.c.h.b16 %v1500
        %v5598 = vunpack.c.l.b16 %v1501
        %v5599 = vunpack.c.h.b16 %v1501
        %v5600 = vunpack.c.l.b16 %v1502
        %v5601 = vunpack.c.h.b16 %v1502
        %v5602 = vunpack.c.l.b16 %v1503
        %v5603 = vunpack.c.h.b16 %v1503
        %v5604 = vunpack.c.l.b16 %v1504
        %v5605 = vunpack.c.h.b16 %v1504
        %v5606 = vunpack.c.l.b16 %v1505
        %v5607 = vunpack.c.h.b16 %v1505
        %v5608 = vunpack.c.l.b16 %v1506
        %v5609 = vunpack.c.h.b16 %v1506
        %v5610 = vunpack.c.l.b16 %v1507
        %v5611 = vunpack.c.h.b16 %v1507
        %v5612 = vunpack.c.l.b16 %v1508
        %v5613 = vunpack.c.h.b16 %v1508
        %v5614 = vunpack.c.l.b16 %v1509
        %v5615 = vunpack.c.h.b16 %v1509
        %v5616 = vunpack.c.l.b16 %v1510
        %v5617 = vunpack.c.h.b16 %v1510
        %v5618 = vunpack.c.l.b16 %v1511
        %v5619 = vunpack.c.h.b16 %v1511
        %v5620 = vunpack.c.l.b16 %v1512
        %v5621 = vunpack.c.h.b16 %v1512
        %v5622 = vunpack.c.l.b16 %v1513
        %v5623 = vunpack.c.h.b16 %v1513
        %v5624 = vunpack.c.l.b16 %v1514
        %v5625 = vunpack.c.h.b16 %v1514
        %v5626 = vunpack.c.l.b16 %v1515
        %v5627 = vunpack.c.h.b16 %v1515
        %v5628 = vunpack.c.l.b16 %v1516
        %v5629 = vunpack.c.h.b16 %v1516
        %v5630 = vunpack.c.l.b16 %v1517
        %v5631 = vunpack.c.h.b16 %v1517
        %v5632 = vunpack.c.l.b16 %v1518
        %v5633 = vunpack.c.h.b16 %v1518
        %v5634 = vunpack.c.l.b16 %v1519
        %v5635 = vunpack.c.h.b16 %v1519
        %v5636 = vunpack.c.l.b16 %v1520
        %v5637 = vunpack.c.h.b16 %v1520
        %v5638 = vunpack.c.l.b16 %v1521
        %v5639 = vunpack.c.h.b16 %v1521
        %v5640 = vunpack.c.l.b16 %v1522
        %v5641 = vunpack.c.h.b16 %v1522
        %v5642 = vunpack.c.l.b16 %v1523
        %v5643 = vunpack.c.h.b16 %v1523
        %v5644 = vunpack.c.l.b16 %v1524
        %v5645 = vunpack.c.h.b16 %v1524
        %v5646 = vunpack.c.l.b16 %v1525
        %v5647 = vunpack.c.h.b16 %v1525
        %v5648 = vunpack.c.l.b16 %v1526
        %v5649 = vunpack.c.h.b16 %v1526
        %v5650 = vunpack.c.l.b16 %v1527
        %v5651 = vunpack.c.h.b16 %v1527
        %v5652 = vunpack.c.l.b16 %v1528
        %v5653 = vunpack.c.h.b16 %v1528
        %v5654 = vunpack.c.l.b16 %v1529
        %v5655 = vunpack.c.h.b16 %v1529
        %v5656 = vunpack.c.l.b16 %v1530
        %v5657 = vunpack.c.h.b16 %v1530
        %v5658 = vunpack.c.l.b16 %v1531
        %v5659 = vunpack.c.h.b16 %v1531
        %v5660 = vunpack.c.l.b16 %v1532
        %v5661 = vunpack.c.h.b16 %v1532
        %v5662 = vunpack.c.l.b16 %v1533
        %v5663 = vunpack.c.h.b16 %v1533
        %v5664 = vunpack.c.l.b16 %v1534
        %v5665 = vunpack.c.h.b16 %v1534
        %v5666 = vunpack.c.l.b16 %v1535
        %v5667 = vunpack.c.h.b16 %v1535
        %v5668 = vunpack.c.l.b16 %v1536
        %v5669 = vunpack.c.h.b16 %v1536
        %v5670 = vunpack.c.l.b16 %v1537
        %v5671 = vunpack.c.h.b16 %v1537
        %v5672 = vunpack.c.l.b16 %v1538
        %v5673 = vunpack.c.h.b16 %v1538
        %v5674 = vunpack.c.l.b16 %v1539
        %v5675 = vunpack.c.h.b16 %v1539
        %v5676 = vunpack.c.l.b16 %v1540
        %v5677 = vunpack.c.h.b16 %v1540
        %v5678 = vunpack.c.l.b16 %v1541
        %v5679 = vunpack.c.h.b16 %v1541
        %v5680 = vunpack.c.l.b16 %v1542
        %v5681 = vunpack.c.h.b16 %v1542
        %v5682 = vunpack.c.l.b16 %v1543
        %v5683 = vunpack.c.h.b16 %v1543
        %v5684 = vunpack.c.l.b16 %v1544
        %v5685 = vunpack.c.h.b16 %v1544
        %v5686 = vunpack.c.l.b16 %v1545
        %v5687 = vunpack.c.h.b16 %v1545
        %v5688 = vunpack.c.l.b16 %v1546
        %v5689 = vunpack.c.h.b16 %v1546
        %v5690 = vunpack.c.l.b16 %v1547
        %v5691 = vunpack.c.h.b16 %v1547
        %v5692 = vunpack.c.l.b16 %v1548
        %v5693 = vunpack.c.h.b16 %v1548
        %v5694 = vunpack.c.l.b16 %v1549
        %v5695 = vunpack.c.h.b16 %v1549
        %v5696 = vunpack.c.l.b16 %v1550
        %v5697 = vunpack.c.h.b16 %v1550
        %v5698 = vunpack.c.l.b16 %v1551
        %v5699 = vunpack.c.h.b16 %v1551
        %v5700 = vunpack.c.l.b16 %v1552
        %v5701 = vunpack.c.h.b16 %v1552
        %v5702 = vunpack.c.l.b16 %v1553
        %v5703 = vunpack.c.h.b16 %v1553
        %v5704 = vunpack.c.l.b16 %v1554
        %v5705 = vunpack.c.h.b16 %v1554
        %v5706 = vunpack.c.l.b16 %v1555
        %v5707 = vunpack.c.h.b16 %v1555
        %v5708 = vunpack.c.l.b16 %v1556
        %v5709 = vunpack.c.h.b16 %v1556
        %v5710 = vunpack.c.l.b16 %v1557
        %v5711 = vunpack.c.h.b16 %v1557
        %v5712 = vunpack.c.l.b16 %v1558
        %v5713 = vunpack.c.h.b16 %v1558
        %v5714 = vunpack.c.l.b16 %v1559
        %v5715 = vunpack.c.h.b16 %v1559
        %v5716 = vunpack.c.l.b16 %v1560
        %v5717 = vunpack.c.h.b16 %v1560
        %v5718 = vunpack.c.l.b16 %v1561
        %v5719 = vunpack.c.h.b16 %v1561
        %v5720 = vunpack.c.l.b16 %v1562
        %v5721 = vunpack.c.h.b16 %v1562
        %v5722 = vunpack.c.l.b16 %v1563
        %v5723 = vunpack.c.h.b16 %v1563
        %v5724 = vunpack.c.l.b16 %v1564
        %v5725 = vunpack.c.h.b16 %v1564
        %v5726 = vunpack.c.l.b16 %v1565
        %v5727 = vunpack.c.h.b16 %v1565
        %v5728 = vunpack.c.l.b16 %v1566
        %v5729 = vunpack.c.h.b16 %v1566
        %v5730 = vunpack.c.l.b16 %v1567
        %v5731 = vunpack.c.h.b16 %v1567
        %v5732 = vunpack.c.l.b16 %v1568
        %v5733 = vunpack.c.h.b16 %v1568
        %v5734 = vunpack.c.l.b16 %v1569
        %v5735 = vunpack.c.h.b16 %v1569
        %v5736 = vunpack.c.l.b16 %v1570
        %v5737 = vunpack.c.h.b16 %v1570
        %v5738 = vunpack.c.l.b16 %v1571
        %v5739 = vunpack.c.h.b16 %v1571
        %v5740 = vunpack.c.l.b16 %v1572
        %v5741 = vunpack.c.h.b16 %v1572
        %v5742 = vunpack.c.l.b16 %v1573
        %v5743 = vunpack.c.h.b16 %v1573
        %v5744 = vunpack.c.l.b16 %v1574
        %v5745 = vunpack.c.h.b16 %v1574
        %v5746 = vunpack.c.l.b16 %v1575
        %v5747 = vunpack.c.h.b16 %v1575
        %v5748 = vunpack.c.l.b16 %v1576
        %v5749 = vunpack.c.h.b16 %v1576
        %v5750 = vunpack.c.l.b16 %v1577
        %v5751 = vunpack.c.h.b16 %v1577
        %v5752 = vunpack.c.l.b16 %v1578
        %v5753 = vunpack.c.h.b16 %v1578
        %v5754 = vunpack.c.l.b16 %v1579
        %v5755 = vunpack.c.h.b16 %v1579
        %v5756 = vunpack.c.l.b16 %v1580
        %v5757 = vunpack.c.h.b16 %v1580
        %v5758 = vunpack.c.l.b16 %v1581
        %v5759 = vunpack.c.h.b16 %v1581
        %v5760 = vpack.c.b16 %v3170, %v3168
        %v5761 = vpack.c.b16 %v3171, %v3169
        %v5762 = vpack.c.b16 %v3174, %v3172
        %v5763 = vpack.c.b16 %v3175, %v3173
        %v5764 = vpack.c.b16 %v3178, %v3176
        %v5765 = vpack.c.b16 %v3179, %v3177
        %v5766 = vpack.c.b16 %v3182, %v3180
        %v5767 = vpack.c.b16 %v3183, %v3181
        %v5768 = vpack.c.b16 %v3186, %v3184
        %v5769 = vpack.c.b16 %v3187, %v3185
        %v5770 = vpack.c.b16 %v3190, %v3188
        %v5771 = vpack.c.b16 %v3191, %v3189
        %v5772 = vpack.c.b16 %v3194, %v3192
        %v5773 = vpack.c.b16 %v3195, %v3193
        %v5774 = vpack.c.b16 %v3198, %v3196
        %v5775 = vpack.c.b16 %v3199, %v3197
        %v5776 = vpack.c.b16 %v3202, %v3200
        %v5777 = vpack.c.b16 %v3203, %v3201
        %v5778 = vpack.c.b16 %v3206, %v3204
        %v5779 = vpack.c.b16 %v3207, %v3205
        %v5780 = vpack.c.b16 %v3210, %v3208
        %v5781 = vpack.c.b16 %v3211, %v3209
        %v5782 = vpack.c.b16 %v3214, %v3212
        %v5783 = vpack.c.b16 %v3215, %v3213
        %v5784 = vpack.c.b16 %v3218, %v3216
        %v5785 = vpack.c.b16 %v3219, %v3217
        %v5786 = vpack.c.b16 %v3222, %v3220
        %v5787 = vpack.c.b16 %v3223, %v3221
        %v5788 = vpack.c.b16 %v3226, %v3224
        %v5789 = vpack.c.b16 %v3227, %v3225
        %v5790 = vpack.c.b16 %v3230, %v3228
        %v5791 = vpack.c.b16 %v3231, %v3229
        %v5792 = vpack.c.b16 %v3234, %v3232
        %v5793 = vpack.c.b16 %v3235, %v3233
        %v5794 = vpack.c.b16 %v3238, %v3236
        %v5795 = vpack.c.b16 %v3239, %v3237
        %v5796 = vpack.c.b16 %v3242, %v3240
        %v5797 = vpack.c.b16 %v3243, %v3241
        %v5798 = vpack.c.b16 %v3246, %v3244
        %v5799 = vpack.c.b16 %v3247, %v3245
        %v5800 = vpack.c.b16 %v3250, %v3248
        %v5801 = vpack.c.b16 %v3251, %v3249
        %v5802 = vpack.c.b16 %v3254, %v3252
        %v5803 = vpack.c.b16 %v3255, %v3253
        %v5804 = vpack.c.b16 %v3258, %v3256
        %v5805 = vpack.c.b16 %v3259, %v3257
        %v5806 = vpack.c.b16 %v3262, %v3260
        %v5807 = vpack.c.b16 %v3263, %v3261
        %v5808 = vpack.c.b16 %v3266, %v3264
        %v5809 = vpack.c.b16 %v3267, %v3265
        %v5810 = vpack.c.b16 %v3270, %v3268
        %v5811 = vpack.c.b16 %v3271, %v3269
        %v5812 = vpack.c.b16 %v3274, %v3272
        %v5813 = vpack.c.b16 %v3275, %v3273
        %v5814 = vpack.c.b16 %v3278, %v3276
        %v5815 = vpack.c.b16 %v3279, %v3277
        %v5816 = vpack.c.b16 %v3282, %v3280
        %v5817 = vpack.c.b16 %v3283, %v3281
        %v5818 = vpack.c.b16 %v3286, %v3284
        %v5819 = vpack.c.b16 %v3287, %v3285
        %v5820 = vpack.c.b16 %v3290, %v3288
        %v5821 = vpack.c.b16 %v3291, %v3289
        %v5822 = vpack.c.b16 %v3294, %v3292
        %v5823 = vpack.c.b16 %v3295, %v3293
        %v5824 = vpack.c.b16 %v3298, %v3296
        %v5825 = vpack.c.b16 %v3299, %v3297
        %v5826 = vpack.c.b16 %v3302, %v3300
        %v5827 = vpack.c.b16 %v3303, %v3301
        %v5828 = vpack.c.b16 %v3306, %v3304
        %v5829 = vpack.c.b16 %v3307, %v3305
        %v5830 = vpack.c.b16 %v3310, %v3308
        %v5831 = vpack.c.b16 %v3311, %v3309
        %v5832 = vpack.c.b16 %v3314, %v3312
        %v5833 = vpack.c.b16 %v3315, %v3313
        %v5834 = vpack.c.b16 %v3318, %v3316
        %v5835 = vpack.c.b16 %v3319, %v3317
        %v5836 = vpack.c.b16 %v3322, %v3320
        %v5837 = vpack.c.b16 %v3323, %v3321
        %v5838 = vpack.c.b16 %v3326, %v3324
        %v5839 = vpack.c.b16 %v3327, %v3325
        %v5840 = vpack.c.b16 %v3330, %v3328
        %v5841 = vpack.c.b16 %v3331, %v3329
        %v5842 = vpack.c.b16 %v3334, %v3332
        %v5843 = vpack.c.b16 %v3335, %v3333
        %v5844 = vpack.c.b16 %v3338, %v3336
        %v5845 = vpack.c.b16 %v3339, %v3337
        %v5846 = vpack.c.b16 %v3342, %v3340
        %v5847 = vpack.c.b16 %v3343, %v3341
        %v5848 = vpack.c.b16 %v3346, %v3344
        %v5849 = vpack.c.b16 %v3347, %v3345
        %v5850 = vpack.c.b16 %v3350, %v3348
        %v5851 = vpack.c.b16 %v3351, %v3349
        %v5852 = vpack.c.b16 %v3354, %v3352
        %v5853 = vpack.c.b16 %v3355, %v3353
        %v5854 = vpack.c.b16 %v3358, %v3356
        %v5855 = vpack.c.b16 %v3359, %v3357
        %v5856 = vpack.c.b16 %v3362, %v3360
        %v5857 = vpack.c.b16 %v3363, %v3361
        %v5858 = vpack.c.b16 %v3366, %v3364
        %v5859 = vpack.c.b16 %v3367, %v3365
        %v5860 = vpack.c.b16 %v3370, %v3368
        %v5861 = vpack.c.b16 %v3371, %v3369
        %v5862 = vpack.c.b16 %v3374, %v3372
        %v5863 = vpack.c.b16 %v3375, %v3373
        %v5864 = vpack.c.b16 %v3378, %v3376
        %v5865 = vpack.c.b16 %v3379, %v3377
        %v5866 = vpack.c.b16 %v3382, %v3380
        %v5867 = vpack.c.b16 %v3383, %v3381
        %v5868 = vpack.c.b16 %v3386, %v3384
        %v5869 = vpack.c.b16 %v3387, %v3385
        %v5870 = vpack.c.b16 %v3390, %v3388
        %v5871 = vpack.c.b16 %v3391, %v3389
        %v5872 = vpack.c.b16 %v3394, %v3392
        %v5873 = vpack.c.b16 %v3395, %v3393
        %v5874 = vpack.c.b16 %v3398, %v3396
        %v5875 = vpack.c.b16 %v3399, %v3397
        %v5876 = vpack.c.b16 %v3402, %v3400
        %v5877 = vpack.c.b16 %v3403, %v3401
        %v5878 = vpack.c.b16 %v3406, %v3404
        %v5879 = vpack.c.b16 %v3407, %v3405
        %v5880 = vpack.c.b16 %v3410, %v3408
        %v5881 = vpack.c.b16 %v3411, %v3409
        %v5882 = vpack.c.b16 %v3414, %v3412
        %v5883 = vpack.c.b16 %v3415, %v3413
        %v5884 = vpack.c.b16 %v3418, %v3416
        %v5885 = vpack.c.b16 %v3419, %v3417
        %v5886 = vpack.c.b16 %v3422, %v3420
        %v5887 = vpack.c.b16 %v3423, %v3421
        %v5888 = vpack.c.b16 %v3426, %v3424
        %v5889 = vpack.c.b16 %v3427, %v3425
        %v5890 = vpack.c.b16 %v3430, %v3428
        %v5891 = vpack.c.b16 %v3431, %v3429
        %v5892 = vpack.c.b16 %v3434, %v3432
        %v5893 = vpack.c.b16 %v3435, %v3433
        %v5894 = vpack.c.b16 %v3438, %v3436
        %v5895 = vpack.c.b16 %v3439, %v3437
        %v5896 = vpack.c.b16 %v3442, %v3440
        %v5897 = vpack.c.b16 %v3443, %v3441
        %v5898 = vpack.c.b16 %v3446, %v3444
        %v5899 = vpack.c.b16 %v3447, %v3445
        %v5900 = vpack.c.b16 %v3450, %v3448
        %v5901 = vpack.c.b16 %v3451, %v3449
        %v5902 = vpack.c.b16 %v3454, %v3452
        %v5903 = vpack.c.b16 %v3455, %v3453
        %v5904 = vpack.c.b16 %v3458, %v3456
        %v5905 = vpack.c.b16 %v3459, %v3457
        %v5906 = vpack.c.b16 %v3462, %v3460
        %v5907 = vpack.c.b16 %v3463, %v3461
        %v5908 = vpack.c.b16 %v3466, %v3464
        %v5909 = vpack.c.b16 %v3467, %v3465
        %v5910 = vpack.c.b16 %v3470, %v3468
        %v5911 = vpack.c.b16 %v3471, %v3469
        %v5912 = vpack.c.b16 %v3474, %v3472
        %v5913 = vpack.c.b16 %v3475, %v3473
        %v5914 = vpack.c.b16 %v3478, %v3476
        %v5915 = vpack.c.b16 %v3479, %v3477
        %v5916 = vpack.c.b16 %v3482, %v3480
        %v5917 = vpack.c.b16 %v3483, %v3481
        %v5918 = vpack.c.b16 %v3486, %v3484
        %v5919 = vpack.c.b16 %v3487, %v3485
        %v5920 = vpack.c.b16 %v3490, %v3488
        %v5921 = vpack.c.b16 %v3491, %v3489
        %v5922 = vpack.c.b16 %v3494, %v3492
        %v5923 = vpack.c.b16 %v3495, %v3493
        %v5924 = vpack.c.b16 %v3498, %v3496
        %v5925 = vpack.c.b16 %v3499, %v3497
        %v5926 = vpack.c.b16 %v3502, %v3500
        %v5927 = vpack.c.b16 %v3503, %v3501
        %v5928 = vpack.c.b16 %v3506, %v3504
        %v5929 = vpack.c.b16 %v3507, %v3505
        %v5930 = vpack.c.b16 %v3510, %v3508
        %v5931 = vpack.c.b16 %v3511, %v3509
        %v5932 = vpack.c.b16 %v3514, %v3512
        %v5933 = vpack.c.b16 %v3515, %v3513
        %v5934 = vpack.c.b16 %v3518, %v3516
        %v5935 = vpack.c.b16 %v3519, %v3517
        %v5936 = vpack.c.b16 %v3522, %v3520
        %v5937 = vpack.c.b16 %v3523, %v3521
        %v5938 = vpack.c.b16 %v3526, %v3524
        %v5939 = vpack.c.b16 %v3527, %v3525
        %v5940 = vpack.c.b16 %v3530, %v3528
        %v5941 = vpack.c.b16 %v3531, %v3529
        %v5942 = vpack.c.b16 %v3534, %v3532
        %v5943 = vpack.c.b16 %v3535, %v3533
        %v5944 = vpack.c.b16 %v3538, %v3536
        %v5945 = vpack.c.b16 %v3539, %v3537
        %v5946 = vpack.c.b16 %v3542, %v3540
        %v5947 = vpack.c.b16 %v3543, %v3541
        %v5948 = vpack.c.b16 %v3546, %v3544
        %v5949 = vpack.c.b16 %v3547, %v3545
        %v5950 = vpack.c.b16 %v3550, %v3548
        %v5951 = vpack.c.b16 %v3551, %v3549
        %v5952 = vpack.c.b16 %v3554, %v3552
        %v5953 = vpack.c.b16 %v3555, %v3553
        %v5954 = vpack.c.b16 %v3558, %v3556
        %v5955 = vpack.c.b16 %v3559, %v3557
        %v5956 = vpack.c.b16 %v3562, %v3560
        %v5957 = vpack.c.b16 %v3563, %v3561
        %v5958 = vpack.c.b16 %v3566, %v3564
        %v5959 = vpack.c.b16 %v3567, %v3565
        %v5960 = vpack.c.b16 %v3570, %v3568
        %v5961 = vpack.c.b16 %v3571, %v3569
        %v5962 = vpack.c.b16 %v3574, %v3572
        %v5963 = vpack.c.b16 %v3575, %v3573
        %v5964 = vpack.c.b16 %v3578, %v3576
        %v5965 = vpack.c.b16 %v3579, %v3577
        %v5966 = vpack.c.b16 %v3582, %v3580
        %v5967 = vpack.c.b16 %v3583, %v3581
        %v5968 = vpack.c.b16 %v3586, %v3584
        %v5969 = vpack.c.b16 %v3587, %v3585
        %v5970 = vpack.c.b16 %v3590, %v3588
        %v5971 = vpack.c.b16 %v3591, %v3589
        %v5972 = vpack.c.b16 %v3594, %v3592
        %v5973 = vpack.c.b16 %v3595, %v3593
        %v5974 = vpack.c.b16 %v3598, %v3596
        %v5975 = vpack.c.b16 %v3599, %v3597
        %v5976 = vpack.c.b16 %v3602, %v3600
        %v5977 = vpack.c.b16 %v3603, %v3601
        %v5978 = vpack.c.b16 %v3606, %v3604
        %v5979 = vpack.c.b16 %v3607, %v3605
        %v5980 = vpack.c.b16 %v3610, %v3608
        %v5981 = vpack.c.b16 %v3611, %v3609
        %v5982 = vpack.c.b16 %v3614, %v3612
        %v5983 = vpack.c.b16 %v3615, %v3613
        %v5984 = vpack.c.b16 %v3618, %v3616
        %v5985 = vpack.c.b16 %v3619, %v3617
        %v5986 = vpack.c.b16 %v3622, %v3620
        %v5987 = vpack.c.b16 %v3623, %v3621
        %v5988 = vpack.c.b16 %v3626, %v3624
        %v5989 = vpack.c.b16 %v3627, %v3625
        %v5990 = vpack.c.b16 %v3630, %v3628
        %v5991 = vpack.c.b16 %v3631, %v3629
        %v5992 = vpack.c.b16 %v3634, %v3632
        %v5993 = vpack.c.b16 %v3635, %v3633
        %v5994 = vpack.c.b16 %v3638, %v3636
        %v5995 = vpack.c.b16 %v3639, %v3637
        %v5996 = vpack.c.b16 %v3642, %v3640
        %v5997 = vpack.c.b16 %v3643, %v3641
        %v5998 = vpack.c.b16 %v3646, %v3644
        %v5999 = vpack.c.b16 %v3647, %v3645
        %v6000 = vpack.c.b16 %v3650, %v3648
        %v6001 = vpack.c.b16 %v3651, %v3649
        %v6002 = vpack.c.b16 %v3654, %v3652
        %v6003 = vpack.c.b16 %v3655, %v3653
        %v6004 = vpack.c.b16 %v3658, %v3656
        %v6005 = vpack.c.b16 %v3659, %v3657
        %v6006 = vpack.c.b16 %v3662, %v3660
        %v6007 = vpack.c.b16 %v3663, %v3661
        %v6008 = vpack.c.b16 %v3666, %v3664
        %v6009 = vpack.c.b16 %v3667, %v3665
        %v6010 = vpack.c.b16 %v3670, %v3668
        %v6011 = vpack.c.b16 %v3671, %v3669
        %v6012 = vpack.c.b16 %v3674, %v3672
        %v6013 = vpack.c.b16 %v3675, %v3673
        %v6014 = vpack.c.b16 %v3678, %v3676
        %v6015 = vpack.c.b16 %v3679, %v3677
        %v6016 = vpack.c.b16 %v3682, %v3680
        %v6017 = vpack.c.b16 %v3683, %v3681
        %v6018 = vpack.c.b16 %v3686, %v3684
        %v6019 = vpack.c.b16 %v3687, %v3685
        %v6020 = vpack.c.b16 %v3690, %v3688
        %v6021 = vpack.c.b16 %v3691, %v3689
        %v6022 = vpack.c.b16 %v3694, %v3692
        %v6023 = vpack.c.b16 %v3695, %v3693
        %v6024 = vpack.c.b16 %v3698, %v3696
        %v6025 = vpack.c.b16 %v3699, %v3697
        %v6026 = vpack.c.b16 %v3702, %v3700
        %v6027 = vpack.c.b16 %v3703, %v3701
        %v6028 = vpack.c.b16 %v3706, %v3704
        %v6029 = vpack.c.b16 %v3707, %v3705
        %v6030 = vpack.c.b16 %v3710, %v3708
        %v6031 = vpack.c.b16 %v3711, %v3709
        %v6032 = vpack.c.b16 %v3714, %v3712
        %v6033 = vpack.c.b16 %v3715, %v3713
        %v6034 = vpack.c.b16 %v3718, %v3716
        %v6035 = vpack.c.b16 %v3719, %v3717
        %v6036 = vpack.c.b16 %v3722, %v3720
        %v6037 = vpack.c.b16 %v3723, %v3721
        %v6038 = vpack.c.b16 %v3726, %v3724
        %v6039 = vpack.c.b16 %v3727, %v3725
        %v6040 = vpack.c.b16 %v3730, %v3728
        %v6041 = vpack.c.b16 %v3731, %v3729
        %v6042 = vpack.c.b16 %v3734, %v3732
        %v6043 = vpack.c.b16 %v3735, %v3733
        %v6044 = vpack.c.b16 %v3738, %v3736
        %v6045 = vpack.c.b16 %v3739, %v3737
        %v6046 = vpack.c.b16 %v3742, %v3740
        %v6047 = vpack.c.b16 %v3743, %v3741
        %v6048 = vpack.c.b16 %v3746, %v3744
        %v6049 = vpack.c.b16 %v3747, %v3745
        %v6050 = vpack.c.b16 %v3750, %v3748
        %v6051 = vpack.c.b16 %v3751, %v3749
        %v6052 = vpack.c.b16 %v3754, %v3752
        %v6053 = vpack.c.b16 %v3755, %v3753
        %v6054 = vpack.c.b16 %v3758, %v3756
        %v6055 = vpack.c.b16 %v3759, %v3757
        %v6056 = vpack.c.b16 %v3762, %v3760
        %v6057 = vpack.c.b16 %v3763, %v3761
        %v6058 = vpack.c.b16 %v3766, %v3764
        %v6059 = vpack.c.b16 %v3767, %v3765
        %v6060 = vpack.c.b16 %v3770, %v3768
        %v6061 = vpack.c.b16 %v3771, %v3769
        %v6062 = vpack.c.b16 %v3774, %v3772
        %v6063 = vpack.c.b16 %v3775, %v3773
        %v6064 = vpack.c.b16 %v3778, %v3776
        %v6065 = vpack.c.b16 %v3779, %v3777
        %v6066 = vpack.c.b16 %v3782, %v3780
        %v6067 = vpack.c.b16 %v3783, %v3781
        %v6068 = vpack.c.b16 %v3786, %v3784
        %v6069 = vpack.c.b16 %v3787, %v3785
        %v6070 = vpack.c.b16 %v3790, %v3788
        %v6071 = vpack.c.b16 %v3791, %v3789
        %v6072 = vpack.c.b16 %v3794, %v3792
        %v6073 = vpack.c.b16 %v3795, %v3793
        %v6074 = vpack.c.b16 %v3798, %v3796
        %v6075 = vpack.c.b16 %v3799, %v3797
        %v6076 = vpack.c.b16 %v3802, %v3800
        %v6077 = vpack.c.b16 %v3803, %v3801
        %v6078 = vpack.c.b16 %v3806, %v3804
        %v6079 = vpack.c.b16 %v3807, %v3805
        %v6080 = vpack.c.b16 %v3810, %v3808
        %v6081 = vpack.c.b16 %v3811, %v3809
        %v6082 = vpack.c.b16 %v3814, %v3812
        %v6083 = vpack.c.b16 %v3815, %v3813
        %v6084 = vpack.c.b16 %v3818, %v3816
        %v6085 = vpack.c.b16 %v3819, %v3817
        %v6086 = vpack.c.b16 %v3822, %v3820
        %v6087 = vpack.c.b16 %v3823, %v3821
        %v6088 = vpack.c.b16 %v3826, %v3824
        %v6089 = vpack.c.b16 %v3827, %v3825
        %v6090 = vpack.c.b16 %v3830, %v3828
        %v6091 = vpack.c.b16 %v3831, %v3829
        %v6092 = vpack.c.b16 %v3834, %v3832
        %v6093 = vpack.c.b16 %v3835, %v3833
        %v6094 = vpack.c.b16 %v3838, %v3836
        %v6095 = vpack.c.b16 %v3839, %v3837
        %v6096 = vpack.c.b16 %v3842, %v3840
        %v6097 = vpack.c.b16 %v3843, %v3841
        %v6098 = vpack.c.b16 %v3846, %v3844
        %v6099 = vpack.c.b16 %v3847, %v3845
        %v6100 = vpack.c.b16 %v3850, %v3848
        %v6101 = vpack.c.b16 %v3851, %v3849
        %v6102 = vpack.c.b16 %v3854, %v3852
        %v6103 = vpack.c.b16 %v3855, %v3853
        %v6104 = vpack.c.b16 %v3858, %v3856
        %v6105 = vpack.c.b16 %v3859, %v3857
        %v6106 = vpack.c.b16 %v3862, %v3860
        %v6107 = vpack.c.b16 %v3863, %v3861
        %v6108 = vpack.c.b16 %v3866, %v3864
        %v6109 = vpack.c.b16 %v3867, %v3865
        %v6110 = vpack.c.b16 %v3870, %v3868
        %v6111 = vpack.c.b16 %v3871, %v3869
        %v6112 = vpack.c.b16 %v3874, %v3872
        %v6113 = vpack.c.b16 %v3875, %v3873
        %v6114 = vpack.c.b16 %v3878, %v3876
        %v6115 = vpack.c.b16 %v3879, %v3877
        %v6116 = vpack.c.b16 %v3882, %v3880
        %v6117 = vpack.c.b16 %v3883, %v3881
        %v6118 = vpack.c.b16 %v3886, %v3884
        %v6119 = vpack.c.b16 %v3887, %v3885
        %v6120 = vpack.c.b16 %v3890, %v3888
        %v6121 = vpack.c.b16 %v3891, %v3889
        %v6122 = vpack.c.b16 %v3894, %v3892
        %v6123 = vpack.c.b16 %v3895, %v3893
        %v6124 = vpack.c.b16 %v3898, %v3896
        %v6125 = vpack.c.b16 %v3899, %v3897
        %v6126 = vpack.c.b16 %v3902, %v3900
        %v6127 = vpack.c.b16 %v3903, %v3901
        %v6128 = vpack.c.b16 %v3906, %v3904
        %v6129 = vpack.c.b16 %v3907, %v3905
        %v6130 = vpack.c.b16 %v3910, %v3908
        %v6131 = vpack.c.b16 %v3911, %v3909
        %v6132 = vpack.c.b16 %v3914, %v3912
        %v6133 = vpack.c.b16 %v3915, %v3913
        %v6134 = vpack.c.b16 %v3918, %v3916
        %v6135 = vpack.c.b16 %v3919, %v3917
        %v6136 = vpack.c.b16 %v3922, %v3920
        %v6137 = vpack.c.b16 %v3923, %v3921
        %v6138 = vpack.c.b16 %v3926, %v3924
        %v6139 = vpack.c.b16 %v3927, %v3925
        %v6140 = vpack.c.b16 %v3930, %v3928
        %v6141 = vpack.c.b16 %v3931, %v3929
        %v6142 = vpack.c.b16 %v3934, %v3932
        %v6143 = vpack.c.b16 %v3935, %v3933
        %v6144 = vpack.c.b16 %v3938, %v3936
        %v6145 = vpack.c.b16 %v3939, %v3937
        %v6146 = vpack.c.b16 %v3942, %v3940
        %v6147 = vpack.c.b16 %v3943, %v3941
        %v6148 = vpack.c.b16 %v3946, %v3944
        %v6149 = vpack.c.b16 %v3947, %v3945
        %v6150 = vpack.c.b16 %v3950, %v3948
        %v6151 = vpack.c.b16 %v3951, %v3949
        %v6152 = vpack.c.b16 %v3954, %v3952
        %v6153 = vpack.c.b16 %v3955, %v3953
        %v6154 = vpack.c.b16 %v3958, %v3956
        %v6155 = vpack.c.b16 %v3959, %v3957
        %v6156 = vpack.c.b16 %v3962, %v3960
        %v6157 = vpack.c.b16 %v3963, %v3961
        %v6158 = vpack.c.b16 %v3966, %v3964
        %v6159 = vpack.c.b16 %v3967, %v3965
        %v6160 = vpack.c.b16 %v3970, %v3968
        %v6161 = vpack.c.b16 %v3971, %v3969
        %v6162 = vpack.c.b16 %v3974, %v3972
        %v6163 = vpack.c.b16 %v3975, %v3973
        %v6164 = vpack.c.b16 %v3978, %v3976
        %v6165 = vpack.c.b16 %v3979, %v3977
        %v6166 = vpack.c.b16 %v3982, %v3980
        %v6167 = vpack.c.b16 %v3983, %v3981
        %v6168 = vpack.c.b16 %v3986, %v3984
        %v6169 = vpack.c.b16 %v3987, %v3985
        %v6170 = vpack.c.b16 %v3990, %v3988
        %v6171 = vpack.c.b16 %v3991, %v3989
        %v6172 = vpack.c.b16 %v3994, %v3992
        %v6173 = vpack.c.b16 %v3995, %v3993
        %v6174 = vpack.c.b16 %v3998, %v3996
        %v6175 = vpack.c.b16 %v3999, %v3997
        %v6176 = vpack.c.b16 %v4002, %v4000
        %v6177 = vpack.c.b16 %v4003, %v4001
        %v6178 = vpack.c.b16 %v4006, %v4004
        %v6179 = vpack.c.b16 %v4007, %v4005
        %v6180 = vpack.c.b16 %v4010, %v4008
        %v6181 = vpack.c.b16 %v4011, %v4009
        %v6182 = vpack.c.b16 %v4014, %v4012
        %v6183 = vpack.c.b16 %v4015, %v4013
        %v6184 = vpack.c.b16 %v4018, %v4016
        %v6185 = vpack.c.b16 %v4019, %v4017
        %v6186 = vpack.c.b16 %v4022, %v4020
        %v6187 = vpack.c.b16 %v4023, %v4021
        %v6188 = vpack.c.b16 %v4026, %v4024
        %v6189 = vpack.c.b16 %v4027, %v4025
        %v6190 = vpack.c.b16 %v4030, %v4028
        %v6191 = vpack.c.b16 %v4031, %v4029
        %v6192 = vpack.c.b16 %v4034, %v4032
        %v6193 = vpack.c.b16 %v4035, %v4033
        %v6194 = vpack.c.b16 %v4038, %v4036
        %v6195 = vpack.c.b16 %v4039, %v4037
        %v6196 = vpack.c.b16 %v4042, %v4040
        %v6197 = vpack.c.b16 %v4043, %v4041
        %v6198 = vpack.c.b16 %v4046, %v4044
        %v6199 = vpack.c.b16 %v4047, %v4045
        %v6200 = vpack.c.b16 %v4050, %v4048
        %v6201 = vpack.c.b16 %v4051, %v4049
        %v6202 = vpack.c.b16 %v4054, %v4052
        %v6203 = vpack.c.b16 %v4055, %v4053
        %v6204 = vpack.c.b16 %v4058, %v4056
        %v6205 = vpack.c.b16 %v4059, %v4057
        %v6206 = vpack.c.b16 %v4062, %v4060
        %v6207 = vpack.c.b16 %v4063, %v4061
        %v6208 = vpack.c.b16 %v4066, %v4064
        %v6209 = vpack.c.b16 %v4067, %v4065
        %v6210 = vpack.c.b16 %v4070, %v4068
        %v6211 = vpack.c.b16 %v4071, %v4069
        %v6212 = vpack.c.b16 %v4074, %v4072
        %v6213 = vpack.c.b16 %v4075, %v4073
        %v6214 = vpack.c.b16 %v4078, %v4076
        %v6215 = vpack.c.b16 %v4079, %v4077
        %v6216 = vpack.c.b16 %v4082, %v4080
        %v6217 = vpack.c.b16 %v4083, %v4081
        %v6218 = vpack.c.b16 %v4086, %v4084
        %v6219 = vpack.c.b16 %v4087, %v4085
        %v6220 = vpack.c.b16 %v4090, %v4088
        %v6221 = vpack.c.b16 %v4091, %v4089
        %v6222 = vpack.c.b16 %v4094, %v4092
        %v6223 = vpack.c.b16 %v4095, %v4093
        %v6224 = vpack.c.b16 %v4098, %v4096
        %v6225 = vpack.c.b16 %v4099, %v4097
        %v6226 = vpack.c.b16 %v4102, %v4100
        %v6227 = vpack.c.b16 %v4103, %v4101
        %v6228 = vpack.c.b16 %v4106, %v4104
        %v6229 = vpack.c.b16 %v4107, %v4105
        %v6230 = vpack.c.b16 %v4110, %v4108
        %v6231 = vpack.c.b16 %v4111, %v4109
        %v6232 = vpack.c.b16 %v4114, %v4112
        %v6233 = vpack.c.b16 %v4115, %v4113
        %v6234 = vpack.c.b16 %v4118, %v4116
        %v6235 = vpack.c.b16 %v4119, %v4117
        %v6236 = vpack.c.b16 %v4122, %v4120
        %v6237 = vpack.c.b16 %v4123, %v4121
        %v6238 = vpack.c.b16 %v4126, %v4124
        %v6239 = vpack.c.b16 %v4127, %v4125
        %v6240 = vpack.c.b16 %v4130, %v4128
        %v6241 = vpack.c.b16 %v4131, %v4129
        %v6242 = vpack.c.b16 %v4134, %v4132
        %v6243 = vpack.c.b16 %v4135, %v4133
        %v6244 = vpack.c.b16 %v4138, %v4136
        %v6245 = vpack.c.b16 %v4139, %v4137
        %v6246 = vpack.c.b16 %v4142, %v4140
        %v6247 = vpack.c.b16 %v4143, %v4141
        %v6248 = vpack.c.b16 %v4146, %v4144
        %v6249 = vpack.c.b16 %v4147, %v4145
        %v6250 = vpack.c.b16 %v4150, %v4148
        %v6251 = vpack.c.b16 %v4151, %v4149
        %v6252 = vpack.c.b16 %v4154, %v4152
        %v6253 = vpack.c.b16 %v4155, %v4153
        %v6254 = vpack.c.b16 %v4158, %v4156
        %v6255 = vpack.c.b16 %v4159, %v4157
        %v6256 = vpack.c.b16 %v4162, %v4160
        %v6257 = vpack.c.b16 %v4163, %v4161
        %v6258 = vpack.c.b16 %v4166, %v4164
        %v6259 = vpack.c.b16 %v4167, %v4165
        %v6260 = vpack.c.b16 %v4170, %v4168
        %v6261 = vpack.c.b16 %v4171, %v4169
        %v6262 = vpack.c.b16 %v4174, %v4172
        %v6263 = vpack.c.b16 %v4175, %v4173
        %v6264 = vpack.c.b16 %v4178, %v4176
        %v6265 = vpack.c.b16 %v4179, %v4177
        %v6266 = vpack.c.b16 %v4182, %v4180
        %v6267 = vpack.c.b16 %v4183, %v4181
        %v6268 = vpack.c.b16 %v4186, %v4184
        %v6269 = vpack.c.b16 %v4187, %v4185
        %v6270 = vpack.c.b16 %v4190, %v4188
        %v6271 = vpack.c.b16 %v4191, %v4189
        %v6272 = vpack.c.b16 %v4194, %v4192
        %v6273 = vpack.c.b16 %v4195, %v4193
        %v6274 = vpack.c.b16 %v4198, %v4196
        %v6275 = vpack.c.b16 %v4199, %v4197
        %v6276 = vpack.c.b16 %v4202, %v4200
        %v6277 = vpack.c.b16 %v4203, %v4201
        %v6278 = vpack.c.b16 %v4206, %v4204
        %v6279 = vpack.c.b16 %v4207, %v4205
        %v6280 = vpack.c.b16 %v4210, %v4208
        %v6281 = vpack.c.b16 %v4211, %v4209
        %v6282 = vpack.c.b16 %v4214, %v4212
        %v6283 = vpack.c.b16 %v4215, %v4213
        %v6284 = vpack.c.b16 %v4218, %v4216
        %v6285 = vpack.c.b16 %v4219, %v4217
        %v6286 = vpack.c.b16 %v4222, %v4220
        %v6287 = vpack.c.b16 %v4223, %v4221
        %v6288 = vpack.c.b16 %v4226, %v4224
        %v6289 = vpack.c.b16 %v4227, %v4225
        %v6290 = vpack.c.b16 %v4230, %v4228
        %v6291 = vpack.c.b16 %v4231, %v4229
        %v6292 = vpack.c.b16 %v4234, %v4232
        %v6293 = vpack.c.b16 %v4235, %v4233
        %v6294 = vpack.c.b16 %v4238, %v4236
        %v6295 = vpack.c.b16 %v4239, %v4237
        %v6296 = vpack.c.b16 %v4242, %v4240
        %v6297 = vpack.c.b16 %v4243, %v4241
        %v6298 = vpack.c.b16 %v4246, %v4244
        %v6299 = vpack.c.b16 %v4247, %v4245
        %v6300 = vpack.c.b16 %v4250, %v4248
        %v6301 = vpack.c.b16 %v4251, %v4249
        %v6302 = vpack.c.b16 %v4254, %v4252
        %v6303 = vpack.c.b16 %v4255, %v4253
        %v6304 = vpack.c.b16 %v4258, %v4256
        %v6305 = vpack.c.b16 %v4259, %v4257
        %v6306 = vpack.c.b16 %v4262, %v4260
        %v6307 = vpack.c.b16 %v4263, %v4261
        %v6308 = vpack.c.b16 %v4266, %v4264
        %v6309 = vpack.c.b16 %v4267, %v4265
        %v6310 = vpack.c.b16 %v4270, %v4268
        %v6311 = vpack.c.b16 %v4271, %v4269
        %v6312 = vpack.c.b16 %v4274, %v4272
        %v6313 = vpack.c.b16 %v4275, %v4273
        %v6314 = vpack.c.b16 %v4278, %v4276
        %v6315 = vpack.c.b16 %v4279, %v4277
        %v6316 = vpack.c.b16 %v4282, %v4280
        %v6317 = vpack.c.b16 %v4283, %v4281
        %v6318 = vpack.c.b16 %v4286, %v4284
        %v6319 = vpack.c.b16 %v4287, %v4285
        %v6320 = vpack.c.b16 %v4290, %v4288
        %v6321 = vpack.c.b16 %v4291, %v4289
        %v6322 = vpack.c.b16 %v4294, %v4292
        %v6323 = vpack.c.b16 %v4295, %v4293
        %v6324 = vpack.c.b16 %v4298, %v4296
        %v6325 = vpack.c.b16 %v4299, %v4297
        %v6326 = vpack.c.b16 %v4302, %v4300
        %v6327 = vpack.c.b16 %v4303, %v4301
        %v6328 = vpack.c.b16 %v4306, %v4304
        %v6329 = vpack.c.b16 %v4307, %v4305
        %v6330 = vpack.c.b16 %v4310, %v4308
        %v6331 = vpack.c.b16 %v4311, %v4309
        %v6332 = vpack.c.b16 %v4314, %v4312
        %v6333 = vpack.c.b16 %v4315, %v4313
        %v6334 = vpack.c.b16 %v4318, %v4316
        %v6335 = vpack.c.b16 %v4319, %v4317
        %v6336 = vpack.c.b16 %v4322, %v4320
        %v6337 = vpack.c.b16 %v4323, %v4321
        %v6338 = vpack.c.b16 %v4326, %v4324
        %v6339 = vpack.c.b16 %v4327, %v4325
        %v6340 = vpack.c.b16 %v4330, %v4328
        %v6341 = vpack.c.b16 %v4331, %v4329
        %v6342 = vpack.c.b16 %v4334, %v4332
        %v6343 = vpack.c.b16 %v4335, %v4333
        %v6344 = vpack.c.b16 %v4338, %v4336
        %v6345 = vpack.c.b16 %v4339, %v4337
        %v6346 = vpack.c.b16 %v4342, %v4340
        %v6347 = vpack.c.b16 %v4343, %v4341
        %v6348 = vpack.c.b16 %v4346, %v4344
        %v6349 = vpack.c.b16 %v4347, %v4345
        %v6350 = vpack.c.b16 %v4350, %v4348
        %v6351 = vpack.c.b16 %v4351, %v4349
        %v6352 = vpack.c.b16 %v4354, %v4352
        %v6353 = vpack.c.b16 %v4355, %v4353
        %v6354 = vpack.c.b16 %v4358, %v4356
        %v6355 = vpack.c.b16 %v4359, %v4357
        %v6356 = vpack.c.b16 %v4362, %v4360
        %v6357 = vpack.c.b16 %v4363, %v4361
        %v6358 = vpack.c.b16 %v4366, %v4364
        %v6359 = vpack.c.b16 %v4367, %v4365
        %v6360 = vpack.c.b16 %v4370, %v4368
        %v6361 = vpack.c.b16 %v4371, %v4369
        %v6362 = vpack.c.b16 %v4374, %v4372
        %v6363 = vpack.c.b16 %v4375, %v4373
        %v6364 = vpack.c.b16 %v4378, %v4376
        %v6365 = vpack.c.b16 %v4379, %v4377
        %v6366 = vpack.c.b16 %v4382, %v4380
        %v6367 = vpack.c.b16 %v4383, %v4381
        %v6368 = vpack.c.b16 %v4386, %v4384
        %v6369 = vpack.c.b16 %v4387, %v4385
        %v6370 = vpack.c.b16 %v4390, %v4388
        %v6371 = vpack.c.b16 %v4391, %v4389
        %v6372 = vpack.c.b16 %v4394, %v4392
        %v6373 = vpack.c.b16 %v4395, %v4393
        %v6374 = vpack.c.b16 %v4398, %v4396
        %v6375 = vpack.c.b16 %v4399, %v4397
        %v6376 = vpack.c.b16 %v4402, %v4400
        %v6377 = vpack.c.b16 %v4403, %v4401
        %v6378 = vpack.c.b16 %v4406, %v4404
        %v6379 = vpack.c.b16 %v4407, %v4405
        %v6380 = vpack.c.b16 %v4410, %v4408
        %v6381 = vpack.c.b16 %v4411, %v4409
        %v6382 = vpack.c.b16 %v4414, %v4412
        %v6383 = vpack.c.b16 %v4415, %v4413
        %v6384 = vpack.c.b16 %v4418, %v4416
        %v6385 = vpack.c.b16 %v4419, %v4417
        %v6386 = vpack.c.b16 %v4422, %v4420
        %v6387 = vpack.c.b16 %v4423, %v4421
        %v6388 = vpack.c.b16 %v4426, %v4424
        %v6389 = vpack.c.b16 %v4427, %v4425
        %v6390 = vpack.c.b16 %v4430, %v4428
        %v6391 = vpack.c.b16 %v4431, %v4429
        %v6392 = vpack.c.b16 %v4434, %v4432
        %v6393 = vpack.c.b16 %v4435, %v4433
        %v6394 = vpack.c.b16 %v4438, %v4436
        %v6395 = vpack.c.b16 %v4439, %v4437
        %v6396 = vpack.c.b16 %v4442, %v4440
        %v6397 = vpack.c.b16 %v4443, %v4441
        %v6398 = vpack.c.b16 %v4446, %v4444
        %v6399 = vpack.c.b16 %v4447, %v4445
        %v6400 = vpack.c.b16 %v4450, %v4448
        %v6401 = vpack.c.b16 %v4451, %v4449
        %v6402 = vpack.c.b16 %v4454, %v4452
        %v6403 = vpack.c.b16 %v4455, %v4453
        %v6404 = vpack.c.b16 %v4458, %v4456
        %v6405 = vpack.c.b16 %v4459, %v4457
        %v6406 = vpack.c.b16 %v4462, %v4460
        %v6407 = vpack.c.b16 %v4463, %v4461
        %v6408 = vpack.c.b16 %v4466, %v4464
        %v6409 = vpack.c.b16 %v4467, %v4465
        %v6410 = vpack.c.b16 %v4470, %v4468
        %v6411 = vpack.c.b16 %v4471, %v4469
        %v6412 = vpack.c.b16 %v4474, %v4472
        %v6413 = vpack.c.b16 %v4475, %v4473
        %v6414 = vpack.c.b16 %v4478, %v4476
        %v6415 = vpack.c.b16 %v4479, %v4477
        %v6416 = vpack.c.b16 %v4482, %v4480
        %v6417 = vpack.c.b16 %v4483, %v4481
        %v6418 = vpack.c.b16 %v4486, %v4484
        %v6419 = vpack.c.b16 %v4487, %v4485
        %v6420 = vpack.c.b16 %v4490, %v4488
        %v6421 = vpack.c.b16 %v4491, %v4489
        %v6422 = vpack.c.b16 %v4494, %v4492
        %v6423 = vpack.c.b16 %v4495, %v4493
        %v6424 = vpack.c.b16 %v4498, %v4496
        %v6425 = vpack.c.b16 %v4499, %v4497
        %v6426 = vpack.c.b16 %v4502, %v4500
        %v6427 = vpack.c.b16 %v4503, %v4501
        %v6428 = vpack.c.b16 %v4506, %v4504
        %v6429 = vpack.c.b16 %v4507, %v4505
        %v6430 = vpack.c.b16 %v4510, %v4508
        %v6431 = vpack.c.b16 %v4511, %v4509
        %v6432 = vpack.c.b16 %v4514, %v4512
        %v6433 = vpack.c.b16 %v4515, %v4513
        %v6434 = vpack.c.b16 %v4518, %v4516
        %v6435 = vpack.c.b16 %v4519, %v4517
        %v6436 = vpack.c.b16 %v4522, %v4520
        %v6437 = vpack.c.b16 %v4523, %v4521
        %v6438 = vpack.c.b16 %v4526, %v4524
        %v6439 = vpack.c.b16 %v4527, %v4525
        %v6440 = vpack.c.b16 %v4530, %v4528
        %v6441 = vpack.c.b16 %v4531, %v4529
        %v6442 = vpack.c.b16 %v4534, %v4532
        %v6443 = vpack.c.b16 %v4535, %v4533
        %v6444 = vpack.c.b16 %v4538, %v4536
        %v6445 = vpack.c.b16 %v4539, %v4537
        %v6446 = vpack.c.b16 %v4542, %v4540
        %v6447 = vpack.c.b16 %v4543, %v4541
        %v6448 = vpack.c.b16 %v4546, %v4544
        %v6449 = vpack.c.b16 %v4547, %v4545
        %v6450 = vpack.c.b16 %v4550, %v4548
        %v6451 = vpack.c.b16 %v4551, %v4549
        %v6452 = vpack.c.b16 %v4554, %v4552
        %v6453 = vpack.c.b16 %v4555, %v4553
        %v6454 = vpack.c.b16 %v4558, %v4556
        %v6455 = vpack.c.b16 %v4559, %v4557
        %v6456 = vpack.c.b16 %v4562, %v4560
        %v6457 = vpack.c.b16 %v4563, %v4561
        %v6458 = vpack.c.b16 %v4566, %v4564
        %v6459 = vpack.c.b16 %v4567, %v4565
        %v6460 = vpack.c.b16 %v4570, %v4568
        %v6461 = vpack.c.b16 %v4571, %v4569
        %v6462 = vpack.c.b16 %v4574, %v4572
        %v6463 = vpack.c.b16 %v4575, %v4573
        %v6464 = vpack.c.b16 %v4578, %v4576
        %v6465 = vpack.c.b16 %v4579, %v4577
        %v6466 = vpack.c.b16 %v4582, %v4580
        %v6467 = vpack.c.b16 %v4583, %v4581
        %v6468 = vpack.c.b16 %v4586, %v4584
        %v6469 = vpack.c.b16 %v4587, %v4585
        %v6470 = vpack.c.b16 %v4590, %v4588
        %v6471 = vpack.c.b16 %v4591, %v4589
        %v6472 = vpack.c.b16 %v4594, %v4592
        %v6473 = vpack.c.b16 %v4595, %v4593
        %v6474 = vpack.c.b16 %v4598, %v4596
        %v6475 = vpack.c.b16 %v4599, %v4597
        %v6476 = vpack.c.b16 %v4602, %v4600
        %v6477 = vpack.c.b16 %v4603, %v4601
        %v6478 = vpack.c.b16 %v4606, %v4604
        %v6479 = vpack.c.b16 %v4607, %v4605
        %v6480 = vpack.c.b16 %v4610, %v4608
        %v6481 = vpack.c.b16 %v4611, %v4609
        %v6482 = vpack.c.b16 %v4614, %v4612
        %v6483 = vpack.c.b16 %v4615, %v4613
        %v6484 = vpack.c.b16 %v4618, %v4616
        %v6485 = vpack.c.b16 %v4619, %v4617
        %v6486 = vpack.c.b16 %v4622, %v4620
        %v6487 = vpack.c.b16 %v4623, %v4621
        %v6488 = vpack.c.b16 %v4626, %v4624
        %v6489 = vpack.c.b16 %v4627, %v4625
        %v6490 = vpack.c.b16 %v4630, %v4628
        %v6491 = vpack.c.b16 %v4631, %v4629
        %v6492 = vpack.c.b16 %v4634, %v4632
        %v6493 = vpack.c.b16 %v4635, %v4633
        %v6494 = vpack.c.b16 %v4638, %v4636
        %v6495 = vpack.c.b16 %v4639, %v4637
        %v6496 = vpack.c.b16 %v4642, %v4640
        %v6497 = vpack.c.b16 %v4643, %v4641
        %v6498 = vpack.c.b16 %v4646, %v4644
        %v6499 = vpack.c.b16 %v4647, %v4645
        %v6500 = vpack.c.b16 %v4650, %v4648
        %v6501 = vpack.c.b16 %v4651, %v4649
        %v6502 = vpack.c.b16 %v4654, %v4652
        %v6503 = vpack.c.b16 %v4655, %v4653
        %v6504 = vpack.c.b16 %v4658, %v4656
        %v6505 = vpack.c.b16 %v4659, %v4657
        %v6506 = vpack.c.b16 %v4662, %v4660
        %v6507 = vpack.c.b16 %v4663, %v4661
        %v6508 = vpack.c.b16 %v4666, %v4664
        %v6509 = vpack.c.b16 %v4667, %v4665
        %v6510 = vpack.c.b16 %v4670, %v4668
        %v6511 = vpack.c.b16 %v4671, %v4669
        %v6512 = vpack.c.b16 %v4674, %v4672
        %v6513 = vpack.c.b16 %v4675, %v4673
        %v6514 = vpack.c.b16 %v4678, %v4676
        %v6515 = vpack.c.b16 %v4679, %v4677
        %v6516 = vpack.c.b16 %v4682, %v4680
        %v6517 = vpack.c.b16 %v4683, %v4681
        %v6518 = vpack.c.b16 %v4686, %v4684
        %v6519 = vpack.c.b16 %v4687, %v4685
        %v6520 = vpack.c.b16 %v4690, %v4688
        %v6521 = vpack.c.b16 %v4691, %v4689
        %v6522 = vpack.c.b16 %v4694, %v4692
        %v6523 = vpack.c.b16 %v4695, %v4693
        %v6524 = vpack.c.b16 %v4698, %v4696
        %v6525 = vpack.c.b16 %v4699, %v4697
        %v6526 = vpack.c.b16 %v4702, %v4700
        %v6527 = vpack.c.b16 %v4703, %v4701
        %v6528 = vpack.c.b16 %v4706, %v4704
        %v6529 = vpack.c.b16 %v4707, %v4705
        %v6530 = vpack.c.b16 %v4710, %v4708
        %v6531 = vpack.c.b16 %v4711, %v4709
        %v6532 = vpack.c.b16 %v4714, %v4712
        %v6533 = vpack.c.b16 %v4715, %v4713
        %v6534 = vpack.c.b16 %v4718, %v4716
        %v6535 = vpack.c.b16 %v4719, %v4717
        %v6536 = vpack.c.b16 %v4722, %v4720
        %v6537 = vpack.c.b16 %v4723, %v4721
        %v6538 = vpack.c.b16 %v4726, %v4724
        %v6539 = vpack.c.b16 %v4727, %v4725
        %v6540 = vpack.c.b16 %v4730, %v4728
        %v6541 = vpack.c.b16 %v4731, %v4729
        %v6542 = vpack.c.b16 %v4734, %v4732
        %v6543 = vpack.c.b16 %v4735, %v4733
        %v6544 = vpack.c.b16 %v4738, %v4736
        %v6545 = vpack.c.b16 %v4739, %v4737
        %v6546 = vpack.c.b16 %v4742, %v4740
        %v6547 = vpack.c.b16 %v4743, %v4741
        %v6548 = vpack.c.b16 %v4746, %v4744
        %v6549 = vpack.c.b16 %v4747, %v4745
        %v6550 = vpack.c.b16 %v4750, %v4748
        %v6551 = vpack.c.b16 %v4751, %v4749
        %v6552 = vpack.c.b16 %v4754, %v4752
        %v6553 = vpack.c.b16 %v4755, %v4753
        %v6554 = vpack.c.b16 %v4758, %v4756
        %v6555 = vpack.c.b16 %v4759, %v4757
        %v6556 = vpack.c.b16 %v4762, %v4760
        %v6557 = vpack.c.b16 %v4763, %v4761
        %v6558 = vpack.c.b16 %v4766, %v4764
        %v6559 = vpack.c.b16 %v4767, %v4765
        %v6560 = vpack.c.b16 %v4770, %v4768
        %v6561 = vpack.c.b16 %v4771, %v4769
        %v6562 = vpack.c.b16 %v4774, %v4772
        %v6563 = vpack.c.b16 %v4775, %v4773
        %v6564 = vpack.c.b16 %v4778, %v4776
        %v6565 = vpack.c.b16 %v4779, %v4777
        %v6566 = vpack.c.b16 %v4782, %v4780
        %v6567 = vpack.c.b16 %v4783, %v4781
        %v6568 = vpack.c.b16 %v4786, %v4784
        %v6569 = vpack.c.b16 %v4787, %v4785
        %v6570 = vpack.c.b16 %v4790, %v4788
        %v6571 = vpack.c.b16 %v4791, %v4789
        %v6572 = vpack.c.b16 %v4794, %v4792
        %v6573 = vpack.c.b16 %v4795, %v4793
        %v6574 = vpack.c.b16 %v4798, %v4796
        %v6575 = vpack.c.b16 %v4799, %v4797
        %v6576 = vpack.c.b16 %v4802, %v4800
        %v6577 = vpack.c.b16 %v4803, %v4801
        %v6578 = vpack.c.b16 %v4806, %v4804
        %v6579 = vpack.c.b16 %v4807, %v4805
        %v6580 = vpack.c.b16 %v4810, %v4808
        %v6581 = vpack.c.b16 %v4811, %v4809
        %v6582 = vpack.c.b16 %v4814, %v4812
        %v6583 = vpack.c.b16 %v4815, %v4813
        %v6584 = vpack.c.b16 %v4818, %v4816
        %v6585 = vpack.c.b16 %v4819, %v4817
        %v6586 = vpack.c.b16 %v4822, %v4820
        %v6587 = vpack.c.b16 %v4823, %v4821
        %v6588 = vpack.c.b16 %v4826, %v4824
        %v6589 = vpack.c.b16 %v4827, %v4825
        %v6590 = vpack.c.b16 %v4830, %v4828
        %v6591 = vpack.c.b16 %v4831, %v4829
        %v6592 = vpack.c.b16 %v4834, %v4832
        %v6593 = vpack.c.b16 %v4835, %v4833
        %v6594 = vpack.c.b16 %v4838, %v4836
        %v6595 = vpack.c.b16 %v4839, %v4837
        %v6596 = vpack.c.b16 %v4842, %v4840
        %v6597 = vpack.c.b16 %v4843, %v4841
        %v6598 = vpack.c.b16 %v4846, %v4844
        %v6599 = vpack.c.b16 %v4847, %v4845
        %v6600 = vpack.c.b16 %v4850, %v4848
        %v6601 = vpack.c.b16 %v4851, %v4849
        %v6602 = vpack.c.b16 %v4854, %v4852
        %v6603 = vpack.c.b16 %v4855, %v4853
        %v6604 = vpack.c.b16 %v4858, %v4856
        %v6605 = vpack.c.b16 %v4859, %v4857
        %v6606 = vpack.c.b16 %v4862, %v4860
        %v6607 = vpack.c.b16 %v4863, %v4861
        %v6608 = vpack.c.b16 %v4866, %v4864
        %v6609 = vpack.c.b16 %v4867, %v4865
        %v6610 = vpack.c.b16 %v4870, %v4868
        %v6611 = vpack.c.b16 %v4871, %v4869
        %v6612 = vpack.c.b16 %v4874, %v4872
        %v6613 = vpack.c.b16 %v4875, %v4873
        %v6614 = vpack.c.b16 %v4878, %v4876
        %v6615 = vpack.c.b16 %v4879, %v4877
        %v6616 = vpack.c.b16 %v4882, %v4880
        %v6617 = vpack.c.b16 %v4883, %v4881
        %v6618 = vpack.c.b16 %v4886, %v4884
        %v6619 = vpack.c.b16 %v4887, %v4885
        %v6620 = vpack.c.b16 %v4890, %v4888
        %v6621 = vpack.c.b16 %v4891, %v4889
        %v6622 = vpack.c.b16 %v4894, %v4892
        %v6623 = vpack.c.b16 %v4895, %v4893
        %v6624 = vpack.c.b16 %v4898, %v4896
        %v6625 = vpack.c.b16 %v4899, %v4897
        %v6626 = vpack.c.b16 %v4902, %v4900
        %v6627 = vpack.c.b16 %v4903, %v4901
        %v6628 = vpack.c.b16 %v4906, %v4904
        %v6629 = vpack.c.b16 %v4907, %v4905
        %v6630 = vpack.c.b16 %v4910, %v4908
        %v6631 = vpack.c.b16 %v4911, %v4909
        %v6632 = vpack.c.b16 %v4914, %v4912
        %v6633 = vpack.c.b16 %v4915, %v4913
        %v6634 = vpack.c.b16 %v4918, %v4916
        %v6635 = vpack.c.b16 %v4919, %v4917
        %v6636 = vpack.c.b16 %v4922, %v4920
        %v6637 = vpack.c.b16 %v4923, %v4921
        %v6638 = vpack.c.b16 %v4926, %v4924
        %v6639 = vpack.c.b16 %v4927, %v4925
        %v6640 = vpack.c.b16 %v4930, %v4928
        %v6641 = vpack.c.b16 %v4931, %v4929
        %v6642 = vpack.c.b16 %v4934, %v4932
        %v6643 = vpack.c.b16 %v4935, %v4933
        %v6644 = vpack.c.b16 %v4938, %v4936
        %v6645 = vpack.c.b16 %v4939, %v4937
        %v6646 = vpack.c.b16 %v4942, %v4940
        %v6647 = vpack.c.b16 %v4943, %v4941
        %v6648 = vpack.c.b16 %v4946, %v4944
        %v6649 = vpack.c.b16 %v4947, %v4945
        %v6650 = vpack.c.b16 %v4950, %v4948
        %v6651 = vpack.c.b16 %v4951, %v4949
        %v6652 = vpack.c.b16 %v4954, %v4952
        %v6653 = vpack.c.b16 %v4955, %v4953
        %v6654 = vpack.c.b16 %v4958, %v4956
        %v6655 = vpack.c.b16 %v4959, %v4957
        %v6656 = vpack.c.b16 %v4962, %v4960
        %v6657 = vpack.c.b16 %v4963, %v4961
        %v6658 = vpack.c.b16 %v4966, %v4964
        %v6659 = vpack.c.b16 %v4967, %v4965
        %v6660 = vpack.c.b16 %v4970, %v4968
        %v6661 = vpack.c.b16 %v4971, %v4969
        %v6662 = vpack.c.b16 %v4974, %v4972
        %v6663 = vpack.c.b16 %v4975, %v4973
        %v6664 = vpack.c.b16 %v4978, %v4976
        %v6665 = vpack.c.b16 %v4979, %v4977
        %v6666 = vpack.c.b16 %v4982, %v4980
        %v6667 = vpack.c.b16 %v4983, %v4981
        %v6668 = vpack.c.b16 %v4986, %v4984
        %v6669 = vpack.c.b16 %v4987, %v4985
        %v6670 = vpack.c.b16 %v4990, %v4988
        %v6671 = vpack.c.b16 %v4991, %v4989
        %v6672 = vpack.c.b16 %v4994, %v4992
        %v6673 = vpack.c.b16 %v4995, %v4993
        %v6674 = vpack.c.b16 %v4998, %v4996
        %v6675 = vpack.c.b16 %v4999, %v4997
        %v6676 = vpack.c.b16 %v5002, %v5000
        %v6677 = vpack.c.b16 %v5003, %v5001
        %v6678 = vpack.c.b16 %v5006, %v5004
        %v6679 = vpack.c.b16 %v5007, %v5005
        %v6680 = vpack.c.b16 %v5010, %v5008
        %v6681 = vpack.c.b16 %v5011, %v5009
        %v6682 = vpack.c.b16 %v5014, %v5012
        %v6683 = vpack.c.b16 %v5015, %v5013
        %v6684 = vpack.c.b16 %v5018, %v5016
        %v6685 = vpack.c.b16 %v5019, %v5017
        %v6686 = vpack.c.b16 %v5022, %v5020
        %v6687 = vpack.c.b16 %v5023, %v5021
        %v6688 = vpack.c.b16 %v5026, %v5024
        %v6689 = vpack.c.b16 %v5027, %v5025
        %v6690 = vpack.c.b16 %v5030, %v5028
        %v6691 = vpack.c.b16 %v5031, %v5029
        %v6692 = vpack.c.b16 %v5034, %v5032
        %v6693 = vpack.c.b16 %v5035, %v5033
        %v6694 = vpack.c.b16 %v5038, %v5036
        %v6695 = vpack.c.b16 %v5039, %v5037
        %v6696 = vpack.c.b16 %v5042, %v5040
        %v6697 = vpack.c.b16 %v5043, %v5041
        %v6698 = vpack.c.b16 %v5046, %v5044
        %v6699 = vpack.c.b16 %v5047, %v5045
        %v6700 = vpack.c.b16 %v5050, %v5048
        %v6701 = vpack.c.b16 %v5051, %v5049
        %v6702 = vpack.c.b16 %v5054, %v5052
        %v6703 = vpack.c.b16 %v5055, %v5053
        %v6704 = vpack.c.b16 %v5058, %v5056
        %v6705 = vpack.c.b16 %v5059, %v5057
        %v6706 = vpack.c.b16 %v5062, %v5060
        %v6707 = vpack.c.b16 %v5063, %v5061
        %v6708 = vpack.c.b16 %v5066, %v5064
        %v6709 = vpack.c.b16 %v5067, %v5065
        %v6710 = vpack.c.b16 %v5070, %v5068
        %v6711 = vpack.c.b16 %v5071, %v5069
        %v6712 = vpack.c.b16 %v5074, %v5072
        %v6713 = vpack.c.b16 %v5075, %v5073
        %v6714 = vpack.c.b16 %v5078, %v5076
        %v6715 = vpack.c.b16 %v5079, %v5077
        %v6716 = vpack.c.b16 %v5082, %v5080
        %v6717 = vpack.c.b16 %v5083, %v5081
        %v6718 = vpack.c.b16 %v5086, %v5084
        %v6719 = vpack.c.b16 %v5087, %v5085
        %v6720 = vpack.c.b16 %v5090, %v5088
        %v6721 = vpack.c.b16 %v5091, %v5089
        %v6722 = vpack.c.b16 %v5094, %v5092
        %v6723 = vpack.c.b16 %v5095, %v5093
        %v6724 = vpack.c.b16 %v5098, %v5096
        %v6725 = vpack.c.b16 %v5099, %v5097
        %v6726 = vpack.c.b16 %v5102, %v5100
        %v6727 = vpack.c.b16 %v5103, %v5101
        %v6728 = vpack.c.b16 %v5106, %v5104
        %v6729 = vpack.c.b16 %v5107, %v5105
        %v6730 = vpack.c.b16 %v5110, %v5108
        %v6731 = vpack.c.b16 %v5111, %v5109
        %v6732 = vpack.c.b16 %v5114, %v5112
        %v6733 = vpack.c.b16 %v5115, %v5113
        %v6734 = vpack.c.b16 %v5118, %v5116
        %v6735 = vpack.c.b16 %v5119, %v5117
        %v6736 = vpack.c.b16 %v5122, %v5120
        %v6737 = vpack.c.b16 %v5123, %v5121
        %v6738 = vpack.c.b16 %v5126, %v5124
        %v6739 = vpack.c.b16 %v5127, %v5125
        %v6740 = vpack.c.b16 %v5130, %v5128
        %v6741 = vpack.c.b16 %v5131, %v5129
        %v6742 = vpack.c.b16 %v5134, %v5132
        %v6743 = vpack.c.b16 %v5135, %v5133
        %v6744 = vpack.c.b16 %v5138, %v5136
        %v6745 = vpack.c.b16 %v5139, %v5137
        %v6746 = vpack.c.b16 %v5142, %v5140
        %v6747 = vpack.c.b16 %v5143, %v5141
        %v6748 = vpack.c.b16 %v5146, %v5144
        %v6749 = vpack.c.b16 %v5147, %v5145
        %v6750 = vpack.c.b16 %v5150, %v5148
        %v6751 = vpack.c.b16 %v5151, %v5149
        %v6752 = vpack.c.b16 %v5154, %v5152
        %v6753 = vpack.c.b16 %v5155, %v5153
        %v6754 = vpack.c.b16 %v5158, %v5156
        %v6755 = vpack.c.b16 %v5159, %v5157
        %v6756 = vpack.c.b16 %v5162, %v5160
        %v6757 = vpack.c.b16 %v5163, %v5161
        %v6758 = vpack.c.b16 %v5166, %v5164
        %v6759 = vpack.c.b16 %v5167, %v5165
        %v6760 = vpack.c.b16 %v5170, %v5168
        %v6761 = vpack.c.b16 %v5171, %v5169
        %v6762 = vpack.c.b16 %v5174, %v5172
        %v6763 = vpack.c.b16 %v5175, %v5173
        %v6764 = vpack.c.b16 %v5178, %v5176
        %v6765 = vpack.c.b16 %v5179, %v5177
        %v6766 = vpack.c.b16 %v5182, %v5180
        %v6767 = vpack.c.b16 %v5183, %v5181
        %v6768 = vpack.c.b16 %v5186, %v5184
        %v6769 = vpack.c.b16 %v5187, %v5185
        %v6770 = vpack.c.b16 %v5190, %v5188
        %v6771 = vpack.c.b16 %v5191, %v5189
        %v6772 = vpack.c.b16 %v5194, %v5192
        %v6773 = vpack.c.b16 %v5195, %v5193
        %v6774 = vpack.c.b16 %v5198, %v5196
        %v6775 = vpack.c.b16 %v5199, %v5197
        %v6776 = vpack.c.b16 %v5202, %v5200
        %v6777 = vpack.c.b16 %v5203, %v5201
        %v6778 = vpack.c.b16 %v5206, %v5204
        %v6779 = vpack.c.b16 %v5207, %v5205
        %v6780 = vpack.c.b16 %v5210, %v5208
        %v6781 = vpack.c.b16 %v5211, %v5209
        %v6782 = vpack.c.b16 %v5214, %v5212
        %v6783 = vpack.c.b16 %v5215, %v5213
        %v6784 = vpack.c.b16 %v5218, %v5216
        %v6785 = vpack.c.b16 %v5219, %v5217
        %v6786 = vpack.c.b16 %v5222, %v5220
        %v6787 = vpack.c.b16 %v5223, %v5221
        %v6788 = vpack.c.b16 %v5226, %v5224
        %v6789 = vpack.c.b16 %v5227, %v5225
        %v6790 = vpack.c.b16 %v5230, %v5228
        %v6791 = vpack.c.b16 %v5231, %v5229
        %v6792 = vpack.c.b16 %v5234, %v5232
        %v6793 = vpack.c.b16 %v5235, %v5233
        %v6794 = vpack.c.b16 %v5238, %v5236
        %v6795 = vpack.c.b16 %v5239, %v5237
        %v6796 = vpack.c.b16 %v5242, %v5240
        %v6797 = vpack.c.b16 %v5243, %v5241
        %v6798 = vpack.c.b16 %v5246, %v5244
        %v6799 = vpack.c.b16 %v5247, %v5245
        %v6800 = vpack.c.b16 %v5250, %v5248
        %v6801 = vpack.c.b16 %v5251, %v5249
        %v6802 = vpack.c.b16 %v5254, %v5252
        %v6803 = vpack.c.b16 %v5255, %v5253
        %v6804 = vpack.c.b16 %v5258, %v5256
        %v6805 = vpack.c.b16 %v5259, %v5257
        %v6806 = vpack.c.b16 %v5262, %v5260
        %v6807 = vpack.c.b16 %v5263, %v5261
        %v6808 = vpack.c.b16 %v5266, %v5264
        %v6809 = vpack.c.b16 %v5267, %v5265
        %v6810 = vpack.c.b16 %v5270, %v5268
        %v6811 = vpack.c.b16 %v5271, %v5269
        %v6812 = vpack.c.b16 %v5274, %v5272
        %v6813 = vpack.c.b16 %v5275, %v5273
        %v6814 = vpack.c.b16 %v5278, %v5276
        %v6815 = vpack.c.b16 %v5279, %v5277
        %v6816 = vpack.c.b16 %v5282, %v5280
        %v6817 = vpack.c.b16 %v5283, %v5281
        %v6818 = vpack.c.b16 %v5286, %v5284
        %v6819 = vpack.c.b16 %v5287, %v5285
        %v6820 = vpack.c.b16 %v5290, %v5288
        %v6821 = vpack.c.b16 %v5291, %v5289
        %v6822 = vpack.c.b16 %v5294, %v5292
        %v6823 = vpack.c.b16 %v5295, %v5293
        %v6824 = vpack.c.b16 %v5298, %v5296
        %v6825 = vpack.c.b16 %v5299, %v5297
        %v6826 = vpack.c.b16 %v5302, %v5300
        %v6827 = vpack.c.b16 %v5303, %v5301
        %v6828 = vpack.c.b16 %v5306, %v5304
        %v6829 = vpack.c.b16 %v5307, %v5305
        %v6830 = vpack.c.b16 %v5310, %v5308
        %v6831 = vpack.c.b16 %v5311, %v5309
        %v6832 = vpack.c.b16 %v5314, %v5312
        %v6833 = vpack.c.b16 %v5315, %v5313
        %v6834 = vpack.c.b16 %v5318, %v5316
        %v6835 = vpack.c.b16 %v5319, %v5317
        %v6836 = vpack.c.b16 %v5322, %v5320
        %v6837 = vpack.c.b16 %v5323, %v5321
        %v6838 = vpack.c.b16 %v5326, %v5324
        %v6839 = vpack.c.b16 %v5327, %v5325
        %v6840 = vpack.c.b16 %v5330, %v5328
        %v6841 = vpack.c.b16 %v5331, %v5329
        %v6842 = vpack.c.b16 %v5334, %v5332
        %v6843 = vpack.c.b16 %v5335, %v5333
        %v6844 = vpack.c.b16 %v5338, %v5336
        %v6845 = vpack.c.b16 %v5339, %v5337
        %v6846 = vpack.c.b16 %v5342, %v5340
        %v6847 = vpack.c.b16 %v5343, %v5341
        %v6848 = vpack.c.b16 %v5346, %v5344
        %v6849 = vpack.c.b16 %v5347, %v5345
        %v6850 = vpack.c.b16 %v5350, %v5348
        %v6851 = vpack.c.b16 %v5351, %v5349
        %v6852 = vpack.c.b16 %v5354, %v5352
        %v6853 = vpack.c.b16 %v5355, %v5353
        %v6854 = vpack.c.b16 %v5358, %v5356
        %v6855 = vpack.c.b16 %v5359, %v5357
        %v6856 = vpack.c.b16 %v5362, %v5360
        %v6857 = vpack.c.b16 %v5363, %v5361
        %v6858 = vpack.c.b16 %v5366, %v5364
        %v6859 = vpack.c.b16 %v5367, %v5365
        %v6860 = vpack.c.b16 %v5370, %v5368
        %v6861 = vpack.c.b16 %v5371, %v5369
        %v6862 = vpack.c.b16 %v5374, %v5372
        %v6863 = vpack.c.b16 %v5375, %v5373
        %v6864 = vpack.c.b16 %v5378, %v5376
        %v6865 = vpack.c.b16 %v5379, %v5377
        %v6866 = vpack.c.b16 %v5382, %v5380
        %v6867 = vpack.c.b16 %v5383, %v5381
        %v6868 = vpack.c.b16 %v5386, %v5384
        %v6869 = vpack.c.b16 %v5387, %v5385
        %v6870 = vpack.c.b16 %v5390, %v5388
        %v6871 = vpack.c.b16 %v5391, %v5389
        %v6872 = vpack.c.b16 %v5394, %v5392
        %v6873 = vpack.c.b16 %v5395, %v5393
        %v6874 = vpack.c.b16 %v5398, %v5396
        %v6875 = vpack.c.b16 %v5399, %v5397
        %v6876 = vpack.c.b16 %v5402, %v5400
        %v6877 = vpack.c.b16 %v5403, %v5401
        %v6878 = vpack.c.b16 %v5406, %v5404
        %v6879 = vpack.c.b16 %v5407, %v5405
        %v6880 = vpack.c.b16 %v5410, %v5408
        %v6881 = vpack.c.b16 %v5411, %v5409
        %v6882 = vpack.c.b16 %v5414, %v5412
        %v6883 = vpack.c.b16 %v5415, %v5413
        %v6884 = vpack.c.b16 %v5418, %v5416
        %v6885 = vpack.c.b16 %v5419, %v5417
        %v6886 = vpack.c.b16 %v5422, %v5420
        %v6887 = vpack.c.b16 %v5423, %v5421
        %v6888 = vpack.c.b16 %v5426, %v5424
        %v6889 = vpack.c.b16 %v5427, %v5425
        %v6890 = vpack.c.b16 %v5430, %v5428
        %v6891 = vpack.c.b16 %v5431, %v5429
        %v6892 = vpack.c.b16 %v5434, %v5432
        %v6893 = vpack.c.b16 %v5435, %v5433
        %v6894 = vpack.c.b16 %v5438, %v5436
        %v6895 = vpack.c.b16 %v5439, %v5437
        %v6896 = vpack.c.b16 %v5442, %v5440
        %v6897 = vpack.c.b16 %v5443, %v5441
        %v6898 = vpack.c.b16 %v5446, %v5444
        %v6899 = vpack.c.b16 %v5447, %v5445
        %v6900 = vpack.c.b16 %v5450, %v5448
        %v6901 = vpack.c.b16 %v5451, %v5449
        %v6902 = vpack.c.b16 %v5454, %v5452
        %v6903 = vpack.c.b16 %v5455, %v5453
        %v6904 = vpack.c.b16 %v5458, %v5456
        %v6905 = vpack.c.b16 %v5459, %v5457
        %v6906 = vpack.c.b16 %v5462, %v5460
        %v6907 = vpack.c.b16 %v5463, %v5461
        %v6908 = vpack.c.b16 %v5466, %v5464
        %v6909 = vpack.c.b16 %v5467, %v5465
        %v6910 = vpack.c.b16 %v5470, %v5468
        %v6911 = vpack.c.b16 %v5471, %v5469
        %v6912 = vpack.c.b16 %v5474, %v5472
        %v6913 = vpack.c.b16 %v5475, %v5473
        %v6914 = vpack.c.b16 %v5478, %v5476
        %v6915 = vpack.c.b16 %v5479, %v5477
        %v6916 = vpack.c.b16 %v5482, %v5480
        %v6917 = vpack.c.b16 %v5483, %v5481
        %v6918 = vpack.c.b16 %v5486, %v5484
        %v6919 = vpack.c.b16 %v5487, %v5485
        %v6920 = vpack.c.b16 %v5490, %v5488
        %v6921 = vpack.c.b16 %v5491, %v5489
        %v6922 = vpack.c.b16 %v5494, %v5492
        %v6923 = vpack.c.b16 %v5495, %v5493
        %v6924 = vpack.c.b16 %v5498, %v5496
        %v6925 = vpack.c.b16 %v5499, %v5497
        %v6926 = vpack.c.b16 %v5502, %v5500
        %v6927 = vpack.c.b16 %v5503, %v5501
        %v6928 = vpack.c.b16 %v5506, %v5504
        %v6929 = vpack.c.b16 %v5507, %v5505
        %v6930 = vpack.c.b16 %v5510, %v5508
        %v6931 = vpack.c.b16 %v5511, %v5509
        %v6932 = vpack.c.b16 %v5514, %v5512
        %v6933 = vpack.c.b16 %v5515, %v5513
        %v6934 = vpack.c.b16 %v5518, %v5516
        %v6935 = vpack.c.b16 %v5519, %v5517
        %v6936 = vpack.c.b16 %v5522, %v5520
        %v6937 = vpack.c.b16 %v5523, %v5521
        %v6938 = vpack.c.b16 %v5526, %v5524
        %v6939 = vpack.c.b16 %v5527, %v5525
        %v6940 = vpack.c.b16 %v5530, %v5528
        %v6941 = vpack.c.b16 %v5531, %v5529
        %v6942 = vpack.c.b16 %v5534, %v5532
        %v6943 = vpack.c.b16 %v5535, %v5533
        %v6944 = vpack.c.b16 %v5538, %v5536
        %v6945 = vpack.c.b16 %v5539, %v5537
        %v6946 = vpack.c.b16 %v5542, %v5540
        %v6947 = vpack.c.b16 %v5543, %v5541
        %v6948 = vpack.c.b16 %v5546, %v5544
        %v6949 = vpack.c.b16 %v5547, %v5545
        %v6950 = vpack.c.b16 %v5550, %v5548
        %v6951 = vpack.c.b16 %v5551, %v5549
        %v6952 = vpack.c.b16 %v5554, %v5552
        %v6953 = vpack.c.b16 %v5555, %v5553
        %v6954 = vpack.c.b16 %v5558, %v5556
        %v6955 = vpack.c.b16 %v5559, %v5557
        %v6956 = vpack.c.b16 %v5562, %v5560
        %v6957 = vpack.c.b16 %v5563, %v5561
        %v6958 = vpack.c.b16 %v5566, %v5564
        %v6959 = vpack.c.b16 %v5567, %v5565
        %v6960 = vpack.c.b16 %v5570, %v5568
        %v6961 = vpack.c.b16 %v5571, %v5569
        %v6962 = vpack.c.b16 %v5574, %v5572
        %v6963 = vpack.c.b16 %v5575, %v5573
        %v6964 = vpack.c.b16 %v5578, %v5576
        %v6965 = vpack.c.b16 %v5579, %v5577
        %v6966 = vpack.c.b16 %v5582, %v5580
        %v6967 = vpack.c.b16 %v5583, %v5581
        %v6968 = vpack.c.b16 %v5586, %v5584
        %v6969 = vpack.c.b16 %v5587, %v5585
        %v6970 = vpack.c.b16 %v5590, %v5588
        %v6971 = vpack.c.b16 %v5591, %v5589
        %v6972 = vpack.c.b16 %v5594, %v5592
        %v6973 = vpack.c.b16 %v5595, %v5593
        %v6974 = vpack.c.b16 %v5598, %v5596
        %v6975 = vpack.c.b16 %v5599, %v5597
        %v6976 = vpack.c.b16 %v5602, %v5600
        %v6977 = vpack.c.b16 %v5603, %v5601
        %v6978 = vpack.c.b16 %v5606, %v5604
        %v6979 = vpack.c.b16 %v5607, %v5605
        %v6980 = vpack.c.b16 %v5610, %v5608
        %v6981 = vpack.c.b16 %v5611, %v5609
        %v6982 = vpack.c.b16 %v5614, %v5612
        %v6983 = vpack.c.b16 %v5615, %v5613
        %v6984 = vpack.c.b16 %v5618, %v5616
        %v6985 = vpack.c.b16 %v5619, %v5617
        %v6986 = vpack.c.b16 %v5622, %v5620
        %v6987 = vpack.c.b16 %v5623, %v5621
        %v6988 = vpack.c.b16 %v5626, %v5624
        %v6989 = vpack.c.b16 %v5627, %v5625
        %v6990 = vpack.c.b16 %v5630, %v5628
        %v6991 = vpack.c.b16 %v5631, %v5629
        %v6992 = vpack.c.b16 %v5634, %v5632
        %v6993 = vpack.c.b16 %v5635, %v5633
        %v6994 = vpack.c.b16 %v5638, %v5636
        %v6995 = vpack.c.b16 %v5639, %v5637
        %v6996 = vpack.c.b16 %v5642, %v5640
        %v6997 = vpack.c.b16 %v5643, %v5641
        %v6998 = vpack.c.b16 %v5646, %v5644
        %v6999 = vpack.c.b16 %v5647, %v5645
        %v7000 = vpack.c.b16 %v5650, %v5648
        %v7001 = vpack.c.b16 %v5651, %v5649
        %v7002 = vpack.c.b16 %v5654, %v5652
        %v7003 = vpack.c.b16 %v5655, %v5653
        %v7004 = vpack.c.b16 %v5658, %v5656
        %v7005 = vpack.c.b16 %v5659, %v5657
        %v7006 = vpack.c.b16 %v5662, %v5660
        %v7007 = vpack.c.b16 %v5663, %v5661
        %v7008 = vpack.c.b16 %v5666, %v5664
        %v7009 = vpack.c.b16 %v5667, %v5665
        %v7010 = vpack.c.b16 %v5670, %v5668
        %v7011 = vpack.c.b16 %v5671, %v5669
        %v7012 = vpack.c.b16 %v5674, %v5672
        %v7013 = vpack.c.b16 %v5675, %v5673
        %v7014 = vpack.c.b16 %v5678, %v5676
        %v7015 = vpack.c.b16 %v5679, %v5677
        %v7016 = vpack.c.b16 %v5682, %v5680
        %v7017 = vpack.c.b16 %v5683, %v5681
        %v7018 = vpack.c.b16 %v5686, %v5684
        %v7019 = vpack.c.b16 %v5687, %v5685
        %v7020 = vpack.c.b16 %v5690, %v5688
        %v7021 = vpack.c.b16 %v5691, %v5689
        %v7022 = vpack.c.b16 %v5694, %v5692
        %v7023 = vpack.c.b16 %v5695, %v5693
        %v7024 = vpack.c.b16 %v5698, %v5696
        %v7025 = vpack.c.b16 %v5699, %v5697
        %v7026 = vpack.c.b16 %v5702, %v5700
        %v7027 = vpack.c.b16 %v5703, %v5701
        %v7028 = vpack.c.b16 %v5706, %v5704
        %v7029 = vpack.c.b16 %v5707, %v5705
        %v7030 = vpack.c.b16 %v5710, %v5708
        %v7031 = vpack.c.b16 %v5711, %v5709
        %v7032 = vpack.c.b16 %v5714, %v5712
        %v7033 = vpack.c.b16 %v5715, %v5713
        %v7034 = vpack.c.b16 %v5718, %v5716
        %v7035 = vpack.c.b16 %v5719, %v5717
        %v7036 = vpack.c.b16 %v5722, %v5720
        %v7037 = vpack.c.b16 %v5723, %v5721
        %v7038 = vpack.c.b16 %v5726, %v5724
        %v7039 = vpack.c.b16 %v5727, %v5725
        %v7040 = vpack.c.b16 %v5730, %v5728
        %v7041 = vpack.c.b16 %v5731, %v5729
        %v7042 = vpack.c.b16 %v5734, %v5732
        %v7043 = vpack.c.b16 %v5735, %v5733
        %v7044 = vpack.c.b16 %v5738, %v5736
        %v7045 = vpack.c.b16 %v5739, %v5737
        %v7046 = vpack.c.b16 %v5742, %v5740
        %v7047 = vpack.c.b16 %v5743, %v5741
        %v7048 = vpack.c.b16 %v5746, %v5744
        %v7049 = vpack.c.b16 %v5747, %v5745
        %v7050 = vpack.c.b16 %v5750, %v5748
        %v7051 = vpack.c.b16 %v5751, %v5749
        %v7052 = vpack.c.b16 %v5754, %v5752
        %v7053 = vpack.c.b16 %v5755, %v5753
        %v7054 = vpack.c.b16 %v5758, %v5756
        %v7055 = vpack.c.b16 %v5759, %v5757
        %8352 = vmatpush.bf16.msra.mxu0 %v5774
        %8353 = vmatpush.bf16.msra.mxu0 %v5772
        %8354 = vmatpush.bf16.msra.mxu0 %v5770
        %8355 = vmatpush.bf16.msra.mxu0 %v5768
        %8356 = vmatpush.bf16.msra.mxu0 %v5766
        %8357 = vmatpush.bf16.msra.mxu0 %v5764
        %8358 = vmatpush.bf16.msra.mxu0 %v5762
        %8359 = vmatpush.bf16.msra.mxu0 %v5760
        %8360 = vmatmul.bf16.gmra.mxu0 %v1710
        %v8361 = vpop.f32.mrf.mxu0
        %v8362 = vadd.f32 %v1584, %v8361
        %v8363 = vpop.f32.mrf.mxu0
        %8364 = vdwg.mxu0
        %8365 = vmatpush.bf16.msra.mxu0 %v5790
        %8366 = vmatpush.bf16.msra.mxu0 %v5788
        %8367 = vmatpush.bf16.msra.mxu0 %v5786
        %8368 = vmatpush.bf16.msra.mxu0 %v5784
        %8369 = vmatpush.bf16.msra.mxu0 %v5782
        %8370 = vmatpush.bf16.msra.mxu0 %v5780
        %8371 = vmatpush.bf16.msra.mxu0 %v5778
        %8372 = vmatpush.bf16.msra.mxu0 %v5776
        %8373 = vmatmul.bf16.gmra.mxu0 %v1711
        %v8374 = vpop.f32.mrf.mxu0
        %v8375 = vadd.f32 %v8362, %v8374
        %v8376 = vpop.f32.mrf.mxu0
        %8377 = vdwg.mxu0
        %8378 = vmatpush.bf16.msra.mxu0 %v5806
        %8379 = vmatpush.bf16.msra.mxu0 %v5804
        %8380 = vmatpush.bf16.msra.mxu0 %v5802
        %8381 = vmatpush.bf16.msra.mxu0 %v5800
        %8382 = vmatpush.bf16.msra.mxu0 %v5798
        %8383 = vmatpush.bf16.msra.mxu0 %v5796
        %8384 = vmatpush.bf16.msra.mxu0 %v5794
        %8385 = vmatpush.bf16.msra.mxu0 %v5792
        %8386 = vmatmul.bf16.gmra.mxu0 %v1712
        %v8387 = vpop.f32.mrf.mxu0
        %v8388 = vadd.f32 %v8375, %v8387
        %v8389 = vpop.f32.mrf.mxu0
        %8390 = vdwg.mxu0
        %8391 = vmatpush.bf16.msra.mxu0 %v5822
        %8392 = vmatpush.bf16.msra.mxu0 %v5820
        %8393 = vmatpush.bf16.msra.mxu0 %v5818
        %8394 = vmatpush.bf16.msra.mxu0 %v5816
        %8395 = vmatpush.bf16.msra.mxu0 %v5814
        %8396 = vmatpush.bf16.msra.mxu0 %v5812
        %8397 = vmatpush.bf16.msra.mxu0 %v5810
        %8398 = vmatpush.bf16.msra.mxu0 %v5808
        %8399 = vmatmul.bf16.gmra.mxu0 %v1713
        %v8400 = vpop.f32.mrf.mxu0
        %v8401 = vadd.f32 %v8388, %v8400
        %v8402 = vpop.f32.mrf.mxu0
        %8403 = vdwg.mxu0
        %8404 = vmatpush.bf16.msra.mxu0 %v5838
        %8405 = vmatpush.bf16.msra.mxu0 %v5836
        %8406 = vmatpush.bf16.msra.mxu0 %v5834
        %8407 = vmatpush.bf16.msra.mxu0 %v5832
        %8408 = vmatpush.bf16.msra.mxu0 %v5830
        %8409 = vmatpush.bf16.msra.mxu0 %v5828
        %8410 = vmatpush.bf16.msra.mxu0 %v5826
        %8411 = vmatpush.bf16.msra.mxu0 %v5824
        %8412 = vmatmul.bf16.gmra.mxu0 %v1714
        %v8413 = vpop.f32.mrf.mxu0
        %v8414 = vadd.f32 %v8401, %v8413
        %v8415 = vpop.f32.mrf.mxu0
        %8416 = vdwg.mxu0
        %8417 = vmatpush.bf16.msra.mxu0 %v5854
        %8418 = vmatpush.bf16.msra.mxu0 %v5852
        %8419 = vmatpush.bf16.msra.mxu0 %v5850
        %8420 = vmatpush.bf16.msra.mxu0 %v5848
        %8421 = vmatpush.bf16.msra.mxu0 %v5846
        %8422 = vmatpush.bf16.msra.mxu0 %v5844
        %8423 = vmatpush.bf16.msra.mxu0 %v5842
        %8424 = vmatpush.bf16.msra.mxu0 %v5840
        %8425 = vmatmul.bf16.gmra.mxu0 %v1715
        %v8426 = vpop.f32.mrf.mxu0
        %v8427 = vadd.f32 %v8414, %v8426
        %v8428 = vpop.f32.mrf.mxu0
        %8429 = vdwg.mxu0
        %8430 = vmatpush.bf16.msra.mxu0 %v5870
        %8431 = vmatpush.bf16.msra.mxu0 %v5868
        %8432 = vmatpush.bf16.msra.mxu0 %v5866
        %8433 = vmatpush.bf16.msra.mxu0 %v5864
        %8434 = vmatpush.bf16.msra.mxu0 %v5862
        %8435 = vmatpush.bf16.msra.mxu0 %v5860
        %8436 = vmatpush.bf16.msra.mxu0 %v5858
        %8437 = vmatpush.bf16.msra.mxu0 %v5856
        %8438 = vmatmul.bf16.gmra.mxu0 %v1716
        %v8439 = vpop.f32.mrf.mxu0
        %v8440 = vadd.f32 %v8427, %v8439
        %v8441 = vpop.f32.mrf.mxu0
        %8442 = vdwg.mxu0
        %8443 = vmatpush.bf16.msra.mxu0 %v5886
        %8444 = vmatpush.bf16.msra.mxu0 %v5884
        %8445 = vmatpush.bf16.msra.mxu0 %v5882
        %8446 = vmatpush.bf16.msra.mxu0 %v5880
        %8447 = vmatpush.bf16.msra.mxu0 %v5878
        %8448 = vmatpush.bf16.msra.mxu0 %v5876
        %8449 = vmatpush.bf16.msra.mxu0 %v5874
        %8450 = vmatpush.bf16.msra.mxu0 %v5872
        %8451 = vmatmul.bf16.gmra.mxu0 %v1717
        %v8452 = vpop.f32.mrf.mxu0
        %v8453 = vadd.f32 %v8440, %v8452
        %v8454 = vpop.f32.mrf.mxu0
        %8455 = vdwg.mxu0
        %8456 = vmatpush.bf16.msra.mxu0 %v5902
        %8457 = vmatpush.bf16.msra.mxu0 %v5900
        %8458 = vmatpush.bf16.msra.mxu0 %v5898
        %8459 = vmatpush.bf16.msra.mxu0 %v5896
        %8460 = vmatpush.bf16.msra.mxu0 %v5894
        %8461 = vmatpush.bf16.msra.mxu0 %v5892
        %8462 = vmatpush.bf16.msra.mxu0 %v5890
        %8463 = vmatpush.bf16.msra.mxu0 %v5888
        %8464 = vmatmul.bf16.gmra.mxu0 %v1718
        %v8465 = vpop.f32.mrf.mxu0
        %v8466 = vadd.f32 %v8453, %v8465
        %v8467 = vpop.f32.mrf.mxu0
        %8468 = vdwg.mxu0
        %8469 = vmatpush.bf16.msra.mxu0 %v5918
        %8470 = vmatpush.bf16.msra.mxu0 %v5916
        %8471 = vmatpush.bf16.msra.mxu0 %v5914
        %8472 = vmatpush.bf16.msra.mxu0 %v5912
        %8473 = vmatpush.bf16.msra.mxu0 %v5910
        %8474 = vmatpush.bf16.msra.mxu0 %v5908
        %8475 = vmatpush.bf16.msra.mxu0 %v5906
        %8476 = vmatpush.bf16.msra.mxu0 %v5904
        %8477 = vmatmul.bf16.gmra.mxu0 %v1719
        %v8478 = vpop.f32.mrf.mxu0
        %v8479 = vadd.f32 %v8466, %v8478
        %v8480 = vpop.f32.mrf.mxu0
        %8481 = vdwg.mxu0
        %8482 = vmatpush.bf16.msra.mxu0 %v5934
        %8483 = vmatpush.bf16.msra.mxu0 %v5932
        %8484 = vmatpush.bf16.msra.mxu0 %v5930
        %8485 = vmatpush.bf16.msra.mxu0 %v5928
        %8486 = vmatpush.bf16.msra.mxu0 %v5926
        %8487 = vmatpush.bf16.msra.mxu0 %v5924
        %8488 = vmatpush.bf16.msra.mxu0 %v5922
        %8489 = vmatpush.bf16.msra.mxu0 %v5920
        %8490 = vmatmul.bf16.gmra.mxu0 %v1720
        %v8491 = vpop.f32.mrf.mxu0
        %v8492 = vadd.f32 %v8479, %v8491
        %v8493 = vpop.f32.mrf.mxu0
        %8494 = vdwg.mxu0
        %8495 = vmatpush.bf16.msra.mxu0 %v5950
        %8496 = vmatpush.bf16.msra.mxu0 %v5948
        %8497 = vmatpush.bf16.msra.mxu0 %v5946
        %8498 = vmatpush.bf16.msra.mxu0 %v5944
        %8499 = vmatpush.bf16.msra.mxu0 %v5942
        %8500 = vmatpush.bf16.msra.mxu0 %v5940
        %8501 = vmatpush.bf16.msra.mxu0 %v5938
        %8502 = vmatpush.bf16.msra.mxu0 %v5936
        %8503 = vmatmul.bf16.gmra.mxu0 %v1721
        %v8504 = vpop.f32.mrf.mxu0
        %v8505 = vadd.f32 %v8492, %v8504
        %v8506 = vpop.f32.mrf.mxu0
        %8507 = vdwg.mxu0
        %8508 = vmatpush.bf16.msra.mxu0 %v5966
        %8509 = vmatpush.bf16.msra.mxu0 %v5964
        %8510 = vmatpush.bf16.msra.mxu0 %v5962
        %8511 = vmatpush.bf16.msra.mxu0 %v5960
        %8512 = vmatpush.bf16.msra.mxu0 %v5958
        %8513 = vmatpush.bf16.msra.mxu0 %v5956
        %8514 = vmatpush.bf16.msra.mxu0 %v5954
        %8515 = vmatpush.bf16.msra.mxu0 %v5952
        %8516 = vmatmul.bf16.gmra.mxu0 %v1722
        %v8517 = vpop.f32.mrf.mxu0
        %v8518 = vadd.f32 %v8505, %v8517
        %v8519 = vpop.f32.mrf.mxu0
        %8520 = vdwg.mxu0
        %8521 = vmatpush.bf16.msra.mxu0 %v5982
        %8522 = vmatpush.bf16.msra.mxu0 %v5980
        %8523 = vmatpush.bf16.msra.mxu0 %v5978
        %8524 = vmatpush.bf16.msra.mxu0 %v5976
        %8525 = vmatpush.bf16.msra.mxu0 %v5974
        %8526 = vmatpush.bf16.msra.mxu0 %v5972
        %8527 = vmatpush.bf16.msra.mxu0 %v5970
        %8528 = vmatpush.bf16.msra.mxu0 %v5968
        %8529 = vmatmul.bf16.gmra.mxu0 %v1723
        %v8530 = vpop.f32.mrf.mxu0
        %v8531 = vadd.f32 %v8518, %v8530
        %v8532 = vpop.f32.mrf.mxu0
        %8533 = vdwg.mxu0
        %8534 = vmatpush.bf16.msra.mxu0 %v5998
        %8535 = vmatpush.bf16.msra.mxu0 %v5996
        %8536 = vmatpush.bf16.msra.mxu0 %v5994
        %8537 = vmatpush.bf16.msra.mxu0 %v5992
        %8538 = vmatpush.bf16.msra.mxu0 %v5990
        %8539 = vmatpush.bf16.msra.mxu0 %v5988
        %8540 = vmatpush.bf16.msra.mxu0 %v5986
        %8541 = vmatpush.bf16.msra.mxu0 %v5984
        %8542 = vmatmul.bf16.gmra.mxu0 %v1724
        %v8543 = vpop.f32.mrf.mxu0
        %v8544 = vadd.f32 %v8531, %v8543
        %v8545 = vpop.f32.mrf.mxu0
        %8546 = vdwg.mxu0
        %8547 = vmatpush.bf16.msra.mxu0 %v6014
        %8548 = vmatpush.bf16.msra.mxu0 %v6012
        %8549 = vmatpush.bf16.msra.mxu0 %v6010
        %8550 = vmatpush.bf16.msra.mxu0 %v6008
        %8551 = vmatpush.bf16.msra.mxu0 %v6006
        %8552 = vmatpush.bf16.msra.mxu0 %v6004
        %8553 = vmatpush.bf16.msra.mxu0 %v6002
        %8554 = vmatpush.bf16.msra.mxu0 %v6000
        %8555 = vmatmul.bf16.gmra.mxu0 %v1725
        %v8556 = vpop.f32.mrf.mxu0
        %v8557 = vadd.f32 %v8544, %v8556
        %v8558 = vpop.f32.mrf.mxu0
        %8559 = vdwg.mxu0
        %8560 = vmatpush.bf16.msra.mxu0 %v6030
        %8561 = vmatpush.bf16.msra.mxu0 %v6028
        %8562 = vmatpush.bf16.msra.mxu0 %v6026
        %8563 = vmatpush.bf16.msra.mxu0 %v6024
        %8564 = vmatpush.bf16.msra.mxu0 %v6022
        %8565 = vmatpush.bf16.msra.mxu0 %v6020
        %8566 = vmatpush.bf16.msra.mxu0 %v6018
        %8567 = vmatpush.bf16.msra.mxu0 %v6016
        %8568 = vmatmul.bf16.gmra.mxu0 %v1726
        %v8569 = vpop.f32.mrf.mxu0
        %v8570 = vadd.f32 %v8557, %v8569
        %v8571 = vpop.f32.mrf.mxu0
        %8572 = vdwg.mxu0
        %8573 = vmatpush.bf16.msra.mxu0 %v6046
        %8574 = vmatpush.bf16.msra.mxu0 %v6044
        %8575 = vmatpush.bf16.msra.mxu0 %v6042
        %8576 = vmatpush.bf16.msra.mxu0 %v6040
        %8577 = vmatpush.bf16.msra.mxu0 %v6038
        %8578 = vmatpush.bf16.msra.mxu0 %v6036
        %8579 = vmatpush.bf16.msra.mxu0 %v6034
        %8580 = vmatpush.bf16.msra.mxu0 %v6032
        %8581 = vmatmul.bf16.gmra.mxu0 %v1727
        %v8582 = vpop.f32.mrf.mxu0
        %v8583 = vadd.f32 %v8570, %v8582
        %v8584 = vpop.f32.mrf.mxu0
        %8585 = vdwg.mxu0
        %8586 = vmatpush.bf16.msra.mxu0 %v6062
        %8587 = vmatpush.bf16.msra.mxu0 %v6060
        %8588 = vmatpush.bf16.msra.mxu0 %v6058
        %8589 = vmatpush.bf16.msra.mxu0 %v6056
        %8590 = vmatpush.bf16.msra.mxu0 %v6054
        %8591 = vmatpush.bf16.msra.mxu0 %v6052
        %8592 = vmatpush.bf16.msra.mxu0 %v6050
        %8593 = vmatpush.bf16.msra.mxu0 %v6048
        %8594 = vmatmul.bf16.gmra.mxu0 %v1728
        %v8595 = vpop.f32.mrf.mxu0
        %v8596 = vadd.f32 %v8583, %v8595
        %v8597 = vpop.f32.mrf.mxu0
        %8598 = vdwg.mxu0
        %8599 = vmatpush.bf16.msra.mxu0 %v6078
        %8600 = vmatpush.bf16.msra.mxu0 %v6076
        %8601 = vmatpush.bf16.msra.mxu0 %v6074
        %8602 = vmatpush.bf16.msra.mxu0 %v6072
        %8603 = vmatpush.bf16.msra.mxu0 %v6070
        %8604 = vmatpush.bf16.msra.mxu0 %v6068
        %8605 = vmatpush.bf16.msra.mxu0 %v6066
        %8606 = vmatpush.bf16.msra.mxu0 %v6064
        %8607 = vmatmul.bf16.gmra.mxu0 %v1729
        %v8608 = vpop.f32.mrf.mxu0
        %v8609 = vadd.f32 %v8596, %v8608
        %v8610 = vpop.f32.mrf.mxu0
        %8611 = vdwg.mxu0
        %8612 = vmatpush.bf16.msra.mxu0 %v6094
        %8613 = vmatpush.bf16.msra.mxu0 %v6092
        %8614 = vmatpush.bf16.msra.mxu0 %v6090
        %8615 = vmatpush.bf16.msra.mxu0 %v6088
        %8616 = vmatpush.bf16.msra.mxu0 %v6086
        %8617 = vmatpush.bf16.msra.mxu0 %v6084
        %8618 = vmatpush.bf16.msra.mxu0 %v6082
        %8619 = vmatpush.bf16.msra.mxu0 %v6080
        %8620 = vmatmul.bf16.gmra.mxu0 %v1730
        %v8621 = vpop.f32.mrf.mxu0
        %v8622 = vadd.f32 %v8609, %v8621
        %v8623 = vpop.f32.mrf.mxu0
        %8624 = vdwg.mxu0
        %8625 = vmatpush.bf16.msra.mxu0 %v6110
        %8626 = vmatpush.bf16.msra.mxu0 %v6108
        %8627 = vmatpush.bf16.msra.mxu0 %v6106
        %8628 = vmatpush.bf16.msra.mxu0 %v6104
        %8629 = vmatpush.bf16.msra.mxu0 %v6102
        %8630 = vmatpush.bf16.msra.mxu0 %v6100
        %8631 = vmatpush.bf16.msra.mxu0 %v6098
        %8632 = vmatpush.bf16.msra.mxu0 %v6096
        %8633 = vmatmul.bf16.gmra.mxu0 %v1731
        %v8634 = vpop.f32.mrf.mxu0
        %v8635 = vadd.f32 %v8622, %v8634
        %v8636 = vpop.f32.mrf.mxu0
        %8637 = vdwg.mxu0
        %8638 = vmatpush.bf16.msra.mxu0 %v6126
        %8639 = vmatpush.bf16.msra.mxu0 %v6124
        %8640 = vmatpush.bf16.msra.mxu0 %v6122
        %8641 = vmatpush.bf16.msra.mxu0 %v6120
        %8642 = vmatpush.bf16.msra.mxu0 %v6118
        %8643 = vmatpush.bf16.msra.mxu0 %v6116
        %8644 = vmatpush.bf16.msra.mxu0 %v6114
        %8645 = vmatpush.bf16.msra.mxu0 %v6112
        %8646 = vmatmul.bf16.gmra.mxu0 %v1732
        %v8647 = vpop.f32.mrf.mxu0
        %v8648 = vadd.f32 %v8635, %v8647
        %v8649 = vpop.f32.mrf.mxu0
        %8650 = vdwg.mxu0
        %8651 = vmatpush.bf16.msra.mxu0 %v6142
        %8652 = vmatpush.bf16.msra.mxu0 %v6140
        %8653 = vmatpush.bf16.msra.mxu0 %v6138
        %8654 = vmatpush.bf16.msra.mxu0 %v6136
        %8655 = vmatpush.bf16.msra.mxu0 %v6134
        %8656 = vmatpush.bf16.msra.mxu0 %v6132
        %8657 = vmatpush.bf16.msra.mxu0 %v6130
        %8658 = vmatpush.bf16.msra.mxu0 %v6128
        %8659 = vmatmul.bf16.gmra.mxu0 %v1733
        %v8660 = vpop.f32.mrf.mxu0
        %v8661 = vadd.f32 %v8648, %v8660
        %v8662 = vpop.f32.mrf.mxu0
        %8663 = vdwg.mxu0
        %8664 = vmatpush.bf16.msra.mxu0 %v6158
        %8665 = vmatpush.bf16.msra.mxu0 %v6156
        %8666 = vmatpush.bf16.msra.mxu0 %v6154
        %8667 = vmatpush.bf16.msra.mxu0 %v6152
        %8668 = vmatpush.bf16.msra.mxu0 %v6150
        %8669 = vmatpush.bf16.msra.mxu0 %v6148
        %8670 = vmatpush.bf16.msra.mxu0 %v6146
        %8671 = vmatpush.bf16.msra.mxu0 %v6144
        %8672 = vmatmul.bf16.gmra.mxu0 %v1734
        %v8673 = vpop.f32.mrf.mxu0
        %v8674 = vadd.f32 %v8661, %v8673
        %v8675 = vpop.f32.mrf.mxu0
        %8676 = vdwg.mxu0
        %8677 = vmatpush.bf16.msra.mxu0 %v6174
        %8678 = vmatpush.bf16.msra.mxu0 %v6172
        %8679 = vmatpush.bf16.msra.mxu0 %v6170
        %8680 = vmatpush.bf16.msra.mxu0 %v6168
        %8681 = vmatpush.bf16.msra.mxu0 %v6166
        %8682 = vmatpush.bf16.msra.mxu0 %v6164
        %8683 = vmatpush.bf16.msra.mxu0 %v6162
        %8684 = vmatpush.bf16.msra.mxu0 %v6160
        %8685 = vmatmul.bf16.gmra.mxu0 %v1735
        %v8686 = vpop.f32.mrf.mxu0
        %v8687 = vadd.f32 %v8674, %v8686
        %v8688 = vpop.f32.mrf.mxu0
        %8689 = vdwg.mxu0
        %8690 = vmatpush.bf16.msra.mxu0 %v6190
        %8691 = vmatpush.bf16.msra.mxu0 %v6188
        %8692 = vmatpush.bf16.msra.mxu0 %v6186
        %8693 = vmatpush.bf16.msra.mxu0 %v6184
        %8694 = vmatpush.bf16.msra.mxu0 %v6182
        %8695 = vmatpush.bf16.msra.mxu0 %v6180
        %8696 = vmatpush.bf16.msra.mxu0 %v6178
        %8697 = vmatpush.bf16.msra.mxu0 %v6176
        %8698 = vmatmul.bf16.gmra.mxu0 %v1736
        %v8699 = vpop.f32.mrf.mxu0
        %v8700 = vadd.f32 %v8687, %v8699
        %v8701 = vpop.f32.mrf.mxu0
        %8702 = vdwg.mxu0
        %8703 = vmatpush.bf16.msra.mxu0 %v6206
        %8704 = vmatpush.bf16.msra.mxu0 %v6204
        %8705 = vmatpush.bf16.msra.mxu0 %v6202
        %8706 = vmatpush.bf16.msra.mxu0 %v6200
        %8707 = vmatpush.bf16.msra.mxu0 %v6198
        %8708 = vmatpush.bf16.msra.mxu0 %v6196
        %8709 = vmatpush.bf16.msra.mxu0 %v6194
        %8710 = vmatpush.bf16.msra.mxu0 %v6192
        %8711 = vmatmul.bf16.gmra.mxu0 %v1737
        %v8712 = vpop.f32.mrf.mxu0
        %v8713 = vadd.f32 %v8700, %v8712
        %v8714 = vpop.f32.mrf.mxu0
        %8715 = vdwg.mxu0
        %8716 = vmatpush.bf16.msra.mxu0 %v6222
        %8717 = vmatpush.bf16.msra.mxu0 %v6220
        %8718 = vmatpush.bf16.msra.mxu0 %v6218
        %8719 = vmatpush.bf16.msra.mxu0 %v6216
        %8720 = vmatpush.bf16.msra.mxu0 %v6214
        %8721 = vmatpush.bf16.msra.mxu0 %v6212
        %8722 = vmatpush.bf16.msra.mxu0 %v6210
        %8723 = vmatpush.bf16.msra.mxu0 %v6208
        %8724 = vmatmul.bf16.gmra.mxu0 %v1738
        %v8725 = vpop.f32.mrf.mxu0
        %v8726 = vadd.f32 %v8713, %v8725
        %v8727 = vpop.f32.mrf.mxu0
        %8728 = vdwg.mxu0
        %8729 = vmatpush.bf16.msra.mxu0 %v6238
        %8730 = vmatpush.bf16.msra.mxu0 %v6236
        %8731 = vmatpush.bf16.msra.mxu0 %v6234
        %8732 = vmatpush.bf16.msra.mxu0 %v6232
        %8733 = vmatpush.bf16.msra.mxu0 %v6230
        %8734 = vmatpush.bf16.msra.mxu0 %v6228
        %8735 = vmatpush.bf16.msra.mxu0 %v6226
        %8736 = vmatpush.bf16.msra.mxu0 %v6224
        %8737 = vmatmul.bf16.gmra.mxu0 %v1739
        %v8738 = vpop.f32.mrf.mxu0
        %v8739 = vadd.f32 %v8726, %v8738
        %v8740 = vpop.f32.mrf.mxu0
        %8741 = vdwg.mxu0
        %8742 = vmatpush.bf16.msra.mxu0 %v6254
        %8743 = vmatpush.bf16.msra.mxu0 %v6252
        %8744 = vmatpush.bf16.msra.mxu0 %v6250
        %8745 = vmatpush.bf16.msra.mxu0 %v6248
        %8746 = vmatpush.bf16.msra.mxu0 %v6246
        %8747 = vmatpush.bf16.msra.mxu0 %v6244
        %8748 = vmatpush.bf16.msra.mxu0 %v6242
        %8749 = vmatpush.bf16.msra.mxu0 %v6240
        %8750 = vmatmul.bf16.gmra.mxu0 %v1740
        %v8751 = vpop.f32.mrf.mxu0
        %v8752 = vadd.f32 %v8739, %v8751
        %v8753 = vpop.f32.mrf.mxu0
        %8754 = vdwg.mxu0
        %8755 = vmatpush.bf16.msra.mxu0 %v6270
        %8756 = vmatpush.bf16.msra.mxu0 %v6268
        %8757 = vmatpush.bf16.msra.mxu0 %v6266
        %8758 = vmatpush.bf16.msra.mxu0 %v6264
        %8759 = vmatpush.bf16.msra.mxu0 %v6262
        %8760 = vmatpush.bf16.msra.mxu0 %v6260
        %8761 = vmatpush.bf16.msra.mxu0 %v6258
        %8762 = vmatpush.bf16.msra.mxu0 %v6256
        %8763 = vmatmul.bf16.gmra.mxu0 %v1741
        %v8764 = vpop.f32.mrf.mxu0
        %v8765 = vadd.f32 %v8752, %v8764
        %v8766 = vpop.f32.mrf.mxu0
        %8767 = vdwg.mxu0
        %8768 = vmatpush.bf16.msra.mxu0 %v6286
        %8769 = vmatpush.bf16.msra.mxu0 %v6284
        %8770 = vmatpush.bf16.msra.mxu0 %v6282
        %8771 = vmatpush.bf16.msra.mxu0 %v6280
        %8772 = vmatpush.bf16.msra.mxu0 %v6278
        %8773 = vmatpush.bf16.msra.mxu0 %v6276
        %8774 = vmatpush.bf16.msra.mxu0 %v6274
        %8775 = vmatpush.bf16.msra.mxu0 %v6272
        %8776 = vmatmul.bf16.gmra.mxu0 %v1742
        %v8777 = vpop.f32.mrf.mxu0
        %v8778 = vadd.f32 %v8765, %v8777
        %v8779 = vpop.f32.mrf.mxu0
        %8780 = vdwg.mxu0
        %8781 = vmatpush.bf16.msra.mxu0 %v6302
        %8782 = vmatpush.bf16.msra.mxu0 %v6300
        %8783 = vmatpush.bf16.msra.mxu0 %v6298
        %8784 = vmatpush.bf16.msra.mxu0 %v6296
        %8785 = vmatpush.bf16.msra.mxu0 %v6294
        %8786 = vmatpush.bf16.msra.mxu0 %v6292
        %8787 = vmatpush.bf16.msra.mxu0 %v6290
        %8788 = vmatpush.bf16.msra.mxu0 %v6288
        %8789 = vmatmul.bf16.gmra.mxu0 %v1743
        %v8790 = vpop.f32.mrf.mxu0
        %v8791 = vadd.f32 %v8778, %v8790
        %v8792 = vpop.f32.mrf.mxu0
        %8793 = vdwg.mxu0
        %8794 = vmatpush.bf16.msra.mxu0 %v6318
        %8795 = vmatpush.bf16.msra.mxu0 %v6316
        %8796 = vmatpush.bf16.msra.mxu0 %v6314
        %8797 = vmatpush.bf16.msra.mxu0 %v6312
        %8798 = vmatpush.bf16.msra.mxu0 %v6310
        %8799 = vmatpush.bf16.msra.mxu0 %v6308
        %8800 = vmatpush.bf16.msra.mxu0 %v6306
        %8801 = vmatpush.bf16.msra.mxu0 %v6304
        %8802 = vmatmul.bf16.gmra.mxu0 %v1744
        %v8803 = vpop.f32.mrf.mxu0
        %v8804 = vadd.f32 %v8791, %v8803
        %v8805 = vpop.f32.mrf.mxu0
        %8806 = vdwg.mxu0
        %8807 = vmatpush.bf16.msra.mxu0 %v6334
        %8808 = vmatpush.bf16.msra.mxu0 %v6332
        %8809 = vmatpush.bf16.msra.mxu0 %v6330
        %8810 = vmatpush.bf16.msra.mxu0 %v6328
        %8811 = vmatpush.bf16.msra.mxu0 %v6326
        %8812 = vmatpush.bf16.msra.mxu0 %v6324
        %8813 = vmatpush.bf16.msra.mxu0 %v6322
        %8814 = vmatpush.bf16.msra.mxu0 %v6320
        %8815 = vmatmul.bf16.gmra.mxu0 %v1745
        %v8816 = vpop.f32.mrf.mxu0
        %v8817 = vadd.f32 %v8804, %v8816
        %v8818 = vpop.f32.mrf.mxu0
        %8819 = vdwg.mxu0
        %8820 = vmatpush.bf16.msra.mxu0 %v6350
        %8821 = vmatpush.bf16.msra.mxu0 %v6348
        %8822 = vmatpush.bf16.msra.mxu0 %v6346
        %8823 = vmatpush.bf16.msra.mxu0 %v6344
        %8824 = vmatpush.bf16.msra.mxu0 %v6342
        %8825 = vmatpush.bf16.msra.mxu0 %v6340
        %8826 = vmatpush.bf16.msra.mxu0 %v6338
        %8827 = vmatpush.bf16.msra.mxu0 %v6336
        %8828 = vmatmul.bf16.gmra.mxu0 %v1746
        %v8829 = vpop.f32.mrf.mxu0
        %v8830 = vadd.f32 %v8817, %v8829
        %v8831 = vpop.f32.mrf.mxu0
        %8832 = vdwg.mxu0
        %8833 = vmatpush.bf16.msra.mxu0 %v6366
        %8834 = vmatpush.bf16.msra.mxu0 %v6364
        %8835 = vmatpush.bf16.msra.mxu0 %v6362
        %8836 = vmatpush.bf16.msra.mxu0 %v6360
        %8837 = vmatpush.bf16.msra.mxu0 %v6358
        %8838 = vmatpush.bf16.msra.mxu0 %v6356
        %8839 = vmatpush.bf16.msra.mxu0 %v6354
        %8840 = vmatpush.bf16.msra.mxu0 %v6352
        %8841 = vmatmul.bf16.gmra.mxu0 %v1747
        %v8842 = vpop.f32.mrf.mxu0
        %v8843 = vadd.f32 %v8830, %v8842
        %v8844 = vpop.f32.mrf.mxu0
        %8845 = vdwg.mxu0
        %8846 = vmatpush.bf16.msra.mxu0 %v6382
        %8847 = vmatpush.bf16.msra.mxu0 %v6380
        %8848 = vmatpush.bf16.msra.mxu0 %v6378
        %8849 = vmatpush.bf16.msra.mxu0 %v6376
        %8850 = vmatpush.bf16.msra.mxu0 %v6374
        %8851 = vmatpush.bf16.msra.mxu0 %v6372
        %8852 = vmatpush.bf16.msra.mxu0 %v6370
        %8853 = vmatpush.bf16.msra.mxu0 %v6368
        %8854 = vmatmul.bf16.gmra.mxu0 %v1748
        %v8855 = vpop.f32.mrf.mxu0
        %v8856 = vadd.f32 %v8843, %v8855
        %v8857 = vpop.f32.mrf.mxu0
        %8858 = vdwg.mxu0
        %8859 = vmatpush.bf16.msra.mxu0 %v6398
        %8860 = vmatpush.bf16.msra.mxu0 %v6396
        %8861 = vmatpush.bf16.msra.mxu0 %v6394
        %8862 = vmatpush.bf16.msra.mxu0 %v6392
        %8863 = vmatpush.bf16.msra.mxu0 %v6390
        %8864 = vmatpush.bf16.msra.mxu0 %v6388
        %8865 = vmatpush.bf16.msra.mxu0 %v6386
        %8866 = vmatpush.bf16.msra.mxu0 %v6384
        %8867 = vmatmul.bf16.gmra.mxu0 %v1749
        %v8868 = vpop.f32.mrf.mxu0
        %v8869 = vadd.f32 %v8856, %v8868
        %v8870 = vpop.f32.mrf.mxu0
        %8871 = vdwg.mxu0
        %8872 = vmatpush.bf16.msra.mxu0 %v6414
        %8873 = vmatpush.bf16.msra.mxu0 %v6412
        %8874 = vmatpush.bf16.msra.mxu0 %v6410
        %8875 = vmatpush.bf16.msra.mxu0 %v6408
        %8876 = vmatpush.bf16.msra.mxu0 %v6406
        %8877 = vmatpush.bf16.msra.mxu0 %v6404
        %8878 = vmatpush.bf16.msra.mxu0 %v6402
        %8879 = vmatpush.bf16.msra.mxu0 %v6400
        %8880 = vmatmul.bf16.gmra.mxu0 %v1750
        %v8881 = vpop.f32.mrf.mxu0
        %v8882 = vadd.f32 %v8869, %v8881
        %v8883 = vpop.f32.mrf.mxu0
        %8884 = vdwg.mxu0
        %8885 = vmatpush.bf16.msra.mxu0 %v6430
        %8886 = vmatpush.bf16.msra.mxu0 %v6428
        %8887 = vmatpush.bf16.msra.mxu0 %v6426
        %8888 = vmatpush.bf16.msra.mxu0 %v6424
        %8889 = vmatpush.bf16.msra.mxu0 %v6422
        %8890 = vmatpush.bf16.msra.mxu0 %v6420
        %8891 = vmatpush.bf16.msra.mxu0 %v6418
        %8892 = vmatpush.bf16.msra.mxu0 %v6416
        %8893 = vmatmul.bf16.gmra.mxu0 %v1751
        %v8894 = vpop.f32.mrf.mxu0
        %v8895 = vadd.f32 %v8882, %v8894
        %v8896 = vpop.f32.mrf.mxu0
        %8897 = vdwg.mxu0
        %8898 = vmatpush.bf16.msra.mxu0 %v6446
        %8899 = vmatpush.bf16.msra.mxu0 %v6444
        %8900 = vmatpush.bf16.msra.mxu0 %v6442
        %8901 = vmatpush.bf16.msra.mxu0 %v6440
        %8902 = vmatpush.bf16.msra.mxu0 %v6438
        %8903 = vmatpush.bf16.msra.mxu0 %v6436
        %8904 = vmatpush.bf16.msra.mxu0 %v6434
        %8905 = vmatpush.bf16.msra.mxu0 %v6432
        %8906 = vmatmul.bf16.gmra.mxu0 %v1752
        %v8907 = vpop.f32.mrf.mxu0
        %v8908 = vadd.f32 %v8895, %v8907
        %v8909 = vpop.f32.mrf.mxu0
        %8910 = vdwg.mxu0
        %8911 = vmatpush.bf16.msra.mxu0 %v6462
        %8912 = vmatpush.bf16.msra.mxu0 %v6460
        %8913 = vmatpush.bf16.msra.mxu0 %v6458
        %8914 = vmatpush.bf16.msra.mxu0 %v6456
        %8915 = vmatpush.bf16.msra.mxu0 %v6454
        %8916 = vmatpush.bf16.msra.mxu0 %v6452
        %8917 = vmatpush.bf16.msra.mxu0 %v6450
        %8918 = vmatpush.bf16.msra.mxu0 %v6448
        %8919 = vmatmul.bf16.gmra.mxu0 %v1753
        %v8920 = vpop.f32.mrf.mxu0
        %v8921 = vadd.f32 %v8908, %v8920
        %v8922 = vpop.f32.mrf.mxu0
        %8923 = vdwg.mxu0
        %8924 = vmatpush.bf16.msra.mxu0 %v6478
        %8925 = vmatpush.bf16.msra.mxu0 %v6476
        %8926 = vmatpush.bf16.msra.mxu0 %v6474
        %8927 = vmatpush.bf16.msra.mxu0 %v6472
        %8928 = vmatpush.bf16.msra.mxu0 %v6470
        %8929 = vmatpush.bf16.msra.mxu0 %v6468
        %8930 = vmatpush.bf16.msra.mxu0 %v6466
        %8931 = vmatpush.bf16.msra.mxu0 %v6464
        %8932 = vmatmul.bf16.gmra.mxu0 %v1754
        %v8933 = vpop.f32.mrf.mxu0
        %v8934 = vadd.f32 %v8921, %v8933
        %v8935 = vpop.f32.mrf.mxu0
        %8936 = vdwg.mxu0
        %8937 = vmatpush.bf16.msra.mxu0 %v6494
        %8938 = vmatpush.bf16.msra.mxu0 %v6492
        %8939 = vmatpush.bf16.msra.mxu0 %v6490
        %8940 = vmatpush.bf16.msra.mxu0 %v6488
        %8941 = vmatpush.bf16.msra.mxu0 %v6486
        %8942 = vmatpush.bf16.msra.mxu0 %v6484
        %8943 = vmatpush.bf16.msra.mxu0 %v6482
        %8944 = vmatpush.bf16.msra.mxu0 %v6480
        %8945 = vmatmul.bf16.gmra.mxu0 %v1755
        %v8946 = vpop.f32.mrf.mxu0
        %v8947 = vadd.f32 %v8934, %v8946
        %v8948 = vpop.f32.mrf.mxu0
        %8949 = vdwg.mxu0
        %8950 = vmatpush.bf16.msra.mxu0 %v6510
        %8951 = vmatpush.bf16.msra.mxu0 %v6508
        %8952 = vmatpush.bf16.msra.mxu0 %v6506
        %8953 = vmatpush.bf16.msra.mxu0 %v6504
        %8954 = vmatpush.bf16.msra.mxu0 %v6502
        %8955 = vmatpush.bf16.msra.mxu0 %v6500
        %8956 = vmatpush.bf16.msra.mxu0 %v6498
        %8957 = vmatpush.bf16.msra.mxu0 %v6496
        %8958 = vmatmul.bf16.gmra.mxu0 %v1756
        %v8959 = vpop.f32.mrf.mxu0
        %v8960 = vadd.f32 %v8947, %v8959
        %v8961 = vpop.f32.mrf.mxu0
        %8962 = vdwg.mxu0
        %8963 = vmatpush.bf16.msra.mxu0 %v6526
        %8964 = vmatpush.bf16.msra.mxu0 %v6524
        %8965 = vmatpush.bf16.msra.mxu0 %v6522
        %8966 = vmatpush.bf16.msra.mxu0 %v6520
        %8967 = vmatpush.bf16.msra.mxu0 %v6518
        %8968 = vmatpush.bf16.msra.mxu0 %v6516
        %8969 = vmatpush.bf16.msra.mxu0 %v6514
        %8970 = vmatpush.bf16.msra.mxu0 %v6512
        %8971 = vmatmul.bf16.gmra.mxu0 %v1757
        %v8972 = vpop.f32.mrf.mxu0
        %v8973 = vadd.f32 %v8960, %v8972
        %v8974 = vpop.f32.mrf.mxu0
        %8975 = vdwg.mxu0
        %8976 = vmatpush.bf16.msra.mxu0 %v6542
        %8977 = vmatpush.bf16.msra.mxu0 %v6540
        %8978 = vmatpush.bf16.msra.mxu0 %v6538
        %8979 = vmatpush.bf16.msra.mxu0 %v6536
        %8980 = vmatpush.bf16.msra.mxu0 %v6534
        %8981 = vmatpush.bf16.msra.mxu0 %v6532
        %8982 = vmatpush.bf16.msra.mxu0 %v6530
        %8983 = vmatpush.bf16.msra.mxu0 %v6528
        %8984 = vmatmul.bf16.gmra.mxu0 %v1758
        %v8985 = vpop.f32.mrf.mxu0
        %v8986 = vadd.f32 %v8973, %v8985
        %v8987 = vpop.f32.mrf.mxu0
        %8988 = vdwg.mxu0
        %8989 = vmatpush.bf16.msra.mxu0 %v6558
        %8990 = vmatpush.bf16.msra.mxu0 %v6556
        %8991 = vmatpush.bf16.msra.mxu0 %v6554
        %8992 = vmatpush.bf16.msra.mxu0 %v6552
        %8993 = vmatpush.bf16.msra.mxu0 %v6550
        %8994 = vmatpush.bf16.msra.mxu0 %v6548
        %8995 = vmatpush.bf16.msra.mxu0 %v6546
        %8996 = vmatpush.bf16.msra.mxu0 %v6544
        %8997 = vmatmul.bf16.gmra.mxu0 %v1759
        %v8998 = vpop.f32.mrf.mxu0
        %v8999 = vadd.f32 %v8986, %v8998
        %v9000 = vpop.f32.mrf.mxu0
        %9001 = vdwg.mxu0
        %9002 = vmatpush.bf16.msra.mxu0 %v6574
        %9003 = vmatpush.bf16.msra.mxu0 %v6572
        %9004 = vmatpush.bf16.msra.mxu0 %v6570
        %9005 = vmatpush.bf16.msra.mxu0 %v6568
        %9006 = vmatpush.bf16.msra.mxu0 %v6566
        %9007 = vmatpush.bf16.msra.mxu0 %v6564
        %9008 = vmatpush.bf16.msra.mxu0 %v6562
        %9009 = vmatpush.bf16.msra.mxu0 %v6560
        %9010 = vmatmul.bf16.gmra.mxu0 %v1760
        %v9011 = vpop.f32.mrf.mxu0
        %v9012 = vadd.f32 %v8999, %v9011
        %v9013 = vpop.f32.mrf.mxu0
        %9014 = vdwg.mxu0
        %9015 = vmatpush.bf16.msra.mxu0 %v6590
        %9016 = vmatpush.bf16.msra.mxu0 %v6588
        %9017 = vmatpush.bf16.msra.mxu0 %v6586
        %9018 = vmatpush.bf16.msra.mxu0 %v6584
        %9019 = vmatpush.bf16.msra.mxu0 %v6582
        %9020 = vmatpush.bf16.msra.mxu0 %v6580
        %9021 = vmatpush.bf16.msra.mxu0 %v6578
        %9022 = vmatpush.bf16.msra.mxu0 %v6576
        %9023 = vmatmul.bf16.gmra.mxu0 %v1761
        %v9024 = vpop.f32.mrf.mxu0
        %v9025 = vadd.f32 %v9012, %v9024
        %v9026 = vpop.f32.mrf.mxu0
        %9027 = vdwg.mxu0
        %9028 = vmatpush.bf16.msra.mxu0 %v6606
        %9029 = vmatpush.bf16.msra.mxu0 %v6604
        %9030 = vmatpush.bf16.msra.mxu0 %v6602
        %9031 = vmatpush.bf16.msra.mxu0 %v6600
        %9032 = vmatpush.bf16.msra.mxu0 %v6598
        %9033 = vmatpush.bf16.msra.mxu0 %v6596
        %9034 = vmatpush.bf16.msra.mxu0 %v6594
        %9035 = vmatpush.bf16.msra.mxu0 %v6592
        %9036 = vmatmul.bf16.gmra.mxu0 %v1762
        %v9037 = vpop.f32.mrf.mxu0
        %v9038 = vadd.f32 %v9025, %v9037
        %v9039 = vpop.f32.mrf.mxu0
        %9040 = vdwg.mxu0
        %9041 = vmatpush.bf16.msra.mxu0 %v6622
        %9042 = vmatpush.bf16.msra.mxu0 %v6620
        %9043 = vmatpush.bf16.msra.mxu0 %v6618
        %9044 = vmatpush.bf16.msra.mxu0 %v6616
        %9045 = vmatpush.bf16.msra.mxu0 %v6614
        %9046 = vmatpush.bf16.msra.mxu0 %v6612
        %9047 = vmatpush.bf16.msra.mxu0 %v6610
        %9048 = vmatpush.bf16.msra.mxu0 %v6608
        %9049 = vmatmul.bf16.gmra.mxu0 %v1763
        %v9050 = vpop.f32.mrf.mxu0
        %v9051 = vadd.f32 %v9038, %v9050
        %v9052 = vpop.f32.mrf.mxu0
        %9053 = vdwg.mxu0
        %9054 = vmatpush.bf16.msra.mxu0 %v6638
        %9055 = vmatpush.bf16.msra.mxu0 %v6636
        %9056 = vmatpush.bf16.msra.mxu0 %v6634
        %9057 = vmatpush.bf16.msra.mxu0 %v6632
        %9058 = vmatpush.bf16.msra.mxu0 %v6630
        %9059 = vmatpush.bf16.msra.mxu0 %v6628
        %9060 = vmatpush.bf16.msra.mxu0 %v6626
        %9061 = vmatpush.bf16.msra.mxu0 %v6624
        %9062 = vmatmul.bf16.gmra.mxu0 %v1764
        %v9063 = vpop.f32.mrf.mxu0
        %v9064 = vadd.f32 %v9051, %v9063
        %v9065 = vpop.f32.mrf.mxu0
        %9066 = vdwg.mxu0
        %9067 = vmatpush.bf16.msra.mxu0 %v6654
        %9068 = vmatpush.bf16.msra.mxu0 %v6652
        %9069 = vmatpush.bf16.msra.mxu0 %v6650
        %9070 = vmatpush.bf16.msra.mxu0 %v6648
        %9071 = vmatpush.bf16.msra.mxu0 %v6646
        %9072 = vmatpush.bf16.msra.mxu0 %v6644
        %9073 = vmatpush.bf16.msra.mxu0 %v6642
        %9074 = vmatpush.bf16.msra.mxu0 %v6640
        %9075 = vmatmul.bf16.gmra.mxu0 %v1765
        %v9076 = vpop.f32.mrf.mxu0
        %v9077 = vadd.f32 %v9064, %v9076
        %v9078 = vpop.f32.mrf.mxu0
        %9079 = vdwg.mxu0
        %9080 = vmatpush.bf16.msra.mxu0 %v6670
        %9081 = vmatpush.bf16.msra.mxu0 %v6668
        %9082 = vmatpush.bf16.msra.mxu0 %v6666
        %9083 = vmatpush.bf16.msra.mxu0 %v6664
        %9084 = vmatpush.bf16.msra.mxu0 %v6662
        %9085 = vmatpush.bf16.msra.mxu0 %v6660
        %9086 = vmatpush.bf16.msra.mxu0 %v6658
        %9087 = vmatpush.bf16.msra.mxu0 %v6656
        %9088 = vmatmul.bf16.gmra.mxu0 %v1766
        %v9089 = vpop.f32.mrf.mxu0
        %v9090 = vadd.f32 %v9077, %v9089
        %v9091 = vpop.f32.mrf.mxu0
        %9092 = vdwg.mxu0
        %9093 = vmatpush.bf16.msra.mxu0 %v6686
        %9094 = vmatpush.bf16.msra.mxu0 %v6684
        %9095 = vmatpush.bf16.msra.mxu0 %v6682
        %9096 = vmatpush.bf16.msra.mxu0 %v6680
        %9097 = vmatpush.bf16.msra.mxu0 %v6678
        %9098 = vmatpush.bf16.msra.mxu0 %v6676
        %9099 = vmatpush.bf16.msra.mxu0 %v6674
        %9100 = vmatpush.bf16.msra.mxu0 %v6672
        %9101 = vmatmul.bf16.gmra.mxu0 %v1767
        %v9102 = vpop.f32.mrf.mxu0
        %v9103 = vadd.f32 %v9090, %v9102
        %v9104 = vpop.f32.mrf.mxu0
        %9105 = vdwg.mxu0
        %9106 = vmatpush.bf16.msra.mxu0 %v6702
        %9107 = vmatpush.bf16.msra.mxu0 %v6700
        %9108 = vmatpush.bf16.msra.mxu0 %v6698
        %9109 = vmatpush.bf16.msra.mxu0 %v6696
        %9110 = vmatpush.bf16.msra.mxu0 %v6694
        %9111 = vmatpush.bf16.msra.mxu0 %v6692
        %9112 = vmatpush.bf16.msra.mxu0 %v6690
        %9113 = vmatpush.bf16.msra.mxu0 %v6688
        %9114 = vmatmul.bf16.gmra.mxu0 %v1768
        %v9115 = vpop.f32.mrf.mxu0
        %v9116 = vadd.f32 %v9103, %v9115
        %v9117 = vpop.f32.mrf.mxu0
        %9118 = vdwg.mxu0
        %9119 = vmatpush.bf16.msra.mxu0 %v6718
        %9120 = vmatpush.bf16.msra.mxu0 %v6716
        %9121 = vmatpush.bf16.msra.mxu0 %v6714
        %9122 = vmatpush.bf16.msra.mxu0 %v6712
        %9123 = vmatpush.bf16.msra.mxu0 %v6710
        %9124 = vmatpush.bf16.msra.mxu0 %v6708
        %9125 = vmatpush.bf16.msra.mxu0 %v6706
        %9126 = vmatpush.bf16.msra.mxu0 %v6704
        %9127 = vmatmul.bf16.gmra.mxu0 %v1769
        %v9128 = vpop.f32.mrf.mxu0
        %v9129 = vadd.f32 %v9116, %v9128
        %v9130 = vpop.f32.mrf.mxu0
        %9131 = vdwg.mxu0
        %9132 = vmatpush.bf16.msra.mxu0 %v6734
        %9133 = vmatpush.bf16.msra.mxu0 %v6732
        %9134 = vmatpush.bf16.msra.mxu0 %v6730
        %9135 = vmatpush.bf16.msra.mxu0 %v6728
        %9136 = vmatpush.bf16.msra.mxu0 %v6726
        %9137 = vmatpush.bf16.msra.mxu0 %v6724
        %9138 = vmatpush.bf16.msra.mxu0 %v6722
        %9139 = vmatpush.bf16.msra.mxu0 %v6720
        %9140 = vmatmul.bf16.gmra.mxu0 %v1770
        %v9141 = vpop.f32.mrf.mxu0
        %v9142 = vadd.f32 %v9129, %v9141
        %v9143 = vpop.f32.mrf.mxu0
        %9144 = vdwg.mxu0
        %9145 = vmatpush.bf16.msra.mxu0 %v6750
        %9146 = vmatpush.bf16.msra.mxu0 %v6748
        %9147 = vmatpush.bf16.msra.mxu0 %v6746
        %9148 = vmatpush.bf16.msra.mxu0 %v6744
        %9149 = vmatpush.bf16.msra.mxu0 %v6742
        %9150 = vmatpush.bf16.msra.mxu0 %v6740
        %9151 = vmatpush.bf16.msra.mxu0 %v6738
        %9152 = vmatpush.bf16.msra.mxu0 %v6736
        %9153 = vmatmul.bf16.gmra.mxu0 %v1771
        %v9154 = vpop.f32.mrf.mxu0
        %v9155 = vadd.f32 %v9142, %v9154
        %v9156 = vpop.f32.mrf.mxu0
        %9157 = vdwg.mxu0
        %9158 = vmatpush.bf16.msra.mxu0 %v6766
        %9159 = vmatpush.bf16.msra.mxu0 %v6764
        %9160 = vmatpush.bf16.msra.mxu0 %v6762
        %9161 = vmatpush.bf16.msra.mxu0 %v6760
        %9162 = vmatpush.bf16.msra.mxu0 %v6758
        %9163 = vmatpush.bf16.msra.mxu0 %v6756
        %9164 = vmatpush.bf16.msra.mxu0 %v6754
        %9165 = vmatpush.bf16.msra.mxu0 %v6752
        %9166 = vmatmul.bf16.gmra.mxu0 %v1772
        %v9167 = vpop.f32.mrf.mxu0
        %v9168 = vadd.f32 %v9155, %v9167
        %v9169 = vpop.f32.mrf.mxu0
        %9170 = vdwg.mxu0
        %9171 = vmatpush.bf16.msra.mxu0 %v6782
        %9172 = vmatpush.bf16.msra.mxu0 %v6780
        %9173 = vmatpush.bf16.msra.mxu0 %v6778
        %9174 = vmatpush.bf16.msra.mxu0 %v6776
        %9175 = vmatpush.bf16.msra.mxu0 %v6774
        %9176 = vmatpush.bf16.msra.mxu0 %v6772
        %9177 = vmatpush.bf16.msra.mxu0 %v6770
        %9178 = vmatpush.bf16.msra.mxu0 %v6768
        %9179 = vmatmul.bf16.gmra.mxu0 %v1773
        %v9180 = vpop.f32.mrf.mxu0
        %v9181 = vadd.f32 %v9168, %v9180
        %v9182 = vpop.f32.mrf.mxu0
        %9183 = vdwg.mxu0
        %9184 = vmatpush.bf16.msra.mxu0 %v6798
        %9185 = vmatpush.bf16.msra.mxu0 %v6796
        %9186 = vmatpush.bf16.msra.mxu0 %v6794
        %9187 = vmatpush.bf16.msra.mxu0 %v6792
        %9188 = vmatpush.bf16.msra.mxu0 %v6790
        %9189 = vmatpush.bf16.msra.mxu0 %v6788
        %9190 = vmatpush.bf16.msra.mxu0 %v6786
        %9191 = vmatpush.bf16.msra.mxu0 %v6784
        %9192 = vmatmul.bf16.gmra.mxu0 %v1774
        %v9193 = vpop.f32.mrf.mxu0
        %v9194 = vadd.f32 %v9181, %v9193
        %v9195 = vpop.f32.mrf.mxu0
        %9196 = vdwg.mxu0
        %9197 = vmatpush.bf16.msra.mxu0 %v6814
        %9198 = vmatpush.bf16.msra.mxu0 %v6812
        %9199 = vmatpush.bf16.msra.mxu0 %v6810
        %9200 = vmatpush.bf16.msra.mxu0 %v6808
        %9201 = vmatpush.bf16.msra.mxu0 %v6806
        %9202 = vmatpush.bf16.msra.mxu0 %v6804
        %9203 = vmatpush.bf16.msra.mxu0 %v6802
        %9204 = vmatpush.bf16.msra.mxu0 %v6800
        %9205 = vmatmul.bf16.gmra.mxu0 %v1775
        %v9206 = vpop.f32.mrf.mxu0
        %v9207 = vadd.f32 %v9194, %v9206
        %v9208 = vpop.f32.mrf.mxu0
        %9209 = vdwg.mxu0
        %9210 = vmatpush.bf16.msra.mxu0 %v6830
        %9211 = vmatpush.bf16.msra.mxu0 %v6828
        %9212 = vmatpush.bf16.msra.mxu0 %v6826
        %9213 = vmatpush.bf16.msra.mxu0 %v6824
        %9214 = vmatpush.bf16.msra.mxu0 %v6822
        %9215 = vmatpush.bf16.msra.mxu0 %v6820
        %9216 = vmatpush.bf16.msra.mxu0 %v6818
        %9217 = vmatpush.bf16.msra.mxu0 %v6816
        %9218 = vmatmul.bf16.gmra.mxu0 %v1776
        %v9219 = vpop.f32.mrf.mxu0
        %v9220 = vadd.f32 %v9207, %v9219
        %v9221 = vpop.f32.mrf.mxu0
        %9222 = vdwg.mxu0
        %9223 = vmatpush.bf16.msra.mxu0 %v6846
        %9224 = vmatpush.bf16.msra.mxu0 %v6844
        %9225 = vmatpush.bf16.msra.mxu0 %v6842
        %9226 = vmatpush.bf16.msra.mxu0 %v6840
        %9227 = vmatpush.bf16.msra.mxu0 %v6838
        %9228 = vmatpush.bf16.msra.mxu0 %v6836
        %9229 = vmatpush.bf16.msra.mxu0 %v6834
        %9230 = vmatpush.bf16.msra.mxu0 %v6832
        %9231 = vmatmul.bf16.gmra.mxu0 %v1777
        %v9232 = vpop.f32.mrf.mxu0
        %v9233 = vadd.f32 %v9220, %v9232
        %v9234 = vpop.f32.mrf.mxu0
        %9235 = vdwg.mxu0
        %9236 = vmatpush.bf16.msra.mxu0 %v6862
        %9237 = vmatpush.bf16.msra.mxu0 %v6860
        %9238 = vmatpush.bf16.msra.mxu0 %v6858
        %9239 = vmatpush.bf16.msra.mxu0 %v6856
        %9240 = vmatpush.bf16.msra.mxu0 %v6854
        %9241 = vmatpush.bf16.msra.mxu0 %v6852
        %9242 = vmatpush.bf16.msra.mxu0 %v6850
        %9243 = vmatpush.bf16.msra.mxu0 %v6848
        %9244 = vmatmul.bf16.gmra.mxu0 %v1778
        %v9245 = vpop.f32.mrf.mxu0
        %v9246 = vadd.f32 %v9233, %v9245
        %v9247 = vpop.f32.mrf.mxu0
        %9248 = vdwg.mxu0
        %9249 = vmatpush.bf16.msra.mxu0 %v6878
        %9250 = vmatpush.bf16.msra.mxu0 %v6876
        %9251 = vmatpush.bf16.msra.mxu0 %v6874
        %9252 = vmatpush.bf16.msra.mxu0 %v6872
        %9253 = vmatpush.bf16.msra.mxu0 %v6870
        %9254 = vmatpush.bf16.msra.mxu0 %v6868
        %9255 = vmatpush.bf16.msra.mxu0 %v6866
        %9256 = vmatpush.bf16.msra.mxu0 %v6864
        %9257 = vmatmul.bf16.gmra.mxu0 %v1779
        %v9258 = vpop.f32.mrf.mxu0
        %v9259 = vadd.f32 %v9246, %v9258
        %v9260 = vpop.f32.mrf.mxu0
        %9261 = vdwg.mxu0
        %9262 = vmatpush.bf16.msra.mxu0 %v6894
        %9263 = vmatpush.bf16.msra.mxu0 %v6892
        %9264 = vmatpush.bf16.msra.mxu0 %v6890
        %9265 = vmatpush.bf16.msra.mxu0 %v6888
        %9266 = vmatpush.bf16.msra.mxu0 %v6886
        %9267 = vmatpush.bf16.msra.mxu0 %v6884
        %9268 = vmatpush.bf16.msra.mxu0 %v6882
        %9269 = vmatpush.bf16.msra.mxu0 %v6880
        %9270 = vmatmul.bf16.gmra.mxu0 %v1780
        %v9271 = vpop.f32.mrf.mxu0
        %v9272 = vadd.f32 %v9259, %v9271
        %v9273 = vpop.f32.mrf.mxu0
        %9274 = vdwg.mxu0
        %9275 = vmatpush.bf16.msra.mxu0 %v6910
        %9276 = vmatpush.bf16.msra.mxu0 %v6908
        %9277 = vmatpush.bf16.msra.mxu0 %v6906
        %9278 = vmatpush.bf16.msra.mxu0 %v6904
        %9279 = vmatpush.bf16.msra.mxu0 %v6902
        %9280 = vmatpush.bf16.msra.mxu0 %v6900
        %9281 = vmatpush.bf16.msra.mxu0 %v6898
        %9282 = vmatpush.bf16.msra.mxu0 %v6896
        %9283 = vmatmul.bf16.gmra.mxu0 %v1781
        %v9284 = vpop.f32.mrf.mxu0
        %v9285 = vadd.f32 %v9272, %v9284
        %v9286 = vpop.f32.mrf.mxu0
        %9287 = vdwg.mxu0
        %9288 = vmatpush.bf16.msra.mxu0 %v6926
        %9289 = vmatpush.bf16.msra.mxu0 %v6924
        %9290 = vmatpush.bf16.msra.mxu0 %v6922
        %9291 = vmatpush.bf16.msra.mxu0 %v6920
        %9292 = vmatpush.bf16.msra.mxu0 %v6918
        %9293 = vmatpush.bf16.msra.mxu0 %v6916
        %9294 = vmatpush.bf16.msra.mxu0 %v6914
        %9295 = vmatpush.bf16.msra.mxu0 %v6912
        %9296 = vmatmul.bf16.gmra.mxu0 %v1782
        %v9297 = vpop.f32.mrf.mxu0
        %v9298 = vadd.f32 %v9285, %v9297
        %v9299 = vpop.f32.mrf.mxu0
        %9300 = vdwg.mxu0
        %9301 = vmatpush.bf16.msra.mxu0 %v6942
        %9302 = vmatpush.bf16.msra.mxu0 %v6940
        %9303 = vmatpush.bf16.msra.mxu0 %v6938
        %9304 = vmatpush.bf16.msra.mxu0 %v6936
        %9305 = vmatpush.bf16.msra.mxu0 %v6934
        %9306 = vmatpush.bf16.msra.mxu0 %v6932
        %9307 = vmatpush.bf16.msra.mxu0 %v6930
        %9308 = vmatpush.bf16.msra.mxu0 %v6928
        %9309 = vmatmul.bf16.gmra.mxu0 %v1783
        %v9310 = vpop.f32.mrf.mxu0
        %v9311 = vadd.f32 %v9298, %v9310
        %v9312 = vpop.f32.mrf.mxu0
        %9313 = vdwg.mxu0
        %9314 = vmatpush.bf16.msra.mxu0 %v6958
        %9315 = vmatpush.bf16.msra.mxu0 %v6956
        %9316 = vmatpush.bf16.msra.mxu0 %v6954
        %9317 = vmatpush.bf16.msra.mxu0 %v6952
        %9318 = vmatpush.bf16.msra.mxu0 %v6950
        %9319 = vmatpush.bf16.msra.mxu0 %v6948
        %9320 = vmatpush.bf16.msra.mxu0 %v6946
        %9321 = vmatpush.bf16.msra.mxu0 %v6944
        %9322 = vmatmul.bf16.gmra.mxu0 %v1784
        %v9323 = vpop.f32.mrf.mxu0
        %v9324 = vadd.f32 %v9311, %v9323
        %v9325 = vpop.f32.mrf.mxu0
        %9326 = vdwg.mxu0
        %9327 = vmatpush.bf16.msra.mxu0 %v6974
        %9328 = vmatpush.bf16.msra.mxu0 %v6972
        %9329 = vmatpush.bf16.msra.mxu0 %v6970
        %9330 = vmatpush.bf16.msra.mxu0 %v6968
        %9331 = vmatpush.bf16.msra.mxu0 %v6966
        %9332 = vmatpush.bf16.msra.mxu0 %v6964
        %9333 = vmatpush.bf16.msra.mxu0 %v6962
        %9334 = vmatpush.bf16.msra.mxu0 %v6960
        %9335 = vmatmul.bf16.gmra.mxu0 %v1785
        %v9336 = vpop.f32.mrf.mxu0
        %v9337 = vadd.f32 %v9324, %v9336
        %v9338 = vpop.f32.mrf.mxu0
        %9339 = vdwg.mxu0
        %9340 = vmatpush.bf16.msra.mxu0 %v6990
        %9341 = vmatpush.bf16.msra.mxu0 %v6988
        %9342 = vmatpush.bf16.msra.mxu0 %v6986
        %9343 = vmatpush.bf16.msra.mxu0 %v6984
        %9344 = vmatpush.bf16.msra.mxu0 %v6982
        %9345 = vmatpush.bf16.msra.mxu0 %v6980
        %9346 = vmatpush.bf16.msra.mxu0 %v6978
        %9347 = vmatpush.bf16.msra.mxu0 %v6976
        %9348 = vmatmul.bf16.gmra.mxu0 %v1786
        %v9349 = vpop.f32.mrf.mxu0
        %v9350 = vadd.f32 %v9337, %v9349
        %v9351 = vpop.f32.mrf.mxu0
        %9352 = vdwg.mxu0
        %9353 = vmatpush.bf16.msra.mxu0 %v7006
        %9354 = vmatpush.bf16.msra.mxu0 %v7004
        %9355 = vmatpush.bf16.msra.mxu0 %v7002
        %9356 = vmatpush.bf16.msra.mxu0 %v7000
        %9357 = vmatpush.bf16.msra.mxu0 %v6998
        %9358 = vmatpush.bf16.msra.mxu0 %v6996
        %9359 = vmatpush.bf16.msra.mxu0 %v6994
        %9360 = vmatpush.bf16.msra.mxu0 %v6992
        %9361 = vmatmul.bf16.gmra.mxu0 %v1787
        %v9362 = vpop.f32.mrf.mxu0
        %v9363 = vadd.f32 %v9350, %v9362
        %v9364 = vpop.f32.mrf.mxu0
        %9365 = vdwg.mxu0
        %9366 = vmatpush.bf16.msra.mxu0 %v7022
        %9367 = vmatpush.bf16.msra.mxu0 %v7020
        %9368 = vmatpush.bf16.msra.mxu0 %v7018
        %9369 = vmatpush.bf16.msra.mxu0 %v7016
        %9370 = vmatpush.bf16.msra.mxu0 %v7014
        %9371 = vmatpush.bf16.msra.mxu0 %v7012
        %9372 = vmatpush.bf16.msra.mxu0 %v7010
        %9373 = vmatpush.bf16.msra.mxu0 %v7008
        %9374 = vmatmul.bf16.gmra.mxu0 %v1788
        %v9375 = vpop.f32.mrf.mxu0
        %v9376 = vadd.f32 %v9363, %v9375
        %v9377 = vpop.f32.mrf.mxu0
        %9378 = vdwg.mxu0
        %9379 = vmatpush.bf16.msra.mxu0 %v7038
        %9380 = vmatpush.bf16.msra.mxu0 %v7036
        %9381 = vmatpush.bf16.msra.mxu0 %v7034
        %9382 = vmatpush.bf16.msra.mxu0 %v7032
        %9383 = vmatpush.bf16.msra.mxu0 %v7030
        %9384 = vmatpush.bf16.msra.mxu0 %v7028
        %9385 = vmatpush.bf16.msra.mxu0 %v7026
        %9386 = vmatpush.bf16.msra.mxu0 %v7024
        %9387 = vmatmul.bf16.gmra.mxu0 %v1789
        %v9388 = vpop.f32.mrf.mxu0
        %v9389 = vadd.f32 %v9376, %v9388
        %v9390 = vpop.f32.mrf.mxu0
        %9391 = vdwg.mxu0
        %9392 = vmatpush.bf16.msra.mxu0 %v7054
        %9393 = vmatpush.bf16.msra.mxu0 %v7052
        %9394 = vmatpush.bf16.msra.mxu0 %v7050
        %9395 = vmatpush.bf16.msra.mxu0 %v7048
        %9396 = vmatpush.bf16.msra.mxu0 %v7046
        %9397 = vmatpush.bf16.msra.mxu0 %v7044
        %9398 = vmatpush.bf16.msra.mxu0 %v7042
        %9399 = vmatpush.bf16.msra.mxu0 %v7040
        %9400 = vmatmul.bf16.gmra.mxu0 %v1790
        %v9401 = vpop.f32.mrf.mxu0
        %v9402 = vadd.f32 %v9389, %v9401
        %v9403 = vpop.f32.mrf.mxu0
        %9404 = vdwg.mxu0
        %9405 = vmatpush.bf16.msra.mxu0 %v5775
        %9406 = vmatpush.bf16.msra.mxu0 %v5773
        %9407 = vmatpush.bf16.msra.mxu0 %v5771
        %9408 = vmatpush.bf16.msra.mxu0 %v5769
        %9409 = vmatpush.bf16.msra.mxu0 %v5767
        %9410 = vmatpush.bf16.msra.mxu0 %v5765
        %9411 = vmatpush.bf16.msra.mxu0 %v5763
        %9412 = vmatpush.bf16.msra.mxu0 %v5761
        %9413 = vmatmul.bf16.gmra.mxu0 %v1710
        %v9414 = vpop.f32.mrf.mxu0
        %v9415 = vadd.f32 %v1585, %v9414
        %v9416 = vpop.f32.mrf.mxu0
        %9417 = vdwg.mxu0
        %9418 = vmatpush.bf16.msra.mxu0 %v5791
        %9419 = vmatpush.bf16.msra.mxu0 %v5789
        %9420 = vmatpush.bf16.msra.mxu0 %v5787
        %9421 = vmatpush.bf16.msra.mxu0 %v5785
        %9422 = vmatpush.bf16.msra.mxu0 %v5783
        %9423 = vmatpush.bf16.msra.mxu0 %v5781
        %9424 = vmatpush.bf16.msra.mxu0 %v5779
        %9425 = vmatpush.bf16.msra.mxu0 %v5777
        %9426 = vmatmul.bf16.gmra.mxu0 %v1711
        %v9427 = vpop.f32.mrf.mxu0
        %v9428 = vadd.f32 %v9415, %v9427
        %v9429 = vpop.f32.mrf.mxu0
        %9430 = vdwg.mxu0
        %9431 = vmatpush.bf16.msra.mxu0 %v5807
        %9432 = vmatpush.bf16.msra.mxu0 %v5805
        %9433 = vmatpush.bf16.msra.mxu0 %v5803
        %9434 = vmatpush.bf16.msra.mxu0 %v5801
        %9435 = vmatpush.bf16.msra.mxu0 %v5799
        %9436 = vmatpush.bf16.msra.mxu0 %v5797
        %9437 = vmatpush.bf16.msra.mxu0 %v5795
        %9438 = vmatpush.bf16.msra.mxu0 %v5793
        %9439 = vmatmul.bf16.gmra.mxu0 %v1712
        %v9440 = vpop.f32.mrf.mxu0
        %v9441 = vadd.f32 %v9428, %v9440
        %v9442 = vpop.f32.mrf.mxu0
        %9443 = vdwg.mxu0
        %9444 = vmatpush.bf16.msra.mxu0 %v5823
        %9445 = vmatpush.bf16.msra.mxu0 %v5821
        %9446 = vmatpush.bf16.msra.mxu0 %v5819
        %9447 = vmatpush.bf16.msra.mxu0 %v5817
        %9448 = vmatpush.bf16.msra.mxu0 %v5815
        %9449 = vmatpush.bf16.msra.mxu0 %v5813
        %9450 = vmatpush.bf16.msra.mxu0 %v5811
        %9451 = vmatpush.bf16.msra.mxu0 %v5809
        %9452 = vmatmul.bf16.gmra.mxu0 %v1713
        %v9453 = vpop.f32.mrf.mxu0
        %v9454 = vadd.f32 %v9441, %v9453
        %v9455 = vpop.f32.mrf.mxu0
        %9456 = vdwg.mxu0
        %9457 = vmatpush.bf16.msra.mxu0 %v5839
        %9458 = vmatpush.bf16.msra.mxu0 %v5837
        %9459 = vmatpush.bf16.msra.mxu0 %v5835
        %9460 = vmatpush.bf16.msra.mxu0 %v5833
        %9461 = vmatpush.bf16.msra.mxu0 %v5831
        %9462 = vmatpush.bf16.msra.mxu0 %v5829
        %9463 = vmatpush.bf16.msra.mxu0 %v5827
        %9464 = vmatpush.bf16.msra.mxu0 %v5825
        %9465 = vmatmul.bf16.gmra.mxu0 %v1714
        %v9466 = vpop.f32.mrf.mxu0
        %v9467 = vadd.f32 %v9454, %v9466
        %v9468 = vpop.f32.mrf.mxu0
        %9469 = vdwg.mxu0
        %9470 = vmatpush.bf16.msra.mxu0 %v5855
        %9471 = vmatpush.bf16.msra.mxu0 %v5853
        %9472 = vmatpush.bf16.msra.mxu0 %v5851
        %9473 = vmatpush.bf16.msra.mxu0 %v5849
        %9474 = vmatpush.bf16.msra.mxu0 %v5847
        %9475 = vmatpush.bf16.msra.mxu0 %v5845
        %9476 = vmatpush.bf16.msra.mxu0 %v5843
        %9477 = vmatpush.bf16.msra.mxu0 %v5841
        %9478 = vmatmul.bf16.gmra.mxu0 %v1715
        %v9479 = vpop.f32.mrf.mxu0
        %v9480 = vadd.f32 %v9467, %v9479
        %v9481 = vpop.f32.mrf.mxu0
        %9482 = vdwg.mxu0
        %9483 = vmatpush.bf16.msra.mxu0 %v5871
        %9484 = vmatpush.bf16.msra.mxu0 %v5869
        %9485 = vmatpush.bf16.msra.mxu0 %v5867
        %9486 = vmatpush.bf16.msra.mxu0 %v5865
        %9487 = vmatpush.bf16.msra.mxu0 %v5863
        %9488 = vmatpush.bf16.msra.mxu0 %v5861
        %9489 = vmatpush.bf16.msra.mxu0 %v5859
        %9490 = vmatpush.bf16.msra.mxu0 %v5857
        %9491 = vmatmul.bf16.gmra.mxu0 %v1716
        %v9492 = vpop.f32.mrf.mxu0
        %v9493 = vadd.f32 %v9480, %v9492
        %v9494 = vpop.f32.mrf.mxu0
        %9495 = vdwg.mxu0
        %9496 = vmatpush.bf16.msra.mxu0 %v5887
        %9497 = vmatpush.bf16.msra.mxu0 %v5885
        %9498 = vmatpush.bf16.msra.mxu0 %v5883
        %9499 = vmatpush.bf16.msra.mxu0 %v5881
        %9500 = vmatpush.bf16.msra.mxu0 %v5879
        %9501 = vmatpush.bf16.msra.mxu0 %v5877
        %9502 = vmatpush.bf16.msra.mxu0 %v5875
        %9503 = vmatpush.bf16.msra.mxu0 %v5873
        %9504 = vmatmul.bf16.gmra.mxu0 %v1717
        %v9505 = vpop.f32.mrf.mxu0
        %v9506 = vadd.f32 %v9493, %v9505
        %v9507 = vpop.f32.mrf.mxu0
        %9508 = vdwg.mxu0
        %9509 = vmatpush.bf16.msra.mxu0 %v5903
        %9510 = vmatpush.bf16.msra.mxu0 %v5901
        %9511 = vmatpush.bf16.msra.mxu0 %v5899
        %9512 = vmatpush.bf16.msra.mxu0 %v5897
        %9513 = vmatpush.bf16.msra.mxu0 %v5895
        %9514 = vmatpush.bf16.msra.mxu0 %v5893
        %9515 = vmatpush.bf16.msra.mxu0 %v5891
        %9516 = vmatpush.bf16.msra.mxu0 %v5889
        %9517 = vmatmul.bf16.gmra.mxu0 %v1718
        %v9518 = vpop.f32.mrf.mxu0
        %v9519 = vadd.f32 %v9506, %v9518
        %v9520 = vpop.f32.mrf.mxu0
        %9521 = vdwg.mxu0
        %9522 = vmatpush.bf16.msra.mxu0 %v5919
        %9523 = vmatpush.bf16.msra.mxu0 %v5917
        %9524 = vmatpush.bf16.msra.mxu0 %v5915
        %9525 = vmatpush.bf16.msra.mxu0 %v5913
        %9526 = vmatpush.bf16.msra.mxu0 %v5911
        %9527 = vmatpush.bf16.msra.mxu0 %v5909
        %9528 = vmatpush.bf16.msra.mxu0 %v5907
        %9529 = vmatpush.bf16.msra.mxu0 %v5905
        %9530 = vmatmul.bf16.gmra.mxu0 %v1719
        %v9531 = vpop.f32.mrf.mxu0
        %v9532 = vadd.f32 %v9519, %v9531
        %v9533 = vpop.f32.mrf.mxu0
        %9534 = vdwg.mxu0
        %9535 = vmatpush.bf16.msra.mxu0 %v5935
        %9536 = vmatpush.bf16.msra.mxu0 %v5933
        %9537 = vmatpush.bf16.msra.mxu0 %v5931
        %9538 = vmatpush.bf16.msra.mxu0 %v5929
        %9539 = vmatpush.bf16.msra.mxu0 %v5927
        %9540 = vmatpush.bf16.msra.mxu0 %v5925
        %9541 = vmatpush.bf16.msra.mxu0 %v5923
        %9542 = vmatpush.bf16.msra.mxu0 %v5921
        %9543 = vmatmul.bf16.gmra.mxu0 %v1720
        %v9544 = vpop.f32.mrf.mxu0
        %v9545 = vadd.f32 %v9532, %v9544
        %v9546 = vpop.f32.mrf.mxu0
        %9547 = vdwg.mxu0
        %9548 = vmatpush.bf16.msra.mxu0 %v5951
        %9549 = vmatpush.bf16.msra.mxu0 %v5949
        %9550 = vmatpush.bf16.msra.mxu0 %v5947
        %9551 = vmatpush.bf16.msra.mxu0 %v5945
        %9552 = vmatpush.bf16.msra.mxu0 %v5943
        %9553 = vmatpush.bf16.msra.mxu0 %v5941
        %9554 = vmatpush.bf16.msra.mxu0 %v5939
        %9555 = vmatpush.bf16.msra.mxu0 %v5937
        %9556 = vmatmul.bf16.gmra.mxu0 %v1721
        %v9557 = vpop.f32.mrf.mxu0
        %v9558 = vadd.f32 %v9545, %v9557
        %v9559 = vpop.f32.mrf.mxu0
        %9560 = vdwg.mxu0
        %9561 = vmatpush.bf16.msra.mxu0 %v5967
        %9562 = vmatpush.bf16.msra.mxu0 %v5965
        %9563 = vmatpush.bf16.msra.mxu0 %v5963
        %9564 = vmatpush.bf16.msra.mxu0 %v5961
        %9565 = vmatpush.bf16.msra.mxu0 %v5959
        %9566 = vmatpush.bf16.msra.mxu0 %v5957
        %9567 = vmatpush.bf16.msra.mxu0 %v5955
        %9568 = vmatpush.bf16.msra.mxu0 %v5953
        %9569 = vmatmul.bf16.gmra.mxu0 %v1722
        %v9570 = vpop.f32.mrf.mxu0
        %v9571 = vadd.f32 %v9558, %v9570
        %v9572 = vpop.f32.mrf.mxu0
        %9573 = vdwg.mxu0
        %9574 = vmatpush.bf16.msra.mxu0 %v5983
        %9575 = vmatpush.bf16.msra.mxu0 %v5981
        %9576 = vmatpush.bf16.msra.mxu0 %v5979
        %9577 = vmatpush.bf16.msra.mxu0 %v5977
        %9578 = vmatpush.bf16.msra.mxu0 %v5975
        %9579 = vmatpush.bf16.msra.mxu0 %v5973
        %9580 = vmatpush.bf16.msra.mxu0 %v5971
        %9581 = vmatpush.bf16.msra.mxu0 %v5969
        %9582 = vmatmul.bf16.gmra.mxu0 %v1723
        %v9583 = vpop.f32.mrf.mxu0
        %v9584 = vadd.f32 %v9571, %v9583
        %v9585 = vpop.f32.mrf.mxu0
        %9586 = vdwg.mxu0
        %9587 = vmatpush.bf16.msra.mxu0 %v5999
        %9588 = vmatpush.bf16.msra.mxu0 %v5997
        %9589 = vmatpush.bf16.msra.mxu0 %v5995
        %9590 = vmatpush.bf16.msra.mxu0 %v5993
        %9591 = vmatpush.bf16.msra.mxu0 %v5991
        %9592 = vmatpush.bf16.msra.mxu0 %v5989
        %9593 = vmatpush.bf16.msra.mxu0 %v5987
        %9594 = vmatpush.bf16.msra.mxu0 %v5985
        %9595 = vmatmul.bf16.gmra.mxu0 %v1724
        %v9596 = vpop.f32.mrf.mxu0
        %v9597 = vadd.f32 %v9584, %v9596
        %v9598 = vpop.f32.mrf.mxu0
        %9599 = vdwg.mxu0
        %9600 = vmatpush.bf16.msra.mxu0 %v6015
        %9601 = vmatpush.bf16.msra.mxu0 %v6013
        %9602 = vmatpush.bf16.msra.mxu0 %v6011
        %9603 = vmatpush.bf16.msra.mxu0 %v6009
        %9604 = vmatpush.bf16.msra.mxu0 %v6007
        %9605 = vmatpush.bf16.msra.mxu0 %v6005
        %9606 = vmatpush.bf16.msra.mxu0 %v6003
        %9607 = vmatpush.bf16.msra.mxu0 %v6001
        %9608 = vmatmul.bf16.gmra.mxu0 %v1725
        %v9609 = vpop.f32.mrf.mxu0
        %v9610 = vadd.f32 %v9597, %v9609
        %v9611 = vpop.f32.mrf.mxu0
        %9612 = vdwg.mxu0
        %9613 = vmatpush.bf16.msra.mxu0 %v6031
        %9614 = vmatpush.bf16.msra.mxu0 %v6029
        %9615 = vmatpush.bf16.msra.mxu0 %v6027
        %9616 = vmatpush.bf16.msra.mxu0 %v6025
        %9617 = vmatpush.bf16.msra.mxu0 %v6023
        %9618 = vmatpush.bf16.msra.mxu0 %v6021
        %9619 = vmatpush.bf16.msra.mxu0 %v6019
        %9620 = vmatpush.bf16.msra.mxu0 %v6017
        %9621 = vmatmul.bf16.gmra.mxu0 %v1726
        %v9622 = vpop.f32.mrf.mxu0
        %v9623 = vadd.f32 %v9610, %v9622
        %v9624 = vpop.f32.mrf.mxu0
        %9625 = vdwg.mxu0
        %9626 = vmatpush.bf16.msra.mxu0 %v6047
        %9627 = vmatpush.bf16.msra.mxu0 %v6045
        %9628 = vmatpush.bf16.msra.mxu0 %v6043
        %9629 = vmatpush.bf16.msra.mxu0 %v6041
        %9630 = vmatpush.bf16.msra.mxu0 %v6039
        %9631 = vmatpush.bf16.msra.mxu0 %v6037
        %9632 = vmatpush.bf16.msra.mxu0 %v6035
        %9633 = vmatpush.bf16.msra.mxu0 %v6033
        %9634 = vmatmul.bf16.gmra.mxu0 %v1727
        %v9635 = vpop.f32.mrf.mxu0
        %v9636 = vadd.f32 %v9623, %v9635
        %v9637 = vpop.f32.mrf.mxu0
        %9638 = vdwg.mxu0
        %9639 = vmatpush.bf16.msra.mxu0 %v6063
        %9640 = vmatpush.bf16.msra.mxu0 %v6061
        %9641 = vmatpush.bf16.msra.mxu0 %v6059
        %9642 = vmatpush.bf16.msra.mxu0 %v6057
        %9643 = vmatpush.bf16.msra.mxu0 %v6055
        %9644 = vmatpush.bf16.msra.mxu0 %v6053
        %9645 = vmatpush.bf16.msra.mxu0 %v6051
        %9646 = vmatpush.bf16.msra.mxu0 %v6049
        %9647 = vmatmul.bf16.gmra.mxu0 %v1728
        %v9648 = vpop.f32.mrf.mxu0
        %v9649 = vadd.f32 %v9636, %v9648
        %v9650 = vpop.f32.mrf.mxu0
        %9651 = vdwg.mxu0
        %9652 = vmatpush.bf16.msra.mxu0 %v6079
        %9653 = vmatpush.bf16.msra.mxu0 %v6077
        %9654 = vmatpush.bf16.msra.mxu0 %v6075
        %9655 = vmatpush.bf16.msra.mxu0 %v6073
        %9656 = vmatpush.bf16.msra.mxu0 %v6071
        %9657 = vmatpush.bf16.msra.mxu0 %v6069
        %9658 = vmatpush.bf16.msra.mxu0 %v6067
        %9659 = vmatpush.bf16.msra.mxu0 %v6065
        %9660 = vmatmul.bf16.gmra.mxu0 %v1729
        %v9661 = vpop.f32.mrf.mxu0
        %v9662 = vadd.f32 %v9649, %v9661
        %v9663 = vpop.f32.mrf.mxu0
        %9664 = vdwg.mxu0
        %9665 = vmatpush.bf16.msra.mxu0 %v6095
        %9666 = vmatpush.bf16.msra.mxu0 %v6093
        %9667 = vmatpush.bf16.msra.mxu0 %v6091
        %9668 = vmatpush.bf16.msra.mxu0 %v6089
        %9669 = vmatpush.bf16.msra.mxu0 %v6087
        %9670 = vmatpush.bf16.msra.mxu0 %v6085
        %9671 = vmatpush.bf16.msra.mxu0 %v6083
        %9672 = vmatpush.bf16.msra.mxu0 %v6081
        %9673 = vmatmul.bf16.gmra.mxu0 %v1730
        %v9674 = vpop.f32.mrf.mxu0
        %v9675 = vadd.f32 %v9662, %v9674
        %v9676 = vpop.f32.mrf.mxu0
        %9677 = vdwg.mxu0
        %9678 = vmatpush.bf16.msra.mxu0 %v6111
        %9679 = vmatpush.bf16.msra.mxu0 %v6109
        %9680 = vmatpush.bf16.msra.mxu0 %v6107
        %9681 = vmatpush.bf16.msra.mxu0 %v6105
        %9682 = vmatpush.bf16.msra.mxu0 %v6103
        %9683 = vmatpush.bf16.msra.mxu0 %v6101
        %9684 = vmatpush.bf16.msra.mxu0 %v6099
        %9685 = vmatpush.bf16.msra.mxu0 %v6097
        %9686 = vmatmul.bf16.gmra.mxu0 %v1731
        %v9687 = vpop.f32.mrf.mxu0
        %v9688 = vadd.f32 %v9675, %v9687
        %v9689 = vpop.f32.mrf.mxu0
        %9690 = vdwg.mxu0
        %9691 = vmatpush.bf16.msra.mxu0 %v6127
        %9692 = vmatpush.bf16.msra.mxu0 %v6125
        %9693 = vmatpush.bf16.msra.mxu0 %v6123
        %9694 = vmatpush.bf16.msra.mxu0 %v6121
        %9695 = vmatpush.bf16.msra.mxu0 %v6119
        %9696 = vmatpush.bf16.msra.mxu0 %v6117
        %9697 = vmatpush.bf16.msra.mxu0 %v6115
        %9698 = vmatpush.bf16.msra.mxu0 %v6113
        %9699 = vmatmul.bf16.gmra.mxu0 %v1732
        %v9700 = vpop.f32.mrf.mxu0
        %v9701 = vadd.f32 %v9688, %v9700
        %v9702 = vpop.f32.mrf.mxu0
        %9703 = vdwg.mxu0
        %9704 = vmatpush.bf16.msra.mxu0 %v6143
        %9705 = vmatpush.bf16.msra.mxu0 %v6141
        %9706 = vmatpush.bf16.msra.mxu0 %v6139
        %9707 = vmatpush.bf16.msra.mxu0 %v6137
        %9708 = vmatpush.bf16.msra.mxu0 %v6135
        %9709 = vmatpush.bf16.msra.mxu0 %v6133
        %9710 = vmatpush.bf16.msra.mxu0 %v6131
        %9711 = vmatpush.bf16.msra.mxu0 %v6129
        %9712 = vmatmul.bf16.gmra.mxu0 %v1733
        %v9713 = vpop.f32.mrf.mxu0
        %v9714 = vadd.f32 %v9701, %v9713
        %v9715 = vpop.f32.mrf.mxu0
        %9716 = vdwg.mxu0
        %9717 = vmatpush.bf16.msra.mxu0 %v6159
        %9718 = vmatpush.bf16.msra.mxu0 %v6157
        %9719 = vmatpush.bf16.msra.mxu0 %v6155
        %9720 = vmatpush.bf16.msra.mxu0 %v6153
        %9721 = vmatpush.bf16.msra.mxu0 %v6151
        %9722 = vmatpush.bf16.msra.mxu0 %v6149
        %9723 = vmatpush.bf16.msra.mxu0 %v6147
        %9724 = vmatpush.bf16.msra.mxu0 %v6145
        %9725 = vmatmul.bf16.gmra.mxu0 %v1734
        %v9726 = vpop.f32.mrf.mxu0
        %v9727 = vadd.f32 %v9714, %v9726
        %v9728 = vpop.f32.mrf.mxu0
        %9729 = vdwg.mxu0
        %9730 = vmatpush.bf16.msra.mxu0 %v6175
        %9731 = vmatpush.bf16.msra.mxu0 %v6173
        %9732 = vmatpush.bf16.msra.mxu0 %v6171
        %9733 = vmatpush.bf16.msra.mxu0 %v6169
        %9734 = vmatpush.bf16.msra.mxu0 %v6167
        %9735 = vmatpush.bf16.msra.mxu0 %v6165
        %9736 = vmatpush.bf16.msra.mxu0 %v6163
        %9737 = vmatpush.bf16.msra.mxu0 %v6161
        %9738 = vmatmul.bf16.gmra.mxu0 %v1735
        %v9739 = vpop.f32.mrf.mxu0
        %v9740 = vadd.f32 %v9727, %v9739
        %v9741 = vpop.f32.mrf.mxu0
        %9742 = vdwg.mxu0
        %9743 = vmatpush.bf16.msra.mxu0 %v6191
        %9744 = vmatpush.bf16.msra.mxu0 %v6189
        %9745 = vmatpush.bf16.msra.mxu0 %v6187
        %9746 = vmatpush.bf16.msra.mxu0 %v6185
        %9747 = vmatpush.bf16.msra.mxu0 %v6183
        %9748 = vmatpush.bf16.msra.mxu0 %v6181
        %9749 = vmatpush.bf16.msra.mxu0 %v6179
        %9750 = vmatpush.bf16.msra.mxu0 %v6177
        %9751 = vmatmul.bf16.gmra.mxu0 %v1736
        %v9752 = vpop.f32.mrf.mxu0
        %v9753 = vadd.f32 %v9740, %v9752
        %v9754 = vpop.f32.mrf.mxu0
        %9755 = vdwg.mxu0
        %9756 = vmatpush.bf16.msra.mxu0 %v6207
        %9757 = vmatpush.bf16.msra.mxu0 %v6205
        %9758 = vmatpush.bf16.msra.mxu0 %v6203
        %9759 = vmatpush.bf16.msra.mxu0 %v6201
        %9760 = vmatpush.bf16.msra.mxu0 %v6199
        %9761 = vmatpush.bf16.msra.mxu0 %v6197
        %9762 = vmatpush.bf16.msra.mxu0 %v6195
        %9763 = vmatpush.bf16.msra.mxu0 %v6193
        %9764 = vmatmul.bf16.gmra.mxu0 %v1737
        %v9765 = vpop.f32.mrf.mxu0
        %v9766 = vadd.f32 %v9753, %v9765
        %v9767 = vpop.f32.mrf.mxu0
        %9768 = vdwg.mxu0
        %9769 = vmatpush.bf16.msra.mxu0 %v6223
        %9770 = vmatpush.bf16.msra.mxu0 %v6221
        %9771 = vmatpush.bf16.msra.mxu0 %v6219
        %9772 = vmatpush.bf16.msra.mxu0 %v6217
        %9773 = vmatpush.bf16.msra.mxu0 %v6215
        %9774 = vmatpush.bf16.msra.mxu0 %v6213
        %9775 = vmatpush.bf16.msra.mxu0 %v6211
        %9776 = vmatpush.bf16.msra.mxu0 %v6209
        %9777 = vmatmul.bf16.gmra.mxu0 %v1738
        %v9778 = vpop.f32.mrf.mxu0
        %v9779 = vadd.f32 %v9766, %v9778
        %v9780 = vpop.f32.mrf.mxu0
        %9781 = vdwg.mxu0
        %9782 = vmatpush.bf16.msra.mxu0 %v6239
        %9783 = vmatpush.bf16.msra.mxu0 %v6237
        %9784 = vmatpush.bf16.msra.mxu0 %v6235
        %9785 = vmatpush.bf16.msra.mxu0 %v6233
        %9786 = vmatpush.bf16.msra.mxu0 %v6231
        %9787 = vmatpush.bf16.msra.mxu0 %v6229
        %9788 = vmatpush.bf16.msra.mxu0 %v6227
        %9789 = vmatpush.bf16.msra.mxu0 %v6225
        %9790 = vmatmul.bf16.gmra.mxu0 %v1739
        %v9791 = vpop.f32.mrf.mxu0
        %v9792 = vadd.f32 %v9779, %v9791
        %v9793 = vpop.f32.mrf.mxu0
        %9794 = vdwg.mxu0
        %9795 = vmatpush.bf16.msra.mxu0 %v6255
        %9796 = vmatpush.bf16.msra.mxu0 %v6253
        %9797 = vmatpush.bf16.msra.mxu0 %v6251
        %9798 = vmatpush.bf16.msra.mxu0 %v6249
        %9799 = vmatpush.bf16.msra.mxu0 %v6247
        %9800 = vmatpush.bf16.msra.mxu0 %v6245
        %9801 = vmatpush.bf16.msra.mxu0 %v6243
        %9802 = vmatpush.bf16.msra.mxu0 %v6241
        %9803 = vmatmul.bf16.gmra.mxu0 %v1740
        %v9804 = vpop.f32.mrf.mxu0
        %v9805 = vadd.f32 %v9792, %v9804
        %v9806 = vpop.f32.mrf.mxu0
        %9807 = vdwg.mxu0
        %9808 = vmatpush.bf16.msra.mxu0 %v6271
        %9809 = vmatpush.bf16.msra.mxu0 %v6269
        %9810 = vmatpush.bf16.msra.mxu0 %v6267
        %9811 = vmatpush.bf16.msra.mxu0 %v6265
        %9812 = vmatpush.bf16.msra.mxu0 %v6263
        %9813 = vmatpush.bf16.msra.mxu0 %v6261
        %9814 = vmatpush.bf16.msra.mxu0 %v6259
        %9815 = vmatpush.bf16.msra.mxu0 %v6257
        %9816 = vmatmul.bf16.gmra.mxu0 %v1741
        %v9817 = vpop.f32.mrf.mxu0
        %v9818 = vadd.f32 %v9805, %v9817
        %v9819 = vpop.f32.mrf.mxu0
        %9820 = vdwg.mxu0
        %9821 = vmatpush.bf16.msra.mxu0 %v6287
        %9822 = vmatpush.bf16.msra.mxu0 %v6285
        %9823 = vmatpush.bf16.msra.mxu0 %v6283
        %9824 = vmatpush.bf16.msra.mxu0 %v6281
        %9825 = vmatpush.bf16.msra.mxu0 %v6279
        %9826 = vmatpush.bf16.msra.mxu0 %v6277
        %9827 = vmatpush.bf16.msra.mxu0 %v6275
        %9828 = vmatpush.bf16.msra.mxu0 %v6273
        %9829 = vmatmul.bf16.gmra.mxu0 %v1742
        %v9830 = vpop.f32.mrf.mxu0
        %v9831 = vadd.f32 %v9818, %v9830
        %v9832 = vpop.f32.mrf.mxu0
        %9833 = vdwg.mxu0
        %9834 = vmatpush.bf16.msra.mxu0 %v6303
        %9835 = vmatpush.bf16.msra.mxu0 %v6301
        %9836 = vmatpush.bf16.msra.mxu0 %v6299
        %9837 = vmatpush.bf16.msra.mxu0 %v6297
        %9838 = vmatpush.bf16.msra.mxu0 %v6295
        %9839 = vmatpush.bf16.msra.mxu0 %v6293
        %9840 = vmatpush.bf16.msra.mxu0 %v6291
        %9841 = vmatpush.bf16.msra.mxu0 %v6289
        %9842 = vmatmul.bf16.gmra.mxu0 %v1743
        %v9843 = vpop.f32.mrf.mxu0
        %v9844 = vadd.f32 %v9831, %v9843
        %v9845 = vpop.f32.mrf.mxu0
        %9846 = vdwg.mxu0
        %9847 = vmatpush.bf16.msra.mxu0 %v6319
        %9848 = vmatpush.bf16.msra.mxu0 %v6317
        %9849 = vmatpush.bf16.msra.mxu0 %v6315
        %9850 = vmatpush.bf16.msra.mxu0 %v6313
        %9851 = vmatpush.bf16.msra.mxu0 %v6311
        %9852 = vmatpush.bf16.msra.mxu0 %v6309
        %9853 = vmatpush.bf16.msra.mxu0 %v6307
        %9854 = vmatpush.bf16.msra.mxu0 %v6305
        %9855 = vmatmul.bf16.gmra.mxu0 %v1744
        %v9856 = vpop.f32.mrf.mxu0
        %v9857 = vadd.f32 %v9844, %v9856
        %v9858 = vpop.f32.mrf.mxu0
        %9859 = vdwg.mxu0
        %9860 = vmatpush.bf16.msra.mxu0 %v6335
        %9861 = vmatpush.bf16.msra.mxu0 %v6333
        %9862 = vmatpush.bf16.msra.mxu0 %v6331
        %9863 = vmatpush.bf16.msra.mxu0 %v6329
        %9864 = vmatpush.bf16.msra.mxu0 %v6327
        %9865 = vmatpush.bf16.msra.mxu0 %v6325
        %9866 = vmatpush.bf16.msra.mxu0 %v6323
        %9867 = vmatpush.bf16.msra.mxu0 %v6321
        %9868 = vmatmul.bf16.gmra.mxu0 %v1745
        %v9869 = vpop.f32.mrf.mxu0
        %v9870 = vadd.f32 %v9857, %v9869
        %v9871 = vpop.f32.mrf.mxu0
        %9872 = vdwg.mxu0
        %9873 = vmatpush.bf16.msra.mxu0 %v6351
        %9874 = vmatpush.bf16.msra.mxu0 %v6349
        %9875 = vmatpush.bf16.msra.mxu0 %v6347
        %9876 = vmatpush.bf16.msra.mxu0 %v6345
        %9877 = vmatpush.bf16.msra.mxu0 %v6343
        %9878 = vmatpush.bf16.msra.mxu0 %v6341
        %9879 = vmatpush.bf16.msra.mxu0 %v6339
        %9880 = vmatpush.bf16.msra.mxu0 %v6337
        %9881 = vmatmul.bf16.gmra.mxu0 %v1746
        %v9882 = vpop.f32.mrf.mxu0
        %v9883 = vadd.f32 %v9870, %v9882
        %v9884 = vpop.f32.mrf.mxu0
        %9885 = vdwg.mxu0
        %9886 = vmatpush.bf16.msra.mxu0 %v6367
        %9887 = vmatpush.bf16.msra.mxu0 %v6365
        %9888 = vmatpush.bf16.msra.mxu0 %v6363
        %9889 = vmatpush.bf16.msra.mxu0 %v6361
        %9890 = vmatpush.bf16.msra.mxu0 %v6359
        %9891 = vmatpush.bf16.msra.mxu0 %v6357
        %9892 = vmatpush.bf16.msra.mxu0 %v6355
        %9893 = vmatpush.bf16.msra.mxu0 %v6353
        %9894 = vmatmul.bf16.gmra.mxu0 %v1747
        %v9895 = vpop.f32.mrf.mxu0
        %v9896 = vadd.f32 %v9883, %v9895
        %v9897 = vpop.f32.mrf.mxu0
        %9898 = vdwg.mxu0
        %9899 = vmatpush.bf16.msra.mxu0 %v6383
        %9900 = vmatpush.bf16.msra.mxu0 %v6381
        %9901 = vmatpush.bf16.msra.mxu0 %v6379
        %9902 = vmatpush.bf16.msra.mxu0 %v6377
        %9903 = vmatpush.bf16.msra.mxu0 %v6375
        %9904 = vmatpush.bf16.msra.mxu0 %v6373
        %9905 = vmatpush.bf16.msra.mxu0 %v6371
        %9906 = vmatpush.bf16.msra.mxu0 %v6369
        %9907 = vmatmul.bf16.gmra.mxu0 %v1748
        %v9908 = vpop.f32.mrf.mxu0
        %v9909 = vadd.f32 %v9896, %v9908
        %v9910 = vpop.f32.mrf.mxu0
        %9911 = vdwg.mxu0
        %9912 = vmatpush.bf16.msra.mxu0 %v6399
        %9913 = vmatpush.bf16.msra.mxu0 %v6397
        %9914 = vmatpush.bf16.msra.mxu0 %v6395
        %9915 = vmatpush.bf16.msra.mxu0 %v6393
        %9916 = vmatpush.bf16.msra.mxu0 %v6391
        %9917 = vmatpush.bf16.msra.mxu0 %v6389
        %9918 = vmatpush.bf16.msra.mxu0 %v6387
        %9919 = vmatpush.bf16.msra.mxu0 %v6385
        %9920 = vmatmul.bf16.gmra.mxu0 %v1749
        %v9921 = vpop.f32.mrf.mxu0
        %v9922 = vadd.f32 %v9909, %v9921
        %v9923 = vpop.f32.mrf.mxu0
        %9924 = vdwg.mxu0
        %9925 = vmatpush.bf16.msra.mxu0 %v6415
        %9926 = vmatpush.bf16.msra.mxu0 %v6413
        %9927 = vmatpush.bf16.msra.mxu0 %v6411
        %9928 = vmatpush.bf16.msra.mxu0 %v6409
        %9929 = vmatpush.bf16.msra.mxu0 %v6407
        %9930 = vmatpush.bf16.msra.mxu0 %v6405
        %9931 = vmatpush.bf16.msra.mxu0 %v6403
        %9932 = vmatpush.bf16.msra.mxu0 %v6401
        %9933 = vmatmul.bf16.gmra.mxu0 %v1750
        %v9934 = vpop.f32.mrf.mxu0
        %v9935 = vadd.f32 %v9922, %v9934
        %v9936 = vpop.f32.mrf.mxu0
        %9937 = vdwg.mxu0
        %9938 = vmatpush.bf16.msra.mxu0 %v6431
        %9939 = vmatpush.bf16.msra.mxu0 %v6429
        %9940 = vmatpush.bf16.msra.mxu0 %v6427
        %9941 = vmatpush.bf16.msra.mxu0 %v6425
        %9942 = vmatpush.bf16.msra.mxu0 %v6423
        %9943 = vmatpush.bf16.msra.mxu0 %v6421
        %9944 = vmatpush.bf16.msra.mxu0 %v6419
        %9945 = vmatpush.bf16.msra.mxu0 %v6417
        %9946 = vmatmul.bf16.gmra.mxu0 %v1751
        %v9947 = vpop.f32.mrf.mxu0
        %v9948 = vadd.f32 %v9935, %v9947
        %v9949 = vpop.f32.mrf.mxu0
        %9950 = vdwg.mxu0
        %9951 = vmatpush.bf16.msra.mxu0 %v6447
        %9952 = vmatpush.bf16.msra.mxu0 %v6445
        %9953 = vmatpush.bf16.msra.mxu0 %v6443
        %9954 = vmatpush.bf16.msra.mxu0 %v6441
        %9955 = vmatpush.bf16.msra.mxu0 %v6439
        %9956 = vmatpush.bf16.msra.mxu0 %v6437
        %9957 = vmatpush.bf16.msra.mxu0 %v6435
        %9958 = vmatpush.bf16.msra.mxu0 %v6433
        %9959 = vmatmul.bf16.gmra.mxu0 %v1752
        %v9960 = vpop.f32.mrf.mxu0
        %v9961 = vadd.f32 %v9948, %v9960
        %v9962 = vpop.f32.mrf.mxu0
        %9963 = vdwg.mxu0
        %9964 = vmatpush.bf16.msra.mxu0 %v6463
        %9965 = vmatpush.bf16.msra.mxu0 %v6461
        %9966 = vmatpush.bf16.msra.mxu0 %v6459
        %9967 = vmatpush.bf16.msra.mxu0 %v6457
        %9968 = vmatpush.bf16.msra.mxu0 %v6455
        %9969 = vmatpush.bf16.msra.mxu0 %v6453
        %9970 = vmatpush.bf16.msra.mxu0 %v6451
        %9971 = vmatpush.bf16.msra.mxu0 %v6449
        %9972 = vmatmul.bf16.gmra.mxu0 %v1753
        %v9973 = vpop.f32.mrf.mxu0
        %v9974 = vadd.f32 %v9961, %v9973
        %v9975 = vpop.f32.mrf.mxu0
        %9976 = vdwg.mxu0
        %9977 = vmatpush.bf16.msra.mxu0 %v6479
        %9978 = vmatpush.bf16.msra.mxu0 %v6477
        %9979 = vmatpush.bf16.msra.mxu0 %v6475
        %9980 = vmatpush.bf16.msra.mxu0 %v6473
        %9981 = vmatpush.bf16.msra.mxu0 %v6471
        %9982 = vmatpush.bf16.msra.mxu0 %v6469
        %9983 = vmatpush.bf16.msra.mxu0 %v6467
        %9984 = vmatpush.bf16.msra.mxu0 %v6465
        %9985 = vmatmul.bf16.gmra.mxu0 %v1754
        %v9986 = vpop.f32.mrf.mxu0
        %v9987 = vadd.f32 %v9974, %v9986
        %v9988 = vpop.f32.mrf.mxu0
        %9989 = vdwg.mxu0
        %9990 = vmatpush.bf16.msra.mxu0 %v6495
        %9991 = vmatpush.bf16.msra.mxu0 %v6493
        %9992 = vmatpush.bf16.msra.mxu0 %v6491
        %9993 = vmatpush.bf16.msra.mxu0 %v6489
        %9994 = vmatpush.bf16.msra.mxu0 %v6487
        %9995 = vmatpush.bf16.msra.mxu0 %v6485
        %9996 = vmatpush.bf16.msra.mxu0 %v6483
        %9997 = vmatpush.bf16.msra.mxu0 %v6481
        %9998 = vmatmul.bf16.gmra.mxu0 %v1755
        %v9999 = vpop.f32.mrf.mxu0
        %v10000 = vadd.f32 %v9987, %v9999
        %v10001 = vpop.f32.mrf.mxu0
        %10002 = vdwg.mxu0
        %10003 = vmatpush.bf16.msra.mxu0 %v6511
        %10004 = vmatpush.bf16.msra.mxu0 %v6509
        %10005 = vmatpush.bf16.msra.mxu0 %v6507
        %10006 = vmatpush.bf16.msra.mxu0 %v6505
        %10007 = vmatpush.bf16.msra.mxu0 %v6503
        %10008 = vmatpush.bf16.msra.mxu0 %v6501
        %10009 = vmatpush.bf16.msra.mxu0 %v6499
        %10010 = vmatpush.bf16.msra.mxu0 %v6497
        %10011 = vmatmul.bf16.gmra.mxu0 %v1756
        %v10012 = vpop.f32.mrf.mxu0
        %v10013 = vadd.f32 %v10000, %v10012
        %v10014 = vpop.f32.mrf.mxu0
        %10015 = vdwg.mxu0
        %10016 = vmatpush.bf16.msra.mxu0 %v6527
        %10017 = vmatpush.bf16.msra.mxu0 %v6525
        %10018 = vmatpush.bf16.msra.mxu0 %v6523
        %10019 = vmatpush.bf16.msra.mxu0 %v6521
        %10020 = vmatpush.bf16.msra.mxu0 %v6519
        %10021 = vmatpush.bf16.msra.mxu0 %v6517
        %10022 = vmatpush.bf16.msra.mxu0 %v6515
        %10023 = vmatpush.bf16.msra.mxu0 %v6513
        %10024 = vmatmul.bf16.gmra.mxu0 %v1757
        %v10025 = vpop.f32.mrf.mxu0
        %v10026 = vadd.f32 %v10013, %v10025
        %v10027 = vpop.f32.mrf.mxu0
        %10028 = vdwg.mxu0
        %10029 = vmatpush.bf16.msra.mxu0 %v6543
        %10030 = vmatpush.bf16.msra.mxu0 %v6541
        %10031 = vmatpush.bf16.msra.mxu0 %v6539
        %10032 = vmatpush.bf16.msra.mxu0 %v6537
        %10033 = vmatpush.bf16.msra.mxu0 %v6535
        %10034 = vmatpush.bf16.msra.mxu0 %v6533
        %10035 = vmatpush.bf16.msra.mxu0 %v6531
        %10036 = vmatpush.bf16.msra.mxu0 %v6529
        %10037 = vmatmul.bf16.gmra.mxu0 %v1758
        %v10038 = vpop.f32.mrf.mxu0
        %v10039 = vadd.f32 %v10026, %v10038
        %v10040 = vpop.f32.mrf.mxu0
        %10041 = vdwg.mxu0
        %10042 = vmatpush.bf16.msra.mxu0 %v6559
        %10043 = vmatpush.bf16.msra.mxu0 %v6557
        %10044 = vmatpush.bf16.msra.mxu0 %v6555
        %10045 = vmatpush.bf16.msra.mxu0 %v6553
        %10046 = vmatpush.bf16.msra.mxu0 %v6551
        %10047 = vmatpush.bf16.msra.mxu0 %v6549
        %10048 = vmatpush.bf16.msra.mxu0 %v6547
        %10049 = vmatpush.bf16.msra.mxu0 %v6545
        %10050 = vmatmul.bf16.gmra.mxu0 %v1759
        %v10051 = vpop.f32.mrf.mxu0
        %v10052 = vadd.f32 %v10039, %v10051
        %v10053 = vpop.f32.mrf.mxu0
        %10054 = vdwg.mxu0
        %10055 = vmatpush.bf16.msra.mxu0 %v6575
        %10056 = vmatpush.bf16.msra.mxu0 %v6573
        %10057 = vmatpush.bf16.msra.mxu0 %v6571
        %10058 = vmatpush.bf16.msra.mxu0 %v6569
        %10059 = vmatpush.bf16.msra.mxu0 %v6567
        %10060 = vmatpush.bf16.msra.mxu0 %v6565
        %10061 = vmatpush.bf16.msra.mxu0 %v6563
        %10062 = vmatpush.bf16.msra.mxu0 %v6561
        %10063 = vmatmul.bf16.gmra.mxu0 %v1760
        %v10064 = vpop.f32.mrf.mxu0
        %v10065 = vadd.f32 %v10052, %v10064
        %v10066 = vpop.f32.mrf.mxu0
        %10067 = vdwg.mxu0
        %10068 = vmatpush.bf16.msra.mxu0 %v6591
        %10069 = vmatpush.bf16.msra.mxu0 %v6589
        %10070 = vmatpush.bf16.msra.mxu0 %v6587
        %10071 = vmatpush.bf16.msra.mxu0 %v6585
        %10072 = vmatpush.bf16.msra.mxu0 %v6583
        %10073 = vmatpush.bf16.msra.mxu0 %v6581
        %10074 = vmatpush.bf16.msra.mxu0 %v6579
        %10075 = vmatpush.bf16.msra.mxu0 %v6577
        %10076 = vmatmul.bf16.gmra.mxu0 %v1761
        %v10077 = vpop.f32.mrf.mxu0
        %v10078 = vadd.f32 %v10065, %v10077
        %v10079 = vpop.f32.mrf.mxu0
        %10080 = vdwg.mxu0
        %10081 = vmatpush.bf16.msra.mxu0 %v6607
        %10082 = vmatpush.bf16.msra.mxu0 %v6605
        %10083 = vmatpush.bf16.msra.mxu0 %v6603
        %10084 = vmatpush.bf16.msra.mxu0 %v6601
        %10085 = vmatpush.bf16.msra.mxu0 %v6599
        %10086 = vmatpush.bf16.msra.mxu0 %v6597
        %10087 = vmatpush.bf16.msra.mxu0 %v6595
        %10088 = vmatpush.bf16.msra.mxu0 %v6593
        %10089 = vmatmul.bf16.gmra.mxu0 %v1762
        %v10090 = vpop.f32.mrf.mxu0
        %v10091 = vadd.f32 %v10078, %v10090
        %v10092 = vpop.f32.mrf.mxu0
        %10093 = vdwg.mxu0
        %10094 = vmatpush.bf16.msra.mxu0 %v6623
        %10095 = vmatpush.bf16.msra.mxu0 %v6621
        %10096 = vmatpush.bf16.msra.mxu0 %v6619
        %10097 = vmatpush.bf16.msra.mxu0 %v6617
        %10098 = vmatpush.bf16.msra.mxu0 %v6615
        %10099 = vmatpush.bf16.msra.mxu0 %v6613
        %10100 = vmatpush.bf16.msra.mxu0 %v6611
        %10101 = vmatpush.bf16.msra.mxu0 %v6609
        %10102 = vmatmul.bf16.gmra.mxu0 %v1763
        %v10103 = vpop.f32.mrf.mxu0
        %v10104 = vadd.f32 %v10091, %v10103
        %v10105 = vpop.f32.mrf.mxu0
        %10106 = vdwg.mxu0
        %10107 = vmatpush.bf16.msra.mxu0 %v6639
        %10108 = vmatpush.bf16.msra.mxu0 %v6637
        %10109 = vmatpush.bf16.msra.mxu0 %v6635
        %10110 = vmatpush.bf16.msra.mxu0 %v6633
        %10111 = vmatpush.bf16.msra.mxu0 %v6631
        %10112 = vmatpush.bf16.msra.mxu0 %v6629
        %10113 = vmatpush.bf16.msra.mxu0 %v6627
        %10114 = vmatpush.bf16.msra.mxu0 %v6625
        %10115 = vmatmul.bf16.gmra.mxu0 %v1764
        %v10116 = vpop.f32.mrf.mxu0
        %v10117 = vadd.f32 %v10104, %v10116
        %v10118 = vpop.f32.mrf.mxu0
        %10119 = vdwg.mxu0
        %10120 = vmatpush.bf16.msra.mxu0 %v6655
        %10121 = vmatpush.bf16.msra.mxu0 %v6653
        %10122 = vmatpush.bf16.msra.mxu0 %v6651
        %10123 = vmatpush.bf16.msra.mxu0 %v6649
        %10124 = vmatpush.bf16.msra.mxu0 %v6647
        %10125 = vmatpush.bf16.msra.mxu0 %v6645
        %10126 = vmatpush.bf16.msra.mxu0 %v6643
        %10127 = vmatpush.bf16.msra.mxu0 %v6641
        %10128 = vmatmul.bf16.gmra.mxu0 %v1765
        %v10129 = vpop.f32.mrf.mxu0
        %v10130 = vadd.f32 %v10117, %v10129
        %v10131 = vpop.f32.mrf.mxu0
        %10132 = vdwg.mxu0
        %10133 = vmatpush.bf16.msra.mxu0 %v6671
        %10134 = vmatpush.bf16.msra.mxu0 %v6669
        %10135 = vmatpush.bf16.msra.mxu0 %v6667
        %10136 = vmatpush.bf16.msra.mxu0 %v6665
        %10137 = vmatpush.bf16.msra.mxu0 %v6663
        %10138 = vmatpush.bf16.msra.mxu0 %v6661
        %10139 = vmatpush.bf16.msra.mxu0 %v6659
        %10140 = vmatpush.bf16.msra.mxu0 %v6657
        %10141 = vmatmul.bf16.gmra.mxu0 %v1766
        %v10142 = vpop.f32.mrf.mxu0
        %v10143 = vadd.f32 %v10130, %v10142
        %v10144 = vpop.f32.mrf.mxu0
        %10145 = vdwg.mxu0
        %10146 = vmatpush.bf16.msra.mxu0 %v6687
        %10147 = vmatpush.bf16.msra.mxu0 %v6685
        %10148 = vmatpush.bf16.msra.mxu0 %v6683
        %10149 = vmatpush.bf16.msra.mxu0 %v6681
        %10150 = vmatpush.bf16.msra.mxu0 %v6679
        %10151 = vmatpush.bf16.msra.mxu0 %v6677
        %10152 = vmatpush.bf16.msra.mxu0 %v6675
        %10153 = vmatpush.bf16.msra.mxu0 %v6673
        %10154 = vmatmul.bf16.gmra.mxu0 %v1767
        %v10155 = vpop.f32.mrf.mxu0
        %v10156 = vadd.f32 %v10143, %v10155
        %v10157 = vpop.f32.mrf.mxu0
        %10158 = vdwg.mxu0
        %10159 = vmatpush.bf16.msra.mxu0 %v6703
        %10160 = vmatpush.bf16.msra.mxu0 %v6701
        %10161 = vmatpush.bf16.msra.mxu0 %v6699
        %10162 = vmatpush.bf16.msra.mxu0 %v6697
        %10163 = vmatpush.bf16.msra.mxu0 %v6695
        %10164 = vmatpush.bf16.msra.mxu0 %v6693
        %10165 = vmatpush.bf16.msra.mxu0 %v6691
        %10166 = vmatpush.bf16.msra.mxu0 %v6689
        %10167 = vmatmul.bf16.gmra.mxu0 %v1768
        %v10168 = vpop.f32.mrf.mxu0
        %v10169 = vadd.f32 %v10156, %v10168
        %v10170 = vpop.f32.mrf.mxu0
        %10171 = vdwg.mxu0
        %10172 = vmatpush.bf16.msra.mxu0 %v6719
        %10173 = vmatpush.bf16.msra.mxu0 %v6717
        %10174 = vmatpush.bf16.msra.mxu0 %v6715
        %10175 = vmatpush.bf16.msra.mxu0 %v6713
        %10176 = vmatpush.bf16.msra.mxu0 %v6711
        %10177 = vmatpush.bf16.msra.mxu0 %v6709
        %10178 = vmatpush.bf16.msra.mxu0 %v6707
        %10179 = vmatpush.bf16.msra.mxu0 %v6705
        %10180 = vmatmul.bf16.gmra.mxu0 %v1769
        %v10181 = vpop.f32.mrf.mxu0
        %v10182 = vadd.f32 %v10169, %v10181
        %v10183 = vpop.f32.mrf.mxu0
        %10184 = vdwg.mxu0
        %10185 = vmatpush.bf16.msra.mxu0 %v6735
        %10186 = vmatpush.bf16.msra.mxu0 %v6733
        %10187 = vmatpush.bf16.msra.mxu0 %v6731
        %10188 = vmatpush.bf16.msra.mxu0 %v6729
        %10189 = vmatpush.bf16.msra.mxu0 %v6727
        %10190 = vmatpush.bf16.msra.mxu0 %v6725
        %10191 = vmatpush.bf16.msra.mxu0 %v6723
        %10192 = vmatpush.bf16.msra.mxu0 %v6721
        %10193 = vmatmul.bf16.gmra.mxu0 %v1770
        %v10194 = vpop.f32.mrf.mxu0
        %v10195 = vadd.f32 %v10182, %v10194
        %v10196 = vpop.f32.mrf.mxu0
        %10197 = vdwg.mxu0
        %10198 = vmatpush.bf16.msra.mxu0 %v6751
        %10199 = vmatpush.bf16.msra.mxu0 %v6749
        %10200 = vmatpush.bf16.msra.mxu0 %v6747
        %10201 = vmatpush.bf16.msra.mxu0 %v6745
        %10202 = vmatpush.bf16.msra.mxu0 %v6743
        %10203 = vmatpush.bf16.msra.mxu0 %v6741
        %10204 = vmatpush.bf16.msra.mxu0 %v6739
        %10205 = vmatpush.bf16.msra.mxu0 %v6737
        %10206 = vmatmul.bf16.gmra.mxu0 %v1771
        %v10207 = vpop.f32.mrf.mxu0
        %v10208 = vadd.f32 %v10195, %v10207
        %v10209 = vpop.f32.mrf.mxu0
        %10210 = vdwg.mxu0
        %10211 = vmatpush.bf16.msra.mxu0 %v6767
        %10212 = vmatpush.bf16.msra.mxu0 %v6765
        %10213 = vmatpush.bf16.msra.mxu0 %v6763
        %10214 = vmatpush.bf16.msra.mxu0 %v6761
        %10215 = vmatpush.bf16.msra.mxu0 %v6759
        %10216 = vmatpush.bf16.msra.mxu0 %v6757
        %10217 = vmatpush.bf16.msra.mxu0 %v6755
        %10218 = vmatpush.bf16.msra.mxu0 %v6753
        %10219 = vmatmul.bf16.gmra.mxu0 %v1772
        %v10220 = vpop.f32.mrf.mxu0
        %v10221 = vadd.f32 %v10208, %v10220
        %v10222 = vpop.f32.mrf.mxu0
        %10223 = vdwg.mxu0
        %10224 = vmatpush.bf16.msra.mxu0 %v6783
        %10225 = vmatpush.bf16.msra.mxu0 %v6781
        %10226 = vmatpush.bf16.msra.mxu0 %v6779
        %10227 = vmatpush.bf16.msra.mxu0 %v6777
        %10228 = vmatpush.bf16.msra.mxu0 %v6775
        %10229 = vmatpush.bf16.msra.mxu0 %v6773
        %10230 = vmatpush.bf16.msra.mxu0 %v6771
        %10231 = vmatpush.bf16.msra.mxu0 %v6769
        %10232 = vmatmul.bf16.gmra.mxu0 %v1773
        %v10233 = vpop.f32.mrf.mxu0
        %v10234 = vadd.f32 %v10221, %v10233
        %v10235 = vpop.f32.mrf.mxu0
        %10236 = vdwg.mxu0
        %10237 = vmatpush.bf16.msra.mxu0 %v6799
        %10238 = vmatpush.bf16.msra.mxu0 %v6797
        %10239 = vmatpush.bf16.msra.mxu0 %v6795
        %10240 = vmatpush.bf16.msra.mxu0 %v6793
        %10241 = vmatpush.bf16.msra.mxu0 %v6791
        %10242 = vmatpush.bf16.msra.mxu0 %v6789
        %10243 = vmatpush.bf16.msra.mxu0 %v6787
        %10244 = vmatpush.bf16.msra.mxu0 %v6785
        %10245 = vmatmul.bf16.gmra.mxu0 %v1774
        %v10246 = vpop.f32.mrf.mxu0
        %v10247 = vadd.f32 %v10234, %v10246
        %v10248 = vpop.f32.mrf.mxu0
        %10249 = vdwg.mxu0
        %10250 = vmatpush.bf16.msra.mxu0 %v6815
        %10251 = vmatpush.bf16.msra.mxu0 %v6813
        %10252 = vmatpush.bf16.msra.mxu0 %v6811
        %10253 = vmatpush.bf16.msra.mxu0 %v6809
        %10254 = vmatpush.bf16.msra.mxu0 %v6807
        %10255 = vmatpush.bf16.msra.mxu0 %v6805
        %10256 = vmatpush.bf16.msra.mxu0 %v6803
        %10257 = vmatpush.bf16.msra.mxu0 %v6801
        %10258 = vmatmul.bf16.gmra.mxu0 %v1775
        %v10259 = vpop.f32.mrf.mxu0
        %v10260 = vadd.f32 %v10247, %v10259
        %v10261 = vpop.f32.mrf.mxu0
        %10262 = vdwg.mxu0
        %10263 = vmatpush.bf16.msra.mxu0 %v6831
        %10264 = vmatpush.bf16.msra.mxu0 %v6829
        %10265 = vmatpush.bf16.msra.mxu0 %v6827
        %10266 = vmatpush.bf16.msra.mxu0 %v6825
        %10267 = vmatpush.bf16.msra.mxu0 %v6823
        %10268 = vmatpush.bf16.msra.mxu0 %v6821
        %10269 = vmatpush.bf16.msra.mxu0 %v6819
        %10270 = vmatpush.bf16.msra.mxu0 %v6817
        %10271 = vmatmul.bf16.gmra.mxu0 %v1776
        %v10272 = vpop.f32.mrf.mxu0
        %v10273 = vadd.f32 %v10260, %v10272
        %v10274 = vpop.f32.mrf.mxu0
        %10275 = vdwg.mxu0
        %10276 = vmatpush.bf16.msra.mxu0 %v6847
        %10277 = vmatpush.bf16.msra.mxu0 %v6845
        %10278 = vmatpush.bf16.msra.mxu0 %v6843
        %10279 = vmatpush.bf16.msra.mxu0 %v6841
        %10280 = vmatpush.bf16.msra.mxu0 %v6839
        %10281 = vmatpush.bf16.msra.mxu0 %v6837
        %10282 = vmatpush.bf16.msra.mxu0 %v6835
        %10283 = vmatpush.bf16.msra.mxu0 %v6833
        %10284 = vmatmul.bf16.gmra.mxu0 %v1777
        %v10285 = vpop.f32.mrf.mxu0
        %v10286 = vadd.f32 %v10273, %v10285
        %v10287 = vpop.f32.mrf.mxu0
        %10288 = vdwg.mxu0
        %10289 = vmatpush.bf16.msra.mxu0 %v6863
        %10290 = vmatpush.bf16.msra.mxu0 %v6861
        %10291 = vmatpush.bf16.msra.mxu0 %v6859
        %10292 = vmatpush.bf16.msra.mxu0 %v6857
        %10293 = vmatpush.bf16.msra.mxu0 %v6855
        %10294 = vmatpush.bf16.msra.mxu0 %v6853
        %10295 = vmatpush.bf16.msra.mxu0 %v6851
        %10296 = vmatpush.bf16.msra.mxu0 %v6849
        %10297 = vmatmul.bf16.gmra.mxu0 %v1778
        %v10298 = vpop.f32.mrf.mxu0
        %v10299 = vadd.f32 %v10286, %v10298
        %v10300 = vpop.f32.mrf.mxu0
        %10301 = vdwg.mxu0
        %10302 = vmatpush.bf16.msra.mxu0 %v6879
        %10303 = vmatpush.bf16.msra.mxu0 %v6877
        %10304 = vmatpush.bf16.msra.mxu0 %v6875
        %10305 = vmatpush.bf16.msra.mxu0 %v6873
        %10306 = vmatpush.bf16.msra.mxu0 %v6871
        %10307 = vmatpush.bf16.msra.mxu0 %v6869
        %10308 = vmatpush.bf16.msra.mxu0 %v6867
        %10309 = vmatpush.bf16.msra.mxu0 %v6865
        %10310 = vmatmul.bf16.gmra.mxu0 %v1779
        %v10311 = vpop.f32.mrf.mxu0
        %v10312 = vadd.f32 %v10299, %v10311
        %v10313 = vpop.f32.mrf.mxu0
        %10314 = vdwg.mxu0
        %10315 = vmatpush.bf16.msra.mxu0 %v6895
        %10316 = vmatpush.bf16.msra.mxu0 %v6893
        %10317 = vmatpush.bf16.msra.mxu0 %v6891
        %10318 = vmatpush.bf16.msra.mxu0 %v6889
        %10319 = vmatpush.bf16.msra.mxu0 %v6887
        %10320 = vmatpush.bf16.msra.mxu0 %v6885
        %10321 = vmatpush.bf16.msra.mxu0 %v6883
        %10322 = vmatpush.bf16.msra.mxu0 %v6881
        %10323 = vmatmul.bf16.gmra.mxu0 %v1780
        %v10324 = vpop.f32.mrf.mxu0
        %v10325 = vadd.f32 %v10312, %v10324
        %v10326 = vpop.f32.mrf.mxu0
        %10327 = vdwg.mxu0
        %10328 = vmatpush.bf16.msra.mxu0 %v6911
        %10329 = vmatpush.bf16.msra.mxu0 %v6909
        %10330 = vmatpush.bf16.msra.mxu0 %v6907
        %10331 = vmatpush.bf16.msra.mxu0 %v6905
        %10332 = vmatpush.bf16.msra.mxu0 %v6903
        %10333 = vmatpush.bf16.msra.mxu0 %v6901
        %10334 = vmatpush.bf16.msra.mxu0 %v6899
        %10335 = vmatpush.bf16.msra.mxu0 %v6897
        %10336 = vmatmul.bf16.gmra.mxu0 %v1781
        %v10337 = vpop.f32.mrf.mxu0
        %v10338 = vadd.f32 %v10325, %v10337
        %v10339 = vpop.f32.mrf.mxu0
        %10340 = vdwg.mxu0
        %10341 = vmatpush.bf16.msra.mxu0 %v6927
        %10342 = vmatpush.bf16.msra.mxu0 %v6925
        %10343 = vmatpush.bf16.msra.mxu0 %v6923
        %10344 = vmatpush.bf16.msra.mxu0 %v6921
        %10345 = vmatpush.bf16.msra.mxu0 %v6919
        %10346 = vmatpush.bf16.msra.mxu0 %v6917
        %10347 = vmatpush.bf16.msra.mxu0 %v6915
        %10348 = vmatpush.bf16.msra.mxu0 %v6913
        %10349 = vmatmul.bf16.gmra.mxu0 %v1782
        %v10350 = vpop.f32.mrf.mxu0
        %v10351 = vadd.f32 %v10338, %v10350
        %v10352 = vpop.f32.mrf.mxu0
        %10353 = vdwg.mxu0
        %10354 = vmatpush.bf16.msra.mxu0 %v6943
        %10355 = vmatpush.bf16.msra.mxu0 %v6941
        %10356 = vmatpush.bf16.msra.mxu0 %v6939
        %10357 = vmatpush.bf16.msra.mxu0 %v6937
        %10358 = vmatpush.bf16.msra.mxu0 %v6935
        %10359 = vmatpush.bf16.msra.mxu0 %v6933
        %10360 = vmatpush.bf16.msra.mxu0 %v6931
        %10361 = vmatpush.bf16.msra.mxu0 %v6929
        %10362 = vmatmul.bf16.gmra.mxu0 %v1783
        %v10363 = vpop.f32.mrf.mxu0
        %v10364 = vadd.f32 %v10351, %v10363
        %v10365 = vpop.f32.mrf.mxu0
        %10366 = vdwg.mxu0
        %10367 = vmatpush.bf16.msra.mxu0 %v6959
        %10368 = vmatpush.bf16.msra.mxu0 %v6957
        %10369 = vmatpush.bf16.msra.mxu0 %v6955
        %10370 = vmatpush.bf16.msra.mxu0 %v6953
        %10371 = vmatpush.bf16.msra.mxu0 %v6951
        %10372 = vmatpush.bf16.msra.mxu0 %v6949
        %10373 = vmatpush.bf16.msra.mxu0 %v6947
        %10374 = vmatpush.bf16.msra.mxu0 %v6945
        %10375 = vmatmul.bf16.gmra.mxu0 %v1784
        %v10376 = vpop.f32.mrf.mxu0
        %v10377 = vadd.f32 %v10364, %v10376
        %v10378 = vpop.f32.mrf.mxu0
        %10379 = vdwg.mxu0
        %10380 = vmatpush.bf16.msra.mxu0 %v6975
        %10381 = vmatpush.bf16.msra.mxu0 %v6973
        %10382 = vmatpush.bf16.msra.mxu0 %v6971
        %10383 = vmatpush.bf16.msra.mxu0 %v6969
        %10384 = vmatpush.bf16.msra.mxu0 %v6967
        %10385 = vmatpush.bf16.msra.mxu0 %v6965
        %10386 = vmatpush.bf16.msra.mxu0 %v6963
        %10387 = vmatpush.bf16.msra.mxu0 %v6961
        %10388 = vmatmul.bf16.gmra.mxu0 %v1785
        %v10389 = vpop.f32.mrf.mxu0
        %v10390 = vadd.f32 %v10377, %v10389
        %v10391 = vpop.f32.mrf.mxu0
        %10392 = vdwg.mxu0
        %10393 = vmatpush.bf16.msra.mxu0 %v6991
        %10394 = vmatpush.bf16.msra.mxu0 %v6989
        %10395 = vmatpush.bf16.msra.mxu0 %v6987
        %10396 = vmatpush.bf16.msra.mxu0 %v6985
        %10397 = vmatpush.bf16.msra.mxu0 %v6983
        %10398 = vmatpush.bf16.msra.mxu0 %v6981
        %10399 = vmatpush.bf16.msra.mxu0 %v6979
        %10400 = vmatpush.bf16.msra.mxu0 %v6977
        %10401 = vmatmul.bf16.gmra.mxu0 %v1786
        %v10402 = vpop.f32.mrf.mxu0
        %v10403 = vadd.f32 %v10390, %v10402
        %v10404 = vpop.f32.mrf.mxu0
        %10405 = vdwg.mxu0
        %10406 = vmatpush.bf16.msra.mxu0 %v7007
        %10407 = vmatpush.bf16.msra.mxu0 %v7005
        %10408 = vmatpush.bf16.msra.mxu0 %v7003
        %10409 = vmatpush.bf16.msra.mxu0 %v7001
        %10410 = vmatpush.bf16.msra.mxu0 %v6999
        %10411 = vmatpush.bf16.msra.mxu0 %v6997
        %10412 = vmatpush.bf16.msra.mxu0 %v6995
        %10413 = vmatpush.bf16.msra.mxu0 %v6993
        %10414 = vmatmul.bf16.gmra.mxu0 %v1787
        %v10415 = vpop.f32.mrf.mxu0
        %v10416 = vadd.f32 %v10403, %v10415
        %v10417 = vpop.f32.mrf.mxu0
        %10418 = vdwg.mxu0
        %10419 = vmatpush.bf16.msra.mxu0 %v7023
        %10420 = vmatpush.bf16.msra.mxu0 %v7021
        %10421 = vmatpush.bf16.msra.mxu0 %v7019
        %10422 = vmatpush.bf16.msra.mxu0 %v7017
        %10423 = vmatpush.bf16.msra.mxu0 %v7015
        %10424 = vmatpush.bf16.msra.mxu0 %v7013
        %10425 = vmatpush.bf16.msra.mxu0 %v7011
        %10426 = vmatpush.bf16.msra.mxu0 %v7009
        %10427 = vmatmul.bf16.gmra.mxu0 %v1788
        %v10428 = vpop.f32.mrf.mxu0
        %v10429 = vadd.f32 %v10416, %v10428
        %v10430 = vpop.f32.mrf.mxu0
        %10431 = vdwg.mxu0
        %10432 = vmatpush.bf16.msra.mxu0 %v7039
        %10433 = vmatpush.bf16.msra.mxu0 %v7037
        %10434 = vmatpush.bf16.msra.mxu0 %v7035
        %10435 = vmatpush.bf16.msra.mxu0 %v7033
        %10436 = vmatpush.bf16.msra.mxu0 %v7031
        %10437 = vmatpush.bf16.msra.mxu0 %v7029
        %10438 = vmatpush.bf16.msra.mxu0 %v7027
        %10439 = vmatpush.bf16.msra.mxu0 %v7025
        %10440 = vmatmul.bf16.gmra.mxu0 %v1789
        %v10441 = vpop.f32.mrf.mxu0
        %v10442 = vadd.f32 %v10429, %v10441
        %v10443 = vpop.f32.mrf.mxu0
        %10444 = vdwg.mxu0
        %10445 = vmatpush.bf16.msra.mxu0 %v7055
        %10446 = vmatpush.bf16.msra.mxu0 %v7053
        %10447 = vmatpush.bf16.msra.mxu0 %v7051
        %10448 = vmatpush.bf16.msra.mxu0 %v7049
        %10449 = vmatpush.bf16.msra.mxu0 %v7047
        %10450 = vmatpush.bf16.msra.mxu0 %v7045
        %10451 = vmatpush.bf16.msra.mxu0 %v7043
        %10452 = vmatpush.bf16.msra.mxu0 %v7041
        %10453 = vmatmul.bf16.gmra.mxu0 %v1790
        %v10454 = vpop.f32.mrf.mxu0
        %v10455 = vadd.f32 %v10442, %v10454
        %v10456 = vpop.f32.mrf.mxu0
        %10457 = vdwg.mxu0
        %10458 = vst [vmem:[%s241] sm:$0xff] %v9402
        %10459 = vst [vmem:[%s241 + $0x8] sm:$0xff] %v10455
        %s10460 = sand.u32 %s102, 1
        %s10461 = scalar_lea.sflag [#allocation4], %s10460
        %s10462 = sand.u32 %s102, 1
        %s10463 = smul.addr %s10462, 16
        %s10464 = scalar_lea.vmem [#allocation8], %s10463
        // Predicated region
        $region45: #{tpu_custom_call.1} parent=31 // pred_check
          %p10465 = pneg %p112
        $region46: #{tpu_custom_call.1} parent=31 // pred_check_branch
          %10467 = sbr.rel (%p10465) target = $region48
        $region47: #{tpu_custom_call.1} parent=31 // pred_region
          %s10468 = smul.u32 2, %s21
          %10470 = vsyncadd %s10461, 0
          %s10471 = smul.addr %s10468, 8
          %s10472 = scalar_lea.hbm %s3, %s10471
          %s10474 = sshll.u32 %s10464, 4
          %s10475 = int_to_ptr.vmem [resolvable:$true] %s10474
          %s10476 = sshll.u32 %s10472, 4
          %s10477 = int_to_ptr.hbm [resolvable:$true] %s10476
          %10479 = dma.vmem_to_hbm [thread:$0]  %s10475, 256, %s10477, %s10461
        $region48: #{tpu_custom_call.1} parent=31 // pred_fallthru
          _
      $region32: #{tpu_custom_call.1} parent=5 // pred_fallthru
        _
      %p10480 = scmp.le.s32.totalorder 2, %s16
      // Predicated region
      $region49: #{tpu_custom_call.1} parent=5 // pred_check
        %p10481 = pneg %p10480
      $region50: #{tpu_custom_call.1} parent=5 // pred_check_branch
        %10483 = sbr.rel (%p10481) target = $region52
      $region51: #{tpu_custom_call.1} parent=5 // pred_region
        %s10484 = ssub.s32 %s16, 2
        // Predicated region
        $region53: #{tpu_custom_call.1} parent=51 // pred_check
          %p10485 = pneg %p118
        $region54: #{tpu_custom_call.1} parent=51 // pred_check_branch
          %10487 = sbr.rel (%p10485) target = $region56
        $region55: #{tpu_custom_call.1} parent=51 // pred_region
          %s10488 = sand.u32 %s103, 1
          %s10489 = scalar_lea.sflag [#allocation4], %s10488
          %s10490 = sand.u32 %s103, 1
          %s10491 = smul.addr %s10490, 16
          %s10492 = scalar_lea.vmem [#allocation8], %s10491
          %10494 = dma.done %s10489, 256
        $region56: #{tpu_custom_call.1} parent=51 // pred_fallthru
          _
      $region52: #{tpu_custom_call.1} parent=5 // pred_fallthru
        _
    $region6: #{tpu_custom_call.1} parent=1 // loop_footer
      %s20 = sadd.s32 1, %s16
    $region7: #{tpu_custom_call.1} parent=1 // loop_footer_branch
      %15 = sbr.rel target = $region3
    $region8: #{tpu_custom_call.1} parent=1 // loop_exit
      _
    %10495 = vsyncpa [#allocation3], 1
    %s10496 = scalar_lea.sflag [#allocation3], 1
    %10497 = vsyncpa %s10496, 1
    %10498 = vsyncpa [#allocation6], 1
    %s10499 = scalar_lea.sflag [#allocation6], 1
    %10500 = vsyncpa %s10499, 1
    %10501 = vsyncpa [#allocation4], 1
    %s10502 = scalar_lea.sflag [#allocation4], 1
    %10503 = vsyncpa %s10502, 1

</llo_original>
